<compile_context>
chip_gen: v7x
topology: tpu7x:2x2x1
jax: 0.10.0
libtpu: 0.0.40
codegen_flags: <defaults>
</compile_context>

<pallas_src>
import functools

import jax
import jax.numpy as jnp
import numpy as np
from jax.experimental import pallas as pl
from jax.experimental.pallas import tpu as pltpu

BN_EPS = 1e-5
LANES = 128
VMEM_LIMIT = 32 * 1024 * 1024   # actual footprint is a few MiB; safe on v7x


def _round_up(x, m):
    return (x + m - 1) // m * m


def _pick_tile_h(ho, wc, target_rows=2048):
    """Even tile height with th*wc ~ target_rows; remainder rows are masked."""
    ho2 = _round_up(max(ho, 1), 2)
    cap = max(2, 2 * (target_rows // (2 * wc)))
    cap = min(cap, ho2)
    best = 0
    for d in range(2, cap + 1, 2):            # largest even divisor of ho2 <= cap
        if ho2 % d == 0:
            best = d
    if best >= max(2, cap // 2):
        return best
    return cap                                 # non-divisor: ho padded + masked


def _compiler_params():
    return pltpu.CompilerParams(dimension_semantics=("parallel", "parallel"),
                                vmem_limit_bytes=VMEM_LIMIT)


# ---------------------------------------------------------------------------
# Shared f32 epilogue: bias + ReLU + zero invalid rows/cols + per-tile stats
# ---------------------------------------------------------------------------
def _bias_relu_stats(acc, bias, mask):
    y = jnp.maximum(acc + bias, 0.0)                         # (tm, cp)
    ym = jnp.where(mask > 0.0, y, 0.0)                       # mask: (tm, 1)
    stats = jnp.concatenate(
        [jnp.sum(ym, axis=0, keepdims=True),
         jnp.sum(ym * ym, axis=0, keepdims=True)], axis=0)   # (2, cp)
    return ym, stats


# ---------------------------------------------------------------------------
# Kernel 1: layer-1 conv as a single K=9*cin matmul (im2col built in glue)
# ---------------------------------------------------------------------------
def _mm_bias_relu_stats_kernel(x_ref, m_ref, w_ref, b_ref, y_ref, s_ref):
    acc = jnp.dot(x_ref[0], w_ref[...], preferred_element_type=jnp.float32)
    ym, st = _bias_relu_stats(acc, b_ref[...], m_ref[0])
    y_ref[0, 0] = ym.astype(y_ref.dtype)
    s_ref[0, 0] = st


# ---------------------------------------------------------------------------
# Kernel 2: layer-2 3x3 conv as 9 row-offset taps of one flat VMEM window
# ---------------------------------------------------------------------------
def _conv3x3_tap_relu_stats_kernel(top_ref, main_ref, bot_ref, m_ref, w_ref,
                                   b_ref, y_ref, s_ref, scr_ref, *, th, wc, pad):
    tm = th * wc
    hh = 2 * wc
    cp = scr_ref.shape[1]
    # Assemble one contiguous flat window (aligned sublane stores); every tap
    # below is a pure row-offset view -> no per-tap copies / reshapes.
    scr_ref[pl.ds(0, hh), :] = top_ref[0]
    scr_ref[pl.ds(hh, tm), :] = main_ref[0]
    scr_ref[pl.ds(hh + tm, hh), :] = bot_ref[0]
    scr_ref[pl.ds(hh + tm + hh, 8), :] = jnp.zeros((8, cp), scr_ref.dtype)

    acc = None
    for dy in range(3):
        for dx in range(3):
            off = hh + (dy - pad) * wc + (dx - pad)
            part = jnp.dot(scr_ref[pl.ds(off, tm), :], w_ref[dy * 3 + dx],
                           preferred_element_type=jnp.float32)
            acc = part if acc is None else acc + part        # unbroken MXU chain
    ym, st = _bias_relu_stats(acc, b_ref[...], m_ref[0])
    y_ref[0, 0] = ym.astype(y_ref.dtype)
    s_ref[0, 0] = st


# ---------------------------------------------------------------------------
# Kernel 3: BN pass 2 fused with inter-layer packing (scale*y + shift, masked)
# ---------------------------------------------------------------------------
def _bn_apply_pack_kernel(y_ref, m_ref, sc_ref, sh_ref, o_ref):
    y = y_ref[0, 0].astype(jnp.float32)
    v = y * sc_ref[...] + sh_ref[...]
    o_ref[0] = jnp.where(m_ref[0] > 0.0, v, 0.0).astype(o_ref.dtype)


# ---------------------------------------------------------------------------
# Glue helpers
# ---------------------------------------------------------------------------
def _make_mask(ho, wo, ho_p, th, wc):
    """(nt+2, th*wc, 1) validity mask with all-zero border tiles."""
    nt = ho_p // th
    rows = (jnp.arange(ho_p) < ho)[:, None]
    cols = (jnp.arange(wc) < wo)[None, :]
    m = (rows & cols).astype(jnp.float32).reshape(nt, th * wc, 1)
    z = jnp.zeros((1, th * wc, 1), jnp.float32)
    return jnp.concatenate([z, m, z], axis=0)


def _bn_scale_shift(stats, mask_ext, n, total, gamma_p, beta_p):
    """Chan-style combine of per-tile (sum, sumsq) -> per-channel scale/shift."""
    cp = stats.shape[-1]
    s = stats.reshape(-1, 2, cp)                               # (n*nt, 2, cp)
    cnt = jnp.sum(mask_ext[1:-1], axis=(1, 2))                 # (nt,)
    cnt = jnp.tile(cnt, n)[:, None]                            # (n*nt, 1)
    tsum, tss = s[:, 0], s[:, 1]
    mean_t = tsum / cnt
    q_t = tss - tsum * mean_t                                  # per-tile centered SS
    mu = jnp.sum(tsum, axis=0) / total
    var = jnp.sum(q_t + cnt * jnp.square(mean_t - mu), axis=0) / total
    var = jnp.maximum(var, 0.0)                                # biased var (PyTorch)
    inv_std = jax.lax.rsqrt(var + BN_EPS)
    scale = gamma_p * inv_std
    shift = beta_p - mu * scale
    return scale.reshape(1, cp), shift.reshape(1, cp)
    # TODO(synk): nn.BatchNorm2d running_mean/running_var buffer updates
    # (training-mode side effect) are not reproduced; only the output matches.


def _conv1_im2col(x_nhwc, w_col, b_p, mask_ext, *, pad, th, wc, ho, ho_p):
    n, h, w, cin = x_nhwc.shape
    kcin, cp = w_col.shape
    nt = ho_p // th
    tm = th * wc
    canvas = jnp.pad(x_nhwc.astype(jnp.bfloat16),
                     ((0, 0), (pad, (ho_p - ho) + pad + 1),
                      (pad, wc - w - pad), (0, 0)))
    cflat = canvas.reshape(n, (ho_p + 3) * wc, cin)
    # K = 9*cin im2col in glue (tiny cin -> negligible HBM traffic).
    xcol = jnp.concatenate(
        [cflat[:, dy * wc + dx: dy * wc + dx + ho_p * wc, :]
         for dy in range(3) for dx in range(3)], axis=-1)      # (n, ho_p*wc, 9*cin)

    return pl.pallas_call(
        _mm_bias_relu_stats_kernel,
        out_shape=(jax.ShapeDtypeStruct((n, nt, tm, cp), jnp.bfloat16),
                   jax.ShapeDtypeStruct((n, nt, 2, cp), jnp.float32)),
        grid=(n, nt),
        in_specs=[
            pl.BlockSpec((1, tm, kcin), lambda i, t: (i, t, 0)),
            pl.BlockSpec((1, tm, 1), lambda i, t: (t + 1, 0, 0)),
            pl.BlockSpec((kcin, cp), lambda i, t: (0, 0)),
            pl.BlockSpec((1, cp), lambda i, t: (0, 0)),
        ],
        out_specs=(pl.BlockSpec((1, 1, tm, cp), lambda i, t: (i, t, 0, 0)),
                   pl.BlockSpec((1, 1, 2, cp), lambda i, t: (i, t, 0, 0))),
        compiler_params=_compiler_params(),
    )(xcol, mask_ext, w_col, b_p.reshape(1, cp))


def _bn_apply_pack(y_raw, mask_ext, scale, shift, *, nt, tm, cp, lead_tail, out_dtype):
    """BN pass 2.  lead_tail=True packs into layer-2's zero-bordered flat canvas."""
    n = y_raw.shape[0]
    if lead_tail:
        grid_t = nt + 2
        y_map = lambda i, t: (i, jnp.minimum(jnp.maximum(t - 1, 0), nt - 1), 0, 0)
        m_map = lambda i, t: (t, 0, 0)          # border tiles have all-zero mask
        out_rows = (nt + 2) * tm
    else:
        grid_t = nt
        y_map = lambda i, t: (i, t, 0, 0)
        m_map = lambda i, t: (t + 1, 0, 0)
        out_rows = nt * tm
    return pl.pallas_call(
        _bn_apply_pack_kernel,
        out_shape=jax.ShapeDtypeStruct((n, out_rows, cp), out_dtype),
        grid=(n, grid_t),
        in_specs=[
            pl.BlockSpec((1, 1, tm, cp), y_map),
            pl.BlockSpec((1, tm, 1), m_map),
            pl.BlockSpec((1, cp), lambda i, t: (0, 0)),
            pl.BlockSpec((1, cp), lambda i, t: (0, 0)),
        ],
        out_specs=pl.BlockSpec((1, tm, cp), lambda i, t: (i, t, 0)),
        compiler_params=_compiler_params(),
    )(y_raw, mask_ext, scale, shift)


def _conv2_taps(f_packed, w_taps, b_p, mask_ext, *, pad, th, wc, nt2):
    n = f_packed.shape[0]
    cp = f_packed.shape[-1]
    tm = th * wc
    hh = 2 * wc
    kernel = functools.partial(_conv3x3_tap_relu_stats_kernel, th=th, wc=wc, pad=pad)
    return pl.pallas_call(
        kernel,
        out_shape=(jax.ShapeDtypeStruct((n, nt2, tm, cp), jnp.bfloat16),
                   jax.ShapeDtypeStruct((n, nt2, 2, cp), jnp.float32)),
        grid=(n, nt2),
        in_specs=[
            # top halo / main / bottom halo: three BlockSpecs on the same array
            pl.BlockSpec((1, hh, cp), lambda i, t: (i, (t + 1) * (th // 2) - 1, 0)),
            pl.BlockSpec((1, tm, cp), lambda i, t: (i, t + 1, 0)),
            pl.BlockSpec((1, hh, cp), lambda i, t: (i, (t + 2) * (th // 2), 0)),
            pl.BlockSpec((1, tm, 1), lambda i, t: (t + 1, 0, 0)),
            pl.BlockSpec((9, cp, cp), lambda i, t: (0, 0, 0)),
            pl.BlockSpec((1, cp), lambda i, t: (0, 0)),
        ],
        out_specs=(pl.BlockSpec((1, 1, tm, cp), lambda i, t: (i, t, 0, 0)),
                   pl.BlockSpec((1, 1, 2, cp), lambda i, t: (i, t, 0, 0))),
        scratch_shapes=[pltpu.VMEM((tm + 4 * wc + 8, cp), jnp.bfloat16)],
        compiler_params=_compiler_params(),
    )(f_packed, f_packed, f_packed, mask_ext, w_taps, b_p.reshape(1, cp))


# ---------------------------------------------------------------------------
# UNetConvBlock forward
# ---------------------------------------------------------------------------
@functools.partial(jax.jit, static_argnames=("padding", "batch_norm"))
def unet_conv_block(x_nchw, params, *, padding=True, batch_norm=True):
    pad = int(padding)
    cout = params["b1"].shape[0]
    cp = params["b1_p"].shape[0]
    n, cin, h, w = x_nchw.shape

    x = jnp.transpose(x_nchw, (0, 2, 3, 1))                   # NCHW -> NHWC

    ho1, wo1 = h + 2 * pad - 2, w + 2 * pad - 2
    ho2, wo2 = ho1 + 2 * pad - 2, wo1 + 2 * pad - 2
    wc = _round_up(w + 2 * pad, 8)                             # lane/sublane-friendly
    th = _pick_tile_h(ho1, wc)
    tm = th * wc
    ho_p1 = _round_up(ho1, th)
    nt1 = ho_p1 // th
    ho_p2 = _round_up(ho2, th)
    nt2 = ho_p2 // th

    mask1 = _make_mask(ho1, wo1, ho_p1, th, wc)
    mask2 = _make_mask(ho2, wo2, ho_p2, th, wc)
    ones = jnp.ones((1, cp), jnp.float32)
    zeros = jnp.zeros((1, cp), jnp.float32)

    # layer 1: conv3x3 (K = 9*cin) + ReLU + per-tile BN stats
    y1_raw, stats1 = _conv1_im2col(x, params["w1_col"], params["b1_p"], mask1,
                                   pad=pad, th=th, wc=wc, ho=ho1, ho_p=ho_p1)
    if batch_norm:
        sc1, sh1 = _bn_scale_shift(stats1, mask1, n, n * ho1 * wo1,
                                   params["g1_p"], params["be1_p"])
    else:
        sc1, sh1 = ones, zeros
    # BN apply + pack into layer-2's zero-bordered flat canvas (no extra pad pass)
    f1 = _bn_apply_pack(y1_raw, mask1, sc1, sh1, nt=nt1, tm=tm, cp=cp,
                        lead_tail=True, out_dtype=jnp.bfloat16)

    # layer 2: conv3x3 (9 row-offset taps) + ReLU + per-tile BN stats
    y2_raw, stats2 = _conv2_taps(f1, params["w2_taps"], params["b2_p"], mask2,
                                 pad=pad, th=th, wc=wc, nt2=nt2)
    if batch_norm:
        sc2, sh2 = _bn_scale_shift(stats2, mask2, n, n * ho2 * wo2,
                                   params["g2_p"], params["be2_p"])
    else:
        sc2, sh2 = ones, zeros
    out_flat = _bn_apply_pack(y2_raw, mask2, sc2, sh2, nt=nt2, tm=tm, cp=cp,
                              lead_tail=False, out_dtype=jnp.float32)

    out = out_flat.reshape(n, ho_p2, wc, cp)[:, :ho2, :wo2, :cout]
    return jnp.transpose(out, (0, 3, 1, 2))                   # NHWC -> NCHW


# ---------------------------------------------------------------------------
# Parameters (nn.Conv2d / nn.BatchNorm2d shapes) + Pallas-prepped forms
# ---------------------------------------------------------------------------
def _prep_w_taps(w_oihw, cin_pad, cout_pad):
    o, i, kh, kw = w_oihw.shape
    w = jnp.transpose(w_oihw, (2, 3, 1, 0)).reshape(kh * kw, i, o)
    w = jnp.pad(w, ((0, 0), (0, cin_pad - i), (0, cout_pad - o)))
    return w.astype(jnp.bfloat16)


def _prep_w_col(w_oihw, cout_pad):
    o, i, kh, kw = w_oihw.shape
    w = jnp.transpose(w_oihw, (2, 3, 1, 0)).reshape(kh * kw * i, o)
    w = jnp.pad(w, ((0, 0), (0, cout_pad - o)))
    return w.astype(jnp.bfloat16)


def init_params(key, in_size, out_size):
    k1, k2, k3, k4 = jax.random.split(key, 4)
    w1 = jax.random.normal(k1, (out_size, in_size, 3, 3), jnp.float32) * 0.1
    b1 = jax.random.normal(k2, (out_size,), jnp.float32) * 0.1
    w2 = jax.random.normal(k3, (out_size, out_size, 3, 3), jnp.float32) * 0.1
    b2 = jax.random.normal(k4, (out_size,), jnp.float32) * 0.1
    g1 = jnp.ones((out_size,), jnp.float32)
    be1 = jnp.zeros((out_size,), jnp.float32)
    g2 = jnp.ones((out_size,), jnp.float32)
    be2 = jnp.zeros((out_size,), jnp.float32)

    cp = _round_up(out_size, LANES)
    pad_vec = lambda v: jnp.pad(v, (0, cp - out_size))
    return {
        # reference (PyTorch-layout) params
        "w1_oihw": w1, "b1": b1, "w2_oihw": w2, "b2": b2,
        "g1": g1, "be1": be1, "g2": g2, "be2": be2,
        # Pallas-prepped (channel-padded, bf16) params
        "w1_col": _prep_w_col(w1, cp),          # (9*cin, cp)
        "w2_taps": _prep_w_taps(w2, cp, cp),    # (9, cp, cp)
        "b1_p": pad_vec(b1), "b2_p": pad_vec(b2),
        "g1_p": pad_vec(g1), "be1_p": pad_vec(be1),
        "g2_p": pad_vec(g2), "be2_p": pad_vec(be2),
    }


# ---------------------------------------------------------------------------
# Pure-JAX reference for correctness check
# ---------------------------------------------------------------------------
def ref_forward(x_nchw, params, *, padding=True, batch_norm=True):
    pad = int(padding)

    def conv(x, w, b):
        y = jax.lax.conv_general_dilated(
            x, w, window_strides=(1, 1), padding=[(pad, pad), (pad, pad)],
            dimension_numbers=("NCHW", "OIHW", "NCHW"),
            precision=jax.lax.Precision.HIGHEST)
        return y + b[None, :, None, None]

    def bn(y, g, be):
        mean = jnp.mean(y, axis=(0, 2, 3), keepdims=True)
        var = jnp.mean(jnp.square(y - mean), axis=(0, 2, 3), keepdims=True)
        return ((y - mean) / jnp.sqrt(var + BN_EPS)
                * g[None, :, None, None] + be[None, :, None, None])

    y = jnp.maximum(conv(x_nchw, params["w1_oihw"], params["b1"]), 0.0)
    if batch_norm:
        y = bn(y, params["g1"], params["be1"])
    y = jnp.maximum(conv(y, params["w2_oihw"], params["b2"]), 0.0)
    if batch_norm:
        y = bn(y, params["g2"], params["be2"])
    return y


if __name__ == "__main__":
    key = jax.random.PRNGKey(0)
    kx, kp = jax.random.split(key)

    N, Cin, Cout, H, W = 2, 4, 8, 16, 16
    x = jax.random.normal(kx, (N, Cin, H, W), jnp.float32)      # NCHW like PyTorch
    params = init_params(kp, Cin, Cout)

    out = unet_conv_block(x, params, padding=True, batch_norm=True)
    out = jax.block_until_ready(out)
    assert out.shape == (N, Cout, H, W), out.shape

    ref = jax.block_until_ready(ref_forward(x, params, padding=True, batch_norm=True))
    # bf16 MXU operands + bf16 intermediates vs f32 HIGHEST reference -> looser tol.
    np.testing.assert_allclose(np.asarray(out), np.asarray(ref), atol=1e-1, rtol=1e-1)

    print("KERNEL_OK")
</pallas_src>

<mosaic_0001>
module attributes {stable_mosaic.version = 11 : i64} {
  func.func @_mm_bias_relu_stats_kernel(%arg0: i32, %arg1: i32, %arg2: memref<1x384x36xbf16, #tpu.memory_space<vmem>>, %arg3: memref<1x384x1xf32, #tpu.memory_space<vmem>>, %arg4: memref<36x128xbf16, #tpu.memory_space<vmem>>, %arg5: memref<1x128xf32, #tpu.memory_space<vmem>>, %arg6: memref<1x1x384x128xbf16, #tpu.memory_space<vmem>>, %arg7: memref<1x1x2x128xf32, #tpu.memory_space<vmem>>) attributes {dimension_semantics = [#tpu.dimension_semantics<parallel>, #tpu.dimension_semantics<parallel>], iteration_bounds = array<i64: 2, 1>, scalar_prefetch = 0 : i64, scratch_operands = 0 : i64, tpu.core_type = #tpu.core_type<tc>, window_params = [{transform_indices = @transform_0, window_bounds = array<i64: 1, 384, 36>}, {transform_indices = @transform_1, window_bounds = array<i64: 1, 384, 1>}, {pipeline_mode = #tpu.pipeline_mode<synchronous>, transform_indices = @transform_2, window_bounds = array<i64: 36, 128>}, {pipeline_mode = #tpu.pipeline_mode<synchronous>, transform_indices = @transform_3, window_bounds = array<i64: 1, 128>}, {transform_indices = @transform_4, window_bounds = array<i64: 1, 1, 384, 128>}, {transform_indices = @transform_5, window_bounds = array<i64: 1, 1, 2, 128>}]} {
    %c0 = arith.constant 0 : index
    %c0_0 = arith.constant 0 : index
    %c0_1 = arith.constant 0 : index
    %0 = vector.load %arg2[%c0, %c0_0, %c0_1] : memref<1x384x36xbf16, #tpu.memory_space<vmem>>, vector<1x384x36xbf16>
    %1 = vector.shape_cast %0 : vector<1x384x36xbf16> to vector<384x36xbf16>
    %c0_2 = arith.constant 0 : index
    %c0_3 = arith.constant 0 : index
    %2 = vector.load %arg4[%c0_2, %c0_3] : memref<36x128xbf16, #tpu.memory_space<vmem>>, vector<36x128xbf16>
    %cst = arith.constant dense<0.000000e+00> : vector<384x128xf32>
    %3 = tpu.matmul %1, %2, %cst {dimension_numbers = #tpu.dot_dimension_numbers<[1], [0], [0], [1], [0, 0, 1, 1], [], []>} : vector<384x36xbf16>, vector<36x128xbf16>, vector<384x128xf32> -> vector<384x128xf32>
    %c0_4 = arith.constant 0 : index
    %c0_5 = arith.constant 0 : index
    %4 = vector.load %arg5[%c0_4, %c0_5] : memref<1x128xf32, #tpu.memory_space<vmem>>, vector<1x128xf32>
    %c0_6 = arith.constant 0 : index
    %c0_7 = arith.constant 0 : index
    %c0_8 = arith.constant 0 : index
    %5 = vector.load %arg3[%c0_6, %c0_7, %c0_8] : memref<1x384x1xf32, #tpu.memory_space<vmem>>, vector<1x384x1xf32>
    %6 = vector.shape_cast %5 : vector<1x384x1xf32> to vector<384x1xf32>
    %7 = vector.broadcast %4 : vector<1x128xf32> to vector<384x128xf32>
    %8 = arith.addf %3, %7 : vector<384x128xf32>
    %cst_9 = arith.constant 0.000000e+00 : f32
    %9 = vector.broadcast %cst_9 : f32 to vector<384x128xf32>
    %10 = arith.maximumf %8, %9 : vector<384x128xf32>
    %cst_10 = arith.constant 0.000000e+00 : f32
    %11 = vector.broadcast %cst_10 : f32 to vector<384x1xf32>
    %12 = arith.cmpf ogt, %6, %11 : vector<384x1xf32>
    %cst_11 = arith.constant 0.000000e+00 : f32
    %13 = vector.shape_cast %12 : vector<384x1xi1> to vector<384x1xi1>
    %14 = vector.broadcast %13 : vector<384x1xi1> to vector<384x128xi1>
    %15 = vector.broadcast %cst_11 : f32 to vector<384x128xf32>
    %16 = arith.select %14, %10, %15 : vector<384x128xi1>, vector<384x128xf32>
    %cst_12 = arith.constant dense<0.000000e+00> : vector<128xf32>
    %17 = vector.multi_reduction <add>, %16, %cst_12 [0] : vector<384x128xf32> to vector<128xf32>
    %18 = vector.shape_cast %17 : vector<128xf32> to vector<1x128xf32>
    %19 = arith.mulf %16, %16 : vector<384x128xf32>
    %cst_13 = arith.constant dense<0.000000e+00> : vector<128xf32>
    %20 = vector.multi_reduction <add>, %19, %cst_13 [0] : vector<384x128xf32> to vector<128xf32>
    %21 = vector.shape_cast %20 : vector<128xf32> to vector<1x128xf32>
    %22 = tpu.concatenate %18, %21 in 0 : vector<1x128xf32>, vector<1x128xf32> -> vector<2x128xf32>
    %23 = arith.truncf %16 : vector<384x128xf32> to vector<384x128xbf16>
    %c0_14 = arith.constant 0 : index
    %c0_15 = arith.constant 0 : index
    %c0_16 = arith.constant 0 : index
    %c0_17 = arith.constant 0 : index
    %24 = vector.load %arg6[%c0_14, %c0_15, %c0_16, %c0_17] : memref<1x1x384x128xbf16, #tpu.memory_space<vmem>>, vector<1x1x384x128xbf16>
    %25 = vector.shape_cast %24 : vector<1x1x384x128xbf16> to vector<384x128xbf16>
    %26 = vector.shape_cast %23 : vector<384x128xbf16> to vector<1x1x384x128xbf16>
    tpu.vector_store %arg6[%c0_14, %c0_15, %c0_16, %c0_17], %26 {strides = array<i32>} : memref<1x1x384x128xbf16, #tpu.memory_space<vmem>>, vector<1x1x384x128xbf16>,
    %c0_18 = arith.constant 0 : index
    %c0_19 = arith.constant 0 : index
    %c0_20 = arith.constant 0 : index
    %c0_21 = arith.constant 0 : index
    %27 = vector.load %arg7[%c0_18, %c0_19, %c0_20, %c0_21] : memref<1x1x2x128xf32, #tpu.memory_space<vmem>>, vector<1x1x2x128xf32>
    %28 = vector.shape_cast %27 : vector<1x1x2x128xf32> to vector<2x128xf32>
    %29 = vector.shape_cast %22 : vector<2x128xf32> to vector<1x1x2x128xf32>
    tpu.vector_store %arg7[%c0_18, %c0_19, %c0_20, %c0_21], %29 {strides = array<i32>} : memref<1x1x2x128xf32, #tpu.memory_space<vmem>>, vector<1x1x2x128xf32>,
    return
  }
  func.func @transform_0(%arg0: i32, %arg1: i32) -> (i32, i32, i32) {
    %c0_i32 = arith.constant 0 : i32
    %c0_i32_0 = arith.constant 0 : i32
    return %arg0, %arg1, %c0_i32 : i32, i32, i32
  }
  func.func @transform_1(%arg0: i32, %arg1: i32) -> (i32, i32, i32) {
    %c1_i32 = arith.constant 1 : i32
    %0 = arith.addi %arg1, %c1_i32 : i32
    %c0_i32 = arith.constant 0 : i32
    %c0_i32_0 = arith.constant 0 : i32
    %c0_i32_1 = arith.constant 0 : i32
    return %0, %c0_i32, %c0_i32_0 : i32, i32, i32
  }
  func.func @transform_2(%arg0: i32, %arg1: i32) -> (i32, i32) {
    %c0_i32 = arith.constant 0 : i32
    %c0_i32_0 = arith.constant 0 : i32
    %c0_i32_1 = arith.constant 0 : i32
    return %c0_i32, %c0_i32_0 : i32, i32
  }
  func.func @transform_3(%arg0: i32, %arg1: i32) -> (i32, i32) {
    %c0_i32 = arith.constant 0 : i32
    %c0_i32_0 = arith.constant 0 : i32
    %c0_i32_1 = arith.constant 0 : i32
    return %c0_i32, %c0_i32_0 : i32, i32
  }
  func.func @transform_4(%arg0: i32, %arg1: i32) -> (i32, i32, i32, i32) {
    %c0_i32 = arith.constant 0 : i32
    %c0_i32_0 = arith.constant 0 : i32
    %c0_i32_1 = arith.constant 0 : i32
    return %arg0, %arg1, %c0_i32, %c0_i32_0 : i32, i32, i32, i32
  }
  func.func @transform_5(%arg0: i32, %arg1: i32) -> (i32, i32, i32, i32) {
    %c0_i32 = arith.constant 0 : i32
    %c0_i32_0 = arith.constant 0 : i32
    %c0_i32_1 = arith.constant 0 : i32
    return %arg0, %arg1, %c0_i32, %c0_i32_0 : i32, i32, i32, i32
  }
}

module attributes {stable_mosaic.version = 11 : i64} {
  func.func @_bn_apply_pack_kernel(%arg0: i32, %arg1: i32, %arg2: memref<1x1x384x128xbf16, #tpu.memory_space<vmem>>, %arg3: memref<1x384x1xf32, #tpu.memory_space<vmem>>, %arg4: memref<1x128xf32, #tpu.memory_space<vmem>>, %arg5: memref<1x128xf32, #tpu.memory_space<vmem>>, %arg6: memref<1x384x128xbf16, #tpu.memory_space<vmem>>) attributes {dimension_semantics = [#tpu.dimension_semantics<parallel>, #tpu.dimension_semantics<parallel>], iteration_bounds = array<i64: 2, 3>, scalar_prefetch = 0 : i64, scratch_operands = 0 : i64, tpu.core_type = #tpu.core_type<tc>, window_params = [{transform_indices = @transform_0, window_bounds = array<i64: 1, 1, 384, 128>}, {transform_indices = @transform_1, window_bounds = array<i64: 1, 384, 1>}, {pipeline_mode = #tpu.pipeline_mode<synchronous>, transform_indices = @transform_2, window_bounds = array<i64: 1, 128>}, {pipeline_mode = #tpu.pipeline_mode<synchronous>, transform_indices = @transform_3, window_bounds = array<i64: 1, 128>}, {transform_indices = @transform_4, window_bounds = array<i64: 1, 384, 128>}]} {
    %c0 = arith.constant 0 : index
    %c0_0 = arith.constant 0 : index
    %c0_1 = arith.constant 0 : index
    %c0_2 = arith.constant 0 : index
    %0 = vector.load %arg2[%c0, %c0_0, %c0_1, %c0_2] : memref<1x1x384x128xbf16, #tpu.memory_space<vmem>>, vector<1x1x384x128xbf16>
    %1 = vector.shape_cast %0 : vector<1x1x384x128xbf16> to vector<384x128xbf16>
    %2 = arith.extf %1 : vector<384x128xbf16> to vector<384x128xf32>
    %c0_3 = arith.constant 0 : index
    %c0_4 = arith.constant 0 : index
    %3 = vector.load %arg4[%c0_3, %c0_4] : memref<1x128xf32, #tpu.memory_space<vmem>>, vector<1x128xf32>
    %4 = vector.broadcast %3 : vector<1x128xf32> to vector<384x128xf32>
    %5 = arith.mulf %2, %4 : vector<384x128xf32>
    %c0_5 = arith.constant 0 : index
    %c0_6 = arith.constant 0 : index
    %6 = vector.load %arg5[%c0_5, %c0_6] : memref<1x128xf32, #tpu.memory_space<vmem>>, vector<1x128xf32>
    %7 = vector.broadcast %6 : vector<1x128xf32> to vector<384x128xf32>
    %8 = arith.addf %5, %7 : vector<384x128xf32>
    %c0_7 = arith.constant 0 : index
    %c0_8 = arith.constant 0 : index
    %c0_9 = arith.constant 0 : index
    %9 = vector.load %arg3[%c0_7, %c0_8, %c0_9] : memref<1x384x1xf32, #tpu.memory_space<vmem>>, vector<1x384x1xf32>
    %10 = vector.shape_cast %9 : vector<1x384x1xf32> to vector<384x1xf32>
    %cst = arith.constant 0.000000e+00 : f32
    %11 = vector.broadcast %cst : f32 to vector<384x1xf32>
    %12 = arith.cmpf ogt, %10, %11 : vector<384x1xf32>
    %cst_10 = arith.constant 0.000000e+00 : f32
    %13 = vector.shape_cast %12 : vector<384x1xi1> to vector<384x1xi1>
    %14 = vector.broadcast %13 : vector<384x1xi1> to vector<384x128xi1>
    %15 = vector.broadcast %cst_10 : f32 to vector<384x128xf32>
    %16 = arith.select %14, %8, %15 : vector<384x128xi1>, vector<384x128xf32>
    %17 = arith.truncf %16 : vector<384x128xf32> to vector<384x128xbf16>
    %c0_11 = arith.constant 0 : index
    %c0_12 = arith.constant 0 : index
    %c0_13 = arith.constant 0 : index
    %18 = vector.load %arg6[%c0_11, %c0_12, %c0_13] : memref<1x384x128xbf16, #tpu.memory_space<vmem>>, vector<1x384x128xbf16>
    %19 = vector.shape_cast %18 : vector<1x384x128xbf16> to vector<384x128xbf16>
    %20 = vector.shape_cast %17 : vector<384x128xbf16> to vector<1x384x128xbf16>
    tpu.vector_store %arg6[%c0_11, %c0_12, %c0_13], %20 {strides = array<i32>} : memref<1x384x128xbf16, #tpu.memory_space<vmem>>, vector<1x384x128xbf16>,
    return
  }
  func.func @transform_0(%arg0: i32, %arg1: i32) -> (i32, i32, i32, i32) {
    %c1_i32 = arith.constant 1 : i32
    %0 = arith.subi %arg1, %c1_i32 : i32
    %c0_i32 = arith.constant 0 : i32
    %1 = arith.maxsi %0, %c0_i32 : i32
    %c0_i32_0 = arith.constant 0 : i32
    %2 = arith.minsi %1, %c0_i32_0 : i32
    %c0_i32_1 = arith.constant 0 : i32
    %c0_i32_2 = arith.constant 0 : i32
    %c0_i32_3 = arith.constant 0 : i32
    return %arg0, %2, %c0_i32_1, %c0_i32_2 : i32, i32, i32, i32
  }
  func.func @transform_1(%arg0: i32, %arg1: i32) -> (i32, i32, i32) {
    %c0_i32 = arith.constant 0 : i32
    %c0_i32_0 = arith.constant 0 : i32
    %c0_i32_1 = arith.constant 0 : i32
    return %arg1, %c0_i32, %c0_i32_0 : i32, i32, i32
  }
  func.func @transform_2(%arg0: i32, %arg1: i32) -> (i32, i32) {
    %c0_i32 = arith.constant 0 : i32
    %c0_i32_0 = arith.constant 0 : i32
    %c0_i32_1 = arith.constant 0 : i32
    return %c0_i32, %c0_i32_0 : i32, i32
  }
  func.func @transform_3(%arg0: i32, %arg1: i32) -> (i32, i32) {
    %c0_i32 = arith.constant 0 : i32
    %c0_i32_0 = arith.constant 0 : i32
    %c0_i32_1 = arith.constant 0 : i32
    return %c0_i32, %c0_i32_0 : i32, i32
  }
  func.func @transform_4(%arg0: i32, %arg1: i32) -> (i32, i32, i32) {
    %c0_i32 = arith.constant 0 : i32
    %c0_i32_0 = arith.constant 0 : i32
    return %arg0, %arg1, %c0_i32 : i32, i32, i32
  }
}

module attributes {stable_mosaic.version = 11 : i64} {
  func.func @_conv3x3_tap_relu_stats_kernel(%arg0: i32, %arg1: i32, %arg2: memref<1x48x128xbf16, #tpu.memory_space<vmem>>, %arg3: memref<1x384x128xbf16, #tpu.memory_space<vmem>>, %arg4: memref<1x48x128xbf16, #tpu.memory_space<vmem>>, %arg5: memref<1x384x1xf32, #tpu.memory_space<vmem>>, %arg6: memref<9x128x128xbf16, #tpu.memory_space<vmem>>, %arg7: memref<1x128xf32, #tpu.memory_space<vmem>>, %arg8: memref<1x1x384x128xbf16, #tpu.memory_space<vmem>>, %arg9: memref<1x1x2x128xf32, #tpu.memory_space<vmem>>, %arg10: memref<488x128xbf16, #tpu.memory_space<vmem>>) attributes {dimension_semantics = [#tpu.dimension_semantics<parallel>, #tpu.dimension_semantics<parallel>], iteration_bounds = array<i64: 2, 1>, scalar_prefetch = 0 : i64, scratch_operands = 1 : i64, tpu.core_type = #tpu.core_type<tc>, window_params = [{transform_indices = @transform_0, window_bounds = array<i64: 1, 48, 128>}, {transform_indices = @transform_1, window_bounds = array<i64: 1, 384, 128>}, {transform_indices = @transform_2, window_bounds = array<i64: 1, 48, 128>}, {transform_indices = @transform_3, window_bounds = array<i64: 1, 384, 1>}, {pipeline_mode = #tpu.pipeline_mode<synchronous>, transform_indices = @transform_4, window_bounds = array<i64: 9, 128, 128>}, {pipeline_mode = #tpu.pipeline_mode<synchronous>, transform_indices = @transform_5, window_bounds = array<i64: 1, 128>}, {transform_indices = @transform_6, window_bounds = array<i64: 1, 1, 384, 128>}, {transform_indices = @transform_7, window_bounds = array<i64: 1, 1, 2, 128>}]} {
    %c0 = arith.constant 0 : index
    %c0_0 = arith.constant 0 : index
    %c0_1 = arith.constant 0 : index
    %0 = vector.load %arg2[%c0, %c0_0, %c0_1] : memref<1x48x128xbf16, #tpu.memory_space<vmem>>, vector<1x48x128xbf16>
    %1 = vector.shape_cast %0 : vector<1x48x128xbf16> to vector<48x128xbf16>
    %c0_2 = arith.constant 0 : index
    %c0_3 = arith.constant 0 : index
    %2 = vector.load %arg10[%c0_2, %c0_3] : memref<488x128xbf16, #tpu.memory_space<vmem>>, vector<48x128xbf16>
    tpu.vector_store %arg10[%c0_2, %c0_3], %1 {strides = array<i32>} : memref<488x128xbf16, #tpu.memory_space<vmem>>, vector<48x128xbf16>,
    %c0_4 = arith.constant 0 : index
    %c0_5 = arith.constant 0 : index
    %c0_6 = arith.constant 0 : index
    %3 = vector.load %arg3[%c0_4, %c0_5, %c0_6] : memref<1x384x128xbf16, #tpu.memory_space<vmem>>, vector<1x384x128xbf16>
    %4 = vector.shape_cast %3 : vector<1x384x128xbf16> to vector<384x128xbf16>
    %c48 = arith.constant 48 : index
    %c0_7 = arith.constant 0 : index
    %5 = vector.load %arg10[%c48, %c0_7] : memref<488x128xbf16, #tpu.memory_space<vmem>>, vector<384x128xbf16>
    tpu.vector_store %arg10[%c48, %c0_7], %4 {strides = array<i32>} : memref<488x128xbf16, #tpu.memory_space<vmem>>, vector<384x128xbf16>,
    %c0_8 = arith.constant 0 : index
    %c0_9 = arith.constant 0 : index
    %c0_10 = arith.constant 0 : index
    %6 = vector.load %arg4[%c0_8, %c0_9, %c0_10] : memref<1x48x128xbf16, #tpu.memory_space<vmem>>, vector<1x48x128xbf16>
    %7 = vector.shape_cast %6 : vector<1x48x128xbf16> to vector<48x128xbf16>
    %c432 = arith.constant 432 : index
    %c0_11 = arith.constant 0 : index
    %8 = vector.load %arg10[%c432, %c0_11] : memref<488x128xbf16, #tpu.memory_space<vmem>>, vector<48x128xbf16>
    tpu.vector_store %arg10[%c432, %c0_11], %7 {strides = array<i32>} : memref<488x128xbf16, #tpu.memory_space<vmem>>, vector<48x128xbf16>,
    %cst = arith.constant 0.000000e+00 : bf16
    %9 = vector.broadcast %cst : bf16 to vector<8x128xbf16>
    %c480 = arith.constant 480 : index
    %c0_12 = arith.constant 0 : index
    %10 = vector.load %arg10[%c480, %c0_12] : memref<488x128xbf16, #tpu.memory_space<vmem>>, vector<8x128xbf16>
    tpu.vector_store %arg10[%c480, %c0_12], %9 {strides = array<i32>} : memref<488x128xbf16, #tpu.memory_space<vmem>>, vector<8x128xbf16>,
    %c23 = arith.constant 23 : index
    %c0_13 = arith.constant 0 : index
    %11 = vector.load %arg10[%c23, %c0_13] : memref<488x128xbf16, #tpu.memory_space<vmem>>, vector<384x128xbf16>
    %c0_14 = arith.constant 0 : index
    %c0_15 = arith.constant 0 : index
    %c0_16 = arith.constant 0 : index
    %12 = vector.load %arg6[%c0_14, %c0_15, %c0_16] : memref<9x128x128xbf16, #tpu.memory_space<vmem>>, vector<1x128x128xbf16>
    %13 = vector.shape_cast %12 : vector<1x128x128xbf16> to vector<128x128xbf16>
    %cst_17 = arith.constant dense<0.000000e+00> : vector<384x128xf32>
    %14 = tpu.matmul %11, %13, %cst_17 {dimension_numbers = #tpu.dot_dimension_numbers<[1], [0], [0], [1], [0, 0, 1, 1], [], []>} : vector<384x128xbf16>, vector<128x128xbf16>, vector<384x128xf32> -> vector<384x128xf32>
    %c24 = arith.constant 24 : index
    %c0_18 = arith.constant 0 : index
    %15 = vector.load %arg10[%c24, %c0_18] : memref<488x128xbf16, #tpu.memory_space<vmem>>, vector<384x128xbf16>
    %c1 = arith.constant 1 : index
    %c0_19 = arith.constant 0 : index
    %c0_20 = arith.constant 0 : index
    %16 = vector.load %arg6[%c1, %c0_19, %c0_20] : memref<9x128x128xbf16, #tpu.memory_space<vmem>>, vector<1x128x128xbf16>
    %17 = vector.shape_cast %16 : vector<1x128x128xbf16> to vector<128x128xbf16>
    %cst_21 = arith.constant dense<0.000000e+00> : vector<384x128xf32>
    %18 = tpu.matmul %15, %17, %cst_21 {dimension_numbers = #tpu.dot_dimension_numbers<[1], [0], [0], [1], [0, 0, 1, 1], [], []>} : vector<384x128xbf16>, vector<128x128xbf16>, vector<384x128xf32> -> vector<384x128xf32>
    %19 = arith.addf %14, %18 : vector<384x128xf32>
    %c25 = arith.constant 25 : index
    %c0_22 = arith.constant 0 : index
    %20 = vector.load %arg10[%c25, %c0_22] : memref<488x128xbf16, #tpu.memory_space<vmem>>, vector<384x128xbf16>
    %c2 = arith.constant 2 : index
    %c0_23 = arith.constant 0 : index
    %c0_24 = arith.constant 0 : index
    %21 = vector.load %arg6[%c2, %c0_23, %c0_24] : memref<9x128x128xbf16, #tpu.memory_space<vmem>>, vector<1x128x128xbf16>
    %22 = vector.shape_cast %21 : vector<1x128x128xbf16> to vector<128x128xbf16>
    %cst_25 = arith.constant dense<0.000000e+00> : vector<384x128xf32>
    %23 = tpu.matmul %20, %22, %cst_25 {dimension_numbers = #tpu.dot_dimension_numbers<[1], [0], [0], [1], [0, 0, 1, 1], [], []>} : vector<384x128xbf16>, vector<128x128xbf16>, vector<384x128xf32> -> vector<384x128xf32>
    %24 = arith.addf %19, %23 : vector<384x128xf32>
    %c47 = arith.constant 47 : index
    %c0_26 = arith.constant 0 : index
    %25 = vector.load %arg10[%c47, %c0_26] : memref<488x128xbf16, #tpu.memory_space<vmem>>, vector<384x128xbf16>
    %c3 = arith.constant 3 : index
    %c0_27 = arith.constant 0 : index
    %c0_28 = arith.constant 0 : index
    %26 = vector.load %arg6[%c3, %c0_27, %c0_28] : memref<9x128x128xbf16, #tpu.memory_space<vmem>>, vector<1x128x128xbf16>
    %27 = vector.shape_cast %26 : vector<1x128x128xbf16> to vector<128x128xbf16>
    %cst_29 = arith.constant dense<0.000000e+00> : vector<384x128xf32>
    %28 = tpu.matmul %25, %27, %cst_29 {dimension_numbers = #tpu.dot_dimension_numbers<[1], [0], [0], [1], [0, 0, 1, 1], [], []>} : vector<384x128xbf16>, vector<128x128xbf16>, vector<384x128xf32> -> vector<384x128xf32>
    %29 = arith.addf %24, %28 : vector<384x128xf32>
    %c48_30 = arith.constant 48 : index
    %c0_31 = arith.constant 0 : index
    %30 = vector.load %arg10[%c48_30, %c0_31] : memref<488x128xbf16, #tpu.memory_space<vmem>>, vector<384x128xbf16>
    %c4 = arith.constant 4 : index
    %c0_32 = arith.constant 0 : index
    %c0_33 = arith.constant 0 : index
    %31 = vector.load %arg6[%c4, %c0_32, %c0_33] : memref<9x128x128xbf16, #tpu.memory_space<vmem>>, vector<1x128x128xbf16>
    %32 = vector.shape_cast %31 : vector<1x128x128xbf16> to vector<128x128xbf16>
    %cst_34 = arith.constant dense<0.000000e+00> : vector<384x128xf32>
    %33 = tpu.matmul %30, %32, %cst_34 {dimension_numbers = #tpu.dot_dimension_numbers<[1], [0], [0], [1], [0, 0, 1, 1], [], []>} : vector<384x128xbf16>, vector<128x128xbf16>, vector<384x128xf32> -> vector<384x128xf32>
    %34 = arith.addf %29, %33 : vector<384x128xf32>
    %c49 = arith.constant 49 : index
    %c0_35 = arith.constant 0 : index
    %35 = vector.load %arg10[%c49, %c0_35] : memref<488x128xbf16, #tpu.memory_space<vmem>>, vector<384x128xbf16>
    %c5 = arith.constant 5 : index
    %c0_36 = arith.constant 0 : index
    %c0_37 = arith.constant 0 : index
    %36 = vector.load %arg6[%c5, %c0_36, %c0_37] : memref<9x128x128xbf16, #tpu.memory_space<vmem>>, vector<1x128x128xbf16>
    %37 = vector.shape_cast %36 : vector<1x128x128xbf16> to vector<128x128xbf16>
    %cst_38 = arith.constant dense<0.000000e+00> : vector<384x128xf32>
    %38 = tpu.matmul %35, %37, %cst_38 {dimension_numbers = #tpu.dot_dimension_numbers<[1], [0], [0], [1], [0, 0, 1, 1], [], []>} : vector<384x128xbf16>, vector<128x128xbf16>, vector<384x128xf32> -> vector<384x128xf32>
    %39 = arith.addf %34, %38 : vector<384x128xf32>
    %c71 = arith.constant 71 : index
    %c0_39 = arith.constant 0 : index
    %40 = vector.load %arg10[%c71, %c0_39] : memref<488x128xbf16, #tpu.memory_space<vmem>>, vector<384x128xbf16>
    %c6 = arith.constant 6 : index
    %c0_40 = arith.constant 0 : index
    %c0_41 = arith.constant 0 : index
    %41 = vector.load %arg6[%c6, %c0_40, %c0_41] : memref<9x128x128xbf16, #tpu.memory_space<vmem>>, vector<1x128x128xbf16>
    %42 = vector.shape_cast %41 : vector<1x128x128xbf16> to vector<128x128xbf16>
    %cst_42 = arith.constant dense<0.000000e+00> : vector<384x128xf32>
    %43 = tpu.matmul %40, %42, %cst_42 {dimension_numbers = #tpu.dot_dimension_numbers<[1], [0], [0], [1], [0, 0, 1, 1], [], []>} : vector<384x128xbf16>, vector<128x128xbf16>, vector<384x128xf32> -> vector<384x128xf32>
    %44 = arith.addf %39, %43 : vector<384x128xf32>
    %c72 = arith.constant 72 : index
    %c0_43 = arith.constant 0 : index
    %45 = vector.load %arg10[%c72, %c0_43] : memref<488x128xbf16, #tpu.memory_space<vmem>>, vector<384x128xbf16>
    %c7 = arith.constant 7 : index
    %c0_44 = arith.constant 0 : index
    %c0_45 = arith.constant 0 : index
    %46 = vector.load %arg6[%c7, %c0_44, %c0_45] : memref<9x128x128xbf16, #tpu.memory_space<vmem>>, vector<1x128x128xbf16>
    %47 = vector.shape_cast %46 : vector<1x128x128xbf16> to vector<128x128xbf16>
    %cst_46 = arith.constant dense<0.000000e+00> : vector<384x128xf32>
    %48 = tpu.matmul %45, %47, %cst_46 {dimension_numbers = #tpu.dot_dimension_numbers<[1], [0], [0], [1], [0, 0, 1, 1], [], []>} : vector<384x128xbf16>, vector<128x128xbf16>, vector<384x128xf32> -> vector<384x128xf32>
    %49 = arith.addf %44, %48 : vector<384x128xf32>
    %c73 = arith.constant 73 : index
    %c0_47 = arith.constant 0 : index
    %50 = vector.load %arg10[%c73, %c0_47] : memref<488x128xbf16, #tpu.memory_space<vmem>>, vector<384x128xbf16>
    %c8 = arith.constant 8 : index
    %c0_48 = arith.constant 0 : index
    %c0_49 = arith.constant 0 : index
    %51 = vector.load %arg6[%c8, %c0_48, %c0_49] : memref<9x128x128xbf16, #tpu.memory_space<vmem>>, vector<1x128x128xbf16>
    %52 = vector.shape_cast %51 : vector<1x128x128xbf16> to vector<128x128xbf16>
    %cst_50 = arith.constant dense<0.000000e+00> : vector<384x128xf32>
    %53 = tpu.matmul %50, %52, %cst_50 {dimension_numbers = #tpu.dot_dimension_numbers<[1], [0], [0], [1], [0, 0, 1, 1], [], []>} : vector<384x128xbf16>, vector<128x128xbf16>, vector<384x128xf32> -> vector<384x128xf32>
    %54 = arith.addf %49, %53 : vector<384x128xf32>
    %c0_51 = arith.constant 0 : index
    %c0_52 = arith.constant 0 : index
    %55 = vector.load %arg7[%c0_51, %c0_52] : memref<1x128xf32, #tpu.memory_space<vmem>>, vector<1x128xf32>
    %c0_53 = arith.constant 0 : index
    %c0_54 = arith.constant 0 : index
    %c0_55 = arith.constant 0 : index
    %56 = vector.load %arg5[%c0_53, %c0_54, %c0_55] : memref<1x384x1xf32, #tpu.memory_space<vmem>>, vector<1x384x1xf32>
    %57 = vector.shape_cast %56 : vector<1x384x1xf32> to vector<384x1xf32>
    %58 = vector.broadcast %55 : vector<1x128xf32> to vector<384x128xf32>
    %59 = arith.addf %54, %58 : vector<384x128xf32>
    %cst_56 = arith.constant 0.000000e+00 : f32
    %60 = vector.broadcast %cst_56 : f32 to vector<384x128xf32>
    %61 = arith.maximumf %59, %60 : vector<384x128xf32>
    %cst_57 = arith.constant 0.000000e+00 : f32
    %62 = vector.broadcast %cst_57 : f32 to vector<384x1xf32>
    %63 = arith.cmpf ogt, %57, %62 : vector<384x1xf32>
    %cst_58 = arith.constant 0.000000e+00 : f32
    %64 = vector.shape_cast %63 : vector<384x1xi1> to vector<384x1xi1>
    %65 = vector.broadcast %64 : vector<384x1xi1> to vector<384x128xi1>
    %66 = vector.broadcast %cst_58 : f32 to vector<384x128xf32>
    %67 = arith.select %65, %61, %66 : vector<384x128xi1>, vector<384x128xf32>
    %cst_59 = arith.constant dense<0.000000e+00> : vector<128xf32>
    %68 = vector.multi_reduction <add>, %67, %cst_59 [0] : vector<384x128xf32> to vector<128xf32>
    %69 = vector.shape_cast %68 : vector<128xf32> to vector<1x128xf32>
    %70 = arith.mulf %67, %67 : vector<384x128xf32>
    %cst_60 = arith.constant dense<0.000000e+00> : vector<128xf32>
    %71 = vector.multi_reduction <add>, %70, %cst_60 [0] : vector<384x128xf32> to vector<128xf32>
    %72 = vector.shape_cast %71 : vector<128xf32> to vector<1x128xf32>
    %73 = tpu.concatenate %69, %72 in 0 : vector<1x128xf32>, vector<1x128xf32> -> vector<2x128xf32>
    %74 = arith.truncf %67 : vector<384x128xf32> to vector<384x128xbf16>
    %c0_61 = arith.constant 0 : index
    %c0_62 = arith.constant 0 : index
    %c0_63 = arith.constant 0 : index
    %c0_64 = arith.constant 0 : index
    %75 = vector.load %arg8[%c0_61, %c0_62, %c0_63, %c0_64] : memref<1x1x384x128xbf16, #tpu.memory_space<vmem>>, vector<1x1x384x128xbf16>
    %76 = vector.shape_cast %75 : vector<1x1x384x128xbf16> to vector<384x128xbf16>
    %77 = vector.shape_cast %74 : vector<384x128xbf16> to vector<1x1x384x128xbf16>
    tpu.vector_store %arg8[%c0_61, %c0_62, %c0_63, %c0_64], %77 {strides = array<i32>} : memref<1x1x384x128xbf16, #tpu.memory_space<vmem>>, vector<1x1x384x128xbf16>,
    %c0_65 = arith.constant 0 : index
    %c0_66 = arith.constant 0 : index
    %c0_67 = arith.constant 0 : index
    %c0_68 = arith.constant 0 : index
    %78 = vector.load %arg9[%c0_65, %c0_66, %c0_67, %c0_68] : memref<1x1x2x128xf32, #tpu.memory_space<vmem>>, vector<1x1x2x128xf32>
    %79 = vector.shape_cast %78 : vector<1x1x2x128xf32> to vector<2x128xf32>
    %80 = vector.shape_cast %73 : vector<2x128xf32> to vector<1x1x2x128xf32>
    tpu.vector_store %arg9[%c0_65, %c0_66, %c0_67, %c0_68], %80 {strides = array<i32>} : memref<1x1x2x128xf32, #tpu.memory_space<vmem>>, vector<1x1x2x128xf32>,
    return
  }
  func.func @transform_0(%arg0: i32, %arg1: i32) -> (i32, i32, i32) {
    %c1_i32 = arith.constant 1 : i32
    %0 = arith.addi %arg1, %c1_i32 : i32
    %c8_i32 = arith.constant 8 : i32
    %1 = arith.muli %0, %c8_i32 : i32
    %c1_i32_0 = arith.constant 1 : i32
    %2 = arith.subi %1, %c1_i32_0 : i32
    %c0_i32 = arith.constant 0 : i32
    %c0_i32_1 = arith.constant 0 : i32
    return %arg0, %2, %c0_i32 : i32, i32, i32
  }
  func.func @transform_1(%arg0: i32, %arg1: i32) -> (i32, i32, i32) {
    %c1_i32 = arith.constant 1 : i32
    %0 = arith.addi %arg1, %c1_i32 : i32
    %c0_i32 = arith.constant 0 : i32
    %c0_i32_0 = arith.constant 0 : i32
    return %arg0, %0, %c0_i32 : i32, i32, i32
  }
  func.func @transform_2(%arg0: i32, %arg1: i32) -> (i32, i32, i32) {
    %c2_i32 = arith.constant 2 : i32
    %0 = arith.addi %arg1, %c2_i32 : i32
    %c8_i32 = arith.constant 8 : i32
    %1 = arith.muli %0, %c8_i32 : i32
    %c0_i32 = arith.constant 0 : i32
    %c0_i32_0 = arith.constant 0 : i32
    return %arg0, %1, %c0_i32 : i32, i32, i32
  }
  func.func @transform_3(%arg0: i32, %arg1: i32) -> (i32, i32, i32) {
    %c1_i32 = arith.constant 1 : i32
    %0 = arith.addi %arg1, %c1_i32 : i32
    %c0_i32 = arith.constant 0 : i32
    %c0_i32_0 = arith.constant 0 : i32
    %c0_i32_1 = arith.constant 0 : i32
    return %0, %c0_i32, %c0_i32_0 : i32, i32, i32
  }
  func.func @transform_4(%arg0: i32, %arg1: i32) -> (i32, i32, i32) {
    %c0_i32 = arith.constant 0 : i32
    %c0_i32_0 = arith.constant 0 : i32
    %c0_i32_1 = arith.constant 0 : i32
    %c0_i32_2 = arith.constant 0 : i32
    return %c0_i32, %c0_i32_0, %c0_i32_1 : i32, i32, i32
  }
  func.func @transform_5(%arg0: i32, %arg1: i32) -> (i32, i32) {
    %c0_i32 = arith.constant 0 : i32
    %c0_i32_0 = arith.constant 0 : i32
    %c0_i32_1 = arith.constant 0 : i32
    return %c0_i32, %c0_i32_0 : i32, i32
  }
  func.func @transform_6(%arg0: i32, %arg1: i32) -> (i32, i32, i32, i32) {
    %c0_i32 = arith.constant 0 : i32
    %c0_i32_0 = arith.constant 0 : i32
    %c0_i32_1 = arith.constant 0 : i32
    return %arg0, %arg1, %c0_i32, %c0_i32_0 : i32, i32, i32, i32
  }
  func.func @transform_7(%arg0: i32, %arg1: i32) -> (i32, i32, i32, i32) {
    %c0_i32 = arith.constant 0 : i32
    %c0_i32_0 = arith.constant 0 : i32
    %c0_i32_1 = arith.constant 0 : i32
    return %arg0, %arg1, %c0_i32, %c0_i32_0 : i32, i32, i32, i32
  }
}

module attributes {stable_mosaic.version = 11 : i64} {
  func.func @_bn_apply_pack_kernel(%arg0: i32, %arg1: i32, %arg2: memref<1x1x384x128xbf16, #tpu.memory_space<vmem>>, %arg3: memref<1x384x1xf32, #tpu.memory_space<vmem>>, %arg4: memref<1x128xf32, #tpu.memory_space<vmem>>, %arg5: memref<1x128xf32, #tpu.memory_space<vmem>>, %arg6: memref<1x384x128xf32, #tpu.memory_space<vmem>>) attributes {dimension_semantics = [#tpu.dimension_semantics<parallel>, #tpu.dimension_semantics<parallel>], iteration_bounds = array<i64: 2, 1>, scalar_prefetch = 0 : i64, scratch_operands = 0 : i64, tpu.core_type = #tpu.core_type<tc>, window_params = [{transform_indices = @transform_0, window_bounds = array<i64: 1, 1, 384, 128>}, {transform_indices = @transform_1, window_bounds = array<i64: 1, 384, 1>}, {pipeline_mode = #tpu.pipeline_mode<synchronous>, transform_indices = @transform_2, window_bounds = array<i64: 1, 128>}, {pipeline_mode = #tpu.pipeline_mode<synchronous>, transform_indices = @transform_3, window_bounds = array<i64: 1, 128>}, {transform_indices = @transform_4, window_bounds = array<i64: 1, 384, 128>}]} {
    %c0 = arith.constant 0 : index
    %c0_0 = arith.constant 0 : index
    %c0_1 = arith.constant 0 : index
    %c0_2 = arith.constant 0 : index
    %0 = vector.load %arg2[%c0, %c0_0, %c0_1, %c0_2] : memref<1x1x384x128xbf16, #tpu.memory_space<vmem>>, vector<1x1x384x128xbf16>
    %1 = vector.shape_cast %0 : vector<1x1x384x128xbf16> to vector<384x128xbf16>
    %2 = arith.extf %1 : vector<384x128xbf16> to vector<384x128xf32>
    %c0_3 = arith.constant 0 : index
    %c0_4 = arith.constant 0 : index
    %3 = vector.load %arg4[%c0_3, %c0_4] : memref<1x128xf32, #tpu.memory_space<vmem>>, vector<1x128xf32>
    %4 = vector.broadcast %3 : vector<1x128xf32> to vector<384x128xf32>
    %5 = arith.mulf %2, %4 : vector<384x128xf32>
    %c0_5 = arith.constant 0 : index
    %c0_6 = arith.constant 0 : index
    %6 = vector.load %arg5[%c0_5, %c0_6] : memref<1x128xf32, #tpu.memory_space<vmem>>, vector<1x128xf32>
    %7 = vector.broadcast %6 : vector<1x128xf32> to vector<384x128xf32>
    %8 = arith.addf %5, %7 : vector<384x128xf32>
    %c0_7 = arith.constant 0 : index
    %c0_8 = arith.constant 0 : index
    %c0_9 = arith.constant 0 : index
    %9 = vector.load %arg3[%c0_7, %c0_8, %c0_9] : memref<1x384x1xf32, #tpu.memory_space<vmem>>, vector<1x384x1xf32>
    %10 = vector.shape_cast %9 : vector<1x384x1xf32> to vector<384x1xf32>
    %cst = arith.constant 0.000000e+00 : f32
    %11 = vector.broadcast %cst : f32 to vector<384x1xf32>
    %12 = arith.cmpf ogt, %10, %11 : vector<384x1xf32>
    %cst_10 = arith.constant 0.000000e+00 : f32
    %13 = vector.shape_cast %12 : vector<384x1xi1> to vector<384x1xi1>
    %14 = vector.broadcast %13 : vector<384x1xi1> to vector<384x128xi1>
    %15 = vector.broadcast %cst_10 : f32 to vector<384x128xf32>
    %16 = arith.select %14, %8, %15 : vector<384x128xi1>, vector<384x128xf32>
    %c0_11 = arith.constant 0 : index
    %c0_12 = arith.constant 0 : index
    %c0_13 = arith.constant 0 : index
    %17 = vector.load %arg6[%c0_11, %c0_12, %c0_13] : memref<1x384x128xf32, #tpu.memory_space<vmem>>, vector<1x384x128xf32>
    %18 = vector.shape_cast %17 : vector<1x384x128xf32> to vector<384x128xf32>
    %19 = vector.shape_cast %16 : vector<384x128xf32> to vector<1x384x128xf32>
    tpu.vector_store %arg6[%c0_11, %c0_12, %c0_13], %19 {strides = array<i32>} : memref<1x384x128xf32, #tpu.memory_space<vmem>>, vector<1x384x128xf32>,
    return
  }
  func.func @transform_0(%arg0: i32, %arg1: i32) -> (i32, i32, i32, i32) {
    %c0_i32 = arith.constant 0 : i32
    %c0_i32_0 = arith.constant 0 : i32
    %c0_i32_1 = arith.constant 0 : i32
    return %arg0, %arg1, %c0_i32, %c0_i32_0 : i32, i32, i32, i32
  }
  func.func @transform_1(%arg0: i32, %arg1: i32) -> (i32, i32, i32) {
    %c1_i32 = arith.constant 1 : i32
    %0 = arith.addi %arg1, %c1_i32 : i32
    %c0_i32 = arith.constant 0 : i32
    %c0_i32_0 = arith.constant 0 : i32
    %c0_i32_1 = arith.constant 0 : i32
    return %0, %c0_i32, %c0_i32_0 : i32, i32, i32
  }
  func.func @transform_2(%arg0: i32, %arg1: i32) -> (i32, i32) {
    %c0_i32 = arith.constant 0 : i32
    %c0_i32_0 = arith.constant 0 : i32
    %c0_i32_1 = arith.constant 0 : i32
    return %c0_i32, %c0_i32_0 : i32, i32
  }
  func.func @transform_3(%arg0: i32, %arg1: i32) -> (i32, i32) {
    %c0_i32 = arith.constant 0 : i32
    %c0_i32_0 = arith.constant 0 : i32
    %c0_i32_1 = arith.constant 0 : i32
    return %c0_i32, %c0_i32_0 : i32, i32
  }
  func.func @transform_4(%arg0: i32, %arg1: i32) -> (i32, i32, i32) {
    %c0_i32 = arith.constant 0 : i32
    %c0_i32_0 = arith.constant 0 : i32
    return %arg0, %arg1, %c0_i32 : i32, i32, i32
  }
}

</mosaic_0001>

<llo_original>
// kernel: unet_conv_block.5
$region0: #{unet_conv_block.5}
  #allocation0 [shape = 'u32[]', space=smem, size = 0x4, offset = 0x4, fixed_abs, tag = 'smem constant byte address 0x4 - core index']
  #allocation1 [shape = 'u32[144,128]{1,0:T(1,128)}', space=vmem, size = 0x12000, scoped, tag = 'internal scratch']
  %s0 = inlined_call_operand.vmem [shape: bf16[2,1,384,128], index: 0, kind: input, shape index: {}]
  %s1 = inlined_call_operand.vmem [shape: f32[3,384,1], index: 1, kind: input, shape index: {}]
  %s2 = inlined_call_operand.vmem [shape: f32[1,128], index: 2, kind: input, shape index: {}]
  %s3 = inlined_call_operand.vmem [shape: f32[1,128], index: 3, kind: input, shape index: {}]
  %s4 = inlined_call_operand.vmem [shape: bf16[2,1152,128], index: 4, kind: output, shape index: {}]
  %s5 = sld [smem:[#allocation0]]
  $region49: #{unet_conv_block.5} parent=0
    _
  %s7 = ssub.s32 1, %s5
  %s8 = scalar_select 0, %s7, %s5
  loop: start=0, step=1, limit=8
  $region2: #{unet_conv_block.5} parent=0 // loop_pre_header
    _
  $region3: #{unet_conv_block.5} parent=0 // loop_header
    %s10 = sphi 0, %s14
    %p11 = scmp.ge.s32.totalorder %s10, 8
    %s17 = sphi 0, %s29
    %s18 = sphi 0, %s25
    %s19 = sphi 0, %s17
    %s20 = sphi 0, %s18
    %s21 = sphi 0, %s19
    %s22 = sphi 0, %s20
    %s44 = sphi 0, %s46
    %s47 = sphi 0, %s44
    %s48 = sphi 0, %s47
    %s64 = sphi 0, %s48
    %s70 = sphi 0, %s72
    %s73 = sphi 0, %s70
    %s74 = sphi 0, %s73
    %s90 = sphi 0, %s74
    %s94 = sphi 0, %s94
    %s96 = sphi 0, %s94
    %s97 = sphi 0, %s96
    %s111 = sphi 0, %s97
    %s115 = sphi 0, %s115
    %s117 = sphi 0, %s115
    %s118 = sphi 0, %s117
    %s132 = sphi 0, %s118
    %s140 = sphi 0, %s142
    %s143 = sphi 0, %s140
    %s144 = sphi 0, %s143
    %s160 = sphi 0, %s144
  $region4: #{unet_conv_block.5} parent=0 // loop_header_branch
    %13 = sbr.rel (%p11) target = $region8
  $region5: #{unet_conv_block.5} parent=0 // loop_body
    %s15 = ssub.s32 %s10, 1
    %s16 = ssub.s32 %s10, 2
    %s23 = sadd.s32 1, %s18
    %p24 = scmp.ge.s32.totalorder %s23, 3
    %s25 = scalar_select %p24, 0, %s23
    %s26 = sadd.s32 1, %s17
    %s27 = scalar_select %p24, %s26, %s17
    %p28 = scmp.ge.s32.totalorder %s27, 2
    %s29 = scalar_select %p28, 0, %s27
    %s30 = ssub.s32 %s18, 1
    %p31 = scmp.gt.s32.totalorder %s30, 0
    %s32 = scalar_select %p31, %s30, 0
    %p33 = scmp.lt.s32.totalorder %s32, 0
    %s34 = scalar_select %p33, %s32, 0
    %s35 = ssub.s32 %s25, 1
    %p36 = scmp.gt.s32.totalorder %s35, 0
    %s37 = scalar_select %p36, %s35, 0
    %p38 = scmp.lt.s32.totalorder %s37, 0
    %s39 = scalar_select %p38, %s37, 0
    %s40 = ssub.s32 %s17, %s29
    %s41 = ssub.s32 %s34, %s39
    %s42 = sor.u32 %s40, %s41
    %p43 = scmp.eq.s32.totalorder %s42, 0
    %s45 = sadd.s32 %s44, 1
    %s46 = scalar_select %p43, %s44, %s45
    %p49 = pneg %p43
    %p50 = scmp.eq.s32.totalorder %s10, 5
    %p51 = por %p49, %p50
    %p52 = scmp.ne.s32.totalorder %s44, %s47
    %p53 = scmp.eq.s32.totalorder %s10, 0
    %p54 = por %p52, %p53
    %p55 = scmp.ne.s32.totalorder %s44, %s47
    %p56 = scmp.eq.s32.totalorder %s15, 5
    %p57 = por %p55, %p56
    %p58 = scmp.ne.s32.totalorder %s47, %s48
    %p59 = scmp.eq.s32.totalorder %s15, 0
    %p60 = por %p58, %p59
    %p61 = scmp.ne.s32.totalorder %s47, %s48
    %p62 = scmp.eq.s32.totalorder %s16, 5
    %p63 = por %p61, %p62
    %p65 = scmp.ne.s32.totalorder %s48, %s64
    %p66 = scmp.eq.s32.totalorder %s16, 0
    %p67 = por %p65, %p66
    %s68 = ssub.s32 %s18, %s25
    %p69 = scmp.eq.s32.totalorder %s68, 0
    %s71 = sadd.s32 %s70, 1
    %s72 = scalar_select %p69, %s70, %s71
    %p75 = pneg %p69
    %p76 = scmp.eq.s32.totalorder %s10, 5
    %p77 = por %p75, %p76
    %p78 = scmp.ne.s32.totalorder %s70, %s73
    %p79 = scmp.eq.s32.totalorder %s10, 0
    %p80 = por %p78, %p79
    %p81 = scmp.ne.s32.totalorder %s70, %s73
    %p82 = scmp.eq.s32.totalorder %s15, 5
    %p83 = por %p81, %p82
    %p84 = scmp.ne.s32.totalorder %s73, %s74
    %p85 = scmp.eq.s32.totalorder %s15, 0
    %p86 = por %p84, %p85
    %p87 = scmp.ne.s32.totalorder %s73, %s74
    %p88 = scmp.eq.s32.totalorder %s16, 5
    %p89 = por %p87, %p88
    %p91 = scmp.ne.s32.totalorder %s74, %s90
    %p92 = scmp.eq.s32.totalorder %s16, 0
    %p93 = por %p91, %p92
    %s95 = sadd.s32 %s94, 1
    %p98 = scmp.eq.s32.totalorder %s10, 5
    %p99 = scmp.ne.s32.totalorder %s94, %s96
    %p100 = scmp.eq.s32.totalorder %s10, 0
    %p101 = por %p99, %p100
    %p102 = scmp.ne.s32.totalorder %s94, %s96
    %p103 = scmp.eq.s32.totalorder %s15, 5
    %p104 = por %p102, %p103
    %p105 = scmp.ne.s32.totalorder %s96, %s97
    %p106 = scmp.eq.s32.totalorder %s15, 0
    %p107 = por %p105, %p106
    %p108 = scmp.ne.s32.totalorder %s96, %s97
    %p109 = scmp.eq.s32.totalorder %s16, 5
    %p110 = por %p108, %p109
    %p112 = scmp.ne.s32.totalorder %s97, %s111
    %p113 = scmp.eq.s32.totalorder %s16, 0
    %p114 = por %p112, %p113
    %s116 = sadd.s32 %s115, 1
    %p119 = scmp.eq.s32.totalorder %s10, 5
    %p120 = scmp.ne.s32.totalorder %s115, %s117
    %p121 = scmp.eq.s32.totalorder %s10, 0
    %p122 = por %p120, %p121
    %p123 = scmp.ne.s32.totalorder %s115, %s117
    %p124 = scmp.eq.s32.totalorder %s15, 5
    %p125 = por %p123, %p124
    %p126 = scmp.ne.s32.totalorder %s117, %s118
    %p127 = scmp.eq.s32.totalorder %s15, 0
    %p128 = por %p126, %p127
    %p129 = scmp.ne.s32.totalorder %s117, %s118
    %p130 = scmp.eq.s32.totalorder %s16, 5
    %p131 = por %p129, %p130
    %p133 = scmp.ne.s32.totalorder %s118, %s132
    %p134 = scmp.eq.s32.totalorder %s16, 0
    %p135 = por %p133, %p134
    %s136 = ssub.s32 %s17, %s29
    %s137 = ssub.s32 %s18, %s25
    %s138 = sor.u32 %s136, %s137
    %p139 = scmp.eq.s32.totalorder %s138, 0
    %s141 = sadd.s32 %s140, 1
    %s142 = scalar_select %p139, %s140, %s141
    %p145 = pneg %p139
    %p146 = scmp.eq.s32.totalorder %s10, 5
    %p147 = por %p145, %p146
    %p148 = scmp.ne.s32.totalorder %s140, %s143
    %p149 = scmp.eq.s32.totalorder %s10, 0
    %p150 = por %p148, %p149
    %p151 = scmp.ne.s32.totalorder %s140, %s143
    %p152 = scmp.eq.s32.totalorder %s15, 5
    %p153 = por %p151, %p152
    %p154 = scmp.ne.s32.totalorder %s143, %s144
    %p155 = scmp.eq.s32.totalorder %s15, 0
    %p156 = por %p154, %p155
    %p157 = scmp.ne.s32.totalorder %s143, %s144
    %p158 = scmp.eq.s32.totalorder %s16, 5
    %p159 = por %p157, %p158
    %p161 = scmp.ne.s32.totalorder %s144, %s160
    %p162 = scmp.eq.s32.totalorder %s16, 0
    %p163 = por %p161, %p162
    %p164 = scmp.le.s32.totalorder 1, %s10
    %p165 = scmp.lt.s32.totalorder %s10, 7
    %p166 = pnand %p164, %p165
    %p167 = pneg %p166
    // Predicated region
    $region9: #{unet_conv_block.5} parent=5 // pred_check
      _
    $region10: #{unet_conv_block.5} parent=5 // pred_check_branch
      %169 = sbr.rel (%p166) target = $region12
    $region11: #{unet_conv_block.5} parent=5 // pred_region
      %s170 = ssub.s32 %s10, 1
      // Predicated region
      $region13: #{unet_conv_block.5} parent=11 // pred_check
        %p171 = pneg %p107
      $region14: #{unet_conv_block.5} parent=11 // pred_check_branch
        %173 = sbr.rel (%p171) target = $region16
      $region15: #{unet_conv_block.5} parent=11 // pred_region
        _
      $region16: #{unet_conv_block.5} parent=11 // pred_fallthru
        _
      // Predicated region
      $region17: #{unet_conv_block.5} parent=11 // pred_check
        %p174 = pneg %p128
      $region18: #{unet_conv_block.5} parent=11 // pred_check_branch
        %176 = sbr.rel (%p174) target = $region20
      $region19: #{unet_conv_block.5} parent=11 // pred_region
        _
      $region20: #{unet_conv_block.5} parent=11 // pred_fallthru
        _
    $region12: #{unet_conv_block.5} parent=5 // pred_fallthru
      _
    %p177 = scmp.lt.s32.totalorder %s10, 6
    // Predicated region
    $region21: #{unet_conv_block.5} parent=5 // pred_check
      %p178 = pneg %p177
    $region22: #{unet_conv_block.5} parent=5 // pred_check_branch
      %180 = sbr.rel (%p178) target = $region24
    $region23: #{unet_conv_block.5} parent=5 // pred_region
      // Predicated region
      $region25: #{unet_conv_block.5} parent=23 // pred_check
        %p181 = pneg %p54
      $region26: #{unet_conv_block.5} parent=23 // pred_check_branch
        %183 = sbr.rel (%p181) target = $region28
      $region27: #{unet_conv_block.5} parent=23 // pred_region
        %s184 = ssub.s32 %s18, 1
        %p185 = scmp.gt.s32.totalorder %s184, 0
        %s186 = scalar_select %p185, %s184, 0
        %p187 = scmp.lt.s32.totalorder %s186, 0
        %s188 = scalar_select %p187, %s186, 0
        %p189 = scmp.lt.s32.totalorder %s17, 1
        %s190 = scalar_select %p189, %s17, 1
        %p191 = scmp.lt.s32.totalorder %s188, 0
        %s192 = scalar_select %p191, %s188, 0
        %s193 = smul.addr %s192, 48
        %s194 = smul.addr %s190, 48
        %s195 = sadd.s32 %s193, %s194
        %s196 = smul.addr %s195, 4
        %s197 = scalar_lea.vmem %s0, %s196
        %s198 = ssub.s32 %s18, 1
        %p199 = scmp.gt.s32.totalorder %s198, 0
        %s200 = scalar_select %p199, %s198, 0
        %p201 = scmp.lt.s32.totalorder %s200, 0
        %s202 = scalar_select %p201, %s200, 0
      $region28: #{unet_conv_block.5} parent=23 // pred_fallthru
        _
      // Predicated region
      $region29: #{unet_conv_block.5} parent=23 // pred_check
        %p203 = pneg %p80
      $region30: #{unet_conv_block.5} parent=23 // pred_check_branch
        %205 = sbr.rel (%p203) target = $region32
      $region31: #{unet_conv_block.5} parent=23 // pred_region
        %p206 = scmp.lt.s32.totalorder %s18, 2
        %s207 = scalar_select %p206, %s18, 2
        %s208 = smul.addr %s207, 48
        %s209 = smul.addr %s208, 8
        %s210 = scalar_lea.vmem %s1, %s209
      $region32: #{unet_conv_block.5} parent=23 // pred_fallthru
        _
    $region24: #{unet_conv_block.5} parent=5 // pred_fallthru
      _
    %p211 = scmp.le.s32.totalorder 1, %s10
    %p212 = scmp.lt.s32.totalorder %s10, 7
    %p213 = pnand %p211, %p212
    %p214 = pneg %p213
    // Predicated region
    $region33: #{unet_conv_block.5} parent=5 // pred_check
      _
    $region34: #{unet_conv_block.5} parent=5 // pred_check_branch
      %216 = sbr.rel (%p213) target = $region36
    $region35: #{unet_conv_block.5} parent=5 // pred_region
      %s217 = ssub.s32 %s10, 1
      %s218 = ssub.s32 %s20, 1
      %p219 = scmp.gt.s32.totalorder %s218, 0
      %s220 = scalar_select %p219, %s218, 0
      %p221 = scmp.lt.s32.totalorder %s220, 0
      %s222 = scalar_select %p221, %s220, 0
      %p223 = scmp.lt.s32.totalorder %s19, 1
      %s224 = scalar_select %p223, %s19, 1
      %p225 = scmp.lt.s32.totalorder %s222, 0
      %s226 = scalar_select %p225, %s222, 0
      %s227 = smul.addr %s226, 48
      %s228 = smul.addr %s224, 48
      %s229 = sadd.s32 %s227, %s228
      %s230 = smul.addr %s229, 4
      %s231 = scalar_lea.vmem %s0, %s230
      %p232 = pneg %p60
      %p233 = pneg %p57
      %p234 = scmp.lt.s32.totalorder %s20, 2
      %s235 = scalar_select %p234, %s20, 2
      %s236 = smul.addr %s235, 48
      %s237 = smul.addr %s236, 8
      %s238 = scalar_lea.vmem %s1, %s237
      %p239 = pneg %p86
      %p240 = pneg %p83
      %p241 = pneg %p107
      %p242 = pneg %p104
      %p243 = pneg %p128
      %p244 = pneg %p125
      %p245 = pneg %p156
      %p246 = pneg %p153
      %s247 = smul.u32 48, %s20
      %p248 = scmp.lt.s32.totalorder %s19, 1
      %s249 = scalar_select %p248, %s19, 1
      %p250 = scmp.lt.s32.totalorder %s247, 143
      %s251 = scalar_select %p250, %s247, 143
      %s252 = smul.addr %s249, 144
      %s253 = sadd.s32 %s251, %s252
      %s254 = smul.addr %s253, 4
      %s255 = scalar_lea.vmem %s4, %s254
      %s256 = ssub.s32 %s20, 1
      %p257 = scmp.gt.s32.totalorder %s256, 0
      %s258 = scalar_select %p257, %s256, 0
      %p259 = scmp.lt.s32.totalorder %s258, 0
      %s260 = scalar_select %p259, %s258, 0
      %p261 = scmp.lt.s32.totalorder %s19, 1
      %s262 = scalar_select %p261, %s19, 1
      %p263 = scmp.lt.s32.totalorder %s260, 0
      %s264 = scalar_select %p263, %s260, 0
      %s265 = smul.addr %s264, 48
      %s266 = smul.addr %s262, 48
      %s267 = sadd.s32 %s265, %s266
      %s268 = smul.addr %s267, 4
      %s269 = scalar_lea.vmem %s0, %s268
      %s270 = ssub.s32 %s20, 1
      %p271 = scmp.gt.s32.totalorder %s270, 0
      %s272 = scalar_select %p271, %s270, 0
      %p273 = scmp.lt.s32.totalorder %s272, 0
      %s274 = scalar_select %p273, %s272, 0
      %p275 = scmp.lt.s32.totalorder %s20, 2
      %s276 = scalar_select %p275, %s20, 2
      %s277 = smul.addr %s276, 48
      %s278 = smul.addr %s277, 8
      %s279 = scalar_lea.vmem %s1, %s278
      %s280 = smul.u32 48, %s20
      %p281 = scmp.lt.s32.totalorder %s19, 1
      %s282 = scalar_select %p281, %s19, 1
      %p283 = scmp.lt.s32.totalorder %s280, 143
      %s284 = scalar_select %p283, %s280, 143
      %s285 = smul.addr %s282, 144
      %s286 = sadd.s32 %s284, %s285
      %s287 = smul.addr %s286, 4
      %s288 = scalar_lea.vmem %s4, %s287
      %s289 = smul.u32 48, %s20
      %v290 = vld [vmem:[%s269] sm:$0xf]
      %v291 = vld [vmem:[%s269 + $0x4] sm:$0xf]
      %v292 = vld [vmem:[%s269 + $0x8] sm:$0xf]
      %v293 = vld [vmem:[%s269 + $0xc] sm:$0xf]
      %v294 = vld [vmem:[%s269 + $0x10] sm:$0xf]
      %v295 = vld [vmem:[%s269 + $0x14] sm:$0xf]
      %v296 = vld [vmem:[%s269 + $0x18] sm:$0xf]
      %v297 = vld [vmem:[%s269 + $0x1c] sm:$0xf]
      %v298 = vld [vmem:[%s269 + $0x20] sm:$0xf]
      %v299 = vld [vmem:[%s269 + $0x24] sm:$0xf]
      %v300 = vld [vmem:[%s269 + $0x28] sm:$0xf]
      %v301 = vld [vmem:[%s269 + $0x2c] sm:$0xf]
      %v302 = vld [vmem:[%s269 + $0x30] sm:$0xf]
      %v303 = vld [vmem:[%s269 + $0x34] sm:$0xf]
      %v304 = vld [vmem:[%s269 + $0x38] sm:$0xf]
      %v305 = vld [vmem:[%s269 + $0x3c] sm:$0xf]
      %v306 = vld [vmem:[%s269 + $0x40] sm:$0xf]
      %v307 = vld [vmem:[%s269 + $0x44] sm:$0xf]
      %v308 = vld [vmem:[%s269 + $0x48] sm:$0xf]
      %v309 = vld [vmem:[%s269 + $0x4c] sm:$0xf]
      %v310 = vld [vmem:[%s269 + $0x50] sm:$0xf]
      %v311 = vld [vmem:[%s269 + $0x54] sm:$0xf]
      %v312 = vld [vmem:[%s269 + $0x58] sm:$0xf]
      %v313 = vld [vmem:[%s269 + $0x5c] sm:$0xf]
      %v314 = vld [vmem:[%s269 + $0x60] sm:$0xf]
      %v315 = vld [vmem:[%s269 + $0x64] sm:$0xf]
      %v316 = vld [vmem:[%s269 + $0x68] sm:$0xf]
      %v317 = vld [vmem:[%s269 + $0x6c] sm:$0xf]
      %v318 = vld [vmem:[%s269 + $0x70] sm:$0xf]
      %v319 = vld [vmem:[%s269 + $0x74] sm:$0xf]
      %v320 = vld [vmem:[%s269 + $0x78] sm:$0xf]
      %v321 = vld [vmem:[%s269 + $0x7c] sm:$0xf]
      %v322 = vld [vmem:[%s269 + $0x80] sm:$0xf]
      %v323 = vld [vmem:[%s269 + $0x84] sm:$0xf]
      %v324 = vld [vmem:[%s269 + $0x88] sm:$0xf]
      %v325 = vld [vmem:[%s269 + $0x8c] sm:$0xf]
      %v326 = vld [vmem:[%s269 + $0x90] sm:$0xf]
      %v327 = vld [vmem:[%s269 + $0x94] sm:$0xf]
      %v328 = vld [vmem:[%s269 + $0x98] sm:$0xf]
      %v329 = vld [vmem:[%s269 + $0x9c] sm:$0xf]
      %v330 = vld [vmem:[%s269 + $0xa0] sm:$0xf]
      %v331 = vld [vmem:[%s269 + $0xa4] sm:$0xf]
      %v332 = vld [vmem:[%s269 + $0xa8] sm:$0xf]
      %v333 = vld [vmem:[%s269 + $0xac] sm:$0xf]
      %v334 = vld [vmem:[%s269 + $0xb0] sm:$0xf]
      %v335 = vld [vmem:[%s269 + $0xb4] sm:$0xf]
      %v336 = vld [vmem:[%s269 + $0xb8] sm:$0xf]
      %v337 = vld [vmem:[%s269 + $0xbc] sm:$0xf]
      %v338 = vunpack.c.l.bf16 %v290
      %v339 = vunpack.c.l.bf16 %v291
      %v340 = vunpack.c.l.bf16 %v292
      %v341 = vunpack.c.l.bf16 %v293
      %v342 = vunpack.c.l.bf16 %v294
      %v343 = vunpack.c.l.bf16 %v295
      %v344 = vunpack.c.l.bf16 %v296
      %v345 = vunpack.c.l.bf16 %v297
      %v346 = vunpack.c.l.bf16 %v298
      %v347 = vunpack.c.l.bf16 %v299
      %v348 = vunpack.c.l.bf16 %v300
      %v349 = vunpack.c.l.bf16 %v301
      %v350 = vunpack.c.l.bf16 %v302
      %v351 = vunpack.c.l.bf16 %v303
      %v352 = vunpack.c.l.bf16 %v304
      %v353 = vunpack.c.l.bf16 %v305
      %v354 = vunpack.c.l.bf16 %v306
      %v355 = vunpack.c.l.bf16 %v307
      %v356 = vunpack.c.l.bf16 %v308
      %v357 = vunpack.c.l.bf16 %v309
      %v358 = vunpack.c.l.bf16 %v310
      %v359 = vunpack.c.l.bf16 %v311
      %v360 = vunpack.c.l.bf16 %v312
      %v361 = vunpack.c.l.bf16 %v313
      %v362 = vunpack.c.l.bf16 %v314
      %v363 = vunpack.c.l.bf16 %v315
      %v364 = vunpack.c.l.bf16 %v316
      %v365 = vunpack.c.l.bf16 %v317
      %v366 = vunpack.c.l.bf16 %v318
      %v367 = vunpack.c.l.bf16 %v319
      %v368 = vunpack.c.l.bf16 %v320
      %v369 = vunpack.c.l.bf16 %v321
      %v370 = vunpack.c.l.bf16 %v322
      %v371 = vunpack.c.l.bf16 %v323
      %v372 = vunpack.c.l.bf16 %v324
      %v373 = vunpack.c.l.bf16 %v325
      %v374 = vunpack.c.l.bf16 %v326
      %v375 = vunpack.c.l.bf16 %v327
      %v376 = vunpack.c.l.bf16 %v328
      %v377 = vunpack.c.l.bf16 %v329
      %v378 = vunpack.c.l.bf16 %v330
      %v379 = vunpack.c.l.bf16 %v331
      %v380 = vunpack.c.l.bf16 %v332
      %v381 = vunpack.c.l.bf16 %v333
      %v382 = vunpack.c.l.bf16 %v334
      %v383 = vunpack.c.l.bf16 %v335
      %v384 = vunpack.c.l.bf16 %v336
      %v385 = vunpack.c.l.bf16 %v337
      %v386 = vld [vmem:[%s2] sm:$0x1]
      %v388 = vlaneseq
      %v389 = vshrl.u32 %v388, 7
      %v390 = vsub.s32 0, %v389
      %v391 = vrot.slane %v386, %v390
      %v393 = vmul.f32 %v338, %v391
      %v394 = vmul.f32 %v339, %v391
      %v395 = vmul.f32 %v340, %v391
      %v396 = vmul.f32 %v341, %v391
      %v397 = vmul.f32 %v342, %v391
      %v398 = vmul.f32 %v343, %v391
      %v399 = vmul.f32 %v344, %v391
      %v400 = vmul.f32 %v345, %v391
      %v401 = vmul.f32 %v346, %v391
      %v402 = vmul.f32 %v347, %v391
      %v403 = vmul.f32 %v348, %v391
      %v404 = vmul.f32 %v349, %v391
      %v405 = vmul.f32 %v350, %v391
      %v406 = vmul.f32 %v351, %v391
      %v407 = vmul.f32 %v352, %v391
      %v408 = vmul.f32 %v353, %v391
      %v409 = vmul.f32 %v354, %v391
      %v410 = vmul.f32 %v355, %v391
      %v411 = vmul.f32 %v356, %v391
      %v412 = vmul.f32 %v357, %v391
      %v413 = vmul.f32 %v358, %v391
      %v414 = vmul.f32 %v359, %v391
      %v415 = vmul.f32 %v360, %v391
      %v416 = vmul.f32 %v361, %v391
      %v417 = vmul.f32 %v362, %v391
      %v418 = vmul.f32 %v363, %v391
      %v419 = vmul.f32 %v364, %v391
      %v420 = vmul.f32 %v365, %v391
      %v421 = vmul.f32 %v366, %v391
      %v422 = vmul.f32 %v367, %v391
      %v423 = vmul.f32 %v368, %v391
      %v424 = vmul.f32 %v369, %v391
      %v425 = vmul.f32 %v370, %v391
      %v426 = vmul.f32 %v371, %v391
      %v427 = vmul.f32 %v372, %v391
      %v428 = vmul.f32 %v373, %v391
      %v429 = vmul.f32 %v374, %v391
      %v430 = vmul.f32 %v375, %v391
      %v431 = vmul.f32 %v376, %v391
      %v432 = vmul.f32 %v377, %v391
      %v433 = vmul.f32 %v378, %v391
      %v434 = vmul.f32 %v379, %v391
      %v435 = vmul.f32 %v380, %v391
      %v436 = vmul.f32 %v381, %v391
      %v437 = vmul.f32 %v382, %v391
      %v438 = vmul.f32 %v383, %v391
      %v439 = vmul.f32 %v384, %v391
      %v440 = vmul.f32 %v385, %v391
      %v441 = vld [vmem:[%s3] sm:$0x1]
      %v443 = vlaneseq
      %v444 = vshrl.u32 %v443, 7
      %v445 = vsub.s32 0, %v444
      %v446 = vrot.slane %v441, %v445
      %v448 = vadd.f32 %v393, %v446
      %v449 = vadd.f32 %v394, %v446
      %v450 = vadd.f32 %v395, %v446
      %v451 = vadd.f32 %v396, %v446
      %v452 = vadd.f32 %v397, %v446
      %v453 = vadd.f32 %v398, %v446
      %v454 = vadd.f32 %v399, %v446
      %v455 = vadd.f32 %v400, %v446
      %v456 = vadd.f32 %v401, %v446
      %v457 = vadd.f32 %v402, %v446
      %v458 = vadd.f32 %v403, %v446
      %v459 = vadd.f32 %v404, %v446
      %v460 = vadd.f32 %v405, %v446
      %v461 = vadd.f32 %v406, %v446
      %v462 = vadd.f32 %v407, %v446
      %v463 = vadd.f32 %v408, %v446
      %v464 = vadd.f32 %v409, %v446
      %v465 = vadd.f32 %v410, %v446
      %v466 = vadd.f32 %v411, %v446
      %v467 = vadd.f32 %v412, %v446
      %v468 = vadd.f32 %v413, %v446
      %v469 = vadd.f32 %v414, %v446
      %v470 = vadd.f32 %v415, %v446
      %v471 = vadd.f32 %v416, %v446
      %v472 = vadd.f32 %v417, %v446
      %v473 = vadd.f32 %v418, %v446
      %v474 = vadd.f32 %v419, %v446
      %v475 = vadd.f32 %v420, %v446
      %v476 = vadd.f32 %v421, %v446
      %v477 = vadd.f32 %v422, %v446
      %v478 = vadd.f32 %v423, %v446
      %v479 = vadd.f32 %v424, %v446
      %v480 = vadd.f32 %v425, %v446
      %v481 = vadd.f32 %v426, %v446
      %v482 = vadd.f32 %v427, %v446
      %v483 = vadd.f32 %v428, %v446
      %v484 = vadd.f32 %v429, %v446
      %v485 = vadd.f32 %v430, %v446
      %v486 = vadd.f32 %v431, %v446
      %v487 = vadd.f32 %v432, %v446
      %v488 = vadd.f32 %v433, %v446
      %v489 = vadd.f32 %v434, %v446
      %v490 = vadd.f32 %v435, %v446
      %v491 = vadd.f32 %v436, %v446
      %v492 = vadd.f32 %v437, %v446
      %v493 = vadd.f32 %v438, %v446
      %v494 = vadd.f32 %v439, %v446
      %v495 = vadd.f32 %v440, %v446
      %v496 = vld [vmem:[%s279] sm:$0xff]
      %v497 = vld [vmem:[%s279 + $0x8] sm:$0xff]
      %v498 = vld [vmem:[%s279 + $0x10] sm:$0xff]
      %v499 = vld [vmem:[%s279 + $0x18] sm:$0xff]
      %v500 = vld [vmem:[%s279 + $0x20] sm:$0xff]
      %v501 = vld [vmem:[%s279 + $0x28] sm:$0xff]
      %v502 = vld [vmem:[%s279 + $0x30] sm:$0xff]
      %v503 = vld [vmem:[%s279 + $0x38] sm:$0xff]
      %v504 = vld [vmem:[%s279 + $0x40] sm:$0xff]
      %v505 = vld [vmem:[%s279 + $0x48] sm:$0xff]
      %v506 = vld [vmem:[%s279 + $0x50] sm:$0xff]
      %v507 = vld [vmem:[%s279 + $0x58] sm:$0xff]
      %v508 = vld [vmem:[%s279 + $0x60] sm:$0xff]
      %v509 = vld [vmem:[%s279 + $0x68] sm:$0xff]
      %v510 = vld [vmem:[%s279 + $0x70] sm:$0xff]
      %v511 = vld [vmem:[%s279 + $0x78] sm:$0xff]
      %v512 = vld [vmem:[%s279 + $0x80] sm:$0xff]
      %v513 = vld [vmem:[%s279 + $0x88] sm:$0xff]
      %v514 = vld [vmem:[%s279 + $0x90] sm:$0xff]
      %v515 = vld [vmem:[%s279 + $0x98] sm:$0xff]
      %v516 = vld [vmem:[%s279 + $0xa0] sm:$0xff]
      %v517 = vld [vmem:[%s279 + $0xa8] sm:$0xff]
      %v518 = vld [vmem:[%s279 + $0xb0] sm:$0xff]
      %v519 = vld [vmem:[%s279 + $0xb8] sm:$0xff]
      %v520 = vld [vmem:[%s279 + $0xc0] sm:$0xff]
      %v521 = vld [vmem:[%s279 + $0xc8] sm:$0xff]
      %v522 = vld [vmem:[%s279 + $0xd0] sm:$0xff]
      %v523 = vld [vmem:[%s279 + $0xd8] sm:$0xff]
      %v524 = vld [vmem:[%s279 + $0xe0] sm:$0xff]
      %v525 = vld [vmem:[%s279 + $0xe8] sm:$0xff]
      %v526 = vld [vmem:[%s279 + $0xf0] sm:$0xff]
      %v527 = vld [vmem:[%s279 + $0xf8] sm:$0xff]
      %v528 = vld [vmem:[%s279 + $0x100] sm:$0xff]
      %v529 = vld [vmem:[%s279 + $0x108] sm:$0xff]
      %v530 = vld [vmem:[%s279 + $0x110] sm:$0xff]
      %v531 = vld [vmem:[%s279 + $0x118] sm:$0xff]
      %v532 = vld [vmem:[%s279 + $0x120] sm:$0xff]
      %v533 = vld [vmem:[%s279 + $0x128] sm:$0xff]
      %v534 = vld [vmem:[%s279 + $0x130] sm:$0xff]
      %v535 = vld [vmem:[%s279 + $0x138] sm:$0xff]
      %v536 = vld [vmem:[%s279 + $0x140] sm:$0xff]
      %v537 = vld [vmem:[%s279 + $0x148] sm:$0xff]
      %v538 = vld [vmem:[%s279 + $0x150] sm:$0xff]
      %v539 = vld [vmem:[%s279 + $0x158] sm:$0xff]
      %v540 = vld [vmem:[%s279 + $0x160] sm:$0xff]
      %v541 = vld [vmem:[%s279 + $0x168] sm:$0xff]
      %v542 = vld [vmem:[%s279 + $0x170] sm:$0xff]
      %v543 = vld [vmem:[%s279 + $0x178] sm:$0xff]
      %vm544 = vcmp.gt.f32.partialorder %v496, 0.0
      %vm545 = vcmp.gt.f32.partialorder %v497, 0.0
      %vm546 = vcmp.gt.f32.partialorder %v498, 0.0
      %vm547 = vcmp.gt.f32.partialorder %v499, 0.0
      %vm548 = vcmp.gt.f32.partialorder %v500, 0.0
      %vm549 = vcmp.gt.f32.partialorder %v501, 0.0
      %vm550 = vcmp.gt.f32.partialorder %v502, 0.0
      %vm551 = vcmp.gt.f32.partialorder %v503, 0.0
      %vm552 = vcmp.gt.f32.partialorder %v504, 0.0
      %vm553 = vcmp.gt.f32.partialorder %v505, 0.0
      %vm554 = vcmp.gt.f32.partialorder %v506, 0.0
      %vm555 = vcmp.gt.f32.partialorder %v507, 0.0
      %vm556 = vcmp.gt.f32.partialorder %v508, 0.0
      %vm557 = vcmp.gt.f32.partialorder %v509, 0.0
      %vm558 = vcmp.gt.f32.partialorder %v510, 0.0
      %vm559 = vcmp.gt.f32.partialorder %v511, 0.0
      %vm560 = vcmp.gt.f32.partialorder %v512, 0.0
      %vm561 = vcmp.gt.f32.partialorder %v513, 0.0
      %vm562 = vcmp.gt.f32.partialorder %v514, 0.0
      %vm563 = vcmp.gt.f32.partialorder %v515, 0.0
      %vm564 = vcmp.gt.f32.partialorder %v516, 0.0
      %vm565 = vcmp.gt.f32.partialorder %v517, 0.0
      %vm566 = vcmp.gt.f32.partialorder %v518, 0.0
      %vm567 = vcmp.gt.f32.partialorder %v519, 0.0
      %vm568 = vcmp.gt.f32.partialorder %v520, 0.0
      %vm569 = vcmp.gt.f32.partialorder %v521, 0.0
      %vm570 = vcmp.gt.f32.partialorder %v522, 0.0
      %vm571 = vcmp.gt.f32.partialorder %v523, 0.0
      %vm572 = vcmp.gt.f32.partialorder %v524, 0.0
      %vm573 = vcmp.gt.f32.partialorder %v525, 0.0
      %vm574 = vcmp.gt.f32.partialorder %v526, 0.0
      %vm575 = vcmp.gt.f32.partialorder %v527, 0.0
      %vm576 = vcmp.gt.f32.partialorder %v528, 0.0
      %vm577 = vcmp.gt.f32.partialorder %v529, 0.0
      %vm578 = vcmp.gt.f32.partialorder %v530, 0.0
      %vm579 = vcmp.gt.f32.partialorder %v531, 0.0
      %vm580 = vcmp.gt.f32.partialorder %v532, 0.0
      %vm581 = vcmp.gt.f32.partialorder %v533, 0.0
      %vm582 = vcmp.gt.f32.partialorder %v534, 0.0
      %vm583 = vcmp.gt.f32.partialorder %v535, 0.0
      %vm584 = vcmp.gt.f32.partialorder %v536, 0.0
      %vm585 = vcmp.gt.f32.partialorder %v537, 0.0
      %vm586 = vcmp.gt.f32.partialorder %v538, 0.0
      %vm587 = vcmp.gt.f32.partialorder %v539, 0.0
      %vm588 = vcmp.gt.f32.partialorder %v540, 0.0
      %vm589 = vcmp.gt.f32.partialorder %v541, 0.0
      %vm590 = vcmp.gt.f32.partialorder %v542, 0.0
      %vm591 = vcmp.gt.f32.partialorder %v543, 0.0
      %v592 = vsel %vm544, 1, 0
      %v593 = vsel %vm545, 1, 0
      %v594 = vsel %vm546, 1, 0
      %v595 = vsel %vm547, 1, 0
      %v596 = vsel %vm548, 1, 0
      %v597 = vsel %vm549, 1, 0
      %v598 = vsel %vm550, 1, 0
      %v599 = vsel %vm551, 1, 0
      %v600 = vsel %vm552, 1, 0
      %v601 = vsel %vm553, 1, 0
      %v602 = vsel %vm554, 1, 0
      %v603 = vsel %vm555, 1, 0
      %v604 = vsel %vm556, 1, 0
      %v605 = vsel %vm557, 1, 0
      %v606 = vsel %vm558, 1, 0
      %v607 = vsel %vm559, 1, 0
      %v608 = vsel %vm560, 1, 0
      %v609 = vsel %vm561, 1, 0
      %v610 = vsel %vm562, 1, 0
      %v611 = vsel %vm563, 1, 0
      %v612 = vsel %vm564, 1, 0
      %v613 = vsel %vm565, 1, 0
      %v614 = vsel %vm566, 1, 0
      %v615 = vsel %vm567, 1, 0
      %v616 = vsel %vm568, 1, 0
      %v617 = vsel %vm569, 1, 0
      %v618 = vsel %vm570, 1, 0
      %v619 = vsel %vm571, 1, 0
      %v620 = vsel %vm572, 1, 0
      %v621 = vsel %vm573, 1, 0
      %v622 = vsel %vm574, 1, 0
      %v623 = vsel %vm575, 1, 0
      %v624 = vsel %vm576, 1, 0
      %v625 = vsel %vm577, 1, 0
      %v626 = vsel %vm578, 1, 0
      %v627 = vsel %vm579, 1, 0
      %v628 = vsel %vm580, 1, 0
      %v629 = vsel %vm581, 1, 0
      %v630 = vsel %vm582, 1, 0
      %v631 = vsel %vm583, 1, 0
      %v632 = vsel %vm584, 1, 0
      %v633 = vsel %vm585, 1, 0
      %v634 = vsel %vm586, 1, 0
      %v635 = vsel %vm587, 1, 0
      %v636 = vsel %vm588, 1, 0
      %v637 = vsel %vm589, 1, 0
      %v638 = vsel %vm590, 1, 0
      %v639 = vsel %vm591, 1, 0
      %640 = vset.pattern.permute.xlu0 0
      %641 = vperm.xlu0 %640, %v592
      %v642 = vpop.permute.xlu0 %641
      %643 = vset.pattern.permute.xlu0 0
      %644 = vperm.xlu0 %643, %v593
      %v645 = vpop.permute.xlu0 %644
      %646 = vset.pattern.permute.xlu0 0
      %647 = vperm.xlu0 %646, %v594
      %v648 = vpop.permute.xlu0 %647
      %649 = vset.pattern.permute.xlu0 0
      %650 = vperm.xlu0 %649, %v595
      %v651 = vpop.permute.xlu0 %650
      %652 = vset.pattern.permute.xlu0 0
      %653 = vperm.xlu0 %652, %v596
      %v654 = vpop.permute.xlu0 %653
      %655 = vset.pattern.permute.xlu0 0
      %656 = vperm.xlu0 %655, %v597
      %v657 = vpop.permute.xlu0 %656
      %658 = vset.pattern.permute.xlu0 0
      %659 = vperm.xlu0 %658, %v598
      %v660 = vpop.permute.xlu0 %659
      %661 = vset.pattern.permute.xlu0 0
      %662 = vperm.xlu0 %661, %v599
      %v663 = vpop.permute.xlu0 %662
      %664 = vset.pattern.permute.xlu0 0
      %665 = vperm.xlu0 %664, %v600
      %v666 = vpop.permute.xlu0 %665
      %667 = vset.pattern.permute.xlu0 0
      %668 = vperm.xlu0 %667, %v601
      %v669 = vpop.permute.xlu0 %668
      %670 = vset.pattern.permute.xlu0 0
      %671 = vperm.xlu0 %670, %v602
      %v672 = vpop.permute.xlu0 %671
      %673 = vset.pattern.permute.xlu0 0
      %674 = vperm.xlu0 %673, %v603
      %v675 = vpop.permute.xlu0 %674
      %676 = vset.pattern.permute.xlu0 0
      %677 = vperm.xlu0 %676, %v604
      %v678 = vpop.permute.xlu0 %677
      %679 = vset.pattern.permute.xlu0 0
      %680 = vperm.xlu0 %679, %v605
      %v681 = vpop.permute.xlu0 %680
      %682 = vset.pattern.permute.xlu0 0
      %683 = vperm.xlu0 %682, %v606
      %v684 = vpop.permute.xlu0 %683
      %685 = vset.pattern.permute.xlu0 0
      %686 = vperm.xlu0 %685, %v607
      %v687 = vpop.permute.xlu0 %686
      %688 = vset.pattern.permute.xlu0 0
      %689 = vperm.xlu0 %688, %v608
      %v690 = vpop.permute.xlu0 %689
      %691 = vset.pattern.permute.xlu0 0
      %692 = vperm.xlu0 %691, %v609
      %v693 = vpop.permute.xlu0 %692
      %694 = vset.pattern.permute.xlu0 0
      %695 = vperm.xlu0 %694, %v610
      %v696 = vpop.permute.xlu0 %695
      %697 = vset.pattern.permute.xlu0 0
      %698 = vperm.xlu0 %697, %v611
      %v699 = vpop.permute.xlu0 %698
      %700 = vset.pattern.permute.xlu0 0
      %701 = vperm.xlu0 %700, %v612
      %v702 = vpop.permute.xlu0 %701
      %703 = vset.pattern.permute.xlu0 0
      %704 = vperm.xlu0 %703, %v613
      %v705 = vpop.permute.xlu0 %704
      %706 = vset.pattern.permute.xlu0 0
      %707 = vperm.xlu0 %706, %v614
      %v708 = vpop.permute.xlu0 %707
      %709 = vset.pattern.permute.xlu0 0
      %710 = vperm.xlu0 %709, %v615
      %v711 = vpop.permute.xlu0 %710
      %712 = vset.pattern.permute.xlu0 0
      %713 = vperm.xlu0 %712, %v616
      %v714 = vpop.permute.xlu0 %713
      %715 = vset.pattern.permute.xlu0 0
      %716 = vperm.xlu0 %715, %v617
      %v717 = vpop.permute.xlu0 %716
      %718 = vset.pattern.permute.xlu0 0
      %719 = vperm.xlu0 %718, %v618
      %v720 = vpop.permute.xlu0 %719
      %721 = vset.pattern.permute.xlu0 0
      %722 = vperm.xlu0 %721, %v619
      %v723 = vpop.permute.xlu0 %722
      %724 = vset.pattern.permute.xlu0 0
      %725 = vperm.xlu0 %724, %v620
      %v726 = vpop.permute.xlu0 %725
      %727 = vset.pattern.permute.xlu0 0
      %728 = vperm.xlu0 %727, %v621
      %v729 = vpop.permute.xlu0 %728
      %730 = vset.pattern.permute.xlu0 0
      %731 = vperm.xlu0 %730, %v622
      %v732 = vpop.permute.xlu0 %731
      %733 = vset.pattern.permute.xlu0 0
      %734 = vperm.xlu0 %733, %v623
      %v735 = vpop.permute.xlu0 %734
      %736 = vset.pattern.permute.xlu0 0
      %737 = vperm.xlu0 %736, %v624
      %v738 = vpop.permute.xlu0 %737
      %739 = vset.pattern.permute.xlu0 0
      %740 = vperm.xlu0 %739, %v625
      %v741 = vpop.permute.xlu0 %740
      %742 = vset.pattern.permute.xlu0 0
      %743 = vperm.xlu0 %742, %v626
      %v744 = vpop.permute.xlu0 %743
      %745 = vset.pattern.permute.xlu0 0
      %746 = vperm.xlu0 %745, %v627
      %v747 = vpop.permute.xlu0 %746
      %748 = vset.pattern.permute.xlu0 0
      %749 = vperm.xlu0 %748, %v628
      %v750 = vpop.permute.xlu0 %749
      %751 = vset.pattern.permute.xlu0 0
      %752 = vperm.xlu0 %751, %v629
      %v753 = vpop.permute.xlu0 %752
      %754 = vset.pattern.permute.xlu0 0
      %755 = vperm.xlu0 %754, %v630
      %v756 = vpop.permute.xlu0 %755
      %757 = vset.pattern.permute.xlu0 0
      %758 = vperm.xlu0 %757, %v631
      %v759 = vpop.permute.xlu0 %758
      %760 = vset.pattern.permute.xlu0 0
      %761 = vperm.xlu0 %760, %v632
      %v762 = vpop.permute.xlu0 %761
      %763 = vset.pattern.permute.xlu0 0
      %764 = vperm.xlu0 %763, %v633
      %v765 = vpop.permute.xlu0 %764
      %766 = vset.pattern.permute.xlu0 0
      %767 = vperm.xlu0 %766, %v634
      %v768 = vpop.permute.xlu0 %767
      %769 = vset.pattern.permute.xlu0 0
      %770 = vperm.xlu0 %769, %v635
      %v771 = vpop.permute.xlu0 %770
      %772 = vset.pattern.permute.xlu0 0
      %773 = vperm.xlu0 %772, %v636
      %v774 = vpop.permute.xlu0 %773
      %775 = vset.pattern.permute.xlu0 0
      %776 = vperm.xlu0 %775, %v637
      %v777 = vpop.permute.xlu0 %776
      %778 = vset.pattern.permute.xlu0 0
      %779 = vperm.xlu0 %778, %v638
      %v780 = vpop.permute.xlu0 %779
      %781 = vset.pattern.permute.xlu0 0
      %782 = vperm.xlu0 %781, %v639
      %v783 = vpop.permute.xlu0 %782
      %vm784 = vcmp.eq.s32.totalorder %v642, 1
      %vm785 = vcmp.eq.s32.totalorder %v645, 1
      %vm786 = vcmp.eq.s32.totalorder %v648, 1
      %vm787 = vcmp.eq.s32.totalorder %v651, 1
      %vm788 = vcmp.eq.s32.totalorder %v654, 1
      %vm789 = vcmp.eq.s32.totalorder %v657, 1
      %vm790 = vcmp.eq.s32.totalorder %v660, 1
      %vm791 = vcmp.eq.s32.totalorder %v663, 1
      %vm792 = vcmp.eq.s32.totalorder %v666, 1
      %vm793 = vcmp.eq.s32.totalorder %v669, 1
      %vm794 = vcmp.eq.s32.totalorder %v672, 1
      %vm795 = vcmp.eq.s32.totalorder %v675, 1
      %vm796 = vcmp.eq.s32.totalorder %v678, 1
      %vm797 = vcmp.eq.s32.totalorder %v681, 1
      %vm798 = vcmp.eq.s32.totalorder %v684, 1
      %vm799 = vcmp.eq.s32.totalorder %v687, 1
      %vm800 = vcmp.eq.s32.totalorder %v690, 1
      %vm801 = vcmp.eq.s32.totalorder %v693, 1
      %vm802 = vcmp.eq.s32.totalorder %v696, 1
      %vm803 = vcmp.eq.s32.totalorder %v699, 1
      %vm804 = vcmp.eq.s32.totalorder %v702, 1
      %vm805 = vcmp.eq.s32.totalorder %v705, 1
      %vm806 = vcmp.eq.s32.totalorder %v708, 1
      %vm807 = vcmp.eq.s32.totalorder %v711, 1
      %vm808 = vcmp.eq.s32.totalorder %v714, 1
      %vm809 = vcmp.eq.s32.totalorder %v717, 1
      %vm810 = vcmp.eq.s32.totalorder %v720, 1
      %vm811 = vcmp.eq.s32.totalorder %v723, 1
      %vm812 = vcmp.eq.s32.totalorder %v726, 1
      %vm813 = vcmp.eq.s32.totalorder %v729, 1
      %vm814 = vcmp.eq.s32.totalorder %v732, 1
      %vm815 = vcmp.eq.s32.totalorder %v735, 1
      %vm816 = vcmp.eq.s32.totalorder %v738, 1
      %vm817 = vcmp.eq.s32.totalorder %v741, 1
      %vm818 = vcmp.eq.s32.totalorder %v744, 1
      %vm819 = vcmp.eq.s32.totalorder %v747, 1
      %vm820 = vcmp.eq.s32.totalorder %v750, 1
      %vm821 = vcmp.eq.s32.totalorder %v753, 1
      %vm822 = vcmp.eq.s32.totalorder %v756, 1
      %vm823 = vcmp.eq.s32.totalorder %v759, 1
      %vm824 = vcmp.eq.s32.totalorder %v762, 1
      %vm825 = vcmp.eq.s32.totalorder %v765, 1
      %vm826 = vcmp.eq.s32.totalorder %v768, 1
      %vm827 = vcmp.eq.s32.totalorder %v771, 1
      %vm828 = vcmp.eq.s32.totalorder %v774, 1
      %vm829 = vcmp.eq.s32.totalorder %v777, 1
      %vm830 = vcmp.eq.s32.totalorder %v780, 1
      %vm831 = vcmp.eq.s32.totalorder %v783, 1
      %v832 = vsel %vm784, %v448, 0.0
      %v833 = vsel %vm785, %v449, 0.0
      %v834 = vsel %vm786, %v450, 0.0
      %v835 = vsel %vm787, %v451, 0.0
      %v836 = vsel %vm788, %v452, 0.0
      %v837 = vsel %vm789, %v453, 0.0
      %v838 = vsel %vm790, %v454, 0.0
      %v839 = vsel %vm791, %v455, 0.0
      %v840 = vsel %vm792, %v456, 0.0
      %v841 = vsel %vm793, %v457, 0.0
      %v842 = vsel %vm794, %v458, 0.0
      %v843 = vsel %vm795, %v459, 0.0
      %v844 = vsel %vm796, %v460, 0.0
      %v845 = vsel %vm797, %v461, 0.0
      %v846 = vsel %vm798, %v462, 0.0
      %v847 = vsel %vm799, %v463, 0.0
      %v848 = vsel %vm800, %v464, 0.0
      %v849 = vsel %vm801, %v465, 0.0
      %v850 = vsel %vm802, %v466, 0.0
      %v851 = vsel %vm803, %v467, 0.0
      %v852 = vsel %vm804, %v468, 0.0
      %v853 = vsel %vm805, %v469, 0.0
      %v854 = vsel %vm806, %v470, 0.0
      %v855 = vsel %vm807, %v471, 0.0
      %v856 = vsel %vm808, %v472, 0.0
      %v857 = vsel %vm809, %v473, 0.0
      %v858 = vsel %vm810, %v474, 0.0
      %v859 = vsel %vm811, %v475, 0.0
      %v860 = vsel %vm812, %v476, 0.0
      %v861 = vsel %vm813, %v477, 0.0
      %v862 = vsel %vm814, %v478, 0.0
      %v863 = vsel %vm815, %v479, 0.0
      %v864 = vsel %vm816, %v480, 0.0
      %v865 = vsel %vm817, %v481, 0.0
      %v866 = vsel %vm818, %v482, 0.0
      %v867 = vsel %vm819, %v483, 0.0
      %v868 = vsel %vm820, %v484, 0.0
      %v869 = vsel %vm821, %v485, 0.0
      %v870 = vsel %vm822, %v486, 0.0
      %v871 = vsel %vm823, %v487, 0.0
      %v872 = vsel %vm824, %v488, 0.0
      %v873 = vsel %vm825, %v489, 0.0
      %v874 = vsel %vm826, %v490, 0.0
      %v875 = vsel %vm827, %v491, 0.0
      %v876 = vsel %vm828, %v492, 0.0
      %v877 = vsel %vm829, %v493, 0.0
      %v878 = vsel %vm830, %v494, 0.0
      %v879 = vsel %vm831, %v495, 0.0
      %v880 = vpack.c.bf16 %v833, %v832
      %v881 = vpack.c.bf16 %v835, %v834
      %v882 = vpack.c.bf16 %v837, %v836
      %v883 = vpack.c.bf16 %v839, %v838
      %v884 = vpack.c.bf16 %v841, %v840
      %v885 = vpack.c.bf16 %v843, %v842
      %v886 = vpack.c.bf16 %v845, %v844
      %v887 = vpack.c.bf16 %v847, %v846
      %v888 = vpack.c.bf16 %v849, %v848
      %v889 = vpack.c.bf16 %v851, %v850
      %v890 = vpack.c.bf16 %v853, %v852
      %v891 = vpack.c.bf16 %v855, %v854
      %v892 = vpack.c.bf16 %v857, %v856
      %v893 = vpack.c.bf16 %v859, %v858
      %v894 = vpack.c.bf16 %v861, %v860
      %v895 = vpack.c.bf16 %v863, %v862
      %v896 = vpack.c.bf16 %v865, %v864
      %v897 = vpack.c.bf16 %v867, %v866
      %v898 = vpack.c.bf16 %v869, %v868
      %v899 = vpack.c.bf16 %v871, %v870
      %v900 = vpack.c.bf16 %v873, %v872
      %v901 = vpack.c.bf16 %v875, %v874
      %v902 = vpack.c.bf16 %v877, %v876
      %v903 = vpack.c.bf16 %v879, %v878
      %v928 = vunpack.c.l.b16 %v880
      %v929 = vunpack.c.h.b16 %v880
      %v930 = vunpack.c.l.b16 %v881
      %v931 = vunpack.c.h.b16 %v881
      %v932 = vunpack.c.l.b16 %v882
      %v933 = vunpack.c.h.b16 %v882
      %v934 = vunpack.c.l.b16 %v883
      %v935 = vunpack.c.h.b16 %v883
      %v936 = vunpack.c.l.b16 %v884
      %v937 = vunpack.c.h.b16 %v884
      %v938 = vunpack.c.l.b16 %v885
      %v939 = vunpack.c.h.b16 %v885
      %v940 = vunpack.c.l.b16 %v886
      %v941 = vunpack.c.h.b16 %v886
      %v942 = vunpack.c.l.b16 %v887
      %v943 = vunpack.c.h.b16 %v887
      %v944 = vunpack.c.l.b16 %v888
      %v945 = vunpack.c.h.b16 %v888
      %v946 = vunpack.c.l.b16 %v889
      %v947 = vunpack.c.h.b16 %v889
      %v948 = vunpack.c.l.b16 %v890
      %v949 = vunpack.c.h.b16 %v890
      %v950 = vunpack.c.l.b16 %v891
      %v951 = vunpack.c.h.b16 %v891
      %v952 = vunpack.c.l.b16 %v892
      %v953 = vunpack.c.h.b16 %v892
      %v954 = vunpack.c.l.b16 %v893
      %v955 = vunpack.c.h.b16 %v893
      %v956 = vunpack.c.l.b16 %v894
      %v957 = vunpack.c.h.b16 %v894
      %v958 = vunpack.c.l.b16 %v895
      %v959 = vunpack.c.h.b16 %v895
      %v960 = vunpack.c.l.b16 %v896
      %v961 = vunpack.c.h.b16 %v896
      %v962 = vunpack.c.l.b16 %v897
      %v963 = vunpack.c.h.b16 %v897
      %v964 = vunpack.c.l.b16 %v898
      %v965 = vunpack.c.h.b16 %v898
      %v966 = vunpack.c.l.b16 %v899
      %v967 = vunpack.c.h.b16 %v899
      %v968 = vunpack.c.l.b16 %v900
      %v969 = vunpack.c.h.b16 %v900
      %v970 = vunpack.c.l.b16 %v901
      %v971 = vunpack.c.h.b16 %v901
      %v972 = vunpack.c.l.b16 %v902
      %v973 = vunpack.c.h.b16 %v902
      %v974 = vunpack.c.l.b16 %v903
      %v975 = vunpack.c.h.b16 %v903
      %v976 = vpack.c.b16 %v928, %v928
      %v977 = vpack.c.b16 %v929, %v929
      %v978 = vpack.c.b16 %v930, %v930
      %v979 = vpack.c.b16 %v931, %v931
      %v980 = vpack.c.b16 %v932, %v932
      %v981 = vpack.c.b16 %v933, %v933
      %v982 = vpack.c.b16 %v934, %v934
      %v983 = vpack.c.b16 %v935, %v935
      %v984 = vpack.c.b16 %v936, %v936
      %v985 = vpack.c.b16 %v937, %v937
      %v986 = vpack.c.b16 %v938, %v938
      %v987 = vpack.c.b16 %v939, %v939
      %v988 = vpack.c.b16 %v940, %v940
      %v989 = vpack.c.b16 %v941, %v941
      %v990 = vpack.c.b16 %v942, %v942
      %v991 = vpack.c.b16 %v943, %v943
      %v992 = vpack.c.b16 %v944, %v944
      %v993 = vpack.c.b16 %v945, %v945
      %v994 = vpack.c.b16 %v946, %v946
      %v995 = vpack.c.b16 %v947, %v947
      %v996 = vpack.c.b16 %v948, %v948
      %v997 = vpack.c.b16 %v949, %v949
      %v998 = vpack.c.b16 %v950, %v950
      %v999 = vpack.c.b16 %v951, %v951
      %v1000 = vpack.c.b16 %v952, %v952
      %v1001 = vpack.c.b16 %v953, %v953
      %v1002 = vpack.c.b16 %v954, %v954
      %v1003 = vpack.c.b16 %v955, %v955
      %v1004 = vpack.c.b16 %v956, %v956
      %v1005 = vpack.c.b16 %v957, %v957
      %v1006 = vpack.c.b16 %v958, %v958
      %v1007 = vpack.c.b16 %v959, %v959
      %v1008 = vpack.c.b16 %v960, %v960
      %v1009 = vpack.c.b16 %v961, %v961
      %v1010 = vpack.c.b16 %v962, %v962
      %v1011 = vpack.c.b16 %v963, %v963
      %v1012 = vpack.c.b16 %v964, %v964
      %v1013 = vpack.c.b16 %v965, %v965
      %v1014 = vpack.c.b16 %v966, %v966
      %v1015 = vpack.c.b16 %v967, %v967
      %v1016 = vpack.c.b16 %v968, %v968
      %v1017 = vpack.c.b16 %v969, %v969
      %v1018 = vpack.c.b16 %v970, %v970
      %v1019 = vpack.c.b16 %v971, %v971
      %v1020 = vpack.c.b16 %v972, %v972
      %v1021 = vpack.c.b16 %v973, %v973
      %v1022 = vpack.c.b16 %v974, %v974
      %v1023 = vpack.c.b16 %v975, %v975
      %1072 = vst [vmem:[%s288] sm:$0xf] %v976
      %1073 = vst [vmem:[%s288 + $0x4] sm:$0xf] %v977
      %1074 = vst [vmem:[%s288 + $0x8] sm:$0xf] %v978
      %1075 = vst [vmem:[%s288 + $0xc] sm:$0xf] %v979
      %1076 = vst [vmem:[%s288 + $0x10] sm:$0xf] %v980
      %1077 = vst [vmem:[%s288 + $0x14] sm:$0xf] %v981
      %1078 = vst [vmem:[%s288 + $0x18] sm:$0xf] %v982
      %1079 = vst [vmem:[%s288 + $0x1c] sm:$0xf] %v983
      %1080 = vst [vmem:[%s288 + $0x20] sm:$0xf] %v984
      %1081 = vst [vmem:[%s288 + $0x24] sm:$0xf] %v985
      %1082 = vst [vmem:[%s288 + $0x28] sm:$0xf] %v986
      %1083 = vst [vmem:[%s288 + $0x2c] sm:$0xf] %v987
      %1084 = vst [vmem:[%s288 + $0x30] sm:$0xf] %v988
      %1085 = vst [vmem:[%s288 + $0x34] sm:$0xf] %v989
      %1086 = vst [vmem:[%s288 + $0x38] sm:$0xf] %v990
      %1087 = vst [vmem:[%s288 + $0x3c] sm:$0xf] %v991
      %1088 = vst [vmem:[%s288 + $0x40] sm:$0xf] %v992
      %1089 = vst [vmem:[%s288 + $0x44] sm:$0xf] %v993
      %1090 = vst [vmem:[%s288 + $0x48] sm:$0xf] %v994
      %1091 = vst [vmem:[%s288 + $0x4c] sm:$0xf] %v995
      %1092 = vst [vmem:[%s288 + $0x50] sm:$0xf] %v996
      %1093 = vst [vmem:[%s288 + $0x54] sm:$0xf] %v997
      %1094 = vst [vmem:[%s288 + $0x58] sm:$0xf] %v998
      %1095 = vst [vmem:[%s288 + $0x5c] sm:$0xf] %v999
      %1096 = vst [vmem:[%s288 + $0x60] sm:$0xf] %v1000
      %1097 = vst [vmem:[%s288 + $0x64] sm:$0xf] %v1001
      %1098 = vst [vmem:[%s288 + $0x68] sm:$0xf] %v1002
      %1099 = vst [vmem:[%s288 + $0x6c] sm:$0xf] %v1003
      %1100 = vst [vmem:[%s288 + $0x70] sm:$0xf] %v1004
      %1101 = vst [vmem:[%s288 + $0x74] sm:$0xf] %v1005
      %1102 = vst [vmem:[%s288 + $0x78] sm:$0xf] %v1006
      %1103 = vst [vmem:[%s288 + $0x7c] sm:$0xf] %v1007
      %1104 = vst [vmem:[%s288 + $0x80] sm:$0xf] %v1008
      %1105 = vst [vmem:[%s288 + $0x84] sm:$0xf] %v1009
      %1106 = vst [vmem:[%s288 + $0x88] sm:$0xf] %v1010
      %1107 = vst [vmem:[%s288 + $0x8c] sm:$0xf] %v1011
      %1108 = vst [vmem:[%s288 + $0x90] sm:$0xf] %v1012
      %1109 = vst [vmem:[%s288 + $0x94] sm:$0xf] %v1013
      %1110 = vst [vmem:[%s288 + $0x98] sm:$0xf] %v1014
      %1111 = vst [vmem:[%s288 + $0x9c] sm:$0xf] %v1015
      %1112 = vst [vmem:[%s288 + $0xa0] sm:$0xf] %v1016
      %1113 = vst [vmem:[%s288 + $0xa4] sm:$0xf] %v1017
      %1114 = vst [vmem:[%s288 + $0xa8] sm:$0xf] %v1018
      %1115 = vst [vmem:[%s288 + $0xac] sm:$0xf] %v1019
      %1116 = vst [vmem:[%s288 + $0xb0] sm:$0xf] %v1020
      %1117 = vst [vmem:[%s288 + $0xb4] sm:$0xf] %v1021
      %1118 = vst [vmem:[%s288 + $0xb8] sm:$0xf] %v1022
      %1119 = vst [vmem:[%s288 + $0xbc] sm:$0xf] %v1023
      %s1120 = smul.u32 48, %s20
      %p1121 = scmp.lt.s32.totalorder %s19, 1
      %s1122 = scalar_select %p1121, %s19, 1
      %p1123 = scmp.lt.s32.totalorder %s1120, 143
      %s1124 = scalar_select %p1123, %s1120, 143
      %s1125 = smul.addr %s1122, 144
      %s1126 = sadd.s32 %s1124, %s1125
      %s1127 = smul.addr %s1126, 4
      %s1128 = scalar_lea.vmem %s4, %s1127
      // Predicated region
      $region37: #{unet_conv_block.5} parent=35 // pred_check
        %p1129 = pneg %p153
      $region38: #{unet_conv_block.5} parent=35 // pred_check_branch
        %1131 = sbr.rel (%p1129) target = $region40
      $region39: #{unet_conv_block.5} parent=35 // pred_region
        %s1132 = smul.u32 48, %s20
      $region40: #{unet_conv_block.5} parent=35 // pred_fallthru
        _
    $region36: #{unet_conv_block.5} parent=5 // pred_fallthru
      _
    %p1133 = scmp.le.s32.totalorder 2, %s10
    // Predicated region
    $region41: #{unet_conv_block.5} parent=5 // pred_check
      %p1134 = pneg %p1133
    $region42: #{unet_conv_block.5} parent=5 // pred_check_branch
      %1136 = sbr.rel (%p1134) target = $region44
    $region43: #{unet_conv_block.5} parent=5 // pred_region
      %s1137 = ssub.s32 %s10, 2
      // Predicated region
      $region45: #{unet_conv_block.5} parent=43 // pred_check
        %p1138 = pneg %p159
      $region46: #{unet_conv_block.5} parent=43 // pred_check_branch
        %1140 = sbr.rel (%p1138) target = $region48
      $region47: #{unet_conv_block.5} parent=43 // pred_region
        %s1141 = smul.u32 48, %s22
        %p1142 = scmp.lt.s32.totalorder %s21, 1
        %s1143 = scalar_select %p1142, %s21, 1
        %p1144 = scmp.lt.s32.totalorder %s1141, 143
        %s1145 = scalar_select %p1144, %s1141, 143
        %s1146 = smul.addr %s1143, 144
        %s1147 = sadd.s32 %s1145, %s1146
        %s1148 = smul.addr %s1147, 4
        %s1149 = scalar_lea.vmem %s4, %s1148
      $region48: #{unet_conv_block.5} parent=43 // pred_fallthru
        _
    $region44: #{unet_conv_block.5} parent=5 // pred_fallthru
      _
  $region6: #{unet_conv_block.5} parent=0 // loop_footer
    %s14 = sadd.s32 1, %s10
  $region7: #{unet_conv_block.5} parent=0 // loop_footer_branch
    %9 = sbr.rel target = $region3
  $region8: #{unet_conv_block.5} parent=0 // loop_exit
    _

// kernel: unet_conv_block.4
$region0: #{unet_conv_block.4}
  #allocation0 [shape = 'u32[]', space=smem, size = 0x4, offset = 0x4, fixed_abs, tag = 'smem constant byte address 0x4 - core index']
  #allocation1 [shape = 'u32[144,128]{1,0:T(1,128)}', space=vmem, size = 0x12000, scoped, tag = 'internal scratch']
  %s0 = inlined_call_operand.vmem [shape: bf16[2,384,36], index: 0, kind: input, shape index: {}]
  %s1 = inlined_call_operand.vmem [shape: f32[3,384,1], index: 1, kind: input, shape index: {}]
  %s2 = inlined_call_operand.vmem [shape: bf16[36,128], index: 2, kind: input, shape index: {}]
  %s3 = inlined_call_operand.vmem [shape: f32[1,128], index: 3, kind: input, shape index: {}]
  %s4 = inlined_call_operand.vmem [shape: bf16[2,1,384,128], index: 4, kind: output, shape index: {0}]
  %s5 = inlined_call_operand.vmem [shape: f32[2,1,2,128], index: 5, kind: output, shape index: {1}]
  %6 = xla_tuple %s4, %s5
  %s7 = sld [smem:[#allocation0]]
  $region57: #{unet_conv_block.4} parent=0
    _
  %s9 = ssub.s32 1, %s7
  %s10 = scalar_select 0, %s9, %s7
  loop: start=0, step=1, limit=4
  $region2: #{unet_conv_block.4} parent=0 // loop_pre_header
    _
  $region3: #{unet_conv_block.4} parent=0 // loop_header
    %s12 = sphi 0, %s16
    %p13 = scmp.ge.s32.totalorder %s12, 4
    %s19 = sphi 0, %s31
    %s20 = sphi 0, %s27
    %s21 = sphi 0, %s19
    %s22 = sphi 0, %s20
    %s23 = sphi 0, %s21
    %s24 = sphi 0, %s22
    %s36 = sphi 0, %s38
    %s39 = sphi 0, %s36
    %s40 = sphi 0, %s39
    %s56 = sphi 0, %s40
    %s64 = sphi 0, %s66
    %s67 = sphi 0, %s64
    %s68 = sphi 0, %s67
    %s84 = sphi 0, %s68
    %s88 = sphi 0, %s88
    %s90 = sphi 0, %s88
    %s91 = sphi 0, %s90
    %s105 = sphi 0, %s91
    %s109 = sphi 0, %s109
    %s111 = sphi 0, %s109
    %s112 = sphi 0, %s111
    %s126 = sphi 0, %s112
    %s134 = sphi 0, %s136
    %s137 = sphi 0, %s134
    %s138 = sphi 0, %s137
    %s154 = sphi 0, %s138
    %s162 = sphi 0, %s164
    %s165 = sphi 0, %s162
    %s166 = sphi 0, %s165
    %s182 = sphi 0, %s166
  $region4: #{unet_conv_block.4} parent=0 // loop_header_branch
    %15 = sbr.rel (%p13) target = $region8
  $region5: #{unet_conv_block.4} parent=0 // loop_body
    %s17 = ssub.s32 %s12, 1
    %s18 = ssub.s32 %s12, 2
    %s25 = sadd.s32 1, %s20
    %p26 = scmp.ge.s32.totalorder %s25, 1
    %s27 = scalar_select %p26, 0, %s25
    %s28 = sadd.s32 1, %s19
    %s29 = scalar_select %p26, %s28, %s19
    %p30 = scmp.ge.s32.totalorder %s29, 2
    %s31 = scalar_select %p30, 0, %s29
    %s32 = ssub.s32 %s19, %s31
    %s33 = ssub.s32 %s20, %s27
    %s34 = sor.u32 %s32, %s33
    %p35 = scmp.eq.s32.totalorder %s34, 0
    %s37 = sadd.s32 %s36, 1
    %s38 = scalar_select %p35, %s36, %s37
    %p41 = pneg %p35
    %p42 = scmp.eq.s32.totalorder %s12, 1
    %p43 = por %p41, %p42
    %p44 = scmp.ne.s32.totalorder %s36, %s39
    %p45 = scmp.eq.s32.totalorder %s12, 0
    %p46 = por %p44, %p45
    %p47 = scmp.ne.s32.totalorder %s36, %s39
    %p48 = scmp.eq.s32.totalorder %s17, 1
    %p49 = por %p47, %p48
    %p50 = scmp.ne.s32.totalorder %s39, %s40
    %p51 = scmp.eq.s32.totalorder %s17, 0
    %p52 = por %p50, %p51
    %p53 = scmp.ne.s32.totalorder %s39, %s40
    %p54 = scmp.eq.s32.totalorder %s18, 1
    %p55 = por %p53, %p54
    %p57 = scmp.ne.s32.totalorder %s40, %s56
    %p58 = scmp.eq.s32.totalorder %s18, 0
    %p59 = por %p57, %p58
    %s60 = sadd.s32 %s20, 1
    %s61 = sadd.s32 %s27, 1
    %s62 = ssub.s32 %s60, %s61
    %p63 = scmp.eq.s32.totalorder %s62, 0
    %s65 = sadd.s32 %s64, 1
    %s66 = scalar_select %p63, %s64, %s65
    %p69 = pneg %p63
    %p70 = scmp.eq.s32.totalorder %s12, 1
    %p71 = por %p69, %p70
    %p72 = scmp.ne.s32.totalorder %s64, %s67
    %p73 = scmp.eq.s32.totalorder %s12, 0
    %p74 = por %p72, %p73
    %p75 = scmp.ne.s32.totalorder %s64, %s67
    %p76 = scmp.eq.s32.totalorder %s17, 1
    %p77 = por %p75, %p76
    %p78 = scmp.ne.s32.totalorder %s67, %s68
    %p79 = scmp.eq.s32.totalorder %s17, 0
    %p80 = por %p78, %p79
    %p81 = scmp.ne.s32.totalorder %s67, %s68
    %p82 = scmp.eq.s32.totalorder %s18, 1
    %p83 = por %p81, %p82
    %p85 = scmp.ne.s32.totalorder %s68, %s84
    %p86 = scmp.eq.s32.totalorder %s18, 0
    %p87 = por %p85, %p86
    %s89 = sadd.s32 %s88, 1
    %p92 = scmp.eq.s32.totalorder %s12, 1
    %p93 = scmp.ne.s32.totalorder %s88, %s90
    %p94 = scmp.eq.s32.totalorder %s12, 0
    %p95 = por %p93, %p94
    %p96 = scmp.ne.s32.totalorder %s88, %s90
    %p97 = scmp.eq.s32.totalorder %s17, 1
    %p98 = por %p96, %p97
    %p99 = scmp.ne.s32.totalorder %s90, %s91
    %p100 = scmp.eq.s32.totalorder %s17, 0
    %p101 = por %p99, %p100
    %p102 = scmp.ne.s32.totalorder %s90, %s91
    %p103 = scmp.eq.s32.totalorder %s18, 1
    %p104 = por %p102, %p103
    %p106 = scmp.ne.s32.totalorder %s91, %s105
    %p107 = scmp.eq.s32.totalorder %s18, 0
    %p108 = por %p106, %p107
    %s110 = sadd.s32 %s109, 1
    %p113 = scmp.eq.s32.totalorder %s12, 1
    %p114 = scmp.ne.s32.totalorder %s109, %s111
    %p115 = scmp.eq.s32.totalorder %s12, 0
    %p116 = por %p114, %p115
    %p117 = scmp.ne.s32.totalorder %s109, %s111
    %p118 = scmp.eq.s32.totalorder %s17, 1
    %p119 = por %p117, %p118
    %p120 = scmp.ne.s32.totalorder %s111, %s112
    %p121 = scmp.eq.s32.totalorder %s17, 0
    %p122 = por %p120, %p121
    %p123 = scmp.ne.s32.totalorder %s111, %s112
    %p124 = scmp.eq.s32.totalorder %s18, 1
    %p125 = por %p123, %p124
    %p127 = scmp.ne.s32.totalorder %s112, %s126
    %p128 = scmp.eq.s32.totalorder %s18, 0
    %p129 = por %p127, %p128
    %s130 = ssub.s32 %s19, %s31
    %s131 = ssub.s32 %s20, %s27
    %s132 = sor.u32 %s130, %s131
    %p133 = scmp.eq.s32.totalorder %s132, 0
    %s135 = sadd.s32 %s134, 1
    %s136 = scalar_select %p133, %s134, %s135
    %p139 = pneg %p133
    %p140 = scmp.eq.s32.totalorder %s12, 1
    %p141 = por %p139, %p140
    %p142 = scmp.ne.s32.totalorder %s134, %s137
    %p143 = scmp.eq.s32.totalorder %s12, 0
    %p144 = por %p142, %p143
    %p145 = scmp.ne.s32.totalorder %s134, %s137
    %p146 = scmp.eq.s32.totalorder %s17, 1
    %p147 = por %p145, %p146
    %p148 = scmp.ne.s32.totalorder %s137, %s138
    %p149 = scmp.eq.s32.totalorder %s17, 0
    %p150 = por %p148, %p149
    %p151 = scmp.ne.s32.totalorder %s137, %s138
    %p152 = scmp.eq.s32.totalorder %s18, 1
    %p153 = por %p151, %p152
    %p155 = scmp.ne.s32.totalorder %s138, %s154
    %p156 = scmp.eq.s32.totalorder %s18, 0
    %p157 = por %p155, %p156
    %s158 = ssub.s32 %s19, %s31
    %s159 = ssub.s32 %s20, %s27
    %s160 = sor.u32 %s158, %s159
    %p161 = scmp.eq.s32.totalorder %s160, 0
    %s163 = sadd.s32 %s162, 1
    %s164 = scalar_select %p161, %s162, %s163
    %p167 = pneg %p161
    %p168 = scmp.eq.s32.totalorder %s12, 1
    %p169 = por %p167, %p168
    %p170 = scmp.ne.s32.totalorder %s162, %s165
    %p171 = scmp.eq.s32.totalorder %s12, 0
    %p172 = por %p170, %p171
    %p173 = scmp.ne.s32.totalorder %s162, %s165
    %p174 = scmp.eq.s32.totalorder %s17, 1
    %p175 = por %p173, %p174
    %p176 = scmp.ne.s32.totalorder %s165, %s166
    %p177 = scmp.eq.s32.totalorder %s17, 0
    %p178 = por %p176, %p177
    %p179 = scmp.ne.s32.totalorder %s165, %s166
    %p180 = scmp.eq.s32.totalorder %s18, 1
    %p181 = por %p179, %p180
    %p183 = scmp.ne.s32.totalorder %s166, %s182
    %p184 = scmp.eq.s32.totalorder %s18, 0
    %p185 = por %p183, %p184
    %p186 = scmp.le.s32.totalorder 1, %s12
    %p187 = scmp.lt.s32.totalorder %s12, 3
    %p188 = pnand %p186, %p187
    %p189 = pneg %p188
    // Predicated region
    $region9: #{unet_conv_block.4} parent=5 // pred_check
      _
    $region10: #{unet_conv_block.4} parent=5 // pred_check_branch
      %191 = sbr.rel (%p188) target = $region12
    $region11: #{unet_conv_block.4} parent=5 // pred_region
      %s192 = ssub.s32 %s12, 1
      // Predicated region
      $region13: #{unet_conv_block.4} parent=11 // pred_check
        %p193 = pneg %p80
      $region14: #{unet_conv_block.4} parent=11 // pred_check_branch
        %195 = sbr.rel (%p193) target = $region16
      $region15: #{unet_conv_block.4} parent=11 // pred_region
        %s196 = sadd.s32 %s22, 1
        %p197 = scmp.lt.s32.totalorder %s196, 2
        %s198 = scalar_select %p197, %s196, 2
        %s199 = smul.addr %s198, 48
        %s200 = smul.addr %s199, 8
        %s201 = scalar_lea.vmem %s1, %s200
        %s202 = sadd.s32 %s22, 1
      $region16: #{unet_conv_block.4} parent=11 // pred_fallthru
        _
      // Predicated region
      $region17: #{unet_conv_block.4} parent=11 // pred_check
        %p203 = pneg %p101
      $region18: #{unet_conv_block.4} parent=11 // pred_check_branch
        %205 = sbr.rel (%p203) target = $region20
      $region19: #{unet_conv_block.4} parent=11 // pred_region
        _
      $region20: #{unet_conv_block.4} parent=11 // pred_fallthru
        _
      // Predicated region
      $region21: #{unet_conv_block.4} parent=11 // pred_check
        %p206 = pneg %p122
      $region22: #{unet_conv_block.4} parent=11 // pred_check_branch
        %208 = sbr.rel (%p206) target = $region24
      $region23: #{unet_conv_block.4} parent=11 // pred_region
        _
      $region24: #{unet_conv_block.4} parent=11 // pred_fallthru
        _
    $region12: #{unet_conv_block.4} parent=5 // pred_fallthru
      _
    %p209 = scmp.lt.s32.totalorder %s12, 2
    // Predicated region
    $region25: #{unet_conv_block.4} parent=5 // pred_check
      %p210 = pneg %p209
    $region26: #{unet_conv_block.4} parent=5 // pred_check_branch
      %212 = sbr.rel (%p210) target = $region28
    $region27: #{unet_conv_block.4} parent=5 // pred_region
      // Predicated region
      $region29: #{unet_conv_block.4} parent=27 // pred_check
        %p213 = pneg %p46
      $region30: #{unet_conv_block.4} parent=27 // pred_check_branch
        %215 = sbr.rel (%p213) target = $region32
      $region31: #{unet_conv_block.4} parent=27 // pred_region
        %s216 = smul.u32 48, %s20
        %p217 = scmp.lt.s32.totalorder %s19, 1
        %s218 = scalar_select %p217, %s19, 1
        %p219 = scmp.lt.s32.totalorder %s216, 47
        %s220 = scalar_select %p219, %s216, 47
        %s221 = smul.addr %s218, 48
        %s222 = sadd.s32 %s220, %s221
        %s223 = smul.addr %s222, 4
        %s224 = scalar_lea.vmem %s0, %s223
        %s225 = smul.u32 48, %s20
      $region32: #{unet_conv_block.4} parent=27 // pred_fallthru
        _
    $region28: #{unet_conv_block.4} parent=5 // pred_fallthru
      _
    %p226 = scmp.le.s32.totalorder 1, %s12
    %p227 = scmp.lt.s32.totalorder %s12, 3
    %p228 = pnand %p226, %p227
    %p229 = pneg %p228
    // Predicated region
    $region33: #{unet_conv_block.4} parent=5 // pred_check
      _
    $region34: #{unet_conv_block.4} parent=5 // pred_check_branch
      %231 = sbr.rel (%p228) target = $region36
    $region35: #{unet_conv_block.4} parent=5 // pred_region
      %s232 = ssub.s32 %s12, 1
      %s233 = smul.u32 48, %s22
      %p234 = scmp.lt.s32.totalorder %s21, 1
      %s235 = scalar_select %p234, %s21, 1
      %p236 = scmp.lt.s32.totalorder %s233, 47
      %s237 = scalar_select %p236, %s233, 47
      %s238 = smul.addr %s235, 48
      %s239 = sadd.s32 %s237, %s238
      %s240 = smul.addr %s239, 4
      %s241 = scalar_lea.vmem %s0, %s240
      %p242 = pneg %p52
      %p243 = pneg %p49
      %s244 = sadd.s32 %s22, 1
      %p245 = scmp.lt.s32.totalorder %s244, 2
      %s246 = scalar_select %p245, %s244, 2
      %s247 = smul.addr %s246, 48
      %s248 = smul.addr %s247, 8
      %s249 = scalar_lea.vmem %s1, %s248
      %p250 = pneg %p80
      %p251 = pneg %p77
      %p252 = pneg %p101
      %p253 = pneg %p98
      %p254 = pneg %p122
      %p255 = pneg %p119
      %p256 = pneg %p150
      %p257 = pneg %p147
      %p258 = scmp.lt.s32.totalorder %s21, 1
      %s259 = scalar_select %p258, %s21, 1
      %p260 = scmp.lt.s32.totalorder %s22, 0
      %s261 = scalar_select %p260, %s22, 0
      %s262 = smul.addr %s261, 48
      %s263 = smul.addr %s259, 48
      %s264 = sadd.s32 %s262, %s263
      %s265 = smul.addr %s264, 4
      %s266 = scalar_lea.vmem %s4, %s265
      %p267 = pneg %p178
      %p268 = pneg %p175
      %p269 = scmp.lt.s32.totalorder %s21, 1
      %s270 = scalar_select %p269, %s21, 1
      %p271 = scmp.lt.s32.totalorder %s22, 0
      %s272 = scalar_select %p271, %s22, 0
      %s273 = sadd.s32 %s272, %s270
      %s274 = smul.addr %s273, 2
      %s275 = scalar_lea.vmem %s5, %s274
      %s276 = smul.u32 48, %s22
      %p277 = scmp.lt.s32.totalorder %s21, 1
      %s278 = scalar_select %p277, %s21, 1
      %p279 = scmp.lt.s32.totalorder %s276, 47
      %s280 = scalar_select %p279, %s276, 47
      %s281 = smul.addr %s278, 48
      %s282 = sadd.s32 %s280, %s281
      %s283 = smul.addr %s282, 4
      %s284 = scalar_lea.vmem %s0, %s283
      %s285 = smul.u32 48, %s22
      %s286 = sadd.s32 %s22, 1
      %p287 = scmp.lt.s32.totalorder %s286, 2
      %s288 = scalar_select %p287, %s286, 2
      %s289 = smul.addr %s288, 48
      %s290 = smul.addr %s289, 8
      %s291 = scalar_lea.vmem %s1, %s290
      %s292 = sadd.s32 %s22, 1
      %p293 = scmp.lt.s32.totalorder %s21, 1
      %s294 = scalar_select %p293, %s21, 1
      %p295 = scmp.lt.s32.totalorder %s22, 0
      %s296 = scalar_select %p295, %s22, 0
      %s297 = smul.addr %s296, 48
      %s298 = smul.addr %s294, 48
      %s299 = sadd.s32 %s297, %s298
      %s300 = smul.addr %s299, 4
      %s301 = scalar_lea.vmem %s4, %s300
      %p302 = scmp.lt.s32.totalorder %s21, 1
      %s303 = scalar_select %p302, %s21, 1
      %p304 = scmp.lt.s32.totalorder %s22, 0
      %s305 = scalar_select %p304, %s22, 0
      %s306 = sadd.s32 %s305, %s303
      %s307 = smul.addr %s306, 2
      %s308 = scalar_lea.vmem %s5, %s307
      %v310 = vld [vmem:[%s284] sm:$0xf]
      %v311 = vld [vmem:[%s284 + $0x4] sm:$0xf]
      %v312 = vld [vmem:[%s284 + $0x8] sm:$0xf]
      %v313 = vld [vmem:[%s284 + $0xc] sm:$0xf]
      %v314 = vld [vmem:[%s284 + $0x10] sm:$0xf]
      %v315 = vld [vmem:[%s284 + $0x14] sm:$0xf]
      %v316 = vld [vmem:[%s284 + $0x18] sm:$0xf]
      %v317 = vld [vmem:[%s284 + $0x1c] sm:$0xf]
      %v318 = vld [vmem:[%s284 + $0x20] sm:$0xf]
      %v319 = vld [vmem:[%s284 + $0x24] sm:$0xf]
      %v320 = vld [vmem:[%s284 + $0x28] sm:$0xf]
      %v321 = vld [vmem:[%s284 + $0x2c] sm:$0xf]
      %v322 = vld [vmem:[%s284 + $0x30] sm:$0xf]
      %v323 = vld [vmem:[%s284 + $0x34] sm:$0xf]
      %v324 = vld [vmem:[%s284 + $0x38] sm:$0xf]
      %v325 = vld [vmem:[%s284 + $0x3c] sm:$0xf]
      %v326 = vld [vmem:[%s284 + $0x40] sm:$0xf]
      %v327 = vld [vmem:[%s284 + $0x44] sm:$0xf]
      %v328 = vld [vmem:[%s284 + $0x48] sm:$0xf]
      %v329 = vld [vmem:[%s284 + $0x4c] sm:$0xf]
      %v330 = vld [vmem:[%s284 + $0x50] sm:$0xf]
      %v331 = vld [vmem:[%s284 + $0x54] sm:$0xf]
      %v332 = vld [vmem:[%s284 + $0x58] sm:$0xf]
      %v333 = vld [vmem:[%s284 + $0x5c] sm:$0xf]
      %v334 = vld [vmem:[%s284 + $0x60] sm:$0xf]
      %v335 = vld [vmem:[%s284 + $0x64] sm:$0xf]
      %v336 = vld [vmem:[%s284 + $0x68] sm:$0xf]
      %v337 = vld [vmem:[%s284 + $0x6c] sm:$0xf]
      %v338 = vld [vmem:[%s284 + $0x70] sm:$0xf]
      %v339 = vld [vmem:[%s284 + $0x74] sm:$0xf]
      %v340 = vld [vmem:[%s284 + $0x78] sm:$0xf]
      %v341 = vld [vmem:[%s284 + $0x7c] sm:$0xf]
      %v342 = vld [vmem:[%s284 + $0x80] sm:$0xf]
      %v343 = vld [vmem:[%s284 + $0x84] sm:$0xf]
      %v344 = vld [vmem:[%s284 + $0x88] sm:$0xf]
      %v345 = vld [vmem:[%s284 + $0x8c] sm:$0xf]
      %v346 = vld [vmem:[%s284 + $0x90] sm:$0xf]
      %v347 = vld [vmem:[%s284 + $0x94] sm:$0xf]
      %v348 = vld [vmem:[%s284 + $0x98] sm:$0xf]
      %v349 = vld [vmem:[%s284 + $0x9c] sm:$0xf]
      %v350 = vld [vmem:[%s284 + $0xa0] sm:$0xf]
      %v351 = vld [vmem:[%s284 + $0xa4] sm:$0xf]
      %v352 = vld [vmem:[%s284 + $0xa8] sm:$0xf]
      %v353 = vld [vmem:[%s284 + $0xac] sm:$0xf]
      %v354 = vld [vmem:[%s284 + $0xb0] sm:$0xf]
      %v355 = vld [vmem:[%s284 + $0xb4] sm:$0xf]
      %v356 = vld [vmem:[%s284 + $0xb8] sm:$0xf]
      %v357 = vld [vmem:[%s284 + $0xbc] sm:$0xf]
      %v358 = vld [vmem:[%s2] sm:$0xf]
      %v359 = vld [vmem:[%s2 + $0x4] sm:$0xf]
      %v360 = vld [vmem:[%s2 + $0x8] sm:$0xf]
      %v361 = vld [vmem:[%s2 + $0xc] sm:$0xf]
      %v362 = vld [vmem:[%s2 + $0x10] sm:$0x3]
      %v363 = vld [vmem:[%s3] sm:$0x1]
      %v364 = vld [vmem:[%s291] sm:$0xff]
      %v365 = vld [vmem:[%s291 + $0x8] sm:$0xff]
      %v366 = vld [vmem:[%s291 + $0x10] sm:$0xff]
      %v367 = vld [vmem:[%s291 + $0x18] sm:$0xff]
      %v368 = vld [vmem:[%s291 + $0x20] sm:$0xff]
      %v369 = vld [vmem:[%s291 + $0x28] sm:$0xff]
      %v370 = vld [vmem:[%s291 + $0x30] sm:$0xff]
      %v371 = vld [vmem:[%s291 + $0x38] sm:$0xff]
      %v372 = vld [vmem:[%s291 + $0x40] sm:$0xff]
      %v373 = vld [vmem:[%s291 + $0x48] sm:$0xff]
      %v374 = vld [vmem:[%s291 + $0x50] sm:$0xff]
      %v375 = vld [vmem:[%s291 + $0x58] sm:$0xff]
      %v376 = vld [vmem:[%s291 + $0x60] sm:$0xff]
      %v377 = vld [vmem:[%s291 + $0x68] sm:$0xff]
      %v378 = vld [vmem:[%s291 + $0x70] sm:$0xff]
      %v379 = vld [vmem:[%s291 + $0x78] sm:$0xff]
      %v380 = vld [vmem:[%s291 + $0x80] sm:$0xff]
      %v381 = vld [vmem:[%s291 + $0x88] sm:$0xff]
      %v382 = vld [vmem:[%s291 + $0x90] sm:$0xff]
      %v383 = vld [vmem:[%s291 + $0x98] sm:$0xff]
      %v384 = vld [vmem:[%s291 + $0xa0] sm:$0xff]
      %v385 = vld [vmem:[%s291 + $0xa8] sm:$0xff]
      %v386 = vld [vmem:[%s291 + $0xb0] sm:$0xff]
      %v387 = vld [vmem:[%s291 + $0xb8] sm:$0xff]
      %v388 = vld [vmem:[%s291 + $0xc0] sm:$0xff]
      %v389 = vld [vmem:[%s291 + $0xc8] sm:$0xff]
      %v390 = vld [vmem:[%s291 + $0xd0] sm:$0xff]
      %v391 = vld [vmem:[%s291 + $0xd8] sm:$0xff]
      %v392 = vld [vmem:[%s291 + $0xe0] sm:$0xff]
      %v393 = vld [vmem:[%s291 + $0xe8] sm:$0xff]
      %v394 = vld [vmem:[%s291 + $0xf0] sm:$0xff]
      %v395 = vld [vmem:[%s291 + $0xf8] sm:$0xff]
      %v396 = vld [vmem:[%s291 + $0x100] sm:$0xff]
      %v397 = vld [vmem:[%s291 + $0x108] sm:$0xff]
      %v398 = vld [vmem:[%s291 + $0x110] sm:$0xff]
      %v399 = vld [vmem:[%s291 + $0x118] sm:$0xff]
      %v400 = vld [vmem:[%s291 + $0x120] sm:$0xff]
      %v401 = vld [vmem:[%s291 + $0x128] sm:$0xff]
      %v402 = vld [vmem:[%s291 + $0x130] sm:$0xff]
      %v403 = vld [vmem:[%s291 + $0x138] sm:$0xff]
      %v404 = vld [vmem:[%s291 + $0x140] sm:$0xff]
      %v405 = vld [vmem:[%s291 + $0x148] sm:$0xff]
      %v406 = vld [vmem:[%s291 + $0x150] sm:$0xff]
      %v407 = vld [vmem:[%s291 + $0x158] sm:$0xff]
      %v408 = vld [vmem:[%s291 + $0x160] sm:$0xff]
      %v409 = vld [vmem:[%s291 + $0x168] sm:$0xff]
      %v410 = vld [vmem:[%s291 + $0x170] sm:$0xff]
      %v411 = vld [vmem:[%s291 + $0x178] sm:$0xff]
      %v413 = vlaneseq
      %v414 = vshrl.u32 %v413, 7
      %v415 = vsub.s32 0, %v414
      %v416 = vrot.slane %v363, %v415
      %v466 = vunpack.c.l.b16 %v310
      %v467 = vunpack.c.l.b16 %v311
      %v468 = vunpack.c.l.b16 %v312
      %v469 = vunpack.c.l.b16 %v313
      %v470 = vunpack.c.l.b16 %v314
      %v471 = vunpack.c.l.b16 %v315
      %v472 = vunpack.c.l.b16 %v316
      %v473 = vunpack.c.l.b16 %v317
      %v474 = vunpack.c.l.b16 %v318
      %v475 = vunpack.c.l.b16 %v319
      %v476 = vunpack.c.l.b16 %v320
      %v477 = vunpack.c.l.b16 %v321
      %v478 = vunpack.c.l.b16 %v322
      %v479 = vunpack.c.l.b16 %v323
      %v480 = vunpack.c.l.b16 %v324
      %v481 = vunpack.c.l.b16 %v325
      %v482 = vunpack.c.l.b16 %v326
      %v483 = vunpack.c.l.b16 %v327
      %v484 = vunpack.c.l.b16 %v328
      %v485 = vunpack.c.l.b16 %v329
      %v486 = vunpack.c.l.b16 %v330
      %v487 = vunpack.c.l.b16 %v331
      %v488 = vunpack.c.l.b16 %v332
      %v489 = vunpack.c.l.b16 %v333
      %v490 = vunpack.c.l.b16 %v334
      %v491 = vunpack.c.l.b16 %v335
      %v492 = vunpack.c.l.b16 %v336
      %v493 = vunpack.c.l.b16 %v337
      %v494 = vunpack.c.l.b16 %v338
      %v495 = vunpack.c.l.b16 %v339
      %v496 = vunpack.c.l.b16 %v340
      %v497 = vunpack.c.l.b16 %v341
      %v498 = vunpack.c.l.b16 %v342
      %v499 = vunpack.c.l.b16 %v343
      %v500 = vunpack.c.l.b16 %v344
      %v501 = vunpack.c.l.b16 %v345
      %v502 = vunpack.c.l.b16 %v346
      %v503 = vunpack.c.l.b16 %v347
      %v504 = vunpack.c.l.b16 %v348
      %v505 = vunpack.c.l.b16 %v349
      %v506 = vunpack.c.l.b16 %v350
      %v507 = vunpack.c.l.b16 %v351
      %v508 = vunpack.c.l.b16 %v352
      %v509 = vunpack.c.l.b16 %v353
      %v510 = vunpack.c.l.b16 %v354
      %v511 = vunpack.c.l.b16 %v355
      %v512 = vunpack.c.l.b16 %v356
      %v513 = vunpack.c.l.b16 %v357
      %v514 = vpack.c.b16 %v467, %v466
      %v515 = vpack.c.b16 %v469, %v468
      %v516 = vpack.c.b16 %v471, %v470
      %v517 = vpack.c.b16 %v473, %v472
      %v518 = vpack.c.b16 %v475, %v474
      %v519 = vpack.c.b16 %v477, %v476
      %v520 = vpack.c.b16 %v479, %v478
      %v521 = vpack.c.b16 %v481, %v480
      %v522 = vpack.c.b16 %v483, %v482
      %v523 = vpack.c.b16 %v485, %v484
      %v524 = vpack.c.b16 %v487, %v486
      %v525 = vpack.c.b16 %v489, %v488
      %v526 = vpack.c.b16 %v491, %v490
      %v527 = vpack.c.b16 %v493, %v492
      %v528 = vpack.c.b16 %v495, %v494
      %v529 = vpack.c.b16 %v497, %v496
      %v530 = vpack.c.b16 %v499, %v498
      %v531 = vpack.c.b16 %v501, %v500
      %v532 = vpack.c.b16 %v503, %v502
      %v533 = vpack.c.b16 %v505, %v504
      %v534 = vpack.c.b16 %v507, %v506
      %v535 = vpack.c.b16 %v509, %v508
      %v536 = vpack.c.b16 %v511, %v510
      %v537 = vpack.c.b16 %v513, %v512
      %v543 = vunpack.c.l.b16 %v358
      %v544 = vunpack.c.l.b16 %v359
      %v545 = vunpack.c.l.b16 %v360
      %v546 = vunpack.c.l.b16 %v361
      %v547 = vunpack.c.l.b16 %v362
      %v548 = vpack.c.b16 %v544, %v543
      %v549 = vpack.c.b16 %v546, %v545
      %v550 = vpack.c.b16 %v547, %v547
      %vm553 = vcmask 293888
      %v555 = vsel %vm553, %v514, 0
      %v558 = vsel %vm553, %v515, 0
      %v561 = vsel %vm553, %v516, 0
      %v564 = vsel %vm553, %v517, 0
      %v567 = vsel %vm553, %v518, 0
      %v570 = vsel %vm553, %v519, 0
      %v573 = vsel %vm553, %v520, 0
      %v576 = vsel %vm553, %v521, 0
      %v579 = vsel %vm553, %v522, 0
      %v582 = vsel %vm553, %v523, 0
      %v585 = vsel %vm553, %v524, 0
      %v588 = vsel %vm553, %v525, 0
      %v591 = vsel %vm553, %v526, 0
      %v594 = vsel %vm553, %v527, 0
      %v597 = vsel %vm553, %v528, 0
      %v600 = vsel %vm553, %v529, 0
      %v603 = vsel %vm553, %v530, 0
      %v606 = vsel %vm553, %v531, 0
      %v609 = vsel %vm553, %v532, 0
      %v612 = vsel %vm553, %v533, 0
      %v615 = vsel %vm553, %v534, 0
      %v618 = vsel %vm553, %v535, 0
      %v621 = vsel %vm553, %v536, 0
      %v624 = vsel %vm553, %v537, 0
      %vm626 = vcmask 1041408
      %v628 = vsel %vm626, %v550, 0
      %630 = vmatprep.subr.bf16.mxu0 0
      %631 = vmatpush1.bf16.msra.mxu0 %v548
      %632 = vmatprep.subr.bf16.mxu0 0
      %633 = vmatpush1.bf16.msra.mxu0 %v549
      %634 = vmatprep.subr.bf16.mxu0 0
      %635 = vmatpush1.bf16.msra.mxu0 %v628
      %636 = vmatprep.subr.bf16.mxu0 0
      %637 = vmatpush1.bf16.msra.mxu0 0
      %638 = vmatprep.subr.bf16.mxu0 0
      %639 = vmatpush1.bf16.msra.mxu0 0
      %640 = vmatprep.subr.bf16.mxu0 0
      %641 = vmatpush1.bf16.msra.mxu0 0
      %642 = vmatprep.subr.bf16.mxu0 0
      %643 = vmatpush1.bf16.msra.mxu0 0
      %644 = vmatprep.subr.bf16.mxu0 0
      %645 = vmatpush1.bf16.msra.mxu0 0
      %646 = vmatprep.subr.bf16.mxu0 0
      %647 = vmatpush1.bf16.msra.mxu0 0
      %648 = vmatprep.subr.bf16.mxu0 0
      %649 = vmatpush1.bf16.msra.mxu0 0
      %650 = vmatprep.subr.bf16.mxu0 0
      %651 = vmatpush1.bf16.msra.mxu0 0
      %652 = vmatprep.subr.bf16.mxu0 0
      %653 = vmatpush1.bf16.msra.mxu0 0
      %654 = vmatprep.subr.bf16.mxu0 0
      %655 = vmatpush1.bf16.msra.mxu0 0
      %656 = vmatprep.subr.bf16.mxu0 0
      %657 = vmatpush1.bf16.msra.mxu0 0
      %658 = vmatprep.subr.bf16.mxu0 0
      %659 = vmatpush1.bf16.msra.mxu0 0
      %660 = vmatprep.subr.bf16.mxu0 0
      %661 = vmatpush1.bf16.msra.mxu0 0
      %662 = vmatprep.mubr.bf16.mxu0 0
      %663 = vmatmul.mubr.bf16.gmra.mrb[0].mxu0 %v555
      %v664 = vpop.f32.mrb[0].mxu0
      %v665 = vadd.f32 %v416, %v664
      %v666 = vpop.f32.mrb[0].mxu0
      %v667 = vpop.f32.mrb[0].mxu0
      %v668 = vadd.f32 %v416, %v667
      %v669 = vpop.f32.mrb[0].mxu0
      %670 = vmatprep.mubr.bf16.mxu0 0
      %671 = vmatmul.mubr.bf16.gmra.mrb[0].mxu0 %v558
      %v672 = vpop.f32.mrb[0].mxu0
      %v673 = vadd.f32 %v416, %v672
      %v674 = vpop.f32.mrb[0].mxu0
      %v675 = vpop.f32.mrb[0].mxu0
      %v676 = vadd.f32 %v416, %v675
      %v677 = vpop.f32.mrb[0].mxu0
      %678 = vmatprep.mubr.bf16.mxu0 0
      %679 = vmatmul.mubr.bf16.gmra.mrb[0].mxu0 %v561
      %v680 = vpop.f32.mrb[0].mxu0
      %v681 = vadd.f32 %v416, %v680
      %v682 = vpop.f32.mrb[0].mxu0
      %v683 = vpop.f32.mrb[0].mxu0
      %v684 = vadd.f32 %v416, %v683
      %v685 = vpop.f32.mrb[0].mxu0
      %686 = vmatprep.mubr.bf16.mxu0 0
      %687 = vmatmul.mubr.bf16.gmra.mrb[0].mxu0 %v564
      %v688 = vpop.f32.mrb[0].mxu0
      %v689 = vadd.f32 %v416, %v688
      %v690 = vpop.f32.mrb[0].mxu0
      %v691 = vpop.f32.mrb[0].mxu0
      %v692 = vadd.f32 %v416, %v691
      %v693 = vpop.f32.mrb[0].mxu0
      %694 = vmatprep.mubr.bf16.mxu0 0
      %695 = vmatmul.mubr.bf16.gmra.mrb[0].mxu0 %v567
      %v696 = vpop.f32.mrb[0].mxu0
      %v697 = vadd.f32 %v416, %v696
      %v698 = vpop.f32.mrb[0].mxu0
      %v699 = vpop.f32.mrb[0].mxu0
      %v700 = vadd.f32 %v416, %v699
      %v701 = vpop.f32.mrb[0].mxu0
      %702 = vmatprep.mubr.bf16.mxu0 0
      %703 = vmatmul.mubr.bf16.gmra.mrb[0].mxu0 %v570
      %v704 = vpop.f32.mrb[0].mxu0
      %v705 = vadd.f32 %v416, %v704
      %v706 = vpop.f32.mrb[0].mxu0
      %v707 = vpop.f32.mrb[0].mxu0
      %v708 = vadd.f32 %v416, %v707
      %v709 = vpop.f32.mrb[0].mxu0
      %710 = vmatprep.mubr.bf16.mxu0 0
      %711 = vmatmul.mubr.bf16.gmra.mrb[0].mxu0 %v573
      %v712 = vpop.f32.mrb[0].mxu0
      %v713 = vadd.f32 %v416, %v712
      %v714 = vpop.f32.mrb[0].mxu0
      %v715 = vpop.f32.mrb[0].mxu0
      %v716 = vadd.f32 %v416, %v715
      %v717 = vpop.f32.mrb[0].mxu0
      %718 = vmatprep.mubr.bf16.mxu0 0
      %719 = vmatmul.mubr.bf16.gmra.mrb[0].mxu0 %v576
      %v720 = vpop.f32.mrb[0].mxu0
      %v721 = vadd.f32 %v416, %v720
      %v722 = vpop.f32.mrb[0].mxu0
      %v723 = vpop.f32.mrb[0].mxu0
      %v724 = vadd.f32 %v416, %v723
      %v725 = vpop.f32.mrb[0].mxu0
      %726 = vmatprep.mubr.bf16.mxu0 0
      %727 = vmatmul.mubr.bf16.gmra.mrb[0].mxu0 %v579
      %v728 = vpop.f32.mrb[0].mxu0
      %v729 = vadd.f32 %v416, %v728
      %v730 = vpop.f32.mrb[0].mxu0
      %v731 = vpop.f32.mrb[0].mxu0
      %v732 = vadd.f32 %v416, %v731
      %v733 = vpop.f32.mrb[0].mxu0
      %734 = vmatprep.mubr.bf16.mxu0 0
      %735 = vmatmul.mubr.bf16.gmra.mrb[0].mxu0 %v582
      %v736 = vpop.f32.mrb[0].mxu0
      %v737 = vadd.f32 %v416, %v736
      %v738 = vpop.f32.mrb[0].mxu0
      %v739 = vpop.f32.mrb[0].mxu0
      %v740 = vadd.f32 %v416, %v739
      %v741 = vpop.f32.mrb[0].mxu0
      %742 = vmatprep.mubr.bf16.mxu0 0
      %743 = vmatmul.mubr.bf16.gmra.mrb[0].mxu0 %v585
      %v744 = vpop.f32.mrb[0].mxu0
      %v745 = vadd.f32 %v416, %v744
      %v746 = vpop.f32.mrb[0].mxu0
      %v747 = vpop.f32.mrb[0].mxu0
      %v748 = vadd.f32 %v416, %v747
      %v749 = vpop.f32.mrb[0].mxu0
      %750 = vmatprep.mubr.bf16.mxu0 0
      %751 = vmatmul.mubr.bf16.gmra.mrb[0].mxu0 %v588
      %v752 = vpop.f32.mrb[0].mxu0
      %v753 = vadd.f32 %v416, %v752
      %v754 = vpop.f32.mrb[0].mxu0
      %v755 = vpop.f32.mrb[0].mxu0
      %v756 = vadd.f32 %v416, %v755
      %v757 = vpop.f32.mrb[0].mxu0
      %758 = vmatprep.mubr.bf16.mxu0 0
      %759 = vmatmul.mubr.bf16.gmra.mrb[0].mxu0 %v591
      %v760 = vpop.f32.mrb[0].mxu0
      %v761 = vadd.f32 %v416, %v760
      %v762 = vpop.f32.mrb[0].mxu0
      %v763 = vpop.f32.mrb[0].mxu0
      %v764 = vadd.f32 %v416, %v763
      %v765 = vpop.f32.mrb[0].mxu0
      %766 = vmatprep.mubr.bf16.mxu0 0
      %767 = vmatmul.mubr.bf16.gmra.mrb[0].mxu0 %v594
      %v768 = vpop.f32.mrb[0].mxu0
      %v769 = vadd.f32 %v416, %v768
      %v770 = vpop.f32.mrb[0].mxu0
      %v771 = vpop.f32.mrb[0].mxu0
      %v772 = vadd.f32 %v416, %v771
      %v773 = vpop.f32.mrb[0].mxu0
      %774 = vmatprep.mubr.bf16.mxu0 0
      %775 = vmatmul.mubr.bf16.gmra.mrb[0].mxu0 %v597
      %v776 = vpop.f32.mrb[0].mxu0
      %v777 = vadd.f32 %v416, %v776
      %v778 = vpop.f32.mrb[0].mxu0
      %v779 = vpop.f32.mrb[0].mxu0
      %v780 = vadd.f32 %v416, %v779
      %v781 = vpop.f32.mrb[0].mxu0
      %782 = vmatprep.mubr.bf16.mxu0 0
      %783 = vmatmul.mubr.bf16.gmra.mrb[0].mxu0 %v600
      %v784 = vpop.f32.mrb[0].mxu0
      %v785 = vadd.f32 %v416, %v784
      %v786 = vpop.f32.mrb[0].mxu0
      %v787 = vpop.f32.mrb[0].mxu0
      %v788 = vadd.f32 %v416, %v787
      %v789 = vpop.f32.mrb[0].mxu0
      %790 = vmatprep.mubr.bf16.mxu0 0
      %791 = vmatmul.mubr.bf16.gmra.mrb[0].mxu0 %v603
      %v792 = vpop.f32.mrb[0].mxu0
      %v793 = vadd.f32 %v416, %v792
      %v794 = vpop.f32.mrb[0].mxu0
      %v795 = vpop.f32.mrb[0].mxu0
      %v796 = vadd.f32 %v416, %v795
      %v797 = vpop.f32.mrb[0].mxu0
      %798 = vmatprep.mubr.bf16.mxu0 0
      %799 = vmatmul.mubr.bf16.gmra.mrb[0].mxu0 %v606
      %v800 = vpop.f32.mrb[0].mxu0
      %v801 = vadd.f32 %v416, %v800
      %v802 = vpop.f32.mrb[0].mxu0
      %v803 = vpop.f32.mrb[0].mxu0
      %v804 = vadd.f32 %v416, %v803
      %v805 = vpop.f32.mrb[0].mxu0
      %806 = vmatprep.mubr.bf16.mxu0 0
      %807 = vmatmul.mubr.bf16.gmra.mrb[0].mxu0 %v609
      %v808 = vpop.f32.mrb[0].mxu0
      %v809 = vadd.f32 %v416, %v808
      %v810 = vpop.f32.mrb[0].mxu0
      %v811 = vpop.f32.mrb[0].mxu0
      %v812 = vadd.f32 %v416, %v811
      %v813 = vpop.f32.mrb[0].mxu0
      %814 = vmatprep.mubr.bf16.mxu0 0
      %815 = vmatmul.mubr.bf16.gmra.mrb[0].mxu0 %v612
      %v816 = vpop.f32.mrb[0].mxu0
      %v817 = vadd.f32 %v416, %v816
      %v818 = vpop.f32.mrb[0].mxu0
      %v819 = vpop.f32.mrb[0].mxu0
      %v820 = vadd.f32 %v416, %v819
      %v821 = vpop.f32.mrb[0].mxu0
      %822 = vmatprep.mubr.bf16.mxu0 0
      %823 = vmatmul.mubr.bf16.gmra.mrb[0].mxu0 %v615
      %v824 = vpop.f32.mrb[0].mxu0
      %v825 = vadd.f32 %v416, %v824
      %v826 = vpop.f32.mrb[0].mxu0
      %v827 = vpop.f32.mrb[0].mxu0
      %v828 = vadd.f32 %v416, %v827
      %v829 = vpop.f32.mrb[0].mxu0
      %830 = vmatprep.mubr.bf16.mxu0 0
      %831 = vmatmul.mubr.bf16.gmra.mrb[0].mxu0 %v618
      %v832 = vpop.f32.mrb[0].mxu0
      %v833 = vadd.f32 %v416, %v832
      %v834 = vpop.f32.mrb[0].mxu0
      %v835 = vpop.f32.mrb[0].mxu0
      %v836 = vadd.f32 %v416, %v835
      %v837 = vpop.f32.mrb[0].mxu0
      %838 = vmatprep.mubr.bf16.mxu0 0
      %839 = vmatmul.mubr.bf16.gmra.mrb[0].mxu0 %v621
      %v840 = vpop.f32.mrb[0].mxu0
      %v841 = vadd.f32 %v416, %v840
      %v842 = vpop.f32.mrb[0].mxu0
      %v843 = vpop.f32.mrb[0].mxu0
      %v844 = vadd.f32 %v416, %v843
      %v845 = vpop.f32.mrb[0].mxu0
      %846 = vmatprep.mubr.bf16.mxu0 0
      %847 = vmatmul.mubr.bf16.gmra.mrb[0].mxu0 %v624
      %v848 = vpop.f32.mrb[0].mxu0
      %v849 = vadd.f32 %v416, %v848
      %v850 = vpop.f32.mrb[0].mxu0
      %v851 = vpop.f32.mrb[0].mxu0
      %v852 = vadd.f32 %v416, %v851
      %v853 = vpop.f32.mrb[0].mxu0
      %854 = vdwg.mxu0
      %v855 = vmax.f32 %v665, 0.0
      %v856 = vmax.f32 %v668, 0.0
      %v857 = vmax.f32 %v673, 0.0
      %v858 = vmax.f32 %v676, 0.0
      %v859 = vmax.f32 %v681, 0.0
      %v860 = vmax.f32 %v684, 0.0
      %v861 = vmax.f32 %v689, 0.0
      %v862 = vmax.f32 %v692, 0.0
      %v863 = vmax.f32 %v697, 0.0
      %v864 = vmax.f32 %v700, 0.0
      %v865 = vmax.f32 %v705, 0.0
      %v866 = vmax.f32 %v708, 0.0
      %v867 = vmax.f32 %v713, 0.0
      %v868 = vmax.f32 %v716, 0.0
      %v869 = vmax.f32 %v721, 0.0
      %v870 = vmax.f32 %v724, 0.0
      %v871 = vmax.f32 %v729, 0.0
      %v872 = vmax.f32 %v732, 0.0
      %v873 = vmax.f32 %v737, 0.0
      %v874 = vmax.f32 %v740, 0.0
      %v875 = vmax.f32 %v745, 0.0
      %v876 = vmax.f32 %v748, 0.0
      %v877 = vmax.f32 %v753, 0.0
      %v878 = vmax.f32 %v756, 0.0
      %v879 = vmax.f32 %v761, 0.0
      %v880 = vmax.f32 %v764, 0.0
      %v881 = vmax.f32 %v769, 0.0
      %v882 = vmax.f32 %v772, 0.0
      %v883 = vmax.f32 %v777, 0.0
      %v884 = vmax.f32 %v780, 0.0
      %v885 = vmax.f32 %v785, 0.0
      %v886 = vmax.f32 %v788, 0.0
      %v887 = vmax.f32 %v793, 0.0
      %v888 = vmax.f32 %v796, 0.0
      %v889 = vmax.f32 %v801, 0.0
      %v890 = vmax.f32 %v804, 0.0
      %v891 = vmax.f32 %v809, 0.0
      %v892 = vmax.f32 %v812, 0.0
      %v893 = vmax.f32 %v817, 0.0
      %v894 = vmax.f32 %v820, 0.0
      %v895 = vmax.f32 %v825, 0.0
      %v896 = vmax.f32 %v828, 0.0
      %v897 = vmax.f32 %v833, 0.0
      %v898 = vmax.f32 %v836, 0.0
      %v899 = vmax.f32 %v841, 0.0
      %v900 = vmax.f32 %v844, 0.0
      %v901 = vmax.f32 %v849, 0.0
      %v902 = vmax.f32 %v852, 0.0
      %vm903 = vcmp.gt.f32.partialorder %v364, 0.0
      %vm904 = vcmp.gt.f32.partialorder %v365, 0.0
      %vm905 = vcmp.gt.f32.partialorder %v366, 0.0
      %vm906 = vcmp.gt.f32.partialorder %v367, 0.0
      %vm907 = vcmp.gt.f32.partialorder %v368, 0.0
      %vm908 = vcmp.gt.f32.partialorder %v369, 0.0
      %vm909 = vcmp.gt.f32.partialorder %v370, 0.0
      %vm910 = vcmp.gt.f32.partialorder %v371, 0.0
      %vm911 = vcmp.gt.f32.partialorder %v372, 0.0
      %vm912 = vcmp.gt.f32.partialorder %v373, 0.0
      %vm913 = vcmp.gt.f32.partialorder %v374, 0.0
      %vm914 = vcmp.gt.f32.partialorder %v375, 0.0
      %vm915 = vcmp.gt.f32.partialorder %v376, 0.0
      %vm916 = vcmp.gt.f32.partialorder %v377, 0.0
      %vm917 = vcmp.gt.f32.partialorder %v378, 0.0
      %vm918 = vcmp.gt.f32.partialorder %v379, 0.0
      %vm919 = vcmp.gt.f32.partialorder %v380, 0.0
      %vm920 = vcmp.gt.f32.partialorder %v381, 0.0
      %vm921 = vcmp.gt.f32.partialorder %v382, 0.0
      %vm922 = vcmp.gt.f32.partialorder %v383, 0.0
      %vm923 = vcmp.gt.f32.partialorder %v384, 0.0
      %vm924 = vcmp.gt.f32.partialorder %v385, 0.0
      %vm925 = vcmp.gt.f32.partialorder %v386, 0.0
      %vm926 = vcmp.gt.f32.partialorder %v387, 0.0
      %vm927 = vcmp.gt.f32.partialorder %v388, 0.0
      %vm928 = vcmp.gt.f32.partialorder %v389, 0.0
      %vm929 = vcmp.gt.f32.partialorder %v390, 0.0
      %vm930 = vcmp.gt.f32.partialorder %v391, 0.0
      %vm931 = vcmp.gt.f32.partialorder %v392, 0.0
      %vm932 = vcmp.gt.f32.partialorder %v393, 0.0
      %vm933 = vcmp.gt.f32.partialorder %v394, 0.0
      %vm934 = vcmp.gt.f32.partialorder %v395, 0.0
      %vm935 = vcmp.gt.f32.partialorder %v396, 0.0
      %vm936 = vcmp.gt.f32.partialorder %v397, 0.0
      %vm937 = vcmp.gt.f32.partialorder %v398, 0.0
      %vm938 = vcmp.gt.f32.partialorder %v399, 0.0
      %vm939 = vcmp.gt.f32.partialorder %v400, 0.0
      %vm940 = vcmp.gt.f32.partialorder %v401, 0.0
      %vm941 = vcmp.gt.f32.partialorder %v402, 0.0
      %vm942 = vcmp.gt.f32.partialorder %v403, 0.0
      %vm943 = vcmp.gt.f32.partialorder %v404, 0.0
      %vm944 = vcmp.gt.f32.partialorder %v405, 0.0
      %vm945 = vcmp.gt.f32.partialorder %v406, 0.0
      %vm946 = vcmp.gt.f32.partialorder %v407, 0.0
      %vm947 = vcmp.gt.f32.partialorder %v408, 0.0
      %vm948 = vcmp.gt.f32.partialorder %v409, 0.0
      %vm949 = vcmp.gt.f32.partialorder %v410, 0.0
      %vm950 = vcmp.gt.f32.partialorder %v411, 0.0
      %v951 = vsel %vm903, 1, 0
      %v952 = vsel %vm904, 1, 0
      %v953 = vsel %vm905, 1, 0
      %v954 = vsel %vm906, 1, 0
      %v955 = vsel %vm907, 1, 0
      %v956 = vsel %vm908, 1, 0
      %v957 = vsel %vm909, 1, 0
      %v958 = vsel %vm910, 1, 0
      %v959 = vsel %vm911, 1, 0
      %v960 = vsel %vm912, 1, 0
      %v961 = vsel %vm913, 1, 0
      %v962 = vsel %vm914, 1, 0
      %v963 = vsel %vm915, 1, 0
      %v964 = vsel %vm916, 1, 0
      %v965 = vsel %vm917, 1, 0
      %v966 = vsel %vm918, 1, 0
      %v967 = vsel %vm919, 1, 0
      %v968 = vsel %vm920, 1, 0
      %v969 = vsel %vm921, 1, 0
      %v970 = vsel %vm922, 1, 0
      %v971 = vsel %vm923, 1, 0
      %v972 = vsel %vm924, 1, 0
      %v973 = vsel %vm925, 1, 0
      %v974 = vsel %vm926, 1, 0
      %v975 = vsel %vm927, 1, 0
      %v976 = vsel %vm928, 1, 0
      %v977 = vsel %vm929, 1, 0
      %v978 = vsel %vm930, 1, 0
      %v979 = vsel %vm931, 1, 0
      %v980 = vsel %vm932, 1, 0
      %v981 = vsel %vm933, 1, 0
      %v982 = vsel %vm934, 1, 0
      %v983 = vsel %vm935, 1, 0
      %v984 = vsel %vm936, 1, 0
      %v985 = vsel %vm937, 1, 0
      %v986 = vsel %vm938, 1, 0
      %v987 = vsel %vm939, 1, 0
      %v988 = vsel %vm940, 1, 0
      %v989 = vsel %vm941, 1, 0
      %v990 = vsel %vm942, 1, 0
      %v991 = vsel %vm943, 1, 0
      %v992 = vsel %vm944, 1, 0
      %v993 = vsel %vm945, 1, 0
      %v994 = vsel %vm946, 1, 0
      %v995 = vsel %vm947, 1, 0
      %v996 = vsel %vm948, 1, 0
      %v997 = vsel %vm949, 1, 0
      %v998 = vsel %vm950, 1, 0
      %999 = vset.pattern.permute.xlu0 0
      %1000 = vperm.xlu0 %999, %v951
      %v1001 = vpop.permute.xlu0 %1000
      %1002 = vset.pattern.permute.xlu0 0
      %1003 = vperm.xlu0 %1002, %v952
      %v1004 = vpop.permute.xlu0 %1003
      %1005 = vset.pattern.permute.xlu0 0
      %1006 = vperm.xlu0 %1005, %v953
      %v1007 = vpop.permute.xlu0 %1006
      %1008 = vset.pattern.permute.xlu0 0
      %1009 = vperm.xlu0 %1008, %v954
      %v1010 = vpop.permute.xlu0 %1009
      %1011 = vset.pattern.permute.xlu0 0
      %1012 = vperm.xlu0 %1011, %v955
      %v1013 = vpop.permute.xlu0 %1012
      %1014 = vset.pattern.permute.xlu0 0
      %1015 = vperm.xlu0 %1014, %v956
      %v1016 = vpop.permute.xlu0 %1015
      %1017 = vset.pattern.permute.xlu0 0
      %1018 = vperm.xlu0 %1017, %v957
      %v1019 = vpop.permute.xlu0 %1018
      %1020 = vset.pattern.permute.xlu0 0
      %1021 = vperm.xlu0 %1020, %v958
      %v1022 = vpop.permute.xlu0 %1021
      %1023 = vset.pattern.permute.xlu0 0
      %1024 = vperm.xlu0 %1023, %v959
      %v1025 = vpop.permute.xlu0 %1024
      %1026 = vset.pattern.permute.xlu0 0
      %1027 = vperm.xlu0 %1026, %v960
      %v1028 = vpop.permute.xlu0 %1027
      %1029 = vset.pattern.permute.xlu0 0
      %1030 = vperm.xlu0 %1029, %v961
      %v1031 = vpop.permute.xlu0 %1030
      %1032 = vset.pattern.permute.xlu0 0
      %1033 = vperm.xlu0 %1032, %v962
      %v1034 = vpop.permute.xlu0 %1033
      %1035 = vset.pattern.permute.xlu0 0
      %1036 = vperm.xlu0 %1035, %v963
      %v1037 = vpop.permute.xlu0 %1036
      %1038 = vset.pattern.permute.xlu0 0
      %1039 = vperm.xlu0 %1038, %v964
      %v1040 = vpop.permute.xlu0 %1039
      %1041 = vset.pattern.permute.xlu0 0
      %1042 = vperm.xlu0 %1041, %v965
      %v1043 = vpop.permute.xlu0 %1042
      %1044 = vset.pattern.permute.xlu0 0
      %1045 = vperm.xlu0 %1044, %v966
      %v1046 = vpop.permute.xlu0 %1045
      %1047 = vset.pattern.permute.xlu0 0
      %1048 = vperm.xlu0 %1047, %v967
      %v1049 = vpop.permute.xlu0 %1048
      %1050 = vset.pattern.permute.xlu0 0
      %1051 = vperm.xlu0 %1050, %v968
      %v1052 = vpop.permute.xlu0 %1051
      %1053 = vset.pattern.permute.xlu0 0
      %1054 = vperm.xlu0 %1053, %v969
      %v1055 = vpop.permute.xlu0 %1054
      %1056 = vset.pattern.permute.xlu0 0
      %1057 = vperm.xlu0 %1056, %v970
      %v1058 = vpop.permute.xlu0 %1057
      %1059 = vset.pattern.permute.xlu0 0
      %1060 = vperm.xlu0 %1059, %v971
      %v1061 = vpop.permute.xlu0 %1060
      %1062 = vset.pattern.permute.xlu0 0
      %1063 = vperm.xlu0 %1062, %v972
      %v1064 = vpop.permute.xlu0 %1063
      %1065 = vset.pattern.permute.xlu0 0
      %1066 = vperm.xlu0 %1065, %v973
      %v1067 = vpop.permute.xlu0 %1066
      %1068 = vset.pattern.permute.xlu0 0
      %1069 = vperm.xlu0 %1068, %v974
      %v1070 = vpop.permute.xlu0 %1069
      %1071 = vset.pattern.permute.xlu0 0
      %1072 = vperm.xlu0 %1071, %v975
      %v1073 = vpop.permute.xlu0 %1072
      %1074 = vset.pattern.permute.xlu0 0
      %1075 = vperm.xlu0 %1074, %v976
      %v1076 = vpop.permute.xlu0 %1075
      %1077 = vset.pattern.permute.xlu0 0
      %1078 = vperm.xlu0 %1077, %v977
      %v1079 = vpop.permute.xlu0 %1078
      %1080 = vset.pattern.permute.xlu0 0
      %1081 = vperm.xlu0 %1080, %v978
      %v1082 = vpop.permute.xlu0 %1081
      %1083 = vset.pattern.permute.xlu0 0
      %1084 = vperm.xlu0 %1083, %v979
      %v1085 = vpop.permute.xlu0 %1084
      %1086 = vset.pattern.permute.xlu0 0
      %1087 = vperm.xlu0 %1086, %v980
      %v1088 = vpop.permute.xlu0 %1087
      %1089 = vset.pattern.permute.xlu0 0
      %1090 = vperm.xlu0 %1089, %v981
      %v1091 = vpop.permute.xlu0 %1090
      %1092 = vset.pattern.permute.xlu0 0
      %1093 = vperm.xlu0 %1092, %v982
      %v1094 = vpop.permute.xlu0 %1093
      %1095 = vset.pattern.permute.xlu0 0
      %1096 = vperm.xlu0 %1095, %v983
      %v1097 = vpop.permute.xlu0 %1096
      %1098 = vset.pattern.permute.xlu0 0
      %1099 = vperm.xlu0 %1098, %v984
      %v1100 = vpop.permute.xlu0 %1099
      %1101 = vset.pattern.permute.xlu0 0
      %1102 = vperm.xlu0 %1101, %v985
      %v1103 = vpop.permute.xlu0 %1102
      %1104 = vset.pattern.permute.xlu0 0
      %1105 = vperm.xlu0 %1104, %v986
      %v1106 = vpop.permute.xlu0 %1105
      %1107 = vset.pattern.permute.xlu0 0
      %1108 = vperm.xlu0 %1107, %v987
      %v1109 = vpop.permute.xlu0 %1108
      %1110 = vset.pattern.permute.xlu0 0
      %1111 = vperm.xlu0 %1110, %v988
      %v1112 = vpop.permute.xlu0 %1111
      %1113 = vset.pattern.permute.xlu0 0
      %1114 = vperm.xlu0 %1113, %v989
      %v1115 = vpop.permute.xlu0 %1114
      %1116 = vset.pattern.permute.xlu0 0
      %1117 = vperm.xlu0 %1116, %v990
      %v1118 = vpop.permute.xlu0 %1117
      %1119 = vset.pattern.permute.xlu0 0
      %1120 = vperm.xlu0 %1119, %v991
      %v1121 = vpop.permute.xlu0 %1120
      %1122 = vset.pattern.permute.xlu0 0
      %1123 = vperm.xlu0 %1122, %v992
      %v1124 = vpop.permute.xlu0 %1123
      %1125 = vset.pattern.permute.xlu0 0
      %1126 = vperm.xlu0 %1125, %v993
      %v1127 = vpop.permute.xlu0 %1126
      %1128 = vset.pattern.permute.xlu0 0
      %1129 = vperm.xlu0 %1128, %v994
      %v1130 = vpop.permute.xlu0 %1129
      %1131 = vset.pattern.permute.xlu0 0
      %1132 = vperm.xlu0 %1131, %v995
      %v1133 = vpop.permute.xlu0 %1132
      %1134 = vset.pattern.permute.xlu0 0
      %1135 = vperm.xlu0 %1134, %v996
      %v1136 = vpop.permute.xlu0 %1135
      %1137 = vset.pattern.permute.xlu0 0
      %1138 = vperm.xlu0 %1137, %v997
      %v1139 = vpop.permute.xlu0 %1138
      %1140 = vset.pattern.permute.xlu0 0
      %1141 = vperm.xlu0 %1140, %v998
      %v1142 = vpop.permute.xlu0 %1141
      %vm1143 = vcmp.eq.s32.totalorder %v1001, 1
      %vm1144 = vcmp.eq.s32.totalorder %v1004, 1
      %vm1145 = vcmp.eq.s32.totalorder %v1007, 1
      %vm1146 = vcmp.eq.s32.totalorder %v1010, 1
      %vm1147 = vcmp.eq.s32.totalorder %v1013, 1
      %vm1148 = vcmp.eq.s32.totalorder %v1016, 1
      %vm1149 = vcmp.eq.s32.totalorder %v1019, 1
      %vm1150 = vcmp.eq.s32.totalorder %v1022, 1
      %vm1151 = vcmp.eq.s32.totalorder %v1025, 1
      %vm1152 = vcmp.eq.s32.totalorder %v1028, 1
      %vm1153 = vcmp.eq.s32.totalorder %v1031, 1
      %vm1154 = vcmp.eq.s32.totalorder %v1034, 1
      %vm1155 = vcmp.eq.s32.totalorder %v1037, 1
      %vm1156 = vcmp.eq.s32.totalorder %v1040, 1
      %vm1157 = vcmp.eq.s32.totalorder %v1043, 1
      %vm1158 = vcmp.eq.s32.totalorder %v1046, 1
      %vm1159 = vcmp.eq.s32.totalorder %v1049, 1
      %vm1160 = vcmp.eq.s32.totalorder %v1052, 1
      %vm1161 = vcmp.eq.s32.totalorder %v1055, 1
      %vm1162 = vcmp.eq.s32.totalorder %v1058, 1
      %vm1163 = vcmp.eq.s32.totalorder %v1061, 1
      %vm1164 = vcmp.eq.s32.totalorder %v1064, 1
      %vm1165 = vcmp.eq.s32.totalorder %v1067, 1
      %vm1166 = vcmp.eq.s32.totalorder %v1070, 1
      %vm1167 = vcmp.eq.s32.totalorder %v1073, 1
      %vm1168 = vcmp.eq.s32.totalorder %v1076, 1
      %vm1169 = vcmp.eq.s32.totalorder %v1079, 1
      %vm1170 = vcmp.eq.s32.totalorder %v1082, 1
      %vm1171 = vcmp.eq.s32.totalorder %v1085, 1
      %vm1172 = vcmp.eq.s32.totalorder %v1088, 1
      %vm1173 = vcmp.eq.s32.totalorder %v1091, 1
      %vm1174 = vcmp.eq.s32.totalorder %v1094, 1
      %vm1175 = vcmp.eq.s32.totalorder %v1097, 1
      %vm1176 = vcmp.eq.s32.totalorder %v1100, 1
      %vm1177 = vcmp.eq.s32.totalorder %v1103, 1
      %vm1178 = vcmp.eq.s32.totalorder %v1106, 1
      %vm1179 = vcmp.eq.s32.totalorder %v1109, 1
      %vm1180 = vcmp.eq.s32.totalorder %v1112, 1
      %vm1181 = vcmp.eq.s32.totalorder %v1115, 1
      %vm1182 = vcmp.eq.s32.totalorder %v1118, 1
      %vm1183 = vcmp.eq.s32.totalorder %v1121, 1
      %vm1184 = vcmp.eq.s32.totalorder %v1124, 1
      %vm1185 = vcmp.eq.s32.totalorder %v1127, 1
      %vm1186 = vcmp.eq.s32.totalorder %v1130, 1
      %vm1187 = vcmp.eq.s32.totalorder %v1133, 1
      %vm1188 = vcmp.eq.s32.totalorder %v1136, 1
      %vm1189 = vcmp.eq.s32.totalorder %v1139, 1
      %vm1190 = vcmp.eq.s32.totalorder %v1142, 1
      %v1191 = vsel %vm1143, %v855, 0.0
      %v1192 = vsel %vm1144, %v856, 0.0
      %v1193 = vsel %vm1145, %v857, 0.0
      %v1194 = vsel %vm1146, %v858, 0.0
      %v1195 = vsel %vm1147, %v859, 0.0
      %v1196 = vsel %vm1148, %v860, 0.0
      %v1197 = vsel %vm1149, %v861, 0.0
      %v1198 = vsel %vm1150, %v862, 0.0
      %v1199 = vsel %vm1151, %v863, 0.0
      %v1200 = vsel %vm1152, %v864, 0.0
      %v1201 = vsel %vm1153, %v865, 0.0
      %v1202 = vsel %vm1154, %v866, 0.0
      %v1203 = vsel %vm1155, %v867, 0.0
      %v1204 = vsel %vm1156, %v868, 0.0
      %v1205 = vsel %vm1157, %v869, 0.0
      %v1206 = vsel %vm1158, %v870, 0.0
      %v1207 = vsel %vm1159, %v871, 0.0
      %v1208 = vsel %vm1160, %v872, 0.0
      %v1209 = vsel %vm1161, %v873, 0.0
      %v1210 = vsel %vm1162, %v874, 0.0
      %v1211 = vsel %vm1163, %v875, 0.0
      %v1212 = vsel %vm1164, %v876, 0.0
      %v1213 = vsel %vm1165, %v877, 0.0
      %v1214 = vsel %vm1166, %v878, 0.0
      %v1215 = vsel %vm1167, %v879, 0.0
      %v1216 = vsel %vm1168, %v880, 0.0
      %v1217 = vsel %vm1169, %v881, 0.0
      %v1218 = vsel %vm1170, %v882, 0.0
      %v1219 = vsel %vm1171, %v883, 0.0
      %v1220 = vsel %vm1172, %v884, 0.0
      %v1221 = vsel %vm1173, %v885, 0.0
      %v1222 = vsel %vm1174, %v886, 0.0
      %v1223 = vsel %vm1175, %v887, 0.0
      %v1224 = vsel %vm1176, %v888, 0.0
      %v1225 = vsel %vm1177, %v889, 0.0
      %v1226 = vsel %vm1178, %v890, 0.0
      %v1227 = vsel %vm1179, %v891, 0.0
      %v1228 = vsel %vm1180, %v892, 0.0
      %v1229 = vsel %vm1181, %v893, 0.0
      %v1230 = vsel %vm1182, %v894, 0.0
      %v1231 = vsel %vm1183, %v895, 0.0
      %v1232 = vsel %vm1184, %v896, 0.0
      %v1233 = vsel %vm1185, %v897, 0.0
      %v1234 = vsel %vm1186, %v898, 0.0
      %v1235 = vsel %vm1187, %v899, 0.0
      %v1236 = vsel %vm1188, %v900, 0.0
      %v1237 = vsel %vm1189, %v901, 0.0
      %v1238 = vsel %vm1190, %v902, 0.0
      %v1239 = vadd.f32 %v1191, %v1192
      %v1240 = vadd.f32 %v1239, %v1193
      %v1241 = vadd.f32 %v1240, %v1194
      %v1242 = vadd.f32 %v1241, %v1195
      %v1243 = vadd.f32 %v1242, %v1196
      %v1244 = vadd.f32 %v1243, %v1197
      %v1245 = vadd.f32 %v1244, %v1198
      %v1246 = vadd.f32 %v1245, %v1199
      %v1247 = vadd.f32 %v1246, %v1200
      %v1248 = vadd.f32 %v1247, %v1201
      %v1249 = vadd.f32 %v1248, %v1202
      %v1250 = vadd.f32 %v1249, %v1203
      %v1251 = vadd.f32 %v1250, %v1204
      %v1252 = vadd.f32 %v1251, %v1205
      %v1253 = vadd.f32 %v1252, %v1206
      %v1254 = vadd.f32 %v1253, %v1207
      %v1255 = vadd.f32 %v1254, %v1208
      %v1256 = vadd.f32 %v1255, %v1209
      %v1257 = vadd.f32 %v1256, %v1210
      %v1258 = vadd.f32 %v1257, %v1211
      %v1259 = vadd.f32 %v1258, %v1212
      %v1260 = vadd.f32 %v1259, %v1213
      %v1261 = vadd.f32 %v1260, %v1214
      %v1262 = vadd.f32 %v1261, %v1215
      %v1263 = vadd.f32 %v1262, %v1216
      %v1264 = vadd.f32 %v1263, %v1217
      %v1265 = vadd.f32 %v1264, %v1218
      %v1266 = vadd.f32 %v1265, %v1219
      %v1267 = vadd.f32 %v1266, %v1220
      %v1268 = vadd.f32 %v1267, %v1221
      %v1269 = vadd.f32 %v1268, %v1222
      %v1270 = vadd.f32 %v1269, %v1223
      %v1271 = vadd.f32 %v1270, %v1224
      %v1272 = vadd.f32 %v1271, %v1225
      %v1273 = vadd.f32 %v1272, %v1226
      %v1274 = vadd.f32 %v1273, %v1227
      %v1275 = vadd.f32 %v1274, %v1228
      %v1276 = vadd.f32 %v1275, %v1229
      %v1277 = vadd.f32 %v1276, %v1230
      %v1278 = vadd.f32 %v1277, %v1231
      %v1279 = vadd.f32 %v1278, %v1232
      %v1280 = vadd.f32 %v1279, %v1233
      %v1281 = vadd.f32 %v1280, %v1234
      %v1282 = vadd.f32 %v1281, %v1235
      %v1283 = vadd.f32 %v1282, %v1236
      %v1284 = vadd.f32 %v1283, %v1237
      %v1285 = vadd.f32 %v1284, %v1238
      %v1286 = vrot.slane %v1285, 4
      %v1287 = vadd.f32 %v1285, %v1286
      %v1288 = vrot.slane %v1287, 2
      %v1289 = vadd.f32 %v1287, %v1288
      %v1290 = vrot.slane %v1289, 1
      %v1291 = vadd.f32 %v1289, %v1290
      %v1292 = vmul.f32 %v1191, %v1191
      %v1293 = vmul.f32 %v1192, %v1192
      %v1294 = vmul.f32 %v1193, %v1193
      %v1295 = vmul.f32 %v1194, %v1194
      %v1296 = vmul.f32 %v1195, %v1195
      %v1297 = vmul.f32 %v1196, %v1196
      %v1298 = vmul.f32 %v1197, %v1197
      %v1299 = vmul.f32 %v1198, %v1198
      %v1300 = vmul.f32 %v1199, %v1199
      %v1301 = vmul.f32 %v1200, %v1200
      %v1302 = vmul.f32 %v1201, %v1201
      %v1303 = vmul.f32 %v1202, %v1202
      %v1304 = vmul.f32 %v1203, %v1203
      %v1305 = vmul.f32 %v1204, %v1204
      %v1306 = vmul.f32 %v1205, %v1205
      %v1307 = vmul.f32 %v1206, %v1206
      %v1308 = vmul.f32 %v1207, %v1207
      %v1309 = vmul.f32 %v1208, %v1208
      %v1310 = vmul.f32 %v1209, %v1209
      %v1311 = vmul.f32 %v1210, %v1210
      %v1312 = vmul.f32 %v1211, %v1211
      %v1313 = vmul.f32 %v1212, %v1212
      %v1314 = vmul.f32 %v1213, %v1213
      %v1315 = vmul.f32 %v1214, %v1214
      %v1316 = vmul.f32 %v1215, %v1215
      %v1317 = vmul.f32 %v1216, %v1216
      %v1318 = vmul.f32 %v1217, %v1217
      %v1319 = vmul.f32 %v1218, %v1218
      %v1320 = vmul.f32 %v1219, %v1219
      %v1321 = vmul.f32 %v1220, %v1220
      %v1322 = vmul.f32 %v1221, %v1221
      %v1323 = vmul.f32 %v1222, %v1222
      %v1324 = vmul.f32 %v1223, %v1223
      %v1325 = vmul.f32 %v1224, %v1224
      %v1326 = vmul.f32 %v1225, %v1225
      %v1327 = vmul.f32 %v1226, %v1226
      %v1328 = vmul.f32 %v1227, %v1227
      %v1329 = vmul.f32 %v1228, %v1228
      %v1330 = vmul.f32 %v1229, %v1229
      %v1331 = vmul.f32 %v1230, %v1230
      %v1332 = vmul.f32 %v1231, %v1231
      %v1333 = vmul.f32 %v1232, %v1232
      %v1334 = vmul.f32 %v1233, %v1233
      %v1335 = vmul.f32 %v1234, %v1234
      %v1336 = vmul.f32 %v1235, %v1235
      %v1337 = vmul.f32 %v1236, %v1236
      %v1338 = vmul.f32 %v1237, %v1237
      %v1339 = vmul.f32 %v1238, %v1238
      %v1340 = vadd.f32 %v1292, %v1293
      %v1341 = vadd.f32 %v1340, %v1294
      %v1342 = vadd.f32 %v1341, %v1295
      %v1343 = vadd.f32 %v1342, %v1296
      %v1344 = vadd.f32 %v1343, %v1297
      %v1345 = vadd.f32 %v1344, %v1298
      %v1346 = vadd.f32 %v1345, %v1299
      %v1347 = vadd.f32 %v1346, %v1300
      %v1348 = vadd.f32 %v1347, %v1301
      %v1349 = vadd.f32 %v1348, %v1302
      %v1350 = vadd.f32 %v1349, %v1303
      %v1351 = vadd.f32 %v1350, %v1304
      %v1352 = vadd.f32 %v1351, %v1305
      %v1353 = vadd.f32 %v1352, %v1306
      %v1354 = vadd.f32 %v1353, %v1307
      %v1355 = vadd.f32 %v1354, %v1308
      %v1356 = vadd.f32 %v1355, %v1309
      %v1357 = vadd.f32 %v1356, %v1310
      %v1358 = vadd.f32 %v1357, %v1311
      %v1359 = vadd.f32 %v1358, %v1312
      %v1360 = vadd.f32 %v1359, %v1313
      %v1361 = vadd.f32 %v1360, %v1314
      %v1362 = vadd.f32 %v1361, %v1315
      %v1363 = vadd.f32 %v1362, %v1316
      %v1364 = vadd.f32 %v1363, %v1317
      %v1365 = vadd.f32 %v1364, %v1318
      %v1366 = vadd.f32 %v1365, %v1319
      %v1367 = vadd.f32 %v1366, %v1320
      %v1368 = vadd.f32 %v1367, %v1321
      %v1369 = vadd.f32 %v1368, %v1322
      %v1370 = vadd.f32 %v1369, %v1323
      %v1371 = vadd.f32 %v1370, %v1324
      %v1372 = vadd.f32 %v1371, %v1325
      %v1373 = vadd.f32 %v1372, %v1326
      %v1374 = vadd.f32 %v1373, %v1327
      %v1375 = vadd.f32 %v1374, %v1328
      %v1376 = vadd.f32 %v1375, %v1329
      %v1377 = vadd.f32 %v1376, %v1330
      %v1378 = vadd.f32 %v1377, %v1331
      %v1379 = vadd.f32 %v1378, %v1332
      %v1380 = vadd.f32 %v1379, %v1333
      %v1381 = vadd.f32 %v1380, %v1334
      %v1382 = vadd.f32 %v1381, %v1335
      %v1383 = vadd.f32 %v1382, %v1336
      %v1384 = vadd.f32 %v1383, %v1337
      %v1385 = vadd.f32 %v1384, %v1338
      %v1386 = vadd.f32 %v1385, %v1339
      %v1387 = vrot.slane %v1386, 4
      %v1388 = vadd.f32 %v1386, %v1387
      %v1389 = vrot.slane %v1388, 2
      %v1390 = vadd.f32 %v1388, %v1389
      %v1391 = vrot.slane %v1390, 1
      %v1392 = vadd.f32 %v1390, %v1391
      %vm1393 = vcmask 1040384
      %v1394 = vsel %vm1393, %v1291, %v1392
      %v1395 = vpack.c.bf16 %v1192, %v1191
      %v1396 = vpack.c.bf16 %v1194, %v1193
      %v1397 = vpack.c.bf16 %v1196, %v1195
      %v1398 = vpack.c.bf16 %v1198, %v1197
      %v1399 = vpack.c.bf16 %v1200, %v1199
      %v1400 = vpack.c.bf16 %v1202, %v1201
      %v1401 = vpack.c.bf16 %v1204, %v1203
      %v1402 = vpack.c.bf16 %v1206, %v1205
      %v1403 = vpack.c.bf16 %v1208, %v1207
      %v1404 = vpack.c.bf16 %v1210, %v1209
      %v1405 = vpack.c.bf16 %v1212, %v1211
      %v1406 = vpack.c.bf16 %v1214, %v1213
      %v1407 = vpack.c.bf16 %v1216, %v1215
      %v1408 = vpack.c.bf16 %v1218, %v1217
      %v1409 = vpack.c.bf16 %v1220, %v1219
      %v1410 = vpack.c.bf16 %v1222, %v1221
      %v1411 = vpack.c.bf16 %v1224, %v1223
      %v1412 = vpack.c.bf16 %v1226, %v1225
      %v1413 = vpack.c.bf16 %v1228, %v1227
      %v1414 = vpack.c.bf16 %v1230, %v1229
      %v1415 = vpack.c.bf16 %v1232, %v1231
      %v1416 = vpack.c.bf16 %v1234, %v1233
      %v1417 = vpack.c.bf16 %v1236, %v1235
      %v1418 = vpack.c.bf16 %v1238, %v1237
      %v1443 = vunpack.c.l.b16 %v1395
      %v1444 = vunpack.c.h.b16 %v1395
      %v1445 = vunpack.c.l.b16 %v1396
      %v1446 = vunpack.c.h.b16 %v1396
      %v1447 = vunpack.c.l.b16 %v1397
      %v1448 = vunpack.c.h.b16 %v1397
      %v1449 = vunpack.c.l.b16 %v1398
      %v1450 = vunpack.c.h.b16 %v1398
      %v1451 = vunpack.c.l.b16 %v1399
      %v1452 = vunpack.c.h.b16 %v1399
      %v1453 = vunpack.c.l.b16 %v1400
      %v1454 = vunpack.c.h.b16 %v1400
      %v1455 = vunpack.c.l.b16 %v1401
      %v1456 = vunpack.c.h.b16 %v1401
      %v1457 = vunpack.c.l.b16 %v1402
      %v1458 = vunpack.c.h.b16 %v1402
      %v1459 = vunpack.c.l.b16 %v1403
      %v1460 = vunpack.c.h.b16 %v1403
      %v1461 = vunpack.c.l.b16 %v1404
      %v1462 = vunpack.c.h.b16 %v1404
      %v1463 = vunpack.c.l.b16 %v1405
      %v1464 = vunpack.c.h.b16 %v1405
      %v1465 = vunpack.c.l.b16 %v1406
      %v1466 = vunpack.c.h.b16 %v1406
      %v1467 = vunpack.c.l.b16 %v1407
      %v1468 = vunpack.c.h.b16 %v1407
      %v1469 = vunpack.c.l.b16 %v1408
      %v1470 = vunpack.c.h.b16 %v1408
      %v1471 = vunpack.c.l.b16 %v1409
      %v1472 = vunpack.c.h.b16 %v1409
      %v1473 = vunpack.c.l.b16 %v1410
      %v1474 = vunpack.c.h.b16 %v1410
      %v1475 = vunpack.c.l.b16 %v1411
      %v1476 = vunpack.c.h.b16 %v1411
      %v1477 = vunpack.c.l.b16 %v1412
      %v1478 = vunpack.c.h.b16 %v1412
      %v1479 = vunpack.c.l.b16 %v1413
      %v1480 = vunpack.c.h.b16 %v1413
      %v1481 = vunpack.c.l.b16 %v1414
      %v1482 = vunpack.c.h.b16 %v1414
      %v1483 = vunpack.c.l.b16 %v1415
      %v1484 = vunpack.c.h.b16 %v1415
      %v1485 = vunpack.c.l.b16 %v1416
      %v1486 = vunpack.c.h.b16 %v1416
      %v1487 = vunpack.c.l.b16 %v1417
      %v1488 = vunpack.c.h.b16 %v1417
      %v1489 = vunpack.c.l.b16 %v1418
      %v1490 = vunpack.c.h.b16 %v1418
      %v1491 = vpack.c.b16 %v1443, %v1443
      %v1492 = vpack.c.b16 %v1444, %v1444
      %v1493 = vpack.c.b16 %v1445, %v1445
      %v1494 = vpack.c.b16 %v1446, %v1446
      %v1495 = vpack.c.b16 %v1447, %v1447
      %v1496 = vpack.c.b16 %v1448, %v1448
      %v1497 = vpack.c.b16 %v1449, %v1449
      %v1498 = vpack.c.b16 %v1450, %v1450
      %v1499 = vpack.c.b16 %v1451, %v1451
      %v1500 = vpack.c.b16 %v1452, %v1452
      %v1501 = vpack.c.b16 %v1453, %v1453
      %v1502 = vpack.c.b16 %v1454, %v1454
      %v1503 = vpack.c.b16 %v1455, %v1455
      %v1504 = vpack.c.b16 %v1456, %v1456
      %v1505 = vpack.c.b16 %v1457, %v1457
      %v1506 = vpack.c.b16 %v1458, %v1458
      %v1507 = vpack.c.b16 %v1459, %v1459
      %v1508 = vpack.c.b16 %v1460, %v1460
      %v1509 = vpack.c.b16 %v1461, %v1461
      %v1510 = vpack.c.b16 %v1462, %v1462
      %v1511 = vpack.c.b16 %v1463, %v1463
      %v1512 = vpack.c.b16 %v1464, %v1464
      %v1513 = vpack.c.b16 %v1465, %v1465
      %v1514 = vpack.c.b16 %v1466, %v1466
      %v1515 = vpack.c.b16 %v1467, %v1467
      %v1516 = vpack.c.b16 %v1468, %v1468
      %v1517 = vpack.c.b16 %v1469, %v1469
      %v1518 = vpack.c.b16 %v1470, %v1470
      %v1519 = vpack.c.b16 %v1471, %v1471
      %v1520 = vpack.c.b16 %v1472, %v1472
      %v1521 = vpack.c.b16 %v1473, %v1473
      %v1522 = vpack.c.b16 %v1474, %v1474
      %v1523 = vpack.c.b16 %v1475, %v1475
      %v1524 = vpack.c.b16 %v1476, %v1476
      %v1525 = vpack.c.b16 %v1477, %v1477
      %v1526 = vpack.c.b16 %v1478, %v1478
      %v1527 = vpack.c.b16 %v1479, %v1479
      %v1528 = vpack.c.b16 %v1480, %v1480
      %v1529 = vpack.c.b16 %v1481, %v1481
      %v1530 = vpack.c.b16 %v1482, %v1482
      %v1531 = vpack.c.b16 %v1483, %v1483
      %v1532 = vpack.c.b16 %v1484, %v1484
      %v1533 = vpack.c.b16 %v1485, %v1485
      %v1534 = vpack.c.b16 %v1486, %v1486
      %v1535 = vpack.c.b16 %v1487, %v1487
      %v1536 = vpack.c.b16 %v1488, %v1488
      %v1537 = vpack.c.b16 %v1489, %v1489
      %v1538 = vpack.c.b16 %v1490, %v1490
      %1587 = vst [vmem:[%s301] sm:$0xf] %v1491
      %1588 = vst [vmem:[%s301 + $0x4] sm:$0xf] %v1492
      %1589 = vst [vmem:[%s301 + $0x8] sm:$0xf] %v1493
      %1590 = vst [vmem:[%s301 + $0xc] sm:$0xf] %v1494
      %1591 = vst [vmem:[%s301 + $0x10] sm:$0xf] %v1495
      %1592 = vst [vmem:[%s301 + $0x14] sm:$0xf] %v1496
      %1593 = vst [vmem:[%s301 + $0x18] sm:$0xf] %v1497
      %1594 = vst [vmem:[%s301 + $0x1c] sm:$0xf] %v1498
      %1595 = vst [vmem:[%s301 + $0x20] sm:$0xf] %v1499
      %1596 = vst [vmem:[%s301 + $0x24] sm:$0xf] %v1500
      %1597 = vst [vmem:[%s301 + $0x28] sm:$0xf] %v1501
      %1598 = vst [vmem:[%s301 + $0x2c] sm:$0xf] %v1502
      %1599 = vst [vmem:[%s301 + $0x30] sm:$0xf] %v1503
      %1600 = vst [vmem:[%s301 + $0x34] sm:$0xf] %v1504
      %1601 = vst [vmem:[%s301 + $0x38] sm:$0xf] %v1505
      %1602 = vst [vmem:[%s301 + $0x3c] sm:$0xf] %v1506
      %1603 = vst [vmem:[%s301 + $0x40] sm:$0xf] %v1507
      %1604 = vst [vmem:[%s301 + $0x44] sm:$0xf] %v1508
      %1605 = vst [vmem:[%s301 + $0x48] sm:$0xf] %v1509
      %1606 = vst [vmem:[%s301 + $0x4c] sm:$0xf] %v1510
      %1607 = vst [vmem:[%s301 + $0x50] sm:$0xf] %v1511
      %1608 = vst [vmem:[%s301 + $0x54] sm:$0xf] %v1512
      %1609 = vst [vmem:[%s301 + $0x58] sm:$0xf] %v1513
      %1610 = vst [vmem:[%s301 + $0x5c] sm:$0xf] %v1514
      %1611 = vst [vmem:[%s301 + $0x60] sm:$0xf] %v1515
      %1612 = vst [vmem:[%s301 + $0x64] sm:$0xf] %v1516
      %1613 = vst [vmem:[%s301 + $0x68] sm:$0xf] %v1517
      %1614 = vst [vmem:[%s301 + $0x6c] sm:$0xf] %v1518
      %1615 = vst [vmem:[%s301 + $0x70] sm:$0xf] %v1519
      %1616 = vst [vmem:[%s301 + $0x74] sm:$0xf] %v1520
      %1617 = vst [vmem:[%s301 + $0x78] sm:$0xf] %v1521
      %1618 = vst [vmem:[%s301 + $0x7c] sm:$0xf] %v1522
      %1619 = vst [vmem:[%s301 + $0x80] sm:$0xf] %v1523
      %1620 = vst [vmem:[%s301 + $0x84] sm:$0xf] %v1524
      %1621 = vst [vmem:[%s301 + $0x88] sm:$0xf] %v1525
      %1622 = vst [vmem:[%s301 + $0x8c] sm:$0xf] %v1526
      %1623 = vst [vmem:[%s301 + $0x90] sm:$0xf] %v1527
      %1624 = vst [vmem:[%s301 + $0x94] sm:$0xf] %v1528
      %1625 = vst [vmem:[%s301 + $0x98] sm:$0xf] %v1529
      %1626 = vst [vmem:[%s301 + $0x9c] sm:$0xf] %v1530
      %1627 = vst [vmem:[%s301 + $0xa0] sm:$0xf] %v1531
      %1628 = vst [vmem:[%s301 + $0xa4] sm:$0xf] %v1532
      %1629 = vst [vmem:[%s301 + $0xa8] sm:$0xf] %v1533
      %1630 = vst [vmem:[%s301 + $0xac] sm:$0xf] %v1534
      %1631 = vst [vmem:[%s301 + $0xb0] sm:$0xf] %v1535
      %1632 = vst [vmem:[%s301 + $0xb4] sm:$0xf] %v1536
      %1633 = vst [vmem:[%s301 + $0xb8] sm:$0xf] %v1537
      %1634 = vst [vmem:[%s301 + $0xbc] sm:$0xf] %v1538
      %1635 = vst [vmem:[%s308] sm:$0x3] %v1394
      %p1636 = scmp.lt.s32.totalorder %s21, 1
      %s1637 = scalar_select %p1636, %s21, 1
      %p1638 = scmp.lt.s32.totalorder %s22, 0
      %s1639 = scalar_select %p1638, %s22, 0
      %s1640 = smul.addr %s1639, 48
      %s1641 = smul.addr %s1637, 48
      %s1642 = sadd.s32 %s1640, %s1641
      %s1643 = smul.addr %s1642, 4
      %s1644 = scalar_lea.vmem %s4, %s1643
      %p1645 = scmp.lt.s32.totalorder %s21, 1
      %s1646 = scalar_select %p1645, %s21, 1
      %p1647 = scmp.lt.s32.totalorder %s22, 0
      %s1648 = scalar_select %p1647, %s22, 0
      %s1649 = sadd.s32 %s1648, %s1646
      %s1650 = smul.addr %s1649, 2
      %s1651 = scalar_lea.vmem %s5, %s1650
      // Predicated region
      $region37: #{unet_conv_block.4} parent=35 // pred_check
        %p1652 = pneg %p147
      $region38: #{unet_conv_block.4} parent=35 // pred_check_branch
        %1654 = sbr.rel (%p1652) target = $region40
      $region39: #{unet_conv_block.4} parent=35 // pred_region
        _
      $region40: #{unet_conv_block.4} parent=35 // pred_fallthru
        _
      // Predicated region
      $region41: #{unet_conv_block.4} parent=35 // pred_check
        %p1655 = pneg %p175
      $region42: #{unet_conv_block.4} parent=35 // pred_check_branch
        %1657 = sbr.rel (%p1655) target = $region44
      $region43: #{unet_conv_block.4} parent=35 // pred_region
        _
      $region44: #{unet_conv_block.4} parent=35 // pred_fallthru
        _
    $region36: #{unet_conv_block.4} parent=5 // pred_fallthru
      _
    %p1658 = scmp.le.s32.totalorder 2, %s12
    // Predicated region
    $region45: #{unet_conv_block.4} parent=5 // pred_check
      %p1659 = pneg %p1658
    $region46: #{unet_conv_block.4} parent=5 // pred_check_branch
      %1661 = sbr.rel (%p1659) target = $region48
    $region47: #{unet_conv_block.4} parent=5 // pred_region
      %s1662 = ssub.s32 %s12, 2
      // Predicated region
      $region49: #{unet_conv_block.4} parent=47 // pred_check
        %p1663 = pneg %p153
      $region50: #{unet_conv_block.4} parent=47 // pred_check_branch
        %1665 = sbr.rel (%p1663) target = $region52
      $region51: #{unet_conv_block.4} parent=47 // pred_region
        %p1666 = scmp.lt.s32.totalorder %s23, 1
        %s1667 = scalar_select %p1666, %s23, 1
        %p1668 = scmp.lt.s32.totalorder %s24, 0
        %s1669 = scalar_select %p1668, %s24, 0
        %s1670 = smul.addr %s1669, 48
        %s1671 = smul.addr %s1667, 48
        %s1672 = sadd.s32 %s1670, %s1671
        %s1673 = smul.addr %s1672, 4
        %s1674 = scalar_lea.vmem %s4, %s1673
      $region52: #{unet_conv_block.4} parent=47 // pred_fallthru
        _
      // Predicated region
      $region53: #{unet_conv_block.4} parent=47 // pred_check
        %p1675 = pneg %p181
      $region54: #{unet_conv_block.4} parent=47 // pred_check_branch
        %1677 = sbr.rel (%p1675) target = $region56
      $region55: #{unet_conv_block.4} parent=47 // pred_region
        %p1678 = scmp.lt.s32.totalorder %s23, 1
        %s1679 = scalar_select %p1678, %s23, 1
        %p1680 = scmp.lt.s32.totalorder %s24, 0
        %s1681 = scalar_select %p1680, %s24, 0
        %s1682 = sadd.s32 %s1681, %s1679
        %s1683 = smul.addr %s1682, 2
        %s1684 = scalar_lea.vmem %s5, %s1683
      $region56: #{unet_conv_block.4} parent=47 // pred_fallthru
        _
    $region48: #{unet_conv_block.4} parent=5 // pred_fallthru
      _
  $region6: #{unet_conv_block.4} parent=0 // loop_footer
    %s16 = sadd.s32 1, %s12
  $region7: #{unet_conv_block.4} parent=0 // loop_footer_branch
    %11 = sbr.rel target = $region3
  $region8: #{unet_conv_block.4} parent=0 // loop_exit
    _

// kernel: unet_conv_block.7
$region0: #{unet_conv_block.7}
  #allocation0 [shape = 'u32[]', space=smem, size = 0x4, offset = 0x4, fixed_abs, tag = 'smem constant byte address 0x4 - core index']
  #allocation1 [shape = 'u32[144,128]{1,0:T(1,128)}', space=vmem, size = 0x12000, scoped, tag = 'internal scratch']
  %s0 = inlined_call_operand.vmem [shape: bf16[2,1,384,128], index: 0, kind: input, shape index: {}]
  %s1 = inlined_call_operand.vmem [shape: f32[3,384,1], index: 1, kind: input, shape index: {}]
  %s2 = inlined_call_operand.vmem [shape: f32[1,128], index: 2, kind: input, shape index: {}]
  %s3 = inlined_call_operand.vmem [shape: f32[1,128], index: 3, kind: input, shape index: {}]
  %s4 = inlined_call_operand.vmem [shape: f32[2,384,128], index: 4, kind: output, shape index: {}]
  %s5 = sld [smem:[#allocation0]]
  $region49: #{unet_conv_block.7} parent=0
    _
  %s7 = ssub.s32 1, %s5
  %s8 = scalar_select 0, %s7, %s5
  loop: start=0, step=1, limit=4
  $region2: #{unet_conv_block.7} parent=0 // loop_pre_header
    _
  $region3: #{unet_conv_block.7} parent=0 // loop_header
    %s10 = sphi 0, %s14
    %p11 = scmp.ge.s32.totalorder %s10, 4
    %s17 = sphi 0, %s29
    %s18 = sphi 0, %s25
    %s19 = sphi 0, %s17
    %s20 = sphi 0, %s18
    %s21 = sphi 0, %s19
    %s22 = sphi 0, %s20
    %s34 = sphi 0, %s36
    %s37 = sphi 0, %s34
    %s38 = sphi 0, %s37
    %s54 = sphi 0, %s38
    %s62 = sphi 0, %s64
    %s65 = sphi 0, %s62
    %s66 = sphi 0, %s65
    %s82 = sphi 0, %s66
    %s86 = sphi 0, %s86
    %s88 = sphi 0, %s86
    %s89 = sphi 0, %s88
    %s103 = sphi 0, %s89
    %s107 = sphi 0, %s107
    %s109 = sphi 0, %s107
    %s110 = sphi 0, %s109
    %s124 = sphi 0, %s110
    %s132 = sphi 0, %s134
    %s135 = sphi 0, %s132
    %s136 = sphi 0, %s135
    %s152 = sphi 0, %s136
  $region4: #{unet_conv_block.7} parent=0 // loop_header_branch
    %13 = sbr.rel (%p11) target = $region8
  $region5: #{unet_conv_block.7} parent=0 // loop_body
    %s15 = ssub.s32 %s10, 1
    %s16 = ssub.s32 %s10, 2
    %s23 = sadd.s32 1, %s18
    %p24 = scmp.ge.s32.totalorder %s23, 1
    %s25 = scalar_select %p24, 0, %s23
    %s26 = sadd.s32 1, %s17
    %s27 = scalar_select %p24, %s26, %s17
    %p28 = scmp.ge.s32.totalorder %s27, 2
    %s29 = scalar_select %p28, 0, %s27
    %s30 = ssub.s32 %s17, %s29
    %s31 = ssub.s32 %s18, %s25
    %s32 = sor.u32 %s30, %s31
    %p33 = scmp.eq.s32.totalorder %s32, 0
    %s35 = sadd.s32 %s34, 1
    %s36 = scalar_select %p33, %s34, %s35
    %p39 = pneg %p33
    %p40 = scmp.eq.s32.totalorder %s10, 1
    %p41 = por %p39, %p40
    %p42 = scmp.ne.s32.totalorder %s34, %s37
    %p43 = scmp.eq.s32.totalorder %s10, 0
    %p44 = por %p42, %p43
    %p45 = scmp.ne.s32.totalorder %s34, %s37
    %p46 = scmp.eq.s32.totalorder %s15, 1
    %p47 = por %p45, %p46
    %p48 = scmp.ne.s32.totalorder %s37, %s38
    %p49 = scmp.eq.s32.totalorder %s15, 0
    %p50 = por %p48, %p49
    %p51 = scmp.ne.s32.totalorder %s37, %s38
    %p52 = scmp.eq.s32.totalorder %s16, 1
    %p53 = por %p51, %p52
    %p55 = scmp.ne.s32.totalorder %s38, %s54
    %p56 = scmp.eq.s32.totalorder %s16, 0
    %p57 = por %p55, %p56
    %s58 = sadd.s32 %s18, 1
    %s59 = sadd.s32 %s25, 1
    %s60 = ssub.s32 %s58, %s59
    %p61 = scmp.eq.s32.totalorder %s60, 0
    %s63 = sadd.s32 %s62, 1
    %s64 = scalar_select %p61, %s62, %s63
    %p67 = pneg %p61
    %p68 = scmp.eq.s32.totalorder %s10, 1
    %p69 = por %p67, %p68
    %p70 = scmp.ne.s32.totalorder %s62, %s65
    %p71 = scmp.eq.s32.totalorder %s10, 0
    %p72 = por %p70, %p71
    %p73 = scmp.ne.s32.totalorder %s62, %s65
    %p74 = scmp.eq.s32.totalorder %s15, 1
    %p75 = por %p73, %p74
    %p76 = scmp.ne.s32.totalorder %s65, %s66
    %p77 = scmp.eq.s32.totalorder %s15, 0
    %p78 = por %p76, %p77
    %p79 = scmp.ne.s32.totalorder %s65, %s66
    %p80 = scmp.eq.s32.totalorder %s16, 1
    %p81 = por %p79, %p80
    %p83 = scmp.ne.s32.totalorder %s66, %s82
    %p84 = scmp.eq.s32.totalorder %s16, 0
    %p85 = por %p83, %p84
    %s87 = sadd.s32 %s86, 1
    %p90 = scmp.eq.s32.totalorder %s10, 1
    %p91 = scmp.ne.s32.totalorder %s86, %s88
    %p92 = scmp.eq.s32.totalorder %s10, 0
    %p93 = por %p91, %p92
    %p94 = scmp.ne.s32.totalorder %s86, %s88
    %p95 = scmp.eq.s32.totalorder %s15, 1
    %p96 = por %p94, %p95
    %p97 = scmp.ne.s32.totalorder %s88, %s89
    %p98 = scmp.eq.s32.totalorder %s15, 0
    %p99 = por %p97, %p98
    %p100 = scmp.ne.s32.totalorder %s88, %s89
    %p101 = scmp.eq.s32.totalorder %s16, 1
    %p102 = por %p100, %p101
    %p104 = scmp.ne.s32.totalorder %s89, %s103
    %p105 = scmp.eq.s32.totalorder %s16, 0
    %p106 = por %p104, %p105
    %s108 = sadd.s32 %s107, 1
    %p111 = scmp.eq.s32.totalorder %s10, 1
    %p112 = scmp.ne.s32.totalorder %s107, %s109
    %p113 = scmp.eq.s32.totalorder %s10, 0
    %p114 = por %p112, %p113
    %p115 = scmp.ne.s32.totalorder %s107, %s109
    %p116 = scmp.eq.s32.totalorder %s15, 1
    %p117 = por %p115, %p116
    %p118 = scmp.ne.s32.totalorder %s109, %s110
    %p119 = scmp.eq.s32.totalorder %s15, 0
    %p120 = por %p118, %p119
    %p121 = scmp.ne.s32.totalorder %s109, %s110
    %p122 = scmp.eq.s32.totalorder %s16, 1
    %p123 = por %p121, %p122
    %p125 = scmp.ne.s32.totalorder %s110, %s124
    %p126 = scmp.eq.s32.totalorder %s16, 0
    %p127 = por %p125, %p126
    %s128 = ssub.s32 %s17, %s29
    %s129 = ssub.s32 %s18, %s25
    %s130 = sor.u32 %s128, %s129
    %p131 = scmp.eq.s32.totalorder %s130, 0
    %s133 = sadd.s32 %s132, 1
    %s134 = scalar_select %p131, %s132, %s133
    %p137 = pneg %p131
    %p138 = scmp.eq.s32.totalorder %s10, 1
    %p139 = por %p137, %p138
    %p140 = scmp.ne.s32.totalorder %s132, %s135
    %p141 = scmp.eq.s32.totalorder %s10, 0
    %p142 = por %p140, %p141
    %p143 = scmp.ne.s32.totalorder %s132, %s135
    %p144 = scmp.eq.s32.totalorder %s15, 1
    %p145 = por %p143, %p144
    %p146 = scmp.ne.s32.totalorder %s135, %s136
    %p147 = scmp.eq.s32.totalorder %s15, 0
    %p148 = por %p146, %p147
    %p149 = scmp.ne.s32.totalorder %s135, %s136
    %p150 = scmp.eq.s32.totalorder %s16, 1
    %p151 = por %p149, %p150
    %p153 = scmp.ne.s32.totalorder %s136, %s152
    %p154 = scmp.eq.s32.totalorder %s16, 0
    %p155 = por %p153, %p154
    %p156 = scmp.le.s32.totalorder 1, %s10
    %p157 = scmp.lt.s32.totalorder %s10, 3
    %p158 = pnand %p156, %p157
    %p159 = pneg %p158
    // Predicated region
    $region9: #{unet_conv_block.7} parent=5 // pred_check
      _
    $region10: #{unet_conv_block.7} parent=5 // pred_check_branch
      %161 = sbr.rel (%p158) target = $region12
    $region11: #{unet_conv_block.7} parent=5 // pred_region
      %s162 = ssub.s32 %s10, 1
      // Predicated region
      $region13: #{unet_conv_block.7} parent=11 // pred_check
        %p163 = pneg %p78
      $region14: #{unet_conv_block.7} parent=11 // pred_check_branch
        %165 = sbr.rel (%p163) target = $region16
      $region15: #{unet_conv_block.7} parent=11 // pred_region
        %s166 = sadd.s32 %s20, 1
        %p167 = scmp.lt.s32.totalorder %s166, 2
        %s168 = scalar_select %p167, %s166, 2
        %s169 = smul.addr %s168, 48
        %s170 = smul.addr %s169, 8
        %s171 = scalar_lea.vmem %s1, %s170
        %s172 = sadd.s32 %s20, 1
      $region16: #{unet_conv_block.7} parent=11 // pred_fallthru
        _
      // Predicated region
      $region17: #{unet_conv_block.7} parent=11 // pred_check
        %p173 = pneg %p99
      $region18: #{unet_conv_block.7} parent=11 // pred_check_branch
        %175 = sbr.rel (%p173) target = $region20
      $region19: #{unet_conv_block.7} parent=11 // pred_region
        _
      $region20: #{unet_conv_block.7} parent=11 // pred_fallthru
        _
      // Predicated region
      $region21: #{unet_conv_block.7} parent=11 // pred_check
        %p176 = pneg %p120
      $region22: #{unet_conv_block.7} parent=11 // pred_check_branch
        %178 = sbr.rel (%p176) target = $region24
      $region23: #{unet_conv_block.7} parent=11 // pred_region
        _
      $region24: #{unet_conv_block.7} parent=11 // pred_fallthru
        _
    $region12: #{unet_conv_block.7} parent=5 // pred_fallthru
      _
    %p179 = scmp.lt.s32.totalorder %s10, 2
    // Predicated region
    $region25: #{unet_conv_block.7} parent=5 // pred_check
      %p180 = pneg %p179
    $region26: #{unet_conv_block.7} parent=5 // pred_check_branch
      %182 = sbr.rel (%p180) target = $region28
    $region27: #{unet_conv_block.7} parent=5 // pred_region
      // Predicated region
      $region29: #{unet_conv_block.7} parent=27 // pred_check
        %p183 = pneg %p44
      $region30: #{unet_conv_block.7} parent=27 // pred_check_branch
        %185 = sbr.rel (%p183) target = $region32
      $region31: #{unet_conv_block.7} parent=27 // pred_region
        %p186 = scmp.lt.s32.totalorder %s17, 1
        %s187 = scalar_select %p186, %s17, 1
        %p188 = scmp.lt.s32.totalorder %s18, 0
        %s189 = scalar_select %p188, %s18, 0
        %s190 = smul.addr %s189, 48
        %s191 = smul.addr %s187, 48
        %s192 = sadd.s32 %s190, %s191
        %s193 = smul.addr %s192, 4
        %s194 = scalar_lea.vmem %s0, %s193
      $region32: #{unet_conv_block.7} parent=27 // pred_fallthru
        _
    $region28: #{unet_conv_block.7} parent=5 // pred_fallthru
      _
    %p195 = scmp.le.s32.totalorder 1, %s10
    %p196 = scmp.lt.s32.totalorder %s10, 3
    %p197 = pnand %p195, %p196
    %p198 = pneg %p197
    // Predicated region
    $region33: #{unet_conv_block.7} parent=5 // pred_check
      _
    $region34: #{unet_conv_block.7} parent=5 // pred_check_branch
      %200 = sbr.rel (%p197) target = $region36
    $region35: #{unet_conv_block.7} parent=5 // pred_region
      %s201 = ssub.s32 %s10, 1
      %p202 = scmp.lt.s32.totalorder %s19, 1
      %s203 = scalar_select %p202, %s19, 1
      %p204 = scmp.lt.s32.totalorder %s20, 0
      %s205 = scalar_select %p204, %s20, 0
      %s206 = smul.addr %s205, 48
      %s207 = smul.addr %s203, 48
      %s208 = sadd.s32 %s206, %s207
      %s209 = smul.addr %s208, 4
      %s210 = scalar_lea.vmem %s0, %s209
      %p211 = pneg %p50
      %p212 = pneg %p47
      %s213 = sadd.s32 %s20, 1
      %p214 = scmp.lt.s32.totalorder %s213, 2
      %s215 = scalar_select %p214, %s213, 2
      %s216 = smul.addr %s215, 48
      %s217 = smul.addr %s216, 8
      %s218 = scalar_lea.vmem %s1, %s217
      %p219 = pneg %p78
      %p220 = pneg %p75
      %p221 = pneg %p99
      %p222 = pneg %p96
      %p223 = pneg %p120
      %p224 = pneg %p117
      %p225 = pneg %p148
      %p226 = pneg %p145
      %s227 = smul.u32 48, %s20
      %p228 = scmp.lt.s32.totalorder %s19, 1
      %s229 = scalar_select %p228, %s19, 1
      %p230 = scmp.lt.s32.totalorder %s227, 47
      %s231 = scalar_select %p230, %s227, 47
      %s232 = smul.addr %s229, 48
      %s233 = sadd.s32 %s231, %s232
      %s234 = smul.addr %s233, 8
      %s235 = scalar_lea.vmem %s4, %s234
      %p236 = scmp.lt.s32.totalorder %s19, 1
      %s237 = scalar_select %p236, %s19, 1
      %p238 = scmp.lt.s32.totalorder %s20, 0
      %s239 = scalar_select %p238, %s20, 0
      %s240 = smul.addr %s239, 48
      %s241 = smul.addr %s237, 48
      %s242 = sadd.s32 %s240, %s241
      %s243 = smul.addr %s242, 4
      %s244 = scalar_lea.vmem %s0, %s243
      %s245 = sadd.s32 %s20, 1
      %p246 = scmp.lt.s32.totalorder %s245, 2
      %s247 = scalar_select %p246, %s245, 2
      %s248 = smul.addr %s247, 48
      %s249 = smul.addr %s248, 8
      %s250 = scalar_lea.vmem %s1, %s249
      %s251 = sadd.s32 %s20, 1
      %s252 = smul.u32 48, %s20
      %p253 = scmp.lt.s32.totalorder %s19, 1
      %s254 = scalar_select %p253, %s19, 1
      %p255 = scmp.lt.s32.totalorder %s252, 47
      %s256 = scalar_select %p255, %s252, 47
      %s257 = smul.addr %s254, 48
      %s258 = sadd.s32 %s256, %s257
      %s259 = smul.addr %s258, 8
      %s260 = scalar_lea.vmem %s4, %s259
      %s261 = smul.u32 48, %s20
      %v262 = vld [vmem:[%s244] sm:$0xf]
      %v263 = vld [vmem:[%s244 + $0x4] sm:$0xf]
      %v264 = vld [vmem:[%s244 + $0x8] sm:$0xf]
      %v265 = vld [vmem:[%s244 + $0xc] sm:$0xf]
      %v266 = vld [vmem:[%s244 + $0x10] sm:$0xf]
      %v267 = vld [vmem:[%s244 + $0x14] sm:$0xf]
      %v268 = vld [vmem:[%s244 + $0x18] sm:$0xf]
      %v269 = vld [vmem:[%s244 + $0x1c] sm:$0xf]
      %v270 = vld [vmem:[%s244 + $0x20] sm:$0xf]
      %v271 = vld [vmem:[%s244 + $0x24] sm:$0xf]
      %v272 = vld [vmem:[%s244 + $0x28] sm:$0xf]
      %v273 = vld [vmem:[%s244 + $0x2c] sm:$0xf]
      %v274 = vld [vmem:[%s244 + $0x30] sm:$0xf]
      %v275 = vld [vmem:[%s244 + $0x34] sm:$0xf]
      %v276 = vld [vmem:[%s244 + $0x38] sm:$0xf]
      %v277 = vld [vmem:[%s244 + $0x3c] sm:$0xf]
      %v278 = vld [vmem:[%s244 + $0x40] sm:$0xf]
      %v279 = vld [vmem:[%s244 + $0x44] sm:$0xf]
      %v280 = vld [vmem:[%s244 + $0x48] sm:$0xf]
      %v281 = vld [vmem:[%s244 + $0x4c] sm:$0xf]
      %v282 = vld [vmem:[%s244 + $0x50] sm:$0xf]
      %v283 = vld [vmem:[%s244 + $0x54] sm:$0xf]
      %v284 = vld [vmem:[%s244 + $0x58] sm:$0xf]
      %v285 = vld [vmem:[%s244 + $0x5c] sm:$0xf]
      %v286 = vld [vmem:[%s244 + $0x60] sm:$0xf]
      %v287 = vld [vmem:[%s244 + $0x64] sm:$0xf]
      %v288 = vld [vmem:[%s244 + $0x68] sm:$0xf]
      %v289 = vld [vmem:[%s244 + $0x6c] sm:$0xf]
      %v290 = vld [vmem:[%s244 + $0x70] sm:$0xf]
      %v291 = vld [vmem:[%s244 + $0x74] sm:$0xf]
      %v292 = vld [vmem:[%s244 + $0x78] sm:$0xf]
      %v293 = vld [vmem:[%s244 + $0x7c] sm:$0xf]
      %v294 = vld [vmem:[%s244 + $0x80] sm:$0xf]
      %v295 = vld [vmem:[%s244 + $0x84] sm:$0xf]
      %v296 = vld [vmem:[%s244 + $0x88] sm:$0xf]
      %v297 = vld [vmem:[%s244 + $0x8c] sm:$0xf]
      %v298 = vld [vmem:[%s244 + $0x90] sm:$0xf]
      %v299 = vld [vmem:[%s244 + $0x94] sm:$0xf]
      %v300 = vld [vmem:[%s244 + $0x98] sm:$0xf]
      %v301 = vld [vmem:[%s244 + $0x9c] sm:$0xf]
      %v302 = vld [vmem:[%s244 + $0xa0] sm:$0xf]
      %v303 = vld [vmem:[%s244 + $0xa4] sm:$0xf]
      %v304 = vld [vmem:[%s244 + $0xa8] sm:$0xf]
      %v305 = vld [vmem:[%s244 + $0xac] sm:$0xf]
      %v306 = vld [vmem:[%s244 + $0xb0] sm:$0xf]
      %v307 = vld [vmem:[%s244 + $0xb4] sm:$0xf]
      %v308 = vld [vmem:[%s244 + $0xb8] sm:$0xf]
      %v309 = vld [vmem:[%s244 + $0xbc] sm:$0xf]
      %v310 = vunpack.c.l.bf16 %v262
      %v311 = vunpack.c.l.bf16 %v263
      %v312 = vunpack.c.l.bf16 %v264
      %v313 = vunpack.c.l.bf16 %v265
      %v314 = vunpack.c.l.bf16 %v266
      %v315 = vunpack.c.l.bf16 %v267
      %v316 = vunpack.c.l.bf16 %v268
      %v317 = vunpack.c.l.bf16 %v269
      %v318 = vunpack.c.l.bf16 %v270
      %v319 = vunpack.c.l.bf16 %v271
      %v320 = vunpack.c.l.bf16 %v272
      %v321 = vunpack.c.l.bf16 %v273
      %v322 = vunpack.c.l.bf16 %v274
      %v323 = vunpack.c.l.bf16 %v275
      %v324 = vunpack.c.l.bf16 %v276
      %v325 = vunpack.c.l.bf16 %v277
      %v326 = vunpack.c.l.bf16 %v278
      %v327 = vunpack.c.l.bf16 %v279
      %v328 = vunpack.c.l.bf16 %v280
      %v329 = vunpack.c.l.bf16 %v281
      %v330 = vunpack.c.l.bf16 %v282
      %v331 = vunpack.c.l.bf16 %v283
      %v332 = vunpack.c.l.bf16 %v284
      %v333 = vunpack.c.l.bf16 %v285
      %v334 = vunpack.c.l.bf16 %v286
      %v335 = vunpack.c.l.bf16 %v287
      %v336 = vunpack.c.l.bf16 %v288
      %v337 = vunpack.c.l.bf16 %v289
      %v338 = vunpack.c.l.bf16 %v290
      %v339 = vunpack.c.l.bf16 %v291
      %v340 = vunpack.c.l.bf16 %v292
      %v341 = vunpack.c.l.bf16 %v293
      %v342 = vunpack.c.l.bf16 %v294
      %v343 = vunpack.c.l.bf16 %v295
      %v344 = vunpack.c.l.bf16 %v296
      %v345 = vunpack.c.l.bf16 %v297
      %v346 = vunpack.c.l.bf16 %v298
      %v347 = vunpack.c.l.bf16 %v299
      %v348 = vunpack.c.l.bf16 %v300
      %v349 = vunpack.c.l.bf16 %v301
      %v350 = vunpack.c.l.bf16 %v302
      %v351 = vunpack.c.l.bf16 %v303
      %v352 = vunpack.c.l.bf16 %v304
      %v353 = vunpack.c.l.bf16 %v305
      %v354 = vunpack.c.l.bf16 %v306
      %v355 = vunpack.c.l.bf16 %v307
      %v356 = vunpack.c.l.bf16 %v308
      %v357 = vunpack.c.l.bf16 %v309
      %v358 = vld [vmem:[%s2] sm:$0x1]
      %v360 = vlaneseq
      %v361 = vshrl.u32 %v360, 7
      %v362 = vsub.s32 0, %v361
      %v363 = vrot.slane %v358, %v362
      %v365 = vmul.f32 %v310, %v363
      %v366 = vmul.f32 %v311, %v363
      %v367 = vmul.f32 %v312, %v363
      %v368 = vmul.f32 %v313, %v363
      %v369 = vmul.f32 %v314, %v363
      %v370 = vmul.f32 %v315, %v363
      %v371 = vmul.f32 %v316, %v363
      %v372 = vmul.f32 %v317, %v363
      %v373 = vmul.f32 %v318, %v363
      %v374 = vmul.f32 %v319, %v363
      %v375 = vmul.f32 %v320, %v363
      %v376 = vmul.f32 %v321, %v363
      %v377 = vmul.f32 %v322, %v363
      %v378 = vmul.f32 %v323, %v363
      %v379 = vmul.f32 %v324, %v363
      %v380 = vmul.f32 %v325, %v363
      %v381 = vmul.f32 %v326, %v363
      %v382 = vmul.f32 %v327, %v363
      %v383 = vmul.f32 %v328, %v363
      %v384 = vmul.f32 %v329, %v363
      %v385 = vmul.f32 %v330, %v363
      %v386 = vmul.f32 %v331, %v363
      %v387 = vmul.f32 %v332, %v363
      %v388 = vmul.f32 %v333, %v363
      %v389 = vmul.f32 %v334, %v363
      %v390 = vmul.f32 %v335, %v363
      %v391 = vmul.f32 %v336, %v363
      %v392 = vmul.f32 %v337, %v363
      %v393 = vmul.f32 %v338, %v363
      %v394 = vmul.f32 %v339, %v363
      %v395 = vmul.f32 %v340, %v363
      %v396 = vmul.f32 %v341, %v363
      %v397 = vmul.f32 %v342, %v363
      %v398 = vmul.f32 %v343, %v363
      %v399 = vmul.f32 %v344, %v363
      %v400 = vmul.f32 %v345, %v363
      %v401 = vmul.f32 %v346, %v363
      %v402 = vmul.f32 %v347, %v363
      %v403 = vmul.f32 %v348, %v363
      %v404 = vmul.f32 %v349, %v363
      %v405 = vmul.f32 %v350, %v363
      %v406 = vmul.f32 %v351, %v363
      %v407 = vmul.f32 %v352, %v363
      %v408 = vmul.f32 %v353, %v363
      %v409 = vmul.f32 %v354, %v363
      %v410 = vmul.f32 %v355, %v363
      %v411 = vmul.f32 %v356, %v363
      %v412 = vmul.f32 %v357, %v363
      %v413 = vld [vmem:[%s3] sm:$0x1]
      %v415 = vlaneseq
      %v416 = vshrl.u32 %v415, 7
      %v417 = vsub.s32 0, %v416
      %v418 = vrot.slane %v413, %v417
      %v420 = vadd.f32 %v365, %v418
      %v421 = vadd.f32 %v366, %v418
      %v422 = vadd.f32 %v367, %v418
      %v423 = vadd.f32 %v368, %v418
      %v424 = vadd.f32 %v369, %v418
      %v425 = vadd.f32 %v370, %v418
      %v426 = vadd.f32 %v371, %v418
      %v427 = vadd.f32 %v372, %v418
      %v428 = vadd.f32 %v373, %v418
      %v429 = vadd.f32 %v374, %v418
      %v430 = vadd.f32 %v375, %v418
      %v431 = vadd.f32 %v376, %v418
      %v432 = vadd.f32 %v377, %v418
      %v433 = vadd.f32 %v378, %v418
      %v434 = vadd.f32 %v379, %v418
      %v435 = vadd.f32 %v380, %v418
      %v436 = vadd.f32 %v381, %v418
      %v437 = vadd.f32 %v382, %v418
      %v438 = vadd.f32 %v383, %v418
      %v439 = vadd.f32 %v384, %v418
      %v440 = vadd.f32 %v385, %v418
      %v441 = vadd.f32 %v386, %v418
      %v442 = vadd.f32 %v387, %v418
      %v443 = vadd.f32 %v388, %v418
      %v444 = vadd.f32 %v389, %v418
      %v445 = vadd.f32 %v390, %v418
      %v446 = vadd.f32 %v391, %v418
      %v447 = vadd.f32 %v392, %v418
      %v448 = vadd.f32 %v393, %v418
      %v449 = vadd.f32 %v394, %v418
      %v450 = vadd.f32 %v395, %v418
      %v451 = vadd.f32 %v396, %v418
      %v452 = vadd.f32 %v397, %v418
      %v453 = vadd.f32 %v398, %v418
      %v454 = vadd.f32 %v399, %v418
      %v455 = vadd.f32 %v400, %v418
      %v456 = vadd.f32 %v401, %v418
      %v457 = vadd.f32 %v402, %v418
      %v458 = vadd.f32 %v403, %v418
      %v459 = vadd.f32 %v404, %v418
      %v460 = vadd.f32 %v405, %v418
      %v461 = vadd.f32 %v406, %v418
      %v462 = vadd.f32 %v407, %v418
      %v463 = vadd.f32 %v408, %v418
      %v464 = vadd.f32 %v409, %v418
      %v465 = vadd.f32 %v410, %v418
      %v466 = vadd.f32 %v411, %v418
      %v467 = vadd.f32 %v412, %v418
      %v468 = vld [vmem:[%s250] sm:$0xff]
      %v469 = vld [vmem:[%s250 + $0x8] sm:$0xff]
      %v470 = vld [vmem:[%s250 + $0x10] sm:$0xff]
      %v471 = vld [vmem:[%s250 + $0x18] sm:$0xff]
      %v472 = vld [vmem:[%s250 + $0x20] sm:$0xff]
      %v473 = vld [vmem:[%s250 + $0x28] sm:$0xff]
      %v474 = vld [vmem:[%s250 + $0x30] sm:$0xff]
      %v475 = vld [vmem:[%s250 + $0x38] sm:$0xff]
      %v476 = vld [vmem:[%s250 + $0x40] sm:$0xff]
      %v477 = vld [vmem:[%s250 + $0x48] sm:$0xff]
      %v478 = vld [vmem:[%s250 + $0x50] sm:$0xff]
      %v479 = vld [vmem:[%s250 + $0x58] sm:$0xff]
      %v480 = vld [vmem:[%s250 + $0x60] sm:$0xff]
      %v481 = vld [vmem:[%s250 + $0x68] sm:$0xff]
      %v482 = vld [vmem:[%s250 + $0x70] sm:$0xff]
      %v483 = vld [vmem:[%s250 + $0x78] sm:$0xff]
      %v484 = vld [vmem:[%s250 + $0x80] sm:$0xff]
      %v485 = vld [vmem:[%s250 + $0x88] sm:$0xff]
      %v486 = vld [vmem:[%s250 + $0x90] sm:$0xff]
      %v487 = vld [vmem:[%s250 + $0x98] sm:$0xff]
      %v488 = vld [vmem:[%s250 + $0xa0] sm:$0xff]
      %v489 = vld [vmem:[%s250 + $0xa8] sm:$0xff]
      %v490 = vld [vmem:[%s250 + $0xb0] sm:$0xff]
      %v491 = vld [vmem:[%s250 + $0xb8] sm:$0xff]
      %v492 = vld [vmem:[%s250 + $0xc0] sm:$0xff]
      %v493 = vld [vmem:[%s250 + $0xc8] sm:$0xff]
      %v494 = vld [vmem:[%s250 + $0xd0] sm:$0xff]
      %v495 = vld [vmem:[%s250 + $0xd8] sm:$0xff]
      %v496 = vld [vmem:[%s250 + $0xe0] sm:$0xff]
      %v497 = vld [vmem:[%s250 + $0xe8] sm:$0xff]
      %v498 = vld [vmem:[%s250 + $0xf0] sm:$0xff]
      %v499 = vld [vmem:[%s250 + $0xf8] sm:$0xff]
      %v500 = vld [vmem:[%s250 + $0x100] sm:$0xff]
      %v501 = vld [vmem:[%s250 + $0x108] sm:$0xff]
      %v502 = vld [vmem:[%s250 + $0x110] sm:$0xff]
      %v503 = vld [vmem:[%s250 + $0x118] sm:$0xff]
      %v504 = vld [vmem:[%s250 + $0x120] sm:$0xff]
      %v505 = vld [vmem:[%s250 + $0x128] sm:$0xff]
      %v506 = vld [vmem:[%s250 + $0x130] sm:$0xff]
      %v507 = vld [vmem:[%s250 + $0x138] sm:$0xff]
      %v508 = vld [vmem:[%s250 + $0x140] sm:$0xff]
      %v509 = vld [vmem:[%s250 + $0x148] sm:$0xff]
      %v510 = vld [vmem:[%s250 + $0x150] sm:$0xff]
      %v511 = vld [vmem:[%s250 + $0x158] sm:$0xff]
      %v512 = vld [vmem:[%s250 + $0x160] sm:$0xff]
      %v513 = vld [vmem:[%s250 + $0x168] sm:$0xff]
      %v514 = vld [vmem:[%s250 + $0x170] sm:$0xff]
      %v515 = vld [vmem:[%s250 + $0x178] sm:$0xff]
      %vm516 = vcmp.gt.f32.partialorder %v468, 0.0
      %vm517 = vcmp.gt.f32.partialorder %v469, 0.0
      %vm518 = vcmp.gt.f32.partialorder %v470, 0.0
      %vm519 = vcmp.gt.f32.partialorder %v471, 0.0
      %vm520 = vcmp.gt.f32.partialorder %v472, 0.0
      %vm521 = vcmp.gt.f32.partialorder %v473, 0.0
      %vm522 = vcmp.gt.f32.partialorder %v474, 0.0
      %vm523 = vcmp.gt.f32.partialorder %v475, 0.0
      %vm524 = vcmp.gt.f32.partialorder %v476, 0.0
      %vm525 = vcmp.gt.f32.partialorder %v477, 0.0
      %vm526 = vcmp.gt.f32.partialorder %v478, 0.0
      %vm527 = vcmp.gt.f32.partialorder %v479, 0.0
      %vm528 = vcmp.gt.f32.partialorder %v480, 0.0
      %vm529 = vcmp.gt.f32.partialorder %v481, 0.0
      %vm530 = vcmp.gt.f32.partialorder %v482, 0.0
      %vm531 = vcmp.gt.f32.partialorder %v483, 0.0
      %vm532 = vcmp.gt.f32.partialorder %v484, 0.0
      %vm533 = vcmp.gt.f32.partialorder %v485, 0.0
      %vm534 = vcmp.gt.f32.partialorder %v486, 0.0
      %vm535 = vcmp.gt.f32.partialorder %v487, 0.0
      %vm536 = vcmp.gt.f32.partialorder %v488, 0.0
      %vm537 = vcmp.gt.f32.partialorder %v489, 0.0
      %vm538 = vcmp.gt.f32.partialorder %v490, 0.0
      %vm539 = vcmp.gt.f32.partialorder %v491, 0.0
      %vm540 = vcmp.gt.f32.partialorder %v492, 0.0
      %vm541 = vcmp.gt.f32.partialorder %v493, 0.0
      %vm542 = vcmp.gt.f32.partialorder %v494, 0.0
      %vm543 = vcmp.gt.f32.partialorder %v495, 0.0
      %vm544 = vcmp.gt.f32.partialorder %v496, 0.0
      %vm545 = vcmp.gt.f32.partialorder %v497, 0.0
      %vm546 = vcmp.gt.f32.partialorder %v498, 0.0
      %vm547 = vcmp.gt.f32.partialorder %v499, 0.0
      %vm548 = vcmp.gt.f32.partialorder %v500, 0.0
      %vm549 = vcmp.gt.f32.partialorder %v501, 0.0
      %vm550 = vcmp.gt.f32.partialorder %v502, 0.0
      %vm551 = vcmp.gt.f32.partialorder %v503, 0.0
      %vm552 = vcmp.gt.f32.partialorder %v504, 0.0
      %vm553 = vcmp.gt.f32.partialorder %v505, 0.0
      %vm554 = vcmp.gt.f32.partialorder %v506, 0.0
      %vm555 = vcmp.gt.f32.partialorder %v507, 0.0
      %vm556 = vcmp.gt.f32.partialorder %v508, 0.0
      %vm557 = vcmp.gt.f32.partialorder %v509, 0.0
      %vm558 = vcmp.gt.f32.partialorder %v510, 0.0
      %vm559 = vcmp.gt.f32.partialorder %v511, 0.0
      %vm560 = vcmp.gt.f32.partialorder %v512, 0.0
      %vm561 = vcmp.gt.f32.partialorder %v513, 0.0
      %vm562 = vcmp.gt.f32.partialorder %v514, 0.0
      %vm563 = vcmp.gt.f32.partialorder %v515, 0.0
      %v564 = vsel %vm516, 1, 0
      %v565 = vsel %vm517, 1, 0
      %v566 = vsel %vm518, 1, 0
      %v567 = vsel %vm519, 1, 0
      %v568 = vsel %vm520, 1, 0
      %v569 = vsel %vm521, 1, 0
      %v570 = vsel %vm522, 1, 0
      %v571 = vsel %vm523, 1, 0
      %v572 = vsel %vm524, 1, 0
      %v573 = vsel %vm525, 1, 0
      %v574 = vsel %vm526, 1, 0
      %v575 = vsel %vm527, 1, 0
      %v576 = vsel %vm528, 1, 0
      %v577 = vsel %vm529, 1, 0
      %v578 = vsel %vm530, 1, 0
      %v579 = vsel %vm531, 1, 0
      %v580 = vsel %vm532, 1, 0
      %v581 = vsel %vm533, 1, 0
      %v582 = vsel %vm534, 1, 0
      %v583 = vsel %vm535, 1, 0
      %v584 = vsel %vm536, 1, 0
      %v585 = vsel %vm537, 1, 0
      %v586 = vsel %vm538, 1, 0
      %v587 = vsel %vm539, 1, 0
      %v588 = vsel %vm540, 1, 0
      %v589 = vsel %vm541, 1, 0
      %v590 = vsel %vm542, 1, 0
      %v591 = vsel %vm543, 1, 0
      %v592 = vsel %vm544, 1, 0
      %v593 = vsel %vm545, 1, 0
      %v594 = vsel %vm546, 1, 0
      %v595 = vsel %vm547, 1, 0
      %v596 = vsel %vm548, 1, 0
      %v597 = vsel %vm549, 1, 0
      %v598 = vsel %vm550, 1, 0
      %v599 = vsel %vm551, 1, 0
      %v600 = vsel %vm552, 1, 0
      %v601 = vsel %vm553, 1, 0
      %v602 = vsel %vm554, 1, 0
      %v603 = vsel %vm555, 1, 0
      %v604 = vsel %vm556, 1, 0
      %v605 = vsel %vm557, 1, 0
      %v606 = vsel %vm558, 1, 0
      %v607 = vsel %vm559, 1, 0
      %v608 = vsel %vm560, 1, 0
      %v609 = vsel %vm561, 1, 0
      %v610 = vsel %vm562, 1, 0
      %v611 = vsel %vm563, 1, 0
      %612 = vset.pattern.permute.xlu0 0
      %613 = vperm.xlu0 %612, %v564
      %v614 = vpop.permute.xlu0 %613
      %615 = vset.pattern.permute.xlu0 0
      %616 = vperm.xlu0 %615, %v565
      %v617 = vpop.permute.xlu0 %616
      %618 = vset.pattern.permute.xlu0 0
      %619 = vperm.xlu0 %618, %v566
      %v620 = vpop.permute.xlu0 %619
      %621 = vset.pattern.permute.xlu0 0
      %622 = vperm.xlu0 %621, %v567
      %v623 = vpop.permute.xlu0 %622
      %624 = vset.pattern.permute.xlu0 0
      %625 = vperm.xlu0 %624, %v568
      %v626 = vpop.permute.xlu0 %625
      %627 = vset.pattern.permute.xlu0 0
      %628 = vperm.xlu0 %627, %v569
      %v629 = vpop.permute.xlu0 %628
      %630 = vset.pattern.permute.xlu0 0
      %631 = vperm.xlu0 %630, %v570
      %v632 = vpop.permute.xlu0 %631
      %633 = vset.pattern.permute.xlu0 0
      %634 = vperm.xlu0 %633, %v571
      %v635 = vpop.permute.xlu0 %634
      %636 = vset.pattern.permute.xlu0 0
      %637 = vperm.xlu0 %636, %v572
      %v638 = vpop.permute.xlu0 %637
      %639 = vset.pattern.permute.xlu0 0
      %640 = vperm.xlu0 %639, %v573
      %v641 = vpop.permute.xlu0 %640
      %642 = vset.pattern.permute.xlu0 0
      %643 = vperm.xlu0 %642, %v574
      %v644 = vpop.permute.xlu0 %643
      %645 = vset.pattern.permute.xlu0 0
      %646 = vperm.xlu0 %645, %v575
      %v647 = vpop.permute.xlu0 %646
      %648 = vset.pattern.permute.xlu0 0
      %649 = vperm.xlu0 %648, %v576
      %v650 = vpop.permute.xlu0 %649
      %651 = vset.pattern.permute.xlu0 0
      %652 = vperm.xlu0 %651, %v577
      %v653 = vpop.permute.xlu0 %652
      %654 = vset.pattern.permute.xlu0 0
      %655 = vperm.xlu0 %654, %v578
      %v656 = vpop.permute.xlu0 %655
      %657 = vset.pattern.permute.xlu0 0
      %658 = vperm.xlu0 %657, %v579
      %v659 = vpop.permute.xlu0 %658
      %660 = vset.pattern.permute.xlu0 0
      %661 = vperm.xlu0 %660, %v580
      %v662 = vpop.permute.xlu0 %661
      %663 = vset.pattern.permute.xlu0 0
      %664 = vperm.xlu0 %663, %v581
      %v665 = vpop.permute.xlu0 %664
      %666 = vset.pattern.permute.xlu0 0
      %667 = vperm.xlu0 %666, %v582
      %v668 = vpop.permute.xlu0 %667
      %669 = vset.pattern.permute.xlu0 0
      %670 = vperm.xlu0 %669, %v583
      %v671 = vpop.permute.xlu0 %670
      %672 = vset.pattern.permute.xlu0 0
      %673 = vperm.xlu0 %672, %v584
      %v674 = vpop.permute.xlu0 %673
      %675 = vset.pattern.permute.xlu0 0
      %676 = vperm.xlu0 %675, %v585
      %v677 = vpop.permute.xlu0 %676
      %678 = vset.pattern.permute.xlu0 0
      %679 = vperm.xlu0 %678, %v586
      %v680 = vpop.permute.xlu0 %679
      %681 = vset.pattern.permute.xlu0 0
      %682 = vperm.xlu0 %681, %v587
      %v683 = vpop.permute.xlu0 %682
      %684 = vset.pattern.permute.xlu0 0
      %685 = vperm.xlu0 %684, %v588
      %v686 = vpop.permute.xlu0 %685
      %687 = vset.pattern.permute.xlu0 0
      %688 = vperm.xlu0 %687, %v589
      %v689 = vpop.permute.xlu0 %688
      %690 = vset.pattern.permute.xlu0 0
      %691 = vperm.xlu0 %690, %v590
      %v692 = vpop.permute.xlu0 %691
      %693 = vset.pattern.permute.xlu0 0
      %694 = vperm.xlu0 %693, %v591
      %v695 = vpop.permute.xlu0 %694
      %696 = vset.pattern.permute.xlu0 0
      %697 = vperm.xlu0 %696, %v592
      %v698 = vpop.permute.xlu0 %697
      %699 = vset.pattern.permute.xlu0 0
      %700 = vperm.xlu0 %699, %v593
      %v701 = vpop.permute.xlu0 %700
      %702 = vset.pattern.permute.xlu0 0
      %703 = vperm.xlu0 %702, %v594
      %v704 = vpop.permute.xlu0 %703
      %705 = vset.pattern.permute.xlu0 0
      %706 = vperm.xlu0 %705, %v595
      %v707 = vpop.permute.xlu0 %706
      %708 = vset.pattern.permute.xlu0 0
      %709 = vperm.xlu0 %708, %v596
      %v710 = vpop.permute.xlu0 %709
      %711 = vset.pattern.permute.xlu0 0
      %712 = vperm.xlu0 %711, %v597
      %v713 = vpop.permute.xlu0 %712
      %714 = vset.pattern.permute.xlu0 0
      %715 = vperm.xlu0 %714, %v598
      %v716 = vpop.permute.xlu0 %715
      %717 = vset.pattern.permute.xlu0 0
      %718 = vperm.xlu0 %717, %v599
      %v719 = vpop.permute.xlu0 %718
      %720 = vset.pattern.permute.xlu0 0
      %721 = vperm.xlu0 %720, %v600
      %v722 = vpop.permute.xlu0 %721
      %723 = vset.pattern.permute.xlu0 0
      %724 = vperm.xlu0 %723, %v601
      %v725 = vpop.permute.xlu0 %724
      %726 = vset.pattern.permute.xlu0 0
      %727 = vperm.xlu0 %726, %v602
      %v728 = vpop.permute.xlu0 %727
      %729 = vset.pattern.permute.xlu0 0
      %730 = vperm.xlu0 %729, %v603
      %v731 = vpop.permute.xlu0 %730
      %732 = vset.pattern.permute.xlu0 0
      %733 = vperm.xlu0 %732, %v604
      %v734 = vpop.permute.xlu0 %733
      %735 = vset.pattern.permute.xlu0 0
      %736 = vperm.xlu0 %735, %v605
      %v737 = vpop.permute.xlu0 %736
      %738 = vset.pattern.permute.xlu0 0
      %739 = vperm.xlu0 %738, %v606
      %v740 = vpop.permute.xlu0 %739
      %741 = vset.pattern.permute.xlu0 0
      %742 = vperm.xlu0 %741, %v607
      %v743 = vpop.permute.xlu0 %742
      %744 = vset.pattern.permute.xlu0 0
      %745 = vperm.xlu0 %744, %v608
      %v746 = vpop.permute.xlu0 %745
      %747 = vset.pattern.permute.xlu0 0
      %748 = vperm.xlu0 %747, %v609
      %v749 = vpop.permute.xlu0 %748
      %750 = vset.pattern.permute.xlu0 0
      %751 = vperm.xlu0 %750, %v610
      %v752 = vpop.permute.xlu0 %751
      %753 = vset.pattern.permute.xlu0 0
      %754 = vperm.xlu0 %753, %v611
      %v755 = vpop.permute.xlu0 %754
      %vm756 = vcmp.eq.s32.totalorder %v614, 1
      %vm757 = vcmp.eq.s32.totalorder %v617, 1
      %vm758 = vcmp.eq.s32.totalorder %v620, 1
      %vm759 = vcmp.eq.s32.totalorder %v623, 1
      %vm760 = vcmp.eq.s32.totalorder %v626, 1
      %vm761 = vcmp.eq.s32.totalorder %v629, 1
      %vm762 = vcmp.eq.s32.totalorder %v632, 1
      %vm763 = vcmp.eq.s32.totalorder %v635, 1
      %vm764 = vcmp.eq.s32.totalorder %v638, 1
      %vm765 = vcmp.eq.s32.totalorder %v641, 1
      %vm766 = vcmp.eq.s32.totalorder %v644, 1
      %vm767 = vcmp.eq.s32.totalorder %v647, 1
      %vm768 = vcmp.eq.s32.totalorder %v650, 1
      %vm769 = vcmp.eq.s32.totalorder %v653, 1
      %vm770 = vcmp.eq.s32.totalorder %v656, 1
      %vm771 = vcmp.eq.s32.totalorder %v659, 1
      %vm772 = vcmp.eq.s32.totalorder %v662, 1
      %vm773 = vcmp.eq.s32.totalorder %v665, 1
      %vm774 = vcmp.eq.s32.totalorder %v668, 1
      %vm775 = vcmp.eq.s32.totalorder %v671, 1
      %vm776 = vcmp.eq.s32.totalorder %v674, 1
      %vm777 = vcmp.eq.s32.totalorder %v677, 1
      %vm778 = vcmp.eq.s32.totalorder %v680, 1
      %vm779 = vcmp.eq.s32.totalorder %v683, 1
      %vm780 = vcmp.eq.s32.totalorder %v686, 1
      %vm781 = vcmp.eq.s32.totalorder %v689, 1
      %vm782 = vcmp.eq.s32.totalorder %v692, 1
      %vm783 = vcmp.eq.s32.totalorder %v695, 1
      %vm784 = vcmp.eq.s32.totalorder %v698, 1
      %vm785 = vcmp.eq.s32.totalorder %v701, 1
      %vm786 = vcmp.eq.s32.totalorder %v704, 1
      %vm787 = vcmp.eq.s32.totalorder %v707, 1
      %vm788 = vcmp.eq.s32.totalorder %v710, 1
      %vm789 = vcmp.eq.s32.totalorder %v713, 1
      %vm790 = vcmp.eq.s32.totalorder %v716, 1
      %vm791 = vcmp.eq.s32.totalorder %v719, 1
      %vm792 = vcmp.eq.s32.totalorder %v722, 1
      %vm793 = vcmp.eq.s32.totalorder %v725, 1
      %vm794 = vcmp.eq.s32.totalorder %v728, 1
      %vm795 = vcmp.eq.s32.totalorder %v731, 1
      %vm796 = vcmp.eq.s32.totalorder %v734, 1
      %vm797 = vcmp.eq.s32.totalorder %v737, 1
      %vm798 = vcmp.eq.s32.totalorder %v740, 1
      %vm799 = vcmp.eq.s32.totalorder %v743, 1
      %vm800 = vcmp.eq.s32.totalorder %v746, 1
      %vm801 = vcmp.eq.s32.totalorder %v749, 1
      %vm802 = vcmp.eq.s32.totalorder %v752, 1
      %vm803 = vcmp.eq.s32.totalorder %v755, 1
      %v804 = vsel %vm756, %v420, 0.0
      %v805 = vsel %vm757, %v421, 0.0
      %v806 = vsel %vm758, %v422, 0.0
      %v807 = vsel %vm759, %v423, 0.0
      %v808 = vsel %vm760, %v424, 0.0
      %v809 = vsel %vm761, %v425, 0.0
      %v810 = vsel %vm762, %v426, 0.0
      %v811 = vsel %vm763, %v427, 0.0
      %v812 = vsel %vm764, %v428, 0.0
      %v813 = vsel %vm765, %v429, 0.0
      %v814 = vsel %vm766, %v430, 0.0
      %v815 = vsel %vm767, %v431, 0.0
      %v816 = vsel %vm768, %v432, 0.0
      %v817 = vsel %vm769, %v433, 0.0
      %v818 = vsel %vm770, %v434, 0.0
      %v819 = vsel %vm771, %v435, 0.0
      %v820 = vsel %vm772, %v436, 0.0
      %v821 = vsel %vm773, %v437, 0.0
      %v822 = vsel %vm774, %v438, 0.0
      %v823 = vsel %vm775, %v439, 0.0
      %v824 = vsel %vm776, %v440, 0.0
      %v825 = vsel %vm777, %v441, 0.0
      %v826 = vsel %vm778, %v442, 0.0
      %v827 = vsel %vm779, %v443, 0.0
      %v828 = vsel %vm780, %v444, 0.0
      %v829 = vsel %vm781, %v445, 0.0
      %v830 = vsel %vm782, %v446, 0.0
      %v831 = vsel %vm783, %v447, 0.0
      %v832 = vsel %vm784, %v448, 0.0
      %v833 = vsel %vm785, %v449, 0.0
      %v834 = vsel %vm786, %v450, 0.0
      %v835 = vsel %vm787, %v451, 0.0
      %v836 = vsel %vm788, %v452, 0.0
      %v837 = vsel %vm789, %v453, 0.0
      %v838 = vsel %vm790, %v454, 0.0
      %v839 = vsel %vm791, %v455, 0.0
      %v840 = vsel %vm792, %v456, 0.0
      %v841 = vsel %vm793, %v457, 0.0
      %v842 = vsel %vm794, %v458, 0.0
      %v843 = vsel %vm795, %v459, 0.0
      %v844 = vsel %vm796, %v460, 0.0
      %v845 = vsel %vm797, %v461, 0.0
      %v846 = vsel %vm798, %v462, 0.0
      %v847 = vsel %vm799, %v463, 0.0
      %v848 = vsel %vm800, %v464, 0.0
      %v849 = vsel %vm801, %v465, 0.0
      %v850 = vsel %vm802, %v466, 0.0
      %v851 = vsel %vm803, %v467, 0.0
      %852 = vst [vmem:[%s260] sm:$0xff] %v804
      %853 = vst [vmem:[%s260 + $0x8] sm:$0xff] %v805
      %854 = vst [vmem:[%s260 + $0x10] sm:$0xff] %v806
      %855 = vst [vmem:[%s260 + $0x18] sm:$0xff] %v807
      %856 = vst [vmem:[%s260 + $0x20] sm:$0xff] %v808
      %857 = vst [vmem:[%s260 + $0x28] sm:$0xff] %v809
      %858 = vst [vmem:[%s260 + $0x30] sm:$0xff] %v810
      %859 = vst [vmem:[%s260 + $0x38] sm:$0xff] %v811
      %860 = vst [vmem:[%s260 + $0x40] sm:$0xff] %v812
      %861 = vst [vmem:[%s260 + $0x48] sm:$0xff] %v813
      %862 = vst [vmem:[%s260 + $0x50] sm:$0xff] %v814
      %863 = vst [vmem:[%s260 + $0x58] sm:$0xff] %v815
      %864 = vst [vmem:[%s260 + $0x60] sm:$0xff] %v816
      %865 = vst [vmem:[%s260 + $0x68] sm:$0xff] %v817
      %866 = vst [vmem:[%s260 + $0x70] sm:$0xff] %v818
      %867 = vst [vmem:[%s260 + $0x78] sm:$0xff] %v819
      %868 = vst [vmem:[%s260 + $0x80] sm:$0xff] %v820
      %869 = vst [vmem:[%s260 + $0x88] sm:$0xff] %v821
      %870 = vst [vmem:[%s260 + $0x90] sm:$0xff] %v822
      %871 = vst [vmem:[%s260 + $0x98] sm:$0xff] %v823
      %872 = vst [vmem:[%s260 + $0xa0] sm:$0xff] %v824
      %873 = vst [vmem:[%s260 + $0xa8] sm:$0xff] %v825
      %874 = vst [vmem:[%s260 + $0xb0] sm:$0xff] %v826
      %875 = vst [vmem:[%s260 + $0xb8] sm:$0xff] %v827
      %876 = vst [vmem:[%s260 + $0xc0] sm:$0xff] %v828
      %877 = vst [vmem:[%s260 + $0xc8] sm:$0xff] %v829
      %878 = vst [vmem:[%s260 + $0xd0] sm:$0xff] %v830
      %879 = vst [vmem:[%s260 + $0xd8] sm:$0xff] %v831
      %880 = vst [vmem:[%s260 + $0xe0] sm:$0xff] %v832
      %881 = vst [vmem:[%s260 + $0xe8] sm:$0xff] %v833
      %882 = vst [vmem:[%s260 + $0xf0] sm:$0xff] %v834
      %883 = vst [vmem:[%s260 + $0xf8] sm:$0xff] %v835
      %884 = vst [vmem:[%s260 + $0x100] sm:$0xff] %v836
      %885 = vst [vmem:[%s260 + $0x108] sm:$0xff] %v837
      %886 = vst [vmem:[%s260 + $0x110] sm:$0xff] %v838
      %887 = vst [vmem:[%s260 + $0x118] sm:$0xff] %v839
      %888 = vst [vmem:[%s260 + $0x120] sm:$0xff] %v840
      %889 = vst [vmem:[%s260 + $0x128] sm:$0xff] %v841
      %890 = vst [vmem:[%s260 + $0x130] sm:$0xff] %v842
      %891 = vst [vmem:[%s260 + $0x138] sm:$0xff] %v843
      %892 = vst [vmem:[%s260 + $0x140] sm:$0xff] %v844
      %893 = vst [vmem:[%s260 + $0x148] sm:$0xff] %v845
      %894 = vst [vmem:[%s260 + $0x150] sm:$0xff] %v846
      %895 = vst [vmem:[%s260 + $0x158] sm:$0xff] %v847
      %896 = vst [vmem:[%s260 + $0x160] sm:$0xff] %v848
      %897 = vst [vmem:[%s260 + $0x168] sm:$0xff] %v849
      %898 = vst [vmem:[%s260 + $0x170] sm:$0xff] %v850
      %899 = vst [vmem:[%s260 + $0x178] sm:$0xff] %v851
      %s900 = smul.u32 48, %s20
      %p901 = scmp.lt.s32.totalorder %s19, 1
      %s902 = scalar_select %p901, %s19, 1
      %p903 = scmp.lt.s32.totalorder %s900, 47
      %s904 = scalar_select %p903, %s900, 47
      %s905 = smul.addr %s902, 48
      %s906 = sadd.s32 %s904, %s905
      %s907 = smul.addr %s906, 8
      %s908 = scalar_lea.vmem %s4, %s907
      // Predicated region
      $region37: #{unet_conv_block.7} parent=35 // pred_check
        %p909 = pneg %p145
      $region38: #{unet_conv_block.7} parent=35 // pred_check_branch
        %911 = sbr.rel (%p909) target = $region40
      $region39: #{unet_conv_block.7} parent=35 // pred_region
        %s912 = smul.u32 48, %s20
      $region40: #{unet_conv_block.7} parent=35 // pred_fallthru
        _
    $region36: #{unet_conv_block.7} parent=5 // pred_fallthru
      _
    %p913 = scmp.le.s32.totalorder 2, %s10
    // Predicated region
    $region41: #{unet_conv_block.7} parent=5 // pred_check
      %p914 = pneg %p913
    $region42: #{unet_conv_block.7} parent=5 // pred_check_branch
      %916 = sbr.rel (%p914) target = $region44
    $region43: #{unet_conv_block.7} parent=5 // pred_region
      %s917 = ssub.s32 %s10, 2
      // Predicated region
      $region45: #{unet_conv_block.7} parent=43 // pred_check
        %p918 = pneg %p151
      $region46: #{unet_conv_block.7} parent=43 // pred_check_branch
        %920 = sbr.rel (%p918) target = $region48
      $region47: #{unet_conv_block.7} parent=43 // pred_region
        %s921 = smul.u32 48, %s22
        %p922 = scmp.lt.s32.totalorder %s21, 1
        %s923 = scalar_select %p922, %s21, 1
        %p924 = scmp.lt.s32.totalorder %s921, 47
        %s925 = scalar_select %p924, %s921, 47
        %s926 = smul.addr %s923, 48
        %s927 = sadd.s32 %s925, %s926
        %s928 = smul.addr %s927, 8
        %s929 = scalar_lea.vmem %s4, %s928
      $region48: #{unet_conv_block.7} parent=43 // pred_fallthru
        _
    $region44: #{unet_conv_block.7} parent=5 // pred_fallthru
      _
  $region6: #{unet_conv_block.7} parent=0 // loop_footer
    %s14 = sadd.s32 1, %s10
  $region7: #{unet_conv_block.7} parent=0 // loop_footer_branch
    %9 = sbr.rel target = $region3
  $region8: #{unet_conv_block.7} parent=0 // loop_exit
    _

// kernel: unet_conv_block.6
$region0: #{unet_conv_block.6}
  #allocation0 [shape = 'u32[]', space=smem, size = 0x4, offset = 0x4, fixed_abs, tag = 'smem constant byte address 0x4 - core index']
  #allocation1 [shape = 'u32[144,128]{1,0:T(1,128)}', space=vmem, size = 0x12000, scoped, tag = 'internal scratch']
  #allocation2 [shape = 'bf16[488,128]{1,0:T(8,128)(2,1)}', space=vmem, size = 0x1e800, scoped, tag = 'scratch operand']
  %s0 = inlined_call_operand.vmem [shape: bf16[2,1152,128], index: 0, kind: input, shape index: {}, may-alias: {0,1,2}]
  %s1 = inlined_call_operand.vmem [shape: bf16[2,1152,128], index: 1, kind: input, shape index: {}, may-alias: {0,1,2}]
  %s2 = inlined_call_operand.vmem [shape: bf16[2,1152,128], index: 2, kind: input, shape index: {}, may-alias: {0,1,2}]
  %s3 = inlined_call_operand.vmem [shape: f32[3,384,1], index: 3, kind: input, shape index: {}]
  %s4 = inlined_call_operand.vmem [shape: bf16[9,128,128], index: 4, kind: input, shape index: {}]
  %s5 = inlined_call_operand.vmem [shape: f32[1,128], index: 5, kind: input, shape index: {}]
  %s6 = inlined_call_operand.vmem [shape: bf16[2,1,384,128], index: 6, kind: output, shape index: {0}]
  %s7 = inlined_call_operand.vmem [shape: f32[2,1,2,128], index: 7, kind: output, shape index: {1}]
  %8 = xla_tuple %s6, %s7
  %s9 = sld [smem:[#allocation0]]
  $region65: #{unet_conv_block.6} parent=0
    _
  %s11 = ssub.s32 1, %s9
  %s12 = scalar_select 0, %s11, %s9
  loop: start=0, step=1, limit=4
  $region2: #{unet_conv_block.6} parent=0 // loop_pre_header
    _
  $region3: #{unet_conv_block.6} parent=0 // loop_header
    %s14 = sphi 0, %s18
    %p15 = scmp.ge.s32.totalorder %s14, 4
    %s21 = sphi 0, %s33
    %s22 = sphi 0, %s29
    %s23 = sphi 0, %s21
    %s24 = sphi 0, %s22
    %s25 = sphi 0, %s23
    %s26 = sphi 0, %s24
    %s44 = sphi 0, %s46
    %s47 = sphi 0, %s44
    %s48 = sphi 0, %s47
    %s64 = sphi 0, %s48
    %s74 = sphi 0, %s76
    %s77 = sphi 0, %s74
    %s78 = sphi 0, %s77
    %s94 = sphi 0, %s78
    %s106 = sphi 0, %s108
    %s109 = sphi 0, %s106
    %s110 = sphi 0, %s109
    %s126 = sphi 0, %s110
    %s134 = sphi 0, %s136
    %s137 = sphi 0, %s134
    %s138 = sphi 0, %s137
    %s154 = sphi 0, %s138
    %s158 = sphi 0, %s158
    %s160 = sphi 0, %s158
    %s161 = sphi 0, %s160
    %s175 = sphi 0, %s161
    %s179 = sphi 0, %s179
    %s181 = sphi 0, %s179
    %s182 = sphi 0, %s181
    %s196 = sphi 0, %s182
    %s204 = sphi 0, %s206
    %s207 = sphi 0, %s204
    %s208 = sphi 0, %s207
    %s224 = sphi 0, %s208
    %s232 = sphi 0, %s234
    %s235 = sphi 0, %s232
    %s236 = sphi 0, %s235
    %s252 = sphi 0, %s236
  $region4: #{unet_conv_block.6} parent=0 // loop_header_branch
    %17 = sbr.rel (%p15) target = $region8
  $region5: #{unet_conv_block.6} parent=0 // loop_body
    %s19 = ssub.s32 %s14, 1
    %s20 = ssub.s32 %s14, 2
    %s27 = sadd.s32 1, %s22
    %p28 = scmp.ge.s32.totalorder %s27, 1
    %s29 = scalar_select %p28, 0, %s27
    %s30 = sadd.s32 1, %s21
    %s31 = scalar_select %p28, %s30, %s21
    %p32 = scmp.ge.s32.totalorder %s31, 2
    %s33 = scalar_select %p32, 0, %s31
    %s34 = sadd.s32 %s22, 1
    %s35 = smul.u32 %s34, 8
    %s36 = ssub.s32 %s35, 1
    %s37 = sadd.s32 %s29, 1
    %s38 = smul.u32 %s37, 8
    %s39 = ssub.s32 %s38, 1
    %s40 = ssub.s32 %s21, %s33
    %s41 = ssub.s32 %s36, %s39
    %s42 = sor.u32 %s40, %s41
    %p43 = scmp.eq.s32.totalorder %s42, 0
    %s45 = sadd.s32 %s44, 1
    %s46 = scalar_select %p43, %s44, %s45
    %p49 = pneg %p43
    %p50 = scmp.eq.s32.totalorder %s14, 1
    %p51 = por %p49, %p50
    %p52 = scmp.ne.s32.totalorder %s44, %s47
    %p53 = scmp.eq.s32.totalorder %s14, 0
    %p54 = por %p52, %p53
    %p55 = scmp.ne.s32.totalorder %s44, %s47
    %p56 = scmp.eq.s32.totalorder %s19, 1
    %p57 = por %p55, %p56
    %p58 = scmp.ne.s32.totalorder %s47, %s48
    %p59 = scmp.eq.s32.totalorder %s19, 0
    %p60 = por %p58, %p59
    %p61 = scmp.ne.s32.totalorder %s47, %s48
    %p62 = scmp.eq.s32.totalorder %s20, 1
    %p63 = por %p61, %p62
    %p65 = scmp.ne.s32.totalorder %s48, %s64
    %p66 = scmp.eq.s32.totalorder %s20, 0
    %p67 = por %p65, %p66
    %s68 = sadd.s32 %s22, 1
    %s69 = sadd.s32 %s29, 1
    %s70 = ssub.s32 %s21, %s33
    %s71 = ssub.s32 %s68, %s69
    %s72 = sor.u32 %s70, %s71
    %p73 = scmp.eq.s32.totalorder %s72, 0
    %s75 = sadd.s32 %s74, 1
    %s76 = scalar_select %p73, %s74, %s75
    %p79 = pneg %p73
    %p80 = scmp.eq.s32.totalorder %s14, 1
    %p81 = por %p79, %p80
    %p82 = scmp.ne.s32.totalorder %s74, %s77
    %p83 = scmp.eq.s32.totalorder %s14, 0
    %p84 = por %p82, %p83
    %p85 = scmp.ne.s32.totalorder %s74, %s77
    %p86 = scmp.eq.s32.totalorder %s19, 1
    %p87 = por %p85, %p86
    %p88 = scmp.ne.s32.totalorder %s77, %s78
    %p89 = scmp.eq.s32.totalorder %s19, 0
    %p90 = por %p88, %p89
    %p91 = scmp.ne.s32.totalorder %s77, %s78
    %p92 = scmp.eq.s32.totalorder %s20, 1
    %p93 = por %p91, %p92
    %p95 = scmp.ne.s32.totalorder %s78, %s94
    %p96 = scmp.eq.s32.totalorder %s20, 0
    %p97 = por %p95, %p96
    %s98 = sadd.s32 %s22, 2
    %s99 = smul.u32 %s98, 8
    %s100 = sadd.s32 %s29, 2
    %s101 = smul.u32 %s100, 8
    %s102 = ssub.s32 %s21, %s33
    %s103 = ssub.s32 %s99, %s101
    %s104 = sor.u32 %s102, %s103
    %p105 = scmp.eq.s32.totalorder %s104, 0
    %s107 = sadd.s32 %s106, 1
    %s108 = scalar_select %p105, %s106, %s107
    %p111 = pneg %p105
    %p112 = scmp.eq.s32.totalorder %s14, 1
    %p113 = por %p111, %p112
    %p114 = scmp.ne.s32.totalorder %s106, %s109
    %p115 = scmp.eq.s32.totalorder %s14, 0
    %p116 = por %p114, %p115
    %p117 = scmp.ne.s32.totalorder %s106, %s109
    %p118 = scmp.eq.s32.totalorder %s19, 1
    %p119 = por %p117, %p118
    %p120 = scmp.ne.s32.totalorder %s109, %s110
    %p121 = scmp.eq.s32.totalorder %s19, 0
    %p122 = por %p120, %p121
    %p123 = scmp.ne.s32.totalorder %s109, %s110
    %p124 = scmp.eq.s32.totalorder %s20, 1
    %p125 = por %p123, %p124
    %p127 = scmp.ne.s32.totalorder %s110, %s126
    %p128 = scmp.eq.s32.totalorder %s20, 0
    %p129 = por %p127, %p128
    %s130 = sadd.s32 %s22, 1
    %s131 = sadd.s32 %s29, 1
    %s132 = ssub.s32 %s130, %s131
    %p133 = scmp.eq.s32.totalorder %s132, 0
    %s135 = sadd.s32 %s134, 1
    %s136 = scalar_select %p133, %s134, %s135
    %p139 = pneg %p133
    %p140 = scmp.eq.s32.totalorder %s14, 1
    %p141 = por %p139, %p140
    %p142 = scmp.ne.s32.totalorder %s134, %s137
    %p143 = scmp.eq.s32.totalorder %s14, 0
    %p144 = por %p142, %p143
    %p145 = scmp.ne.s32.totalorder %s134, %s137
    %p146 = scmp.eq.s32.totalorder %s19, 1
    %p147 = por %p145, %p146
    %p148 = scmp.ne.s32.totalorder %s137, %s138
    %p149 = scmp.eq.s32.totalorder %s19, 0
    %p150 = por %p148, %p149
    %p151 = scmp.ne.s32.totalorder %s137, %s138
    %p152 = scmp.eq.s32.totalorder %s20, 1
    %p153 = por %p151, %p152
    %p155 = scmp.ne.s32.totalorder %s138, %s154
    %p156 = scmp.eq.s32.totalorder %s20, 0
    %p157 = por %p155, %p156
    %s159 = sadd.s32 %s158, 1
    %p162 = scmp.eq.s32.totalorder %s14, 1
    %p163 = scmp.ne.s32.totalorder %s158, %s160
    %p164 = scmp.eq.s32.totalorder %s14, 0
    %p165 = por %p163, %p164
    %p166 = scmp.ne.s32.totalorder %s158, %s160
    %p167 = scmp.eq.s32.totalorder %s19, 1
    %p168 = por %p166, %p167
    %p169 = scmp.ne.s32.totalorder %s160, %s161
    %p170 = scmp.eq.s32.totalorder %s19, 0
    %p171 = por %p169, %p170
    %p172 = scmp.ne.s32.totalorder %s160, %s161
    %p173 = scmp.eq.s32.totalorder %s20, 1
    %p174 = por %p172, %p173
    %p176 = scmp.ne.s32.totalorder %s161, %s175
    %p177 = scmp.eq.s32.totalorder %s20, 0
    %p178 = por %p176, %p177
    %s180 = sadd.s32 %s179, 1
    %p183 = scmp.eq.s32.totalorder %s14, 1
    %p184 = scmp.ne.s32.totalorder %s179, %s181
    %p185 = scmp.eq.s32.totalorder %s14, 0
    %p186 = por %p184, %p185
    %p187 = scmp.ne.s32.totalorder %s179, %s181
    %p188 = scmp.eq.s32.totalorder %s19, 1
    %p189 = por %p187, %p188
    %p190 = scmp.ne.s32.totalorder %s181, %s182
    %p191 = scmp.eq.s32.totalorder %s19, 0
    %p192 = por %p190, %p191
    %p193 = scmp.ne.s32.totalorder %s181, %s182
    %p194 = scmp.eq.s32.totalorder %s20, 1
    %p195 = por %p193, %p194
    %p197 = scmp.ne.s32.totalorder %s182, %s196
    %p198 = scmp.eq.s32.totalorder %s20, 0
    %p199 = por %p197, %p198
    %s200 = ssub.s32 %s21, %s33
    %s201 = ssub.s32 %s22, %s29
    %s202 = sor.u32 %s200, %s201
    %p203 = scmp.eq.s32.totalorder %s202, 0
    %s205 = sadd.s32 %s204, 1
    %s206 = scalar_select %p203, %s204, %s205
    %p209 = pneg %p203
    %p210 = scmp.eq.s32.totalorder %s14, 1
    %p211 = por %p209, %p210
    %p212 = scmp.ne.s32.totalorder %s204, %s207
    %p213 = scmp.eq.s32.totalorder %s14, 0
    %p214 = por %p212, %p213
    %p215 = scmp.ne.s32.totalorder %s204, %s207
    %p216 = scmp.eq.s32.totalorder %s19, 1
    %p217 = por %p215, %p216
    %p218 = scmp.ne.s32.totalorder %s207, %s208
    %p219 = scmp.eq.s32.totalorder %s19, 0
    %p220 = por %p218, %p219
    %p221 = scmp.ne.s32.totalorder %s207, %s208
    %p222 = scmp.eq.s32.totalorder %s20, 1
    %p223 = por %p221, %p222
    %p225 = scmp.ne.s32.totalorder %s208, %s224
    %p226 = scmp.eq.s32.totalorder %s20, 0
    %p227 = por %p225, %p226
    %s228 = ssub.s32 %s21, %s33
    %s229 = ssub.s32 %s22, %s29
    %s230 = sor.u32 %s228, %s229
    %p231 = scmp.eq.s32.totalorder %s230, 0
    %s233 = sadd.s32 %s232, 1
    %s234 = scalar_select %p231, %s232, %s233
    %p237 = pneg %p231
    %p238 = scmp.eq.s32.totalorder %s14, 1
    %p239 = por %p237, %p238
    %p240 = scmp.ne.s32.totalorder %s232, %s235
    %p241 = scmp.eq.s32.totalorder %s14, 0
    %p242 = por %p240, %p241
    %p243 = scmp.ne.s32.totalorder %s232, %s235
    %p244 = scmp.eq.s32.totalorder %s19, 1
    %p245 = por %p243, %p244
    %p246 = scmp.ne.s32.totalorder %s235, %s236
    %p247 = scmp.eq.s32.totalorder %s19, 0
    %p248 = por %p246, %p247
    %p249 = scmp.ne.s32.totalorder %s235, %s236
    %p250 = scmp.eq.s32.totalorder %s20, 1
    %p251 = por %p249, %p250
    %p253 = scmp.ne.s32.totalorder %s236, %s252
    %p254 = scmp.eq.s32.totalorder %s20, 0
    %p255 = por %p253, %p254
    %p256 = scmp.le.s32.totalorder 1, %s14
    %p257 = scmp.lt.s32.totalorder %s14, 3
    %p258 = pnand %p256, %p257
    %p259 = pneg %p258
    // Predicated region
    $region9: #{unet_conv_block.6} parent=5 // pred_check
      _
    $region10: #{unet_conv_block.6} parent=5 // pred_check_branch
      %261 = sbr.rel (%p258) target = $region12
    $region11: #{unet_conv_block.6} parent=5 // pred_region
      %s262 = ssub.s32 %s14, 1
      // Predicated region
      $region13: #{unet_conv_block.6} parent=11 // pred_check
        %p263 = pneg %p150
      $region14: #{unet_conv_block.6} parent=11 // pred_check_branch
        %265 = sbr.rel (%p263) target = $region16
      $region15: #{unet_conv_block.6} parent=11 // pred_region
        %s266 = sadd.s32 %s24, 1
        %p267 = scmp.lt.s32.totalorder %s266, 2
        %s268 = scalar_select %p267, %s266, 2
        %s269 = smul.addr %s268, 48
        %s270 = smul.addr %s269, 8
        %s271 = scalar_lea.vmem %s3, %s270
        %s272 = sadd.s32 %s24, 1
      $region16: #{unet_conv_block.6} parent=11 // pred_fallthru
        _
      // Predicated region
      $region17: #{unet_conv_block.6} parent=11 // pred_check
        %p273 = pneg %p171
      $region18: #{unet_conv_block.6} parent=11 // pred_check_branch
        %275 = sbr.rel (%p273) target = $region20
      $region19: #{unet_conv_block.6} parent=11 // pred_region
        _
      $region20: #{unet_conv_block.6} parent=11 // pred_fallthru
        _
      // Predicated region
      $region21: #{unet_conv_block.6} parent=11 // pred_check
        %p276 = pneg %p192
      $region22: #{unet_conv_block.6} parent=11 // pred_check_branch
        %278 = sbr.rel (%p276) target = $region24
      $region23: #{unet_conv_block.6} parent=11 // pred_region
        _
      $region24: #{unet_conv_block.6} parent=11 // pred_fallthru
        _
    $region12: #{unet_conv_block.6} parent=5 // pred_fallthru
      _
    %p279 = scmp.lt.s32.totalorder %s14, 2
    // Predicated region
    $region25: #{unet_conv_block.6} parent=5 // pred_check
      %p280 = pneg %p279
    $region26: #{unet_conv_block.6} parent=5 // pred_check_branch
      %282 = sbr.rel (%p280) target = $region28
    $region27: #{unet_conv_block.6} parent=5 // pred_region
      // Predicated region
      $region29: #{unet_conv_block.6} parent=27 // pred_check
        %p283 = pneg %p54
      $region30: #{unet_conv_block.6} parent=27 // pred_check_branch
        %285 = sbr.rel (%p283) target = $region32
      $region31: #{unet_conv_block.6} parent=27 // pred_region
        %s286 = sadd.s32 %s22, 1
        %s287 = smul.u32 %s286, 8
        %s288 = ssub.s32 %s287, 1
        %s289 = smul.u32 6, %s288
        %p290 = scmp.lt.s32.totalorder %s21, 1
        %s291 = scalar_select %p290, %s21, 1
        %p292 = scmp.lt.s32.totalorder %s289, 143
        %s293 = scalar_select %p292, %s289, 143
        %s294 = smul.addr %s291, 144
        %s295 = sadd.s32 %s293, %s294
        %s296 = smul.addr %s295, 4
        %s297 = scalar_lea.vmem %s0, %s296
        %s298 = sadd.s32 %s22, 1
        %s299 = smul.u32 %s298, 8
        %s300 = ssub.s32 %s299, 1
        %s301 = smul.u32 6, %s300
      $region32: #{unet_conv_block.6} parent=27 // pred_fallthru
        _
      // Predicated region
      $region33: #{unet_conv_block.6} parent=27 // pred_check
        %p302 = pneg %p84
      $region34: #{unet_conv_block.6} parent=27 // pred_check_branch
        %304 = sbr.rel (%p302) target = $region36
      $region35: #{unet_conv_block.6} parent=27 // pred_region
        %s305 = sadd.s32 %s22, 1
        %s306 = smul.u32 48, %s305
        %p307 = scmp.lt.s32.totalorder %s21, 1
        %s308 = scalar_select %p307, %s21, 1
        %p309 = scmp.lt.s32.totalorder %s306, 143
        %s310 = scalar_select %p309, %s306, 143
        %s311 = smul.addr %s308, 144
        %s312 = sadd.s32 %s310, %s311
        %s313 = smul.addr %s312, 4
        %s314 = scalar_lea.vmem %s1, %s313
        %s315 = sadd.s32 %s22, 1
        %s316 = smul.u32 48, %s315
      $region36: #{unet_conv_block.6} parent=27 // pred_fallthru
        _
      // Predicated region
      $region37: #{unet_conv_block.6} parent=27 // pred_check
        %p317 = pneg %p116
      $region38: #{unet_conv_block.6} parent=27 // pred_check_branch
        %319 = sbr.rel (%p317) target = $region40
      $region39: #{unet_conv_block.6} parent=27 // pred_region
        %s320 = sadd.s32 %s22, 2
        %s321 = smul.u32 %s320, 8
        %s322 = smul.u32 6, %s321
        %p323 = scmp.lt.s32.totalorder %s21, 1
        %s324 = scalar_select %p323, %s21, 1
        %p325 = scmp.lt.s32.totalorder %s322, 143
        %s326 = scalar_select %p325, %s322, 143
        %s327 = smul.addr %s324, 144
        %s328 = sadd.s32 %s326, %s327
        %s329 = smul.addr %s328, 4
        %s330 = scalar_lea.vmem %s2, %s329
        %s331 = sadd.s32 %s22, 2
        %s332 = smul.u32 %s331, 8
        %s333 = smul.u32 6, %s332
      $region40: #{unet_conv_block.6} parent=27 // pred_fallthru
        _
    $region28: #{unet_conv_block.6} parent=5 // pred_fallthru
      _
    %p334 = scmp.le.s32.totalorder 1, %s14
    %p335 = scmp.lt.s32.totalorder %s14, 3
    %p336 = pnand %p334, %p335
    %p337 = pneg %p336
    // Predicated region
    $region41: #{unet_conv_block.6} parent=5 // pred_check
      _
    $region42: #{unet_conv_block.6} parent=5 // pred_check_branch
      %339 = sbr.rel (%p336) target = $region44
    $region43: #{unet_conv_block.6} parent=5 // pred_region
      %s340 = ssub.s32 %s14, 1
      %s341 = sadd.s32 %s24, 1
      %s342 = smul.u32 %s341, 8
      %s343 = ssub.s32 %s342, 1
      %s344 = smul.u32 6, %s343
      %p345 = scmp.lt.s32.totalorder %s23, 1
      %s346 = scalar_select %p345, %s23, 1
      %p347 = scmp.lt.s32.totalorder %s344, 143
      %s348 = scalar_select %p347, %s344, 143
      %s349 = smul.addr %s346, 144
      %s350 = sadd.s32 %s348, %s349
      %s351 = smul.addr %s350, 4
      %s352 = scalar_lea.vmem %s0, %s351
      %p353 = pneg %p60
      %p354 = pneg %p57
      %s355 = sadd.s32 %s24, 1
      %s356 = smul.u32 48, %s355
      %p357 = scmp.lt.s32.totalorder %s23, 1
      %s358 = scalar_select %p357, %s23, 1
      %p359 = scmp.lt.s32.totalorder %s356, 143
      %s360 = scalar_select %p359, %s356, 143
      %s361 = smul.addr %s358, 144
      %s362 = sadd.s32 %s360, %s361
      %s363 = smul.addr %s362, 4
      %s364 = scalar_lea.vmem %s1, %s363
      %p365 = pneg %p90
      %p366 = pneg %p87
      %s367 = sadd.s32 %s24, 2
      %s368 = smul.u32 %s367, 8
      %s369 = smul.u32 6, %s368
      %p370 = scmp.lt.s32.totalorder %s23, 1
      %s371 = scalar_select %p370, %s23, 1
      %p372 = scmp.lt.s32.totalorder %s369, 143
      %s373 = scalar_select %p372, %s369, 143
      %s374 = smul.addr %s371, 144
      %s375 = sadd.s32 %s373, %s374
      %s376 = smul.addr %s375, 4
      %s377 = scalar_lea.vmem %s2, %s376
      %p378 = pneg %p122
      %p379 = pneg %p119
      %s380 = sadd.s32 %s24, 1
      %p381 = scmp.lt.s32.totalorder %s380, 2
      %s382 = scalar_select %p381, %s380, 2
      %s383 = smul.addr %s382, 48
      %s384 = smul.addr %s383, 8
      %s385 = scalar_lea.vmem %s3, %s384
      %p386 = pneg %p150
      %p387 = pneg %p147
      %p388 = pneg %p171
      %p389 = pneg %p168
      %p390 = pneg %p192
      %p391 = pneg %p189
      %p392 = pneg %p220
      %p393 = pneg %p217
      %p394 = scmp.lt.s32.totalorder %s23, 1
      %s395 = scalar_select %p394, %s23, 1
      %p396 = scmp.lt.s32.totalorder %s24, 0
      %s397 = scalar_select %p396, %s24, 0
      %s398 = smul.addr %s397, 48
      %s399 = smul.addr %s395, 48
      %s400 = sadd.s32 %s398, %s399
      %s401 = smul.addr %s400, 4
      %s402 = scalar_lea.vmem %s6, %s401
      %p403 = pneg %p248
      %p404 = pneg %p245
      %p405 = scmp.lt.s32.totalorder %s23, 1
      %s406 = scalar_select %p405, %s23, 1
      %p407 = scmp.lt.s32.totalorder %s24, 0
      %s408 = scalar_select %p407, %s24, 0
      %s409 = sadd.s32 %s408, %s406
      %s410 = smul.addr %s409, 2
      %s411 = scalar_lea.vmem %s7, %s410
      %s412 = sadd.s32 %s24, 1
      %s413 = smul.u32 %s412, 8
      %s414 = ssub.s32 %s413, 1
      %s415 = smul.u32 6, %s414
      %p416 = scmp.lt.s32.totalorder %s23, 1
      %s417 = scalar_select %p416, %s23, 1
      %p418 = scmp.lt.s32.totalorder %s415, 143
      %s419 = scalar_select %p418, %s415, 143
      %s420 = smul.addr %s417, 144
      %s421 = sadd.s32 %s419, %s420
      %s422 = smul.addr %s421, 4
      %s423 = scalar_lea.vmem %s0, %s422
      %s424 = sadd.s32 %s24, 1
      %s425 = smul.u32 %s424, 8
      %s426 = ssub.s32 %s425, 1
      %s427 = smul.u32 6, %s426
      %s428 = sadd.s32 %s24, 1
      %s429 = smul.u32 48, %s428
      %p430 = scmp.lt.s32.totalorder %s23, 1
      %s431 = scalar_select %p430, %s23, 1
      %p432 = scmp.lt.s32.totalorder %s429, 143
      %s433 = scalar_select %p432, %s429, 143
      %s434 = smul.addr %s431, 144
      %s435 = sadd.s32 %s433, %s434
      %s436 = smul.addr %s435, 4
      %s437 = scalar_lea.vmem %s1, %s436
      %s438 = sadd.s32 %s24, 1
      %s439 = smul.u32 48, %s438
      %s440 = sadd.s32 %s24, 2
      %s441 = smul.u32 %s440, 8
      %s442 = smul.u32 6, %s441
      %p443 = scmp.lt.s32.totalorder %s23, 1
      %s444 = scalar_select %p443, %s23, 1
      %p445 = scmp.lt.s32.totalorder %s442, 143
      %s446 = scalar_select %p445, %s442, 143
      %s447 = smul.addr %s444, 144
      %s448 = sadd.s32 %s446, %s447
      %s449 = smul.addr %s448, 4
      %s450 = scalar_lea.vmem %s2, %s449
      %s451 = sadd.s32 %s24, 2
      %s452 = smul.u32 %s451, 8
      %s453 = smul.u32 6, %s452
      %s454 = sadd.s32 %s24, 1
      %p455 = scmp.lt.s32.totalorder %s454, 2
      %s456 = scalar_select %p455, %s454, 2
      %s457 = smul.addr %s456, 48
      %s458 = smul.addr %s457, 8
      %s459 = scalar_lea.vmem %s3, %s458
      %s460 = sadd.s32 %s24, 1
      %p461 = scmp.lt.s32.totalorder %s23, 1
      %s462 = scalar_select %p461, %s23, 1
      %p463 = scmp.lt.s32.totalorder %s24, 0
      %s464 = scalar_select %p463, %s24, 0
      %s465 = smul.addr %s464, 48
      %s466 = smul.addr %s462, 48
      %s467 = sadd.s32 %s465, %s466
      %s468 = smul.addr %s467, 4
      %s469 = scalar_lea.vmem %s6, %s468
      %p470 = scmp.lt.s32.totalorder %s23, 1
      %s471 = scalar_select %p470, %s23, 1
      %p472 = scmp.lt.s32.totalorder %s24, 0
      %s473 = scalar_select %p472, %s24, 0
      %s474 = sadd.s32 %s473, %s471
      %s475 = smul.addr %s474, 2
      %s476 = scalar_lea.vmem %s7, %s475
      %v478 = vld [vmem:[%s423] sm:$0xf]
      %v479 = vld [vmem:[%s423 + $0x4] sm:$0xf]
      %v480 = vld [vmem:[%s423 + $0x8] sm:$0xf]
      %v481 = vld [vmem:[%s423 + $0xc] sm:$0xf]
      %v482 = vld [vmem:[%s423 + $0x10] sm:$0xf]
      %v483 = vld [vmem:[%s423 + $0x14] sm:$0xf]
      %484 = vst [vmem:[#allocation2] sm:$0xf] %v478
      %485 = vst [vmem:[#allocation2 + $0x4] sm:$0xf] %v479
      %486 = vst [vmem:[#allocation2 + $0x8] sm:$0xf] %v480
      %487 = vst [vmem:[#allocation2 + $0xc] sm:$0xf] %v481
      %488 = vst [vmem:[#allocation2 + $0x10] sm:$0xf] %v482
      %489 = vst [vmem:[#allocation2 + $0x14] sm:$0xf] %v483
      %v490 = vld [vmem:[%s437] sm:$0xf]
      %v491 = vld [vmem:[%s437 + $0x4] sm:$0xf]
      %v492 = vld [vmem:[%s437 + $0x8] sm:$0xf]
      %v493 = vld [vmem:[%s437 + $0xc] sm:$0xf]
      %v494 = vld [vmem:[%s437 + $0x10] sm:$0xf]
      %v495 = vld [vmem:[%s437 + $0x14] sm:$0xf]
      %v496 = vld [vmem:[%s437 + $0x18] sm:$0xf]
      %v497 = vld [vmem:[%s437 + $0x1c] sm:$0xf]
      %v498 = vld [vmem:[%s437 + $0x20] sm:$0xf]
      %v499 = vld [vmem:[%s437 + $0x24] sm:$0xf]
      %v500 = vld [vmem:[%s437 + $0x28] sm:$0xf]
      %v501 = vld [vmem:[%s437 + $0x2c] sm:$0xf]
      %v502 = vld [vmem:[%s437 + $0x30] sm:$0xf]
      %v503 = vld [vmem:[%s437 + $0x34] sm:$0xf]
      %v504 = vld [vmem:[%s437 + $0x38] sm:$0xf]
      %v505 = vld [vmem:[%s437 + $0x3c] sm:$0xf]
      %v506 = vld [vmem:[%s437 + $0x40] sm:$0xf]
      %v507 = vld [vmem:[%s437 + $0x44] sm:$0xf]
      %v508 = vld [vmem:[%s437 + $0x48] sm:$0xf]
      %v509 = vld [vmem:[%s437 + $0x4c] sm:$0xf]
      %v510 = vld [vmem:[%s437 + $0x50] sm:$0xf]
      %v511 = vld [vmem:[%s437 + $0x54] sm:$0xf]
      %v512 = vld [vmem:[%s437 + $0x58] sm:$0xf]
      %v513 = vld [vmem:[%s437 + $0x5c] sm:$0xf]
      %v514 = vld [vmem:[%s437 + $0x60] sm:$0xf]
      %v515 = vld [vmem:[%s437 + $0x64] sm:$0xf]
      %v516 = vld [vmem:[%s437 + $0x68] sm:$0xf]
      %v517 = vld [vmem:[%s437 + $0x6c] sm:$0xf]
      %v518 = vld [vmem:[%s437 + $0x70] sm:$0xf]
      %v519 = vld [vmem:[%s437 + $0x74] sm:$0xf]
      %v520 = vld [vmem:[%s437 + $0x78] sm:$0xf]
      %v521 = vld [vmem:[%s437 + $0x7c] sm:$0xf]
      %v522 = vld [vmem:[%s437 + $0x80] sm:$0xf]
      %v523 = vld [vmem:[%s437 + $0x84] sm:$0xf]
      %v524 = vld [vmem:[%s437 + $0x88] sm:$0xf]
      %v525 = vld [vmem:[%s437 + $0x8c] sm:$0xf]
      %v526 = vld [vmem:[%s437 + $0x90] sm:$0xf]
      %v527 = vld [vmem:[%s437 + $0x94] sm:$0xf]
      %v528 = vld [vmem:[%s437 + $0x98] sm:$0xf]
      %v529 = vld [vmem:[%s437 + $0x9c] sm:$0xf]
      %v530 = vld [vmem:[%s437 + $0xa0] sm:$0xf]
      %v531 = vld [vmem:[%s437 + $0xa4] sm:$0xf]
      %v532 = vld [vmem:[%s437 + $0xa8] sm:$0xf]
      %v533 = vld [vmem:[%s437 + $0xac] sm:$0xf]
      %v534 = vld [vmem:[%s437 + $0xb0] sm:$0xf]
      %v535 = vld [vmem:[%s437 + $0xb4] sm:$0xf]
      %v536 = vld [vmem:[%s437 + $0xb8] sm:$0xf]
      %v537 = vld [vmem:[%s437 + $0xbc] sm:$0xf]
      %538 = vst [vmem:[#allocation2 + $0x18] sm:$0xf] %v490
      %539 = vst [vmem:[#allocation2 + $0x1c] sm:$0xf] %v491
      %540 = vst [vmem:[#allocation2 + $0x20] sm:$0xf] %v492
      %541 = vst [vmem:[#allocation2 + $0x24] sm:$0xf] %v493
      %542 = vst [vmem:[#allocation2 + $0x28] sm:$0xf] %v494
      %543 = vst [vmem:[#allocation2 + $0x2c] sm:$0xf] %v495
      %544 = vst [vmem:[#allocation2 + $0x30] sm:$0xf] %v496
      %545 = vst [vmem:[#allocation2 + $0x34] sm:$0xf] %v497
      %546 = vst [vmem:[#allocation2 + $0x38] sm:$0xf] %v498
      %547 = vst [vmem:[#allocation2 + $0x3c] sm:$0xf] %v499
      %548 = vst [vmem:[#allocation2 + $0x40] sm:$0xf] %v500
      %549 = vst [vmem:[#allocation2 + $0x44] sm:$0xf] %v501
      %550 = vst [vmem:[#allocation2 + $0x48] sm:$0xf] %v502
      %551 = vst [vmem:[#allocation2 + $0x4c] sm:$0xf] %v503
      %552 = vst [vmem:[#allocation2 + $0x50] sm:$0xf] %v504
      %553 = vst [vmem:[#allocation2 + $0x54] sm:$0xf] %v505
      %554 = vst [vmem:[#allocation2 + $0x58] sm:$0xf] %v506
      %555 = vst [vmem:[#allocation2 + $0x5c] sm:$0xf] %v507
      %556 = vst [vmem:[#allocation2 + $0x60] sm:$0xf] %v508
      %557 = vst [vmem:[#allocation2 + $0x64] sm:$0xf] %v509
      %558 = vst [vmem:[#allocation2 + $0x68] sm:$0xf] %v510
      %559 = vst [vmem:[#allocation2 + $0x6c] sm:$0xf] %v511
      %560 = vst [vmem:[#allocation2 + $0x70] sm:$0xf] %v512
      %561 = vst [vmem:[#allocation2 + $0x74] sm:$0xf] %v513
      %562 = vst [vmem:[#allocation2 + $0x78] sm:$0xf] %v514
      %563 = vst [vmem:[#allocation2 + $0x7c] sm:$0xf] %v515
      %564 = vst [vmem:[#allocation2 + $0x80] sm:$0xf] %v516
      %565 = vst [vmem:[#allocation2 + $0x84] sm:$0xf] %v517
      %566 = vst [vmem:[#allocation2 + $0x88] sm:$0xf] %v518
      %567 = vst [vmem:[#allocation2 + $0x8c] sm:$0xf] %v519
      %568 = vst [vmem:[#allocation2 + $0x90] sm:$0xf] %v520
      %569 = vst [vmem:[#allocation2 + $0x94] sm:$0xf] %v521
      %570 = vst [vmem:[#allocation2 + $0x98] sm:$0xf] %v522
      %571 = vst [vmem:[#allocation2 + $0x9c] sm:$0xf] %v523
      %572 = vst [vmem:[#allocation2 + $0xa0] sm:$0xf] %v524
      %573 = vst [vmem:[#allocation2 + $0xa4] sm:$0xf] %v525
      %574 = vst [vmem:[#allocation2 + $0xa8] sm:$0xf] %v526
      %575 = vst [vmem:[#allocation2 + $0xac] sm:$0xf] %v527
      %576 = vst [vmem:[#allocation2 + $0xb0] sm:$0xf] %v528
      %577 = vst [vmem:[#allocation2 + $0xb4] sm:$0xf] %v529
      %578 = vst [vmem:[#allocation2 + $0xb8] sm:$0xf] %v530
      %579 = vst [vmem:[#allocation2 + $0xbc] sm:$0xf] %v531
      %580 = vst [vmem:[#allocation2 + $0xc0] sm:$0xf] %v532
      %581 = vst [vmem:[#allocation2 + $0xc4] sm:$0xf] %v533
      %582 = vst [vmem:[#allocation2 + $0xc8] sm:$0xf] %v534
      %583 = vst [vmem:[#allocation2 + $0xcc] sm:$0xf] %v535
      %584 = vst [vmem:[#allocation2 + $0xd0] sm:$0xf] %v536
      %585 = vst [vmem:[#allocation2 + $0xd4] sm:$0xf] %v537
      %v586 = vld [vmem:[%s450] sm:$0xf]
      %v587 = vld [vmem:[%s450 + $0x4] sm:$0xf]
      %v588 = vld [vmem:[%s450 + $0x8] sm:$0xf]
      %v589 = vld [vmem:[%s450 + $0xc] sm:$0xf]
      %v590 = vld [vmem:[%s450 + $0x10] sm:$0xf]
      %v591 = vld [vmem:[%s450 + $0x14] sm:$0xf]
      %592 = vst [vmem:[#allocation2 + $0xd8] sm:$0xf] %v586
      %593 = vst [vmem:[#allocation2 + $0xdc] sm:$0xf] %v587
      %594 = vst [vmem:[#allocation2 + $0xe0] sm:$0xf] %v588
      %595 = vst [vmem:[#allocation2 + $0xe4] sm:$0xf] %v589
      %596 = vst [vmem:[#allocation2 + $0xe8] sm:$0xf] %v590
      %597 = vst [vmem:[#allocation2 + $0xec] sm:$0xf] %v591
      %598 = vst [vmem:[#allocation2 + $0xf0] sm:$0xf] 0
      %v599 = vld [vmem:[#allocation2 + $0x8] sm:$0x8]
      %v600 = vld [vmem:[#allocation2 + $0xc] sm:$0xf]
      %v601 = vld [vmem:[#allocation2 + $0x10] sm:$0xf]
      %v602 = vld [vmem:[#allocation2 + $0x14] sm:$0xf]
      %v603 = vld [vmem:[#allocation2 + $0x18] sm:$0xf]
      %v604 = vld [vmem:[#allocation2 + $0x1c] sm:$0xf]
      %v605 = vld [vmem:[#allocation2 + $0x20] sm:$0xf]
      %v606 = vld [vmem:[#allocation2 + $0x24] sm:$0xf]
      %v607 = vld [vmem:[#allocation2 + $0x28] sm:$0xf]
      %v608 = vld [vmem:[#allocation2 + $0x2c] sm:$0xf]
      %v609 = vld [vmem:[#allocation2 + $0x30] sm:$0xf]
      %v610 = vld [vmem:[#allocation2 + $0x34] sm:$0xf]
      %v611 = vld [vmem:[#allocation2 + $0x38] sm:$0xf]
      %v612 = vld [vmem:[#allocation2 + $0x3c] sm:$0xf]
      %v613 = vld [vmem:[#allocation2 + $0x40] sm:$0xf]
      %v614 = vld [vmem:[#allocation2 + $0x44] sm:$0xf]
      %v615 = vld [vmem:[#allocation2 + $0x48] sm:$0xf]
      %v616 = vld [vmem:[#allocation2 + $0x4c] sm:$0xf]
      %v617 = vld [vmem:[#allocation2 + $0x50] sm:$0xf]
      %v618 = vld [vmem:[#allocation2 + $0x54] sm:$0xf]
      %v619 = vld [vmem:[#allocation2 + $0x58] sm:$0xf]
      %v620 = vld [vmem:[#allocation2 + $0x5c] sm:$0xf]
      %v621 = vld [vmem:[#allocation2 + $0x60] sm:$0xf]
      %v622 = vld [vmem:[#allocation2 + $0x64] sm:$0xf]
      %v623 = vld [vmem:[#allocation2 + $0x68] sm:$0xf]
      %v624 = vld [vmem:[#allocation2 + $0x6c] sm:$0xf]
      %v625 = vld [vmem:[#allocation2 + $0x70] sm:$0xf]
      %v626 = vld [vmem:[#allocation2 + $0x74] sm:$0xf]
      %v627 = vld [vmem:[#allocation2 + $0x78] sm:$0xf]
      %v628 = vld [vmem:[#allocation2 + $0x7c] sm:$0xf]
      %v629 = vld [vmem:[#allocation2 + $0x80] sm:$0xf]
      %v630 = vld [vmem:[#allocation2 + $0x84] sm:$0xf]
      %v631 = vld [vmem:[#allocation2 + $0x88] sm:$0xf]
      %v632 = vld [vmem:[#allocation2 + $0x8c] sm:$0xf]
      %v633 = vld [vmem:[#allocation2 + $0x90] sm:$0xf]
      %v634 = vld [vmem:[#allocation2 + $0x94] sm:$0xf]
      %v635 = vld [vmem:[#allocation2 + $0x98] sm:$0xf]
      %v636 = vld [vmem:[#allocation2 + $0x9c] sm:$0xf]
      %v637 = vld [vmem:[#allocation2 + $0xa0] sm:$0xf]
      %v638 = vld [vmem:[#allocation2 + $0xa4] sm:$0xf]
      %v639 = vld [vmem:[#allocation2 + $0xa8] sm:$0xf]
      %v640 = vld [vmem:[#allocation2 + $0xac] sm:$0xf]
      %v641 = vld [vmem:[#allocation2 + $0xb0] sm:$0xf]
      %v642 = vld [vmem:[#allocation2 + $0xb4] sm:$0xf]
      %v643 = vld [vmem:[#allocation2 + $0xb8] sm:$0xf]
      %v644 = vld [vmem:[#allocation2 + $0xbc] sm:$0xf]
      %v645 = vld [vmem:[#allocation2 + $0xc0] sm:$0xf]
      %v646 = vld [vmem:[#allocation2 + $0xc4] sm:$0xf]
      %v647 = vld [vmem:[#allocation2 + $0xc8] sm:$0xf]
      %v648 = vld [vmem:[%s4] sm:$0xf]
      %v649 = vld [vmem:[%s4 + $0x4] sm:$0xf]
      %v650 = vld [vmem:[%s4 + $0x8] sm:$0xf]
      %v651 = vld [vmem:[%s4 + $0xc] sm:$0xf]
      %v652 = vld [vmem:[%s4 + $0x10] sm:$0xf]
      %v653 = vld [vmem:[%s4 + $0x14] sm:$0xf]
      %v654 = vld [vmem:[%s4 + $0x18] sm:$0xf]
      %v655 = vld [vmem:[%s4 + $0x1c] sm:$0xf]
      %v656 = vld [vmem:[%s4 + $0x20] sm:$0xf]
      %v657 = vld [vmem:[%s4 + $0x24] sm:$0xf]
      %v658 = vld [vmem:[%s4 + $0x28] sm:$0xf]
      %v659 = vld [vmem:[%s4 + $0x2c] sm:$0xf]
      %v660 = vld [vmem:[%s4 + $0x30] sm:$0xf]
      %v661 = vld [vmem:[%s4 + $0x34] sm:$0xf]
      %v662 = vld [vmem:[%s4 + $0x38] sm:$0xf]
      %v663 = vld [vmem:[%s4 + $0x3c] sm:$0xf]
      %s664 = scalar_lea.vmem %s4, 64
      %v665 = vld [vmem:[%s664] sm:$0xf]
      %v666 = vld [vmem:[%s664 + $0x4] sm:$0xf]
      %v667 = vld [vmem:[%s664 + $0x8] sm:$0xf]
      %v668 = vld [vmem:[%s664 + $0xc] sm:$0xf]
      %v669 = vld [vmem:[%s664 + $0x10] sm:$0xf]
      %v670 = vld [vmem:[%s664 + $0x14] sm:$0xf]
      %v671 = vld [vmem:[%s664 + $0x18] sm:$0xf]
      %v672 = vld [vmem:[%s664 + $0x1c] sm:$0xf]
      %v673 = vld [vmem:[%s664 + $0x20] sm:$0xf]
      %v674 = vld [vmem:[%s664 + $0x24] sm:$0xf]
      %v675 = vld [vmem:[%s664 + $0x28] sm:$0xf]
      %v676 = vld [vmem:[%s664 + $0x2c] sm:$0xf]
      %v677 = vld [vmem:[%s664 + $0x30] sm:$0xf]
      %v678 = vld [vmem:[%s664 + $0x34] sm:$0xf]
      %v679 = vld [vmem:[%s664 + $0x38] sm:$0xf]
      %v680 = vld [vmem:[%s664 + $0x3c] sm:$0xf]
      %v729 = vunpack.c.l.b16 %v600
      %v730 = vunpack.c.l.b16 %v601
      %v731 = vunpack.c.l.b16 %v602
      %v732 = vunpack.c.l.b16 %v603
      %v733 = vunpack.c.l.b16 %v604
      %v734 = vunpack.c.l.b16 %v605
      %v735 = vunpack.c.l.b16 %v606
      %v736 = vunpack.c.l.b16 %v607
      %v737 = vunpack.c.l.b16 %v608
      %v738 = vunpack.c.l.b16 %v609
      %v739 = vunpack.c.l.b16 %v610
      %v740 = vunpack.c.l.b16 %v611
      %v741 = vunpack.c.l.b16 %v612
      %v742 = vunpack.c.l.b16 %v613
      %v743 = vunpack.c.l.b16 %v614
      %v744 = vunpack.c.l.b16 %v615
      %v745 = vunpack.c.l.b16 %v616
      %v746 = vunpack.c.l.b16 %v617
      %v747 = vunpack.c.l.b16 %v618
      %v748 = vunpack.c.l.b16 %v619
      %v749 = vunpack.c.l.b16 %v620
      %v750 = vunpack.c.l.b16 %v621
      %v751 = vunpack.c.l.b16 %v622
      %v752 = vunpack.c.l.b16 %v623
      %v753 = vunpack.c.l.b16 %v624
      %v754 = vunpack.c.l.b16 %v625
      %v755 = vunpack.c.l.b16 %v626
      %v756 = vunpack.c.l.b16 %v627
      %v757 = vunpack.c.l.b16 %v628
      %v758 = vunpack.c.l.b16 %v629
      %v759 = vunpack.c.l.b16 %v630
      %v760 = vunpack.c.l.b16 %v631
      %v761 = vunpack.c.l.b16 %v632
      %v762 = vunpack.c.l.b16 %v633
      %v763 = vunpack.c.l.b16 %v634
      %v764 = vunpack.c.l.b16 %v635
      %v765 = vunpack.c.l.b16 %v636
      %v766 = vunpack.c.l.b16 %v637
      %v767 = vunpack.c.l.b16 %v638
      %v768 = vunpack.c.l.b16 %v639
      %v769 = vunpack.c.l.b16 %v640
      %v770 = vunpack.c.l.b16 %v641
      %v771 = vunpack.c.l.b16 %v642
      %v772 = vunpack.c.l.b16 %v643
      %v773 = vunpack.c.l.b16 %v644
      %v774 = vunpack.c.l.b16 %v645
      %v775 = vunpack.c.l.b16 %v646
      %v776 = vunpack.c.l.b16 %v647
      %v777 = vpack.c.b16 %v730, %v729
      %v778 = vpack.c.b16 %v732, %v731
      %v779 = vpack.c.b16 %v734, %v733
      %v780 = vpack.c.b16 %v736, %v735
      %v781 = vpack.c.b16 %v738, %v737
      %v782 = vpack.c.b16 %v740, %v739
      %v783 = vpack.c.b16 %v742, %v741
      %v784 = vpack.c.b16 %v744, %v743
      %v785 = vpack.c.b16 %v746, %v745
      %v786 = vpack.c.b16 %v748, %v747
      %v787 = vpack.c.b16 %v750, %v749
      %v788 = vpack.c.b16 %v752, %v751
      %v789 = vpack.c.b16 %v754, %v753
      %v790 = vpack.c.b16 %v756, %v755
      %v791 = vpack.c.b16 %v758, %v757
      %v792 = vpack.c.b16 %v760, %v759
      %v793 = vpack.c.b16 %v762, %v761
      %v794 = vpack.c.b16 %v764, %v763
      %v795 = vpack.c.b16 %v766, %v765
      %v796 = vpack.c.b16 %v768, %v767
      %v797 = vpack.c.b16 %v770, %v769
      %v798 = vpack.c.b16 %v772, %v771
      %v799 = vpack.c.b16 %v774, %v773
      %v800 = vpack.c.b16 %v776, %v775
      %v841 = vunpack.c.l.b16 %v665
      %v842 = vunpack.c.l.b16 %v666
      %v843 = vunpack.c.l.b16 %v667
      %v844 = vunpack.c.l.b16 %v668
      %v845 = vunpack.c.l.b16 %v669
      %v846 = vunpack.c.l.b16 %v670
      %v847 = vunpack.c.l.b16 %v671
      %v848 = vunpack.c.l.b16 %v672
      %v849 = vunpack.c.l.b16 %v673
      %v850 = vunpack.c.l.b16 %v674
      %v851 = vunpack.c.l.b16 %v675
      %v852 = vunpack.c.l.b16 %v676
      %v853 = vunpack.c.l.b16 %v677
      %v854 = vunpack.c.l.b16 %v678
      %v855 = vunpack.c.l.b16 %v679
      %v856 = vunpack.c.l.b16 %v680
      %v857 = vpack.c.b16 %v842, %v841
      %v858 = vpack.c.b16 %v844, %v843
      %v859 = vpack.c.b16 %v846, %v845
      %v860 = vpack.c.b16 %v848, %v847
      %v861 = vpack.c.b16 %v850, %v849
      %v862 = vpack.c.b16 %v852, %v851
      %v863 = vpack.c.b16 %v854, %v853
      %v864 = vpack.c.b16 %v856, %v855
      %873 = vmatprep.subr.bf16.mxu0 0
      %874 = vmatpush1.bf16.msra.mxu0 %v857
      %875 = vmatprep.subr.bf16.mxu0 0
      %876 = vmatpush1.bf16.msra.mxu0 %v858
      %877 = vmatprep.subr.bf16.mxu0 0
      %878 = vmatpush1.bf16.msra.mxu0 %v859
      %879 = vmatprep.subr.bf16.mxu0 0
      %880 = vmatpush1.bf16.msra.mxu0 %v860
      %881 = vmatprep.subr.bf16.mxu0 0
      %882 = vmatpush1.bf16.msra.mxu0 %v861
      %883 = vmatprep.subr.bf16.mxu0 0
      %884 = vmatpush1.bf16.msra.mxu0 %v862
      %885 = vmatprep.subr.bf16.mxu0 0
      %886 = vmatpush1.bf16.msra.mxu0 %v863
      %887 = vmatprep.subr.bf16.mxu0 0
      %888 = vmatpush1.bf16.msra.mxu0 %v864
      %889 = vmatprep.subr.bf16.mxu0 0
      %890 = vmatpush1.bf16.msra.mxu0 0
      %891 = vmatprep.subr.bf16.mxu0 0
      %892 = vmatpush1.bf16.msra.mxu0 0
      %893 = vmatprep.subr.bf16.mxu0 0
      %894 = vmatpush1.bf16.msra.mxu0 0
      %895 = vmatprep.subr.bf16.mxu0 0
      %896 = vmatpush1.bf16.msra.mxu0 0
      %897 = vmatprep.subr.bf16.mxu0 0
      %898 = vmatpush1.bf16.msra.mxu0 0
      %899 = vmatprep.subr.bf16.mxu0 0
      %900 = vmatpush1.bf16.msra.mxu0 0
      %901 = vmatprep.subr.bf16.mxu0 0
      %902 = vmatpush1.bf16.msra.mxu0 0
      %903 = vmatprep.subr.bf16.mxu0 0
      %904 = vmatpush1.bf16.msra.mxu0 0
      %905 = vmatprep.mubr.bf16.mxu0 0
      %906 = vmatmul.mubr.bf16.gmra.mrb[0].mxu0 %v777
      %v907 = vpop.f32.mrb[0].mxu0
      %v908 = vadd.f32 0.0, %v907
      %v909 = vpop.f32.mrb[0].mxu0
      %v910 = vpop.f32.mrb[0].mxu0
      %v911 = vadd.f32 0.0, %v910
      %v912 = vpop.f32.mrb[0].mxu0
      %913 = vmatprep.mubr.bf16.mxu0 0
      %914 = vmatmul.mubr.bf16.gmra.mrb[0].mxu0 %v778
      %v915 = vpop.f32.mrb[0].mxu0
      %v916 = vadd.f32 0.0, %v915
      %v917 = vpop.f32.mrb[0].mxu0
      %v918 = vpop.f32.mrb[0].mxu0
      %v919 = vadd.f32 0.0, %v918
      %v920 = vpop.f32.mrb[0].mxu0
      %921 = vmatprep.mubr.bf16.mxu0 0
      %922 = vmatmul.mubr.bf16.gmra.mrb[0].mxu0 %v779
      %v923 = vpop.f32.mrb[0].mxu0
      %v924 = vadd.f32 0.0, %v923
      %v925 = vpop.f32.mrb[0].mxu0
      %v926 = vpop.f32.mrb[0].mxu0
      %v927 = vadd.f32 0.0, %v926
      %v928 = vpop.f32.mrb[0].mxu0
      %929 = vmatprep.mubr.bf16.mxu0 0
      %930 = vmatmul.mubr.bf16.gmra.mrb[0].mxu0 %v780
      %v931 = vpop.f32.mrb[0].mxu0
      %v932 = vadd.f32 0.0, %v931
      %v933 = vpop.f32.mrb[0].mxu0
      %v934 = vpop.f32.mrb[0].mxu0
      %v935 = vadd.f32 0.0, %v934
      %v936 = vpop.f32.mrb[0].mxu0
      %937 = vmatprep.mubr.bf16.mxu0 0
      %938 = vmatmul.mubr.bf16.gmra.mrb[0].mxu0 %v781
      %v939 = vpop.f32.mrb[0].mxu0
      %v940 = vadd.f32 0.0, %v939
      %v941 = vpop.f32.mrb[0].mxu0
      %v942 = vpop.f32.mrb[0].mxu0
      %v943 = vadd.f32 0.0, %v942
      %v944 = vpop.f32.mrb[0].mxu0
      %945 = vmatprep.mubr.bf16.mxu0 0
      %946 = vmatmul.mubr.bf16.gmra.mrb[0].mxu0 %v782
      %v947 = vpop.f32.mrb[0].mxu0
      %v948 = vadd.f32 0.0, %v947
      %v949 = vpop.f32.mrb[0].mxu0
      %v950 = vpop.f32.mrb[0].mxu0
      %v951 = vadd.f32 0.0, %v950
      %v952 = vpop.f32.mrb[0].mxu0
      %953 = vmatprep.mubr.bf16.mxu0 0
      %954 = vmatmul.mubr.bf16.gmra.mrb[0].mxu0 %v783
      %v955 = vpop.f32.mrb[0].mxu0
      %v956 = vadd.f32 0.0, %v955
      %v957 = vpop.f32.mrb[0].mxu0
      %v958 = vpop.f32.mrb[0].mxu0
      %v959 = vadd.f32 0.0, %v958
      %v960 = vpop.f32.mrb[0].mxu0
      %961 = vmatprep.mubr.bf16.mxu0 0
      %962 = vmatmul.mubr.bf16.gmra.mrb[0].mxu0 %v784
      %v963 = vpop.f32.mrb[0].mxu0
      %v964 = vadd.f32 0.0, %v963
      %v965 = vpop.f32.mrb[0].mxu0
      %v966 = vpop.f32.mrb[0].mxu0
      %v967 = vadd.f32 0.0, %v966
      %v968 = vpop.f32.mrb[0].mxu0
      %969 = vmatprep.mubr.bf16.mxu0 0
      %970 = vmatmul.mubr.bf16.gmra.mrb[0].mxu0 %v785
      %v971 = vpop.f32.mrb[0].mxu0
      %v972 = vadd.f32 0.0, %v971
      %v973 = vpop.f32.mrb[0].mxu0
      %v974 = vpop.f32.mrb[0].mxu0
      %v975 = vadd.f32 0.0, %v974
      %v976 = vpop.f32.mrb[0].mxu0
      %977 = vmatprep.mubr.bf16.mxu0 0
      %978 = vmatmul.mubr.bf16.gmra.mrb[0].mxu0 %v786
      %v979 = vpop.f32.mrb[0].mxu0
      %v980 = vadd.f32 0.0, %v979
      %v981 = vpop.f32.mrb[0].mxu0
      %v982 = vpop.f32.mrb[0].mxu0
      %v983 = vadd.f32 0.0, %v982
      %v984 = vpop.f32.mrb[0].mxu0
      %985 = vmatprep.mubr.bf16.mxu0 0
      %986 = vmatmul.mubr.bf16.gmra.mrb[0].mxu0 %v787
      %v987 = vpop.f32.mrb[0].mxu0
      %v988 = vadd.f32 0.0, %v987
      %v989 = vpop.f32.mrb[0].mxu0
      %v990 = vpop.f32.mrb[0].mxu0
      %v991 = vadd.f32 0.0, %v990
      %v992 = vpop.f32.mrb[0].mxu0
      %993 = vmatprep.mubr.bf16.mxu0 0
      %994 = vmatmul.mubr.bf16.gmra.mrb[0].mxu0 %v788
      %v995 = vpop.f32.mrb[0].mxu0
      %v996 = vadd.f32 0.0, %v995
      %v997 = vpop.f32.mrb[0].mxu0
      %v998 = vpop.f32.mrb[0].mxu0
      %v999 = vadd.f32 0.0, %v998
      %v1000 = vpop.f32.mrb[0].mxu0
      %1001 = vmatprep.mubr.bf16.mxu0 0
      %1002 = vmatmul.mubr.bf16.gmra.mrb[0].mxu0 %v789
      %v1003 = vpop.f32.mrb[0].mxu0
      %v1004 = vadd.f32 0.0, %v1003
      %v1005 = vpop.f32.mrb[0].mxu0
      %v1006 = vpop.f32.mrb[0].mxu0
      %v1007 = vadd.f32 0.0, %v1006
      %v1008 = vpop.f32.mrb[0].mxu0
      %1009 = vmatprep.mubr.bf16.mxu0 0
      %1010 = vmatmul.mubr.bf16.gmra.mrb[0].mxu0 %v790
      %v1011 = vpop.f32.mrb[0].mxu0
      %v1012 = vadd.f32 0.0, %v1011
      %v1013 = vpop.f32.mrb[0].mxu0
      %v1014 = vpop.f32.mrb[0].mxu0
      %v1015 = vadd.f32 0.0, %v1014
      %v1016 = vpop.f32.mrb[0].mxu0
      %1017 = vmatprep.mubr.bf16.mxu0 0
      %1018 = vmatmul.mubr.bf16.gmra.mrb[0].mxu0 %v791
      %v1019 = vpop.f32.mrb[0].mxu0
      %v1020 = vadd.f32 0.0, %v1019
      %v1021 = vpop.f32.mrb[0].mxu0
      %v1022 = vpop.f32.mrb[0].mxu0
      %v1023 = vadd.f32 0.0, %v1022
      %v1024 = vpop.f32.mrb[0].mxu0
      %1025 = vmatprep.mubr.bf16.mxu0 0
      %1026 = vmatmul.mubr.bf16.gmra.mrb[0].mxu0 %v792
      %v1027 = vpop.f32.mrb[0].mxu0
      %v1028 = vadd.f32 0.0, %v1027
      %v1029 = vpop.f32.mrb[0].mxu0
      %v1030 = vpop.f32.mrb[0].mxu0
      %v1031 = vadd.f32 0.0, %v1030
      %v1032 = vpop.f32.mrb[0].mxu0
      %1033 = vmatprep.mubr.bf16.mxu0 0
      %1034 = vmatmul.mubr.bf16.gmra.mrb[0].mxu0 %v793
      %v1035 = vpop.f32.mrb[0].mxu0
      %v1036 = vadd.f32 0.0, %v1035
      %v1037 = vpop.f32.mrb[0].mxu0
      %v1038 = vpop.f32.mrb[0].mxu0
      %v1039 = vadd.f32 0.0, %v1038
      %v1040 = vpop.f32.mrb[0].mxu0
      %1041 = vmatprep.mubr.bf16.mxu0 0
      %1042 = vmatmul.mubr.bf16.gmra.mrb[0].mxu0 %v794
      %v1043 = vpop.f32.mrb[0].mxu0
      %v1044 = vadd.f32 0.0, %v1043
      %v1045 = vpop.f32.mrb[0].mxu0
      %v1046 = vpop.f32.mrb[0].mxu0
      %v1047 = vadd.f32 0.0, %v1046
      %v1048 = vpop.f32.mrb[0].mxu0
      %1049 = vmatprep.mubr.bf16.mxu0 0
      %1050 = vmatmul.mubr.bf16.gmra.mrb[0].mxu0 %v795
      %v1051 = vpop.f32.mrb[0].mxu0
      %v1052 = vadd.f32 0.0, %v1051
      %v1053 = vpop.f32.mrb[0].mxu0
      %v1054 = vpop.f32.mrb[0].mxu0
      %v1055 = vadd.f32 0.0, %v1054
      %v1056 = vpop.f32.mrb[0].mxu0
      %1057 = vmatprep.mubr.bf16.mxu0 0
      %1058 = vmatmul.mubr.bf16.gmra.mrb[0].mxu0 %v796
      %v1059 = vpop.f32.mrb[0].mxu0
      %v1060 = vadd.f32 0.0, %v1059
      %v1061 = vpop.f32.mrb[0].mxu0
      %v1062 = vpop.f32.mrb[0].mxu0
      %v1063 = vadd.f32 0.0, %v1062
      %v1064 = vpop.f32.mrb[0].mxu0
      %1065 = vmatprep.mubr.bf16.mxu0 0
      %1066 = vmatmul.mubr.bf16.gmra.mrb[0].mxu0 %v797
      %v1067 = vpop.f32.mrb[0].mxu0
      %v1068 = vadd.f32 0.0, %v1067
      %v1069 = vpop.f32.mrb[0].mxu0
      %v1070 = vpop.f32.mrb[0].mxu0
      %v1071 = vadd.f32 0.0, %v1070
      %v1072 = vpop.f32.mrb[0].mxu0
      %1073 = vmatprep.mubr.bf16.mxu0 0
      %1074 = vmatmul.mubr.bf16.gmra.mrb[0].mxu0 %v798
      %v1075 = vpop.f32.mrb[0].mxu0
      %v1076 = vadd.f32 0.0, %v1075
      %v1077 = vpop.f32.mrb[0].mxu0
      %v1078 = vpop.f32.mrb[0].mxu0
      %v1079 = vadd.f32 0.0, %v1078
      %v1080 = vpop.f32.mrb[0].mxu0
      %1081 = vmatprep.mubr.bf16.mxu0 0
      %1082 = vmatmul.mubr.bf16.gmra.mrb[0].mxu0 %v799
      %v1083 = vpop.f32.mrb[0].mxu0
      %v1084 = vadd.f32 0.0, %v1083
      %v1085 = vpop.f32.mrb[0].mxu0
      %v1086 = vpop.f32.mrb[0].mxu0
      %v1087 = vadd.f32 0.0, %v1086
      %v1088 = vpop.f32.mrb[0].mxu0
      %1089 = vmatprep.mubr.bf16.mxu0 0
      %1090 = vmatmul.mubr.bf16.gmra.mrb[0].mxu0 %v800
      %v1091 = vpop.f32.mrb[0].mxu0
      %v1092 = vadd.f32 0.0, %v1091
      %v1093 = vpop.f32.mrb[0].mxu0
      %v1094 = vpop.f32.mrb[0].mxu0
      %v1095 = vadd.f32 0.0, %v1094
      %v1096 = vpop.f32.mrb[0].mxu0
      %1097 = vdwg.mxu0
      %v1099 = vunpack.c.l.b16 %v599
      %v1100 = vpack.c.b16 %v729, %v1099
      %v1101 = vpack.c.b16 %v731, %v730
      %v1102 = vpack.c.b16 %v733, %v732
      %v1103 = vpack.c.b16 %v735, %v734
      %v1104 = vpack.c.b16 %v737, %v736
      %v1105 = vpack.c.b16 %v739, %v738
      %v1106 = vpack.c.b16 %v741, %v740
      %v1107 = vpack.c.b16 %v743, %v742
      %v1108 = vpack.c.b16 %v745, %v744
      %v1109 = vpack.c.b16 %v747, %v746
      %v1110 = vpack.c.b16 %v749, %v748
      %v1111 = vpack.c.b16 %v751, %v750
      %v1112 = vpack.c.b16 %v753, %v752
      %v1113 = vpack.c.b16 %v755, %v754
      %v1114 = vpack.c.b16 %v757, %v756
      %v1115 = vpack.c.b16 %v759, %v758
      %v1116 = vpack.c.b16 %v761, %v760
      %v1117 = vpack.c.b16 %v763, %v762
      %v1118 = vpack.c.b16 %v765, %v764
      %v1119 = vpack.c.b16 %v767, %v766
      %v1120 = vpack.c.b16 %v769, %v768
      %v1121 = vpack.c.b16 %v771, %v770
      %v1122 = vpack.c.b16 %v773, %v772
      %v1123 = vpack.c.b16 %v775, %v774
      %v1124 = vpack.c.b16 %v776, %v776
      %vm1125 = vsmask.f32 4352
      %v1127 = vshrl.u32 %v1100, 16
      %v1129 = vrot.slane %v1127, 3
      %v1130 = vshll.u32 %v1100, 16
      %v1132 = vrot.slane %v1130, 4
      %v1133 = vor.u32 %v1129, %v1132
      %v1135 = vshrl.u32 %v1101, 16
      %v1137 = vrot.slane %v1135, 3
      %v1138 = vshll.u32 %v1101, 16
      %v1140 = vrot.slane %v1138, 4
      %v1141 = vor.u32 %v1137, %v1140
      %v1142 = vsel %vm1125, %v1133, %v1141
      %v1144 = vshrl.u32 %v1102, 16
      %v1146 = vrot.slane %v1144, 3
      %v1147 = vshll.u32 %v1102, 16
      %v1149 = vrot.slane %v1147, 4
      %v1150 = vor.u32 %v1146, %v1149
      %v1151 = vsel %vm1125, %v1141, %v1150
      %v1153 = vshrl.u32 %v1103, 16
      %v1155 = vrot.slane %v1153, 3
      %v1156 = vshll.u32 %v1103, 16
      %v1158 = vrot.slane %v1156, 4
      %v1159 = vor.u32 %v1155, %v1158
      %v1160 = vsel %vm1125, %v1150, %v1159
      %v1162 = vshrl.u32 %v1104, 16
      %v1164 = vrot.slane %v1162, 3
      %v1165 = vshll.u32 %v1104, 16
      %v1167 = vrot.slane %v1165, 4
      %v1168 = vor.u32 %v1164, %v1167
      %v1169 = vsel %vm1125, %v1159, %v1168
      %v1171 = vshrl.u32 %v1105, 16
      %v1173 = vrot.slane %v1171, 3
      %v1174 = vshll.u32 %v1105, 16
      %v1176 = vrot.slane %v1174, 4
      %v1177 = vor.u32 %v1173, %v1176
      %v1178 = vsel %vm1125, %v1168, %v1177
      %v1180 = vshrl.u32 %v1106, 16
      %v1182 = vrot.slane %v1180, 3
      %v1183 = vshll.u32 %v1106, 16
      %v1185 = vrot.slane %v1183, 4
      %v1186 = vor.u32 %v1182, %v1185
      %v1187 = vsel %vm1125, %v1177, %v1186
      %v1189 = vshrl.u32 %v1107, 16
      %v1191 = vrot.slane %v1189, 3
      %v1192 = vshll.u32 %v1107, 16
      %v1194 = vrot.slane %v1192, 4
      %v1195 = vor.u32 %v1191, %v1194
      %v1196 = vsel %vm1125, %v1186, %v1195
      %v1198 = vshrl.u32 %v1108, 16
      %v1200 = vrot.slane %v1198, 3
      %v1201 = vshll.u32 %v1108, 16
      %v1203 = vrot.slane %v1201, 4
      %v1204 = vor.u32 %v1200, %v1203
      %v1205 = vsel %vm1125, %v1195, %v1204
      %v1207 = vshrl.u32 %v1109, 16
      %v1209 = vrot.slane %v1207, 3
      %v1210 = vshll.u32 %v1109, 16
      %v1212 = vrot.slane %v1210, 4
      %v1213 = vor.u32 %v1209, %v1212
      %v1214 = vsel %vm1125, %v1204, %v1213
      %v1216 = vshrl.u32 %v1110, 16
      %v1218 = vrot.slane %v1216, 3
      %v1219 = vshll.u32 %v1110, 16
      %v1221 = vrot.slane %v1219, 4
      %v1222 = vor.u32 %v1218, %v1221
      %v1223 = vsel %vm1125, %v1213, %v1222
      %v1225 = vshrl.u32 %v1111, 16
      %v1227 = vrot.slane %v1225, 3
      %v1228 = vshll.u32 %v1111, 16
      %v1230 = vrot.slane %v1228, 4
      %v1231 = vor.u32 %v1227, %v1230
      %v1232 = vsel %vm1125, %v1222, %v1231
      %v1234 = vshrl.u32 %v1112, 16
      %v1236 = vrot.slane %v1234, 3
      %v1237 = vshll.u32 %v1112, 16
      %v1239 = vrot.slane %v1237, 4
      %v1240 = vor.u32 %v1236, %v1239
      %v1241 = vsel %vm1125, %v1231, %v1240
      %v1243 = vshrl.u32 %v1113, 16
      %v1245 = vrot.slane %v1243, 3
      %v1246 = vshll.u32 %v1113, 16
      %v1248 = vrot.slane %v1246, 4
      %v1249 = vor.u32 %v1245, %v1248
      %v1250 = vsel %vm1125, %v1240, %v1249
      %v1252 = vshrl.u32 %v1114, 16
      %v1254 = vrot.slane %v1252, 3
      %v1255 = vshll.u32 %v1114, 16
      %v1257 = vrot.slane %v1255, 4
      %v1258 = vor.u32 %v1254, %v1257
      %v1259 = vsel %vm1125, %v1249, %v1258
      %v1261 = vshrl.u32 %v1115, 16
      %v1263 = vrot.slane %v1261, 3
      %v1264 = vshll.u32 %v1115, 16
      %v1266 = vrot.slane %v1264, 4
      %v1267 = vor.u32 %v1263, %v1266
      %v1268 = vsel %vm1125, %v1258, %v1267
      %v1270 = vshrl.u32 %v1116, 16
      %v1272 = vrot.slane %v1270, 3
      %v1273 = vshll.u32 %v1116, 16
      %v1275 = vrot.slane %v1273, 4
      %v1276 = vor.u32 %v1272, %v1275
      %v1277 = vsel %vm1125, %v1267, %v1276
      %v1279 = vshrl.u32 %v1117, 16
      %v1281 = vrot.slane %v1279, 3
      %v1282 = vshll.u32 %v1117, 16
      %v1284 = vrot.slane %v1282, 4
      %v1285 = vor.u32 %v1281, %v1284
      %v1286 = vsel %vm1125, %v1276, %v1285
      %v1288 = vshrl.u32 %v1118, 16
      %v1290 = vrot.slane %v1288, 3
      %v1291 = vshll.u32 %v1118, 16
      %v1293 = vrot.slane %v1291, 4
      %v1294 = vor.u32 %v1290, %v1293
      %v1295 = vsel %vm1125, %v1285, %v1294
      %v1297 = vshrl.u32 %v1119, 16
      %v1299 = vrot.slane %v1297, 3
      %v1300 = vshll.u32 %v1119, 16
      %v1302 = vrot.slane %v1300, 4
      %v1303 = vor.u32 %v1299, %v1302
      %v1304 = vsel %vm1125, %v1294, %v1303
      %v1306 = vshrl.u32 %v1120, 16
      %v1308 = vrot.slane %v1306, 3
      %v1309 = vshll.u32 %v1120, 16
      %v1311 = vrot.slane %v1309, 4
      %v1312 = vor.u32 %v1308, %v1311
      %v1313 = vsel %vm1125, %v1303, %v1312
      %v1315 = vshrl.u32 %v1121, 16
      %v1317 = vrot.slane %v1315, 3
      %v1318 = vshll.u32 %v1121, 16
      %v1320 = vrot.slane %v1318, 4
      %v1321 = vor.u32 %v1317, %v1320
      %v1322 = vsel %vm1125, %v1312, %v1321
      %v1324 = vshrl.u32 %v1122, 16
      %v1326 = vrot.slane %v1324, 3
      %v1327 = vshll.u32 %v1122, 16
      %v1329 = vrot.slane %v1327, 4
      %v1330 = vor.u32 %v1326, %v1329
      %v1331 = vsel %vm1125, %v1321, %v1330
      %v1333 = vshrl.u32 %v1123, 16
      %v1335 = vrot.slane %v1333, 3
      %v1336 = vshll.u32 %v1123, 16
      %v1338 = vrot.slane %v1336, 4
      %v1339 = vor.u32 %v1335, %v1338
      %v1340 = vsel %vm1125, %v1330, %v1339
      %v1342 = vshrl.u32 %v1124, 16
      %v1344 = vrot.slane %v1342, 3
      %v1345 = vshll.u32 %v1124, 16
      %v1347 = vrot.slane %v1345, 4
      %v1348 = vor.u32 %v1344, %v1347
      %v1349 = vsel %vm1125, %v1339, %v1348
      %v1390 = vunpack.c.l.b16 %v648
      %v1391 = vunpack.c.l.b16 %v649
      %v1392 = vunpack.c.l.b16 %v650
      %v1393 = vunpack.c.l.b16 %v651
      %v1394 = vunpack.c.l.b16 %v652
      %v1395 = vunpack.c.l.b16 %v653
      %v1396 = vunpack.c.l.b16 %v654
      %v1397 = vunpack.c.l.b16 %v655
      %v1398 = vunpack.c.l.b16 %v656
      %v1399 = vunpack.c.l.b16 %v657
      %v1400 = vunpack.c.l.b16 %v658
      %v1401 = vunpack.c.l.b16 %v659
      %v1402 = vunpack.c.l.b16 %v660
      %v1403 = vunpack.c.l.b16 %v661
      %v1404 = vunpack.c.l.b16 %v662
      %v1405 = vunpack.c.l.b16 %v663
      %v1406 = vpack.c.b16 %v1391, %v1390
      %v1407 = vpack.c.b16 %v1393, %v1392
      %v1408 = vpack.c.b16 %v1395, %v1394
      %v1409 = vpack.c.b16 %v1397, %v1396
      %v1410 = vpack.c.b16 %v1399, %v1398
      %v1411 = vpack.c.b16 %v1401, %v1400
      %v1412 = vpack.c.b16 %v1403, %v1402
      %v1413 = vpack.c.b16 %v1405, %v1404
      %1422 = vmatprep.subr.bf16.mxu0 0
      %1423 = vmatpush1.bf16.msra.mxu0 %v1406
      %1424 = vmatprep.subr.bf16.mxu0 0
      %1425 = vmatpush1.bf16.msra.mxu0 %v1407
      %1426 = vmatprep.subr.bf16.mxu0 0
      %1427 = vmatpush1.bf16.msra.mxu0 %v1408
      %1428 = vmatprep.subr.bf16.mxu0 0
      %1429 = vmatpush1.bf16.msra.mxu0 %v1409
      %1430 = vmatprep.subr.bf16.mxu0 0
      %1431 = vmatpush1.bf16.msra.mxu0 %v1410
      %1432 = vmatprep.subr.bf16.mxu0 0
      %1433 = vmatpush1.bf16.msra.mxu0 %v1411
      %1434 = vmatprep.subr.bf16.mxu0 0
      %1435 = vmatpush1.bf16.msra.mxu0 %v1412
      %1436 = vmatprep.subr.bf16.mxu0 0
      %1437 = vmatpush1.bf16.msra.mxu0 %v1413
      %1438 = vmatprep.subr.bf16.mxu0 0
      %1439 = vmatpush1.bf16.msra.mxu0 0
      %1440 = vmatprep.subr.bf16.mxu0 0
      %1441 = vmatpush1.bf16.msra.mxu0 0
      %1442 = vmatprep.subr.bf16.mxu0 0
      %1443 = vmatpush1.bf16.msra.mxu0 0
      %1444 = vmatprep.subr.bf16.mxu0 0
      %1445 = vmatpush1.bf16.msra.mxu0 0
      %1446 = vmatprep.subr.bf16.mxu0 0
      %1447 = vmatpush1.bf16.msra.mxu0 0
      %1448 = vmatprep.subr.bf16.mxu0 0
      %1449 = vmatpush1.bf16.msra.mxu0 0
      %1450 = vmatprep.subr.bf16.mxu0 0
      %1451 = vmatpush1.bf16.msra.mxu0 0
      %1452 = vmatprep.subr.bf16.mxu0 0
      %1453 = vmatpush1.bf16.msra.mxu0 0
      %1454 = vmatprep.mubr.bf16.mxu0 0
      %1455 = vmatmul.mubr.bf16.gmra.mrb[0].mxu0 %v1142
      %v1456 = vpop.f32.mrb[0].mxu0
      %v1457 = vadd.f32 %v908, %v1456
      %v1458 = vpop.f32.mrb[0].mxu0
      %v1459 = vpop.f32.mrb[0].mxu0
      %v1460 = vadd.f32 %v911, %v1459
      %v1461 = vpop.f32.mrb[0].mxu0
      %1462 = vmatprep.mubr.bf16.mxu0 0
      %1463 = vmatmul.mubr.bf16.gmra.mrb[0].mxu0 %v1151
      %v1464 = vpop.f32.mrb[0].mxu0
      %v1465 = vadd.f32 %v916, %v1464
      %v1466 = vpop.f32.mrb[0].mxu0
      %v1467 = vpop.f32.mrb[0].mxu0
      %v1468 = vadd.f32 %v919, %v1467
      %v1469 = vpop.f32.mrb[0].mxu0
      %1470 = vmatprep.mubr.bf16.mxu0 0
      %1471 = vmatmul.mubr.bf16.gmra.mrb[0].mxu0 %v1160
      %v1472 = vpop.f32.mrb[0].mxu0
      %v1473 = vadd.f32 %v924, %v1472
      %v1474 = vpop.f32.mrb[0].mxu0
      %v1475 = vpop.f32.mrb[0].mxu0
      %v1476 = vadd.f32 %v927, %v1475
      %v1477 = vpop.f32.mrb[0].mxu0
      %1478 = vmatprep.mubr.bf16.mxu0 0
      %1479 = vmatmul.mubr.bf16.gmra.mrb[0].mxu0 %v1169
      %v1480 = vpop.f32.mrb[0].mxu0
      %v1481 = vadd.f32 %v932, %v1480
      %v1482 = vpop.f32.mrb[0].mxu0
      %v1483 = vpop.f32.mrb[0].mxu0
      %v1484 = vadd.f32 %v935, %v1483
      %v1485 = vpop.f32.mrb[0].mxu0
      %1486 = vmatprep.mubr.bf16.mxu0 0
      %1487 = vmatmul.mubr.bf16.gmra.mrb[0].mxu0 %v1178
      %v1488 = vpop.f32.mrb[0].mxu0
      %v1489 = vadd.f32 %v940, %v1488
      %v1490 = vpop.f32.mrb[0].mxu0
      %v1491 = vpop.f32.mrb[0].mxu0
      %v1492 = vadd.f32 %v943, %v1491
      %v1493 = vpop.f32.mrb[0].mxu0
      %1494 = vmatprep.mubr.bf16.mxu0 0
      %1495 = vmatmul.mubr.bf16.gmra.mrb[0].mxu0 %v1187
      %v1496 = vpop.f32.mrb[0].mxu0
      %v1497 = vadd.f32 %v948, %v1496
      %v1498 = vpop.f32.mrb[0].mxu0
      %v1499 = vpop.f32.mrb[0].mxu0
      %v1500 = vadd.f32 %v951, %v1499
      %v1501 = vpop.f32.mrb[0].mxu0
      %1502 = vmatprep.mubr.bf16.mxu0 0
      %1503 = vmatmul.mubr.bf16.gmra.mrb[0].mxu0 %v1196
      %v1504 = vpop.f32.mrb[0].mxu0
      %v1505 = vadd.f32 %v956, %v1504
      %v1506 = vpop.f32.mrb[0].mxu0
      %v1507 = vpop.f32.mrb[0].mxu0
      %v1508 = vadd.f32 %v959, %v1507
      %v1509 = vpop.f32.mrb[0].mxu0
      %1510 = vmatprep.mubr.bf16.mxu0 0
      %1511 = vmatmul.mubr.bf16.gmra.mrb[0].mxu0 %v1205
      %v1512 = vpop.f32.mrb[0].mxu0
      %v1513 = vadd.f32 %v964, %v1512
      %v1514 = vpop.f32.mrb[0].mxu0
      %v1515 = vpop.f32.mrb[0].mxu0
      %v1516 = vadd.f32 %v967, %v1515
      %v1517 = vpop.f32.mrb[0].mxu0
      %1518 = vmatprep.mubr.bf16.mxu0 0
      %1519 = vmatmul.mubr.bf16.gmra.mrb[0].mxu0 %v1214
      %v1520 = vpop.f32.mrb[0].mxu0
      %v1521 = vadd.f32 %v972, %v1520
      %v1522 = vpop.f32.mrb[0].mxu0
      %v1523 = vpop.f32.mrb[0].mxu0
      %v1524 = vadd.f32 %v975, %v1523
      %v1525 = vpop.f32.mrb[0].mxu0
      %1526 = vmatprep.mubr.bf16.mxu0 0
      %1527 = vmatmul.mubr.bf16.gmra.mrb[0].mxu0 %v1223
      %v1528 = vpop.f32.mrb[0].mxu0
      %v1529 = vadd.f32 %v980, %v1528
      %v1530 = vpop.f32.mrb[0].mxu0
      %v1531 = vpop.f32.mrb[0].mxu0
      %v1532 = vadd.f32 %v983, %v1531
      %v1533 = vpop.f32.mrb[0].mxu0
      %1534 = vmatprep.mubr.bf16.mxu0 0
      %1535 = vmatmul.mubr.bf16.gmra.mrb[0].mxu0 %v1232
      %v1536 = vpop.f32.mrb[0].mxu0
      %v1537 = vadd.f32 %v988, %v1536
      %v1538 = vpop.f32.mrb[0].mxu0
      %v1539 = vpop.f32.mrb[0].mxu0
      %v1540 = vadd.f32 %v991, %v1539
      %v1541 = vpop.f32.mrb[0].mxu0
      %1542 = vmatprep.mubr.bf16.mxu0 0
      %1543 = vmatmul.mubr.bf16.gmra.mrb[0].mxu0 %v1241
      %v1544 = vpop.f32.mrb[0].mxu0
      %v1545 = vadd.f32 %v996, %v1544
      %v1546 = vpop.f32.mrb[0].mxu0
      %v1547 = vpop.f32.mrb[0].mxu0
      %v1548 = vadd.f32 %v999, %v1547
      %v1549 = vpop.f32.mrb[0].mxu0
      %1550 = vmatprep.mubr.bf16.mxu0 0
      %1551 = vmatmul.mubr.bf16.gmra.mrb[0].mxu0 %v1250
      %v1552 = vpop.f32.mrb[0].mxu0
      %v1553 = vadd.f32 %v1004, %v1552
      %v1554 = vpop.f32.mrb[0].mxu0
      %v1555 = vpop.f32.mrb[0].mxu0
      %v1556 = vadd.f32 %v1007, %v1555
      %v1557 = vpop.f32.mrb[0].mxu0
      %1558 = vmatprep.mubr.bf16.mxu0 0
      %1559 = vmatmul.mubr.bf16.gmra.mrb[0].mxu0 %v1259
      %v1560 = vpop.f32.mrb[0].mxu0
      %v1561 = vadd.f32 %v1012, %v1560
      %v1562 = vpop.f32.mrb[0].mxu0
      %v1563 = vpop.f32.mrb[0].mxu0
      %v1564 = vadd.f32 %v1015, %v1563
      %v1565 = vpop.f32.mrb[0].mxu0
      %1566 = vmatprep.mubr.bf16.mxu0 0
      %1567 = vmatmul.mubr.bf16.gmra.mrb[0].mxu0 %v1268
      %v1568 = vpop.f32.mrb[0].mxu0
      %v1569 = vadd.f32 %v1020, %v1568
      %v1570 = vpop.f32.mrb[0].mxu0
      %v1571 = vpop.f32.mrb[0].mxu0
      %v1572 = vadd.f32 %v1023, %v1571
      %v1573 = vpop.f32.mrb[0].mxu0
      %1574 = vmatprep.mubr.bf16.mxu0 0
      %1575 = vmatmul.mubr.bf16.gmra.mrb[0].mxu0 %v1277
      %v1576 = vpop.f32.mrb[0].mxu0
      %v1577 = vadd.f32 %v1028, %v1576
      %v1578 = vpop.f32.mrb[0].mxu0
      %v1579 = vpop.f32.mrb[0].mxu0
      %v1580 = vadd.f32 %v1031, %v1579
      %v1581 = vpop.f32.mrb[0].mxu0
      %1582 = vmatprep.mubr.bf16.mxu0 0
      %1583 = vmatmul.mubr.bf16.gmra.mrb[0].mxu0 %v1286
      %v1584 = vpop.f32.mrb[0].mxu0
      %v1585 = vadd.f32 %v1036, %v1584
      %v1586 = vpop.f32.mrb[0].mxu0
      %v1587 = vpop.f32.mrb[0].mxu0
      %v1588 = vadd.f32 %v1039, %v1587
      %v1589 = vpop.f32.mrb[0].mxu0
      %1590 = vmatprep.mubr.bf16.mxu0 0
      %1591 = vmatmul.mubr.bf16.gmra.mrb[0].mxu0 %v1295
      %v1592 = vpop.f32.mrb[0].mxu0
      %v1593 = vadd.f32 %v1044, %v1592
      %v1594 = vpop.f32.mrb[0].mxu0
      %v1595 = vpop.f32.mrb[0].mxu0
      %v1596 = vadd.f32 %v1047, %v1595
      %v1597 = vpop.f32.mrb[0].mxu0
      %1598 = vmatprep.mubr.bf16.mxu0 0
      %1599 = vmatmul.mubr.bf16.gmra.mrb[0].mxu0 %v1304
      %v1600 = vpop.f32.mrb[0].mxu0
      %v1601 = vadd.f32 %v1052, %v1600
      %v1602 = vpop.f32.mrb[0].mxu0
      %v1603 = vpop.f32.mrb[0].mxu0
      %v1604 = vadd.f32 %v1055, %v1603
      %v1605 = vpop.f32.mrb[0].mxu0
      %1606 = vmatprep.mubr.bf16.mxu0 0
      %1607 = vmatmul.mubr.bf16.gmra.mrb[0].mxu0 %v1313
      %v1608 = vpop.f32.mrb[0].mxu0
      %v1609 = vadd.f32 %v1060, %v1608
      %v1610 = vpop.f32.mrb[0].mxu0
      %v1611 = vpop.f32.mrb[0].mxu0
      %v1612 = vadd.f32 %v1063, %v1611
      %v1613 = vpop.f32.mrb[0].mxu0
      %1614 = vmatprep.mubr.bf16.mxu0 0
      %1615 = vmatmul.mubr.bf16.gmra.mrb[0].mxu0 %v1322
      %v1616 = vpop.f32.mrb[0].mxu0
      %v1617 = vadd.f32 %v1068, %v1616
      %v1618 = vpop.f32.mrb[0].mxu0
      %v1619 = vpop.f32.mrb[0].mxu0
      %v1620 = vadd.f32 %v1071, %v1619
      %v1621 = vpop.f32.mrb[0].mxu0
      %1622 = vmatprep.mubr.bf16.mxu0 0
      %1623 = vmatmul.mubr.bf16.gmra.mrb[0].mxu0 %v1331
      %v1624 = vpop.f32.mrb[0].mxu0
      %v1625 = vadd.f32 %v1076, %v1624
      %v1626 = vpop.f32.mrb[0].mxu0
      %v1627 = vpop.f32.mrb[0].mxu0
      %v1628 = vadd.f32 %v1079, %v1627
      %v1629 = vpop.f32.mrb[0].mxu0
      %1630 = vmatprep.mubr.bf16.mxu0 0
      %1631 = vmatmul.mubr.bf16.gmra.mrb[0].mxu0 %v1340
      %v1632 = vpop.f32.mrb[0].mxu0
      %v1633 = vadd.f32 %v1084, %v1632
      %v1634 = vpop.f32.mrb[0].mxu0
      %v1635 = vpop.f32.mrb[0].mxu0
      %v1636 = vadd.f32 %v1087, %v1635
      %v1637 = vpop.f32.mrb[0].mxu0
      %1638 = vmatprep.mubr.bf16.mxu0 0
      %1639 = vmatmul.mubr.bf16.gmra.mrb[0].mxu0 %v1349
      %v1640 = vpop.f32.mrb[0].mxu0
      %v1641 = vadd.f32 %v1092, %v1640
      %v1642 = vpop.f32.mrb[0].mxu0
      %v1643 = vpop.f32.mrb[0].mxu0
      %v1644 = vadd.f32 %v1095, %v1643
      %v1645 = vpop.f32.mrb[0].mxu0
      %1646 = vdwg.mxu0
      %v1647 = vld [vmem:[#allocation2 + $0xc] sm:$0xf]
      %v1648 = vld [vmem:[#allocation2 + $0x10] sm:$0xf]
      %v1649 = vld [vmem:[#allocation2 + $0x14] sm:$0xf]
      %v1650 = vld [vmem:[#allocation2 + $0x18] sm:$0xf]
      %v1651 = vld [vmem:[#allocation2 + $0x1c] sm:$0xf]
      %v1652 = vld [vmem:[#allocation2 + $0x20] sm:$0xf]
      %v1653 = vld [vmem:[#allocation2 + $0x24] sm:$0xf]
      %v1654 = vld [vmem:[#allocation2 + $0x28] sm:$0xf]
      %v1655 = vld [vmem:[#allocation2 + $0x2c] sm:$0xf]
      %v1656 = vld [vmem:[#allocation2 + $0x30] sm:$0xf]
      %v1657 = vld [vmem:[#allocation2 + $0x34] sm:$0xf]
      %v1658 = vld [vmem:[#allocation2 + $0x38] sm:$0xf]
      %v1659 = vld [vmem:[#allocation2 + $0x3c] sm:$0xf]
      %v1660 = vld [vmem:[#allocation2 + $0x40] sm:$0xf]
      %v1661 = vld [vmem:[#allocation2 + $0x44] sm:$0xf]
      %v1662 = vld [vmem:[#allocation2 + $0x48] sm:$0xf]
      %v1663 = vld [vmem:[#allocation2 + $0x4c] sm:$0xf]
      %v1664 = vld [vmem:[#allocation2 + $0x50] sm:$0xf]
      %v1665 = vld [vmem:[#allocation2 + $0x54] sm:$0xf]
      %v1666 = vld [vmem:[#allocation2 + $0x58] sm:$0xf]
      %v1667 = vld [vmem:[#allocation2 + $0x5c] sm:$0xf]
      %v1668 = vld [vmem:[#allocation2 + $0x60] sm:$0xf]
      %v1669 = vld [vmem:[#allocation2 + $0x64] sm:$0xf]
      %v1670 = vld [vmem:[#allocation2 + $0x68] sm:$0xf]
      %v1671 = vld [vmem:[#allocation2 + $0x6c] sm:$0xf]
      %v1672 = vld [vmem:[#allocation2 + $0x70] sm:$0xf]
      %v1673 = vld [vmem:[#allocation2 + $0x74] sm:$0xf]
      %v1674 = vld [vmem:[#allocation2 + $0x78] sm:$0xf]
      %v1675 = vld [vmem:[#allocation2 + $0x7c] sm:$0xf]
      %v1676 = vld [vmem:[#allocation2 + $0x80] sm:$0xf]
      %v1677 = vld [vmem:[#allocation2 + $0x84] sm:$0xf]
      %v1678 = vld [vmem:[#allocation2 + $0x88] sm:$0xf]
      %v1679 = vld [vmem:[#allocation2 + $0x8c] sm:$0xf]
      %v1680 = vld [vmem:[#allocation2 + $0x90] sm:$0xf]
      %v1681 = vld [vmem:[#allocation2 + $0x94] sm:$0xf]
      %v1682 = vld [vmem:[#allocation2 + $0x98] sm:$0xf]
      %v1683 = vld [vmem:[#allocation2 + $0x9c] sm:$0xf]
      %v1684 = vld [vmem:[#allocation2 + $0xa0] sm:$0xf]
      %v1685 = vld [vmem:[#allocation2 + $0xa4] sm:$0xf]
      %v1686 = vld [vmem:[#allocation2 + $0xa8] sm:$0xf]
      %v1687 = vld [vmem:[#allocation2 + $0xac] sm:$0xf]
      %v1688 = vld [vmem:[#allocation2 + $0xb0] sm:$0xf]
      %v1689 = vld [vmem:[#allocation2 + $0xb4] sm:$0xf]
      %v1690 = vld [vmem:[#allocation2 + $0xb8] sm:$0xf]
      %v1691 = vld [vmem:[#allocation2 + $0xbc] sm:$0xf]
      %v1692 = vld [vmem:[#allocation2 + $0xc0] sm:$0xf]
      %v1693 = vld [vmem:[#allocation2 + $0xc4] sm:$0xf]
      %v1694 = vld [vmem:[#allocation2 + $0xc8] sm:$0xf]
      %v1695 = vld [vmem:[#allocation2 + $0xcc] sm:$0x1]
      %s1696 = scalar_lea.vmem %s4, 128
      %v1697 = vld [vmem:[%s1696] sm:$0xf]
      %v1698 = vld [vmem:[%s1696 + $0x4] sm:$0xf]
      %v1699 = vld [vmem:[%s1696 + $0x8] sm:$0xf]
      %v1700 = vld [vmem:[%s1696 + $0xc] sm:$0xf]
      %v1701 = vld [vmem:[%s1696 + $0x10] sm:$0xf]
      %v1702 = vld [vmem:[%s1696 + $0x14] sm:$0xf]
      %v1703 = vld [vmem:[%s1696 + $0x18] sm:$0xf]
      %v1704 = vld [vmem:[%s1696 + $0x1c] sm:$0xf]
      %v1705 = vld [vmem:[%s1696 + $0x20] sm:$0xf]
      %v1706 = vld [vmem:[%s1696 + $0x24] sm:$0xf]
      %v1707 = vld [vmem:[%s1696 + $0x28] sm:$0xf]
      %v1708 = vld [vmem:[%s1696 + $0x2c] sm:$0xf]
      %v1709 = vld [vmem:[%s1696 + $0x30] sm:$0xf]
      %v1710 = vld [vmem:[%s1696 + $0x34] sm:$0xf]
      %v1711 = vld [vmem:[%s1696 + $0x38] sm:$0xf]
      %v1712 = vld [vmem:[%s1696 + $0x3c] sm:$0xf]
      %v1762 = vunpack.c.l.b16 %v1647
      %v1763 = vunpack.c.l.b16 %v1648
      %v1764 = vunpack.c.l.b16 %v1649
      %v1765 = vunpack.c.l.b16 %v1650
      %v1766 = vunpack.c.l.b16 %v1651
      %v1767 = vunpack.c.l.b16 %v1652
      %v1768 = vunpack.c.l.b16 %v1653
      %v1769 = vunpack.c.l.b16 %v1654
      %v1770 = vunpack.c.l.b16 %v1655
      %v1771 = vunpack.c.l.b16 %v1656
      %v1772 = vunpack.c.l.b16 %v1657
      %v1773 = vunpack.c.l.b16 %v1658
      %v1774 = vunpack.c.l.b16 %v1659
      %v1775 = vunpack.c.l.b16 %v1660
      %v1776 = vunpack.c.l.b16 %v1661
      %v1777 = vunpack.c.l.b16 %v1662
      %v1778 = vunpack.c.l.b16 %v1663
      %v1779 = vunpack.c.l.b16 %v1664
      %v1780 = vunpack.c.l.b16 %v1665
      %v1781 = vunpack.c.l.b16 %v1666
      %v1782 = vunpack.c.l.b16 %v1667
      %v1783 = vunpack.c.l.b16 %v1668
      %v1784 = vunpack.c.l.b16 %v1669
      %v1785 = vunpack.c.l.b16 %v1670
      %v1786 = vunpack.c.l.b16 %v1671
      %v1787 = vunpack.c.l.b16 %v1672
      %v1788 = vunpack.c.l.b16 %v1673
      %v1789 = vunpack.c.l.b16 %v1674
      %v1790 = vunpack.c.l.b16 %v1675
      %v1791 = vunpack.c.l.b16 %v1676
      %v1792 = vunpack.c.l.b16 %v1677
      %v1793 = vunpack.c.l.b16 %v1678
      %v1794 = vunpack.c.l.b16 %v1679
      %v1795 = vunpack.c.l.b16 %v1680
      %v1796 = vunpack.c.l.b16 %v1681
      %v1797 = vunpack.c.l.b16 %v1682
      %v1798 = vunpack.c.l.b16 %v1683
      %v1799 = vunpack.c.l.b16 %v1684
      %v1800 = vunpack.c.l.b16 %v1685
      %v1801 = vunpack.c.l.b16 %v1686
      %v1802 = vunpack.c.l.b16 %v1687
      %v1803 = vunpack.c.l.b16 %v1688
      %v1804 = vunpack.c.l.b16 %v1689
      %v1805 = vunpack.c.l.b16 %v1690
      %v1806 = vunpack.c.l.b16 %v1691
      %v1807 = vunpack.c.l.b16 %v1692
      %v1808 = vunpack.c.l.b16 %v1693
      %v1809 = vunpack.c.l.b16 %v1694
      %v1810 = vunpack.c.l.b16 %v1695
      %v1811 = vpack.c.b16 %v1763, %v1762
      %v1812 = vpack.c.b16 %v1765, %v1764
      %v1813 = vpack.c.b16 %v1767, %v1766
      %v1814 = vpack.c.b16 %v1769, %v1768
      %v1815 = vpack.c.b16 %v1771, %v1770
      %v1816 = vpack.c.b16 %v1773, %v1772
      %v1817 = vpack.c.b16 %v1775, %v1774
      %v1818 = vpack.c.b16 %v1777, %v1776
      %v1819 = vpack.c.b16 %v1779, %v1778
      %v1820 = vpack.c.b16 %v1781, %v1780
      %v1821 = vpack.c.b16 %v1783, %v1782
      %v1822 = vpack.c.b16 %v1785, %v1784
      %v1823 = vpack.c.b16 %v1787, %v1786
      %v1824 = vpack.c.b16 %v1789, %v1788
      %v1825 = vpack.c.b16 %v1791, %v1790
      %v1826 = vpack.c.b16 %v1793, %v1792
      %v1827 = vpack.c.b16 %v1795, %v1794
      %v1828 = vpack.c.b16 %v1797, %v1796
      %v1829 = vpack.c.b16 %v1799, %v1798
      %v1830 = vpack.c.b16 %v1801, %v1800
      %v1831 = vpack.c.b16 %v1803, %v1802
      %v1832 = vpack.c.b16 %v1805, %v1804
      %v1833 = vpack.c.b16 %v1807, %v1806
      %v1834 = vpack.c.b16 %v1809, %v1808
      %v1835 = vpack.c.b16 %v1810, %v1810
      %vm1836 = vsmask.f32 7424
      %v1838 = vshrl.u32 %v1811, 16
      %v1840 = vshll.u32 %v1811, 16
      %v1842 = vrot.slane %v1840, 1
      %v1843 = vor.u32 %v1838, %v1842
      %v1845 = vshll.u32 %v1812, 16
      %v1847 = vrot.slane %v1845, 1
      %v1848 = vsel %vm1836, %v1843, %v1847
      %v1849 = vshrl.u32 %v1812, 16
      %v1851 = vor.u32 %v1849, %v1847
      %v1853 = vshll.u32 %v1813, 16
      %v1855 = vrot.slane %v1853, 1
      %v1856 = vsel %vm1836, %v1851, %v1855
      %v1857 = vshrl.u32 %v1813, 16
      %v1859 = vor.u32 %v1857, %v1855
      %v1861 = vshll.u32 %v1814, 16
      %v1863 = vrot.slane %v1861, 1
      %v1864 = vsel %vm1836, %v1859, %v1863
      %v1865 = vshrl.u32 %v1814, 16
      %v1867 = vor.u32 %v1865, %v1863
      %v1869 = vshll.u32 %v1815, 16
      %v1871 = vrot.slane %v1869, 1
      %v1872 = vsel %vm1836, %v1867, %v1871
      %v1873 = vshrl.u32 %v1815, 16
      %v1875 = vor.u32 %v1873, %v1871
      %v1877 = vshll.u32 %v1816, 16
      %v1879 = vrot.slane %v1877, 1
      %v1880 = vsel %vm1836, %v1875, %v1879
      %v1881 = vshrl.u32 %v1816, 16
      %v1883 = vor.u32 %v1881, %v1879
      %v1885 = vshll.u32 %v1817, 16
      %v1887 = vrot.slane %v1885, 1
      %v1888 = vsel %vm1836, %v1883, %v1887
      %v1889 = vshrl.u32 %v1817, 16
      %v1891 = vor.u32 %v1889, %v1887
      %v1893 = vshll.u32 %v1818, 16
      %v1895 = vrot.slane %v1893, 1
      %v1896 = vsel %vm1836, %v1891, %v1895
      %v1897 = vshrl.u32 %v1818, 16
      %v1899 = vor.u32 %v1897, %v1895
      %v1901 = vshll.u32 %v1819, 16
      %v1903 = vrot.slane %v1901, 1
      %v1904 = vsel %vm1836, %v1899, %v1903
      %v1905 = vshrl.u32 %v1819, 16
      %v1907 = vor.u32 %v1905, %v1903
      %v1909 = vshll.u32 %v1820, 16
      %v1911 = vrot.slane %v1909, 1
      %v1912 = vsel %vm1836, %v1907, %v1911
      %v1913 = vshrl.u32 %v1820, 16
      %v1915 = vor.u32 %v1913, %v1911
      %v1917 = vshll.u32 %v1821, 16
      %v1919 = vrot.slane %v1917, 1
      %v1920 = vsel %vm1836, %v1915, %v1919
      %v1921 = vshrl.u32 %v1821, 16
      %v1923 = vor.u32 %v1921, %v1919
      %v1925 = vshll.u32 %v1822, 16
      %v1927 = vrot.slane %v1925, 1
      %v1928 = vsel %vm1836, %v1923, %v1927
      %v1929 = vshrl.u32 %v1822, 16
      %v1931 = vor.u32 %v1929, %v1927
      %v1933 = vshll.u32 %v1823, 16
      %v1935 = vrot.slane %v1933, 1
      %v1936 = vsel %vm1836, %v1931, %v1935
      %v1937 = vshrl.u32 %v1823, 16
      %v1939 = vor.u32 %v1937, %v1935
      %v1941 = vshll.u32 %v1824, 16
      %v1943 = vrot.slane %v1941, 1
      %v1944 = vsel %vm1836, %v1939, %v1943
      %v1945 = vshrl.u32 %v1824, 16
      %v1947 = vor.u32 %v1945, %v1943
      %v1949 = vshll.u32 %v1825, 16
      %v1951 = vrot.slane %v1949, 1
      %v1952 = vsel %vm1836, %v1947, %v1951
      %v1953 = vshrl.u32 %v1825, 16
      %v1955 = vor.u32 %v1953, %v1951
      %v1957 = vshll.u32 %v1826, 16
      %v1959 = vrot.slane %v1957, 1
      %v1960 = vsel %vm1836, %v1955, %v1959
      %v1961 = vshrl.u32 %v1826, 16
      %v1963 = vor.u32 %v1961, %v1959
      %v1965 = vshll.u32 %v1827, 16
      %v1967 = vrot.slane %v1965, 1
      %v1968 = vsel %vm1836, %v1963, %v1967
      %v1969 = vshrl.u32 %v1827, 16
      %v1971 = vor.u32 %v1969, %v1967
      %v1973 = vshll.u32 %v1828, 16
      %v1975 = vrot.slane %v1973, 1
      %v1976 = vsel %vm1836, %v1971, %v1975
      %v1977 = vshrl.u32 %v1828, 16
      %v1979 = vor.u32 %v1977, %v1975
      %v1981 = vshll.u32 %v1829, 16
      %v1983 = vrot.slane %v1981, 1
      %v1984 = vsel %vm1836, %v1979, %v1983
      %v1985 = vshrl.u32 %v1829, 16
      %v1987 = vor.u32 %v1985, %v1983
      %v1989 = vshll.u32 %v1830, 16
      %v1991 = vrot.slane %v1989, 1
      %v1992 = vsel %vm1836, %v1987, %v1991
      %v1993 = vshrl.u32 %v1830, 16
      %v1995 = vor.u32 %v1993, %v1991
      %v1997 = vshll.u32 %v1831, 16
      %v1999 = vrot.slane %v1997, 1
      %v2000 = vsel %vm1836, %v1995, %v1999
      %v2001 = vshrl.u32 %v1831, 16
      %v2003 = vor.u32 %v2001, %v1999
      %v2005 = vshll.u32 %v1832, 16
      %v2007 = vrot.slane %v2005, 1
      %v2008 = vsel %vm1836, %v2003, %v2007
      %v2009 = vshrl.u32 %v1832, 16
      %v2011 = vor.u32 %v2009, %v2007
      %v2013 = vshll.u32 %v1833, 16
      %v2015 = vrot.slane %v2013, 1
      %v2016 = vsel %vm1836, %v2011, %v2015
      %v2017 = vshrl.u32 %v1833, 16
      %v2019 = vor.u32 %v2017, %v2015
      %v2021 = vshll.u32 %v1834, 16
      %v2023 = vrot.slane %v2021, 1
      %v2024 = vsel %vm1836, %v2019, %v2023
      %v2025 = vshrl.u32 %v1834, 16
      %v2027 = vor.u32 %v2025, %v2023
      %v2029 = vshll.u32 %v1835, 16
      %v2031 = vrot.slane %v2029, 1
      %v2032 = vsel %vm1836, %v2027, %v2031
      %v2073 = vunpack.c.l.b16 %v1697
      %v2074 = vunpack.c.l.b16 %v1698
      %v2075 = vunpack.c.l.b16 %v1699
      %v2076 = vunpack.c.l.b16 %v1700
      %v2077 = vunpack.c.l.b16 %v1701
      %v2078 = vunpack.c.l.b16 %v1702
      %v2079 = vunpack.c.l.b16 %v1703
      %v2080 = vunpack.c.l.b16 %v1704
      %v2081 = vunpack.c.l.b16 %v1705
      %v2082 = vunpack.c.l.b16 %v1706
      %v2083 = vunpack.c.l.b16 %v1707
      %v2084 = vunpack.c.l.b16 %v1708
      %v2085 = vunpack.c.l.b16 %v1709
      %v2086 = vunpack.c.l.b16 %v1710
      %v2087 = vunpack.c.l.b16 %v1711
      %v2088 = vunpack.c.l.b16 %v1712
      %v2089 = vpack.c.b16 %v2074, %v2073
      %v2090 = vpack.c.b16 %v2076, %v2075
      %v2091 = vpack.c.b16 %v2078, %v2077
      %v2092 = vpack.c.b16 %v2080, %v2079
      %v2093 = vpack.c.b16 %v2082, %v2081
      %v2094 = vpack.c.b16 %v2084, %v2083
      %v2095 = vpack.c.b16 %v2086, %v2085
      %v2096 = vpack.c.b16 %v2088, %v2087
      %2105 = vmatprep.subr.bf16.mxu0 0
      %2106 = vmatpush1.bf16.msra.mxu0 %v2089
      %2107 = vmatprep.subr.bf16.mxu0 0
      %2108 = vmatpush1.bf16.msra.mxu0 %v2090
      %2109 = vmatprep.subr.bf16.mxu0 0
      %2110 = vmatpush1.bf16.msra.mxu0 %v2091
      %2111 = vmatprep.subr.bf16.mxu0 0
      %2112 = vmatpush1.bf16.msra.mxu0 %v2092
      %2113 = vmatprep.subr.bf16.mxu0 0
      %2114 = vmatpush1.bf16.msra.mxu0 %v2093
      %2115 = vmatprep.subr.bf16.mxu0 0
      %2116 = vmatpush1.bf16.msra.mxu0 %v2094
      %2117 = vmatprep.subr.bf16.mxu0 0
      %2118 = vmatpush1.bf16.msra.mxu0 %v2095
      %2119 = vmatprep.subr.bf16.mxu0 0
      %2120 = vmatpush1.bf16.msra.mxu0 %v2096
      %2121 = vmatprep.subr.bf16.mxu0 0
      %2122 = vmatpush1.bf16.msra.mxu0 0
      %2123 = vmatprep.subr.bf16.mxu0 0
      %2124 = vmatpush1.bf16.msra.mxu0 0
      %2125 = vmatprep.subr.bf16.mxu0 0
      %2126 = vmatpush1.bf16.msra.mxu0 0
      %2127 = vmatprep.subr.bf16.mxu0 0
      %2128 = vmatpush1.bf16.msra.mxu0 0
      %2129 = vmatprep.subr.bf16.mxu0 0
      %2130 = vmatpush1.bf16.msra.mxu0 0
      %2131 = vmatprep.subr.bf16.mxu0 0
      %2132 = vmatpush1.bf16.msra.mxu0 0
      %2133 = vmatprep.subr.bf16.mxu0 0
      %2134 = vmatpush1.bf16.msra.mxu0 0
      %2135 = vmatprep.subr.bf16.mxu0 0
      %2136 = vmatpush1.bf16.msra.mxu0 0
      %2137 = vmatprep.mubr.bf16.mxu0 0
      %2138 = vmatmul.mubr.bf16.gmra.mrb[0].mxu0 %v1848
      %v2139 = vpop.f32.mrb[0].mxu0
      %v2140 = vadd.f32 0.0, %v2139
      %v2141 = vpop.f32.mrb[0].mxu0
      %v2142 = vpop.f32.mrb[0].mxu0
      %v2143 = vadd.f32 0.0, %v2142
      %v2144 = vpop.f32.mrb[0].mxu0
      %2145 = vmatprep.mubr.bf16.mxu0 0
      %2146 = vmatmul.mubr.bf16.gmra.mrb[0].mxu0 %v1856
      %v2147 = vpop.f32.mrb[0].mxu0
      %v2148 = vadd.f32 0.0, %v2147
      %v2149 = vpop.f32.mrb[0].mxu0
      %v2150 = vpop.f32.mrb[0].mxu0
      %v2151 = vadd.f32 0.0, %v2150
      %v2152 = vpop.f32.mrb[0].mxu0
      %2153 = vmatprep.mubr.bf16.mxu0 0
      %2154 = vmatmul.mubr.bf16.gmra.mrb[0].mxu0 %v1864
      %v2155 = vpop.f32.mrb[0].mxu0
      %v2156 = vadd.f32 0.0, %v2155
      %v2157 = vpop.f32.mrb[0].mxu0
      %v2158 = vpop.f32.mrb[0].mxu0
      %v2159 = vadd.f32 0.0, %v2158
      %v2160 = vpop.f32.mrb[0].mxu0
      %2161 = vmatprep.mubr.bf16.mxu0 0
      %2162 = vmatmul.mubr.bf16.gmra.mrb[0].mxu0 %v1872
      %v2163 = vpop.f32.mrb[0].mxu0
      %v2164 = vadd.f32 0.0, %v2163
      %v2165 = vpop.f32.mrb[0].mxu0
      %v2166 = vpop.f32.mrb[0].mxu0
      %v2167 = vadd.f32 0.0, %v2166
      %v2168 = vpop.f32.mrb[0].mxu0
      %2169 = vmatprep.mubr.bf16.mxu0 0
      %2170 = vmatmul.mubr.bf16.gmra.mrb[0].mxu0 %v1880
      %v2171 = vpop.f32.mrb[0].mxu0
      %v2172 = vadd.f32 0.0, %v2171
      %v2173 = vpop.f32.mrb[0].mxu0
      %v2174 = vpop.f32.mrb[0].mxu0
      %v2175 = vadd.f32 0.0, %v2174
      %v2176 = vpop.f32.mrb[0].mxu0
      %2177 = vmatprep.mubr.bf16.mxu0 0
      %2178 = vmatmul.mubr.bf16.gmra.mrb[0].mxu0 %v1888
      %v2179 = vpop.f32.mrb[0].mxu0
      %v2180 = vadd.f32 0.0, %v2179
      %v2181 = vpop.f32.mrb[0].mxu0
      %v2182 = vpop.f32.mrb[0].mxu0
      %v2183 = vadd.f32 0.0, %v2182
      %v2184 = vpop.f32.mrb[0].mxu0
      %2185 = vmatprep.mubr.bf16.mxu0 0
      %2186 = vmatmul.mubr.bf16.gmra.mrb[0].mxu0 %v1896
      %v2187 = vpop.f32.mrb[0].mxu0
      %v2188 = vadd.f32 0.0, %v2187
      %v2189 = vpop.f32.mrb[0].mxu0
      %v2190 = vpop.f32.mrb[0].mxu0
      %v2191 = vadd.f32 0.0, %v2190
      %v2192 = vpop.f32.mrb[0].mxu0
      %2193 = vmatprep.mubr.bf16.mxu0 0
      %2194 = vmatmul.mubr.bf16.gmra.mrb[0].mxu0 %v1904
      %v2195 = vpop.f32.mrb[0].mxu0
      %v2196 = vadd.f32 0.0, %v2195
      %v2197 = vpop.f32.mrb[0].mxu0
      %v2198 = vpop.f32.mrb[0].mxu0
      %v2199 = vadd.f32 0.0, %v2198
      %v2200 = vpop.f32.mrb[0].mxu0
      %2201 = vmatprep.mubr.bf16.mxu0 0
      %2202 = vmatmul.mubr.bf16.gmra.mrb[0].mxu0 %v1912
      %v2203 = vpop.f32.mrb[0].mxu0
      %v2204 = vadd.f32 0.0, %v2203
      %v2205 = vpop.f32.mrb[0].mxu0
      %v2206 = vpop.f32.mrb[0].mxu0
      %v2207 = vadd.f32 0.0, %v2206
      %v2208 = vpop.f32.mrb[0].mxu0
      %2209 = vmatprep.mubr.bf16.mxu0 0
      %2210 = vmatmul.mubr.bf16.gmra.mrb[0].mxu0 %v1920
      %v2211 = vpop.f32.mrb[0].mxu0
      %v2212 = vadd.f32 0.0, %v2211
      %v2213 = vpop.f32.mrb[0].mxu0
      %v2214 = vpop.f32.mrb[0].mxu0
      %v2215 = vadd.f32 0.0, %v2214
      %v2216 = vpop.f32.mrb[0].mxu0
      %2217 = vmatprep.mubr.bf16.mxu0 0
      %2218 = vmatmul.mubr.bf16.gmra.mrb[0].mxu0 %v1928
      %v2219 = vpop.f32.mrb[0].mxu0
      %v2220 = vadd.f32 0.0, %v2219
      %v2221 = vpop.f32.mrb[0].mxu0
      %v2222 = vpop.f32.mrb[0].mxu0
      %v2223 = vadd.f32 0.0, %v2222
      %v2224 = vpop.f32.mrb[0].mxu0
      %2225 = vmatprep.mubr.bf16.mxu0 0
      %2226 = vmatmul.mubr.bf16.gmra.mrb[0].mxu0 %v1936
      %v2227 = vpop.f32.mrb[0].mxu0
      %v2228 = vadd.f32 0.0, %v2227
      %v2229 = vpop.f32.mrb[0].mxu0
      %v2230 = vpop.f32.mrb[0].mxu0
      %v2231 = vadd.f32 0.0, %v2230
      %v2232 = vpop.f32.mrb[0].mxu0
      %2233 = vmatprep.mubr.bf16.mxu0 0
      %2234 = vmatmul.mubr.bf16.gmra.mrb[0].mxu0 %v1944
      %v2235 = vpop.f32.mrb[0].mxu0
      %v2236 = vadd.f32 0.0, %v2235
      %v2237 = vpop.f32.mrb[0].mxu0
      %v2238 = vpop.f32.mrb[0].mxu0
      %v2239 = vadd.f32 0.0, %v2238
      %v2240 = vpop.f32.mrb[0].mxu0
      %2241 = vmatprep.mubr.bf16.mxu0 0
      %2242 = vmatmul.mubr.bf16.gmra.mrb[0].mxu0 %v1952
      %v2243 = vpop.f32.mrb[0].mxu0
      %v2244 = vadd.f32 0.0, %v2243
      %v2245 = vpop.f32.mrb[0].mxu0
      %v2246 = vpop.f32.mrb[0].mxu0
      %v2247 = vadd.f32 0.0, %v2246
      %v2248 = vpop.f32.mrb[0].mxu0
      %2249 = vmatprep.mubr.bf16.mxu0 0
      %2250 = vmatmul.mubr.bf16.gmra.mrb[0].mxu0 %v1960
      %v2251 = vpop.f32.mrb[0].mxu0
      %v2252 = vadd.f32 0.0, %v2251
      %v2253 = vpop.f32.mrb[0].mxu0
      %v2254 = vpop.f32.mrb[0].mxu0
      %v2255 = vadd.f32 0.0, %v2254
      %v2256 = vpop.f32.mrb[0].mxu0
      %2257 = vmatprep.mubr.bf16.mxu0 0
      %2258 = vmatmul.mubr.bf16.gmra.mrb[0].mxu0 %v1968
      %v2259 = vpop.f32.mrb[0].mxu0
      %v2260 = vadd.f32 0.0, %v2259
      %v2261 = vpop.f32.mrb[0].mxu0
      %v2262 = vpop.f32.mrb[0].mxu0
      %v2263 = vadd.f32 0.0, %v2262
      %v2264 = vpop.f32.mrb[0].mxu0
      %2265 = vmatprep.mubr.bf16.mxu0 0
      %2266 = vmatmul.mubr.bf16.gmra.mrb[0].mxu0 %v1976
      %v2267 = vpop.f32.mrb[0].mxu0
      %v2268 = vadd.f32 0.0, %v2267
      %v2269 = vpop.f32.mrb[0].mxu0
      %v2270 = vpop.f32.mrb[0].mxu0
      %v2271 = vadd.f32 0.0, %v2270
      %v2272 = vpop.f32.mrb[0].mxu0
      %2273 = vmatprep.mubr.bf16.mxu0 0
      %2274 = vmatmul.mubr.bf16.gmra.mrb[0].mxu0 %v1984
      %v2275 = vpop.f32.mrb[0].mxu0
      %v2276 = vadd.f32 0.0, %v2275
      %v2277 = vpop.f32.mrb[0].mxu0
      %v2278 = vpop.f32.mrb[0].mxu0
      %v2279 = vadd.f32 0.0, %v2278
      %v2280 = vpop.f32.mrb[0].mxu0
      %2281 = vmatprep.mubr.bf16.mxu0 0
      %2282 = vmatmul.mubr.bf16.gmra.mrb[0].mxu0 %v1992
      %v2283 = vpop.f32.mrb[0].mxu0
      %v2284 = vadd.f32 0.0, %v2283
      %v2285 = vpop.f32.mrb[0].mxu0
      %v2286 = vpop.f32.mrb[0].mxu0
      %v2287 = vadd.f32 0.0, %v2286
      %v2288 = vpop.f32.mrb[0].mxu0
      %2289 = vmatprep.mubr.bf16.mxu0 0
      %2290 = vmatmul.mubr.bf16.gmra.mrb[0].mxu0 %v2000
      %v2291 = vpop.f32.mrb[0].mxu0
      %v2292 = vadd.f32 0.0, %v2291
      %v2293 = vpop.f32.mrb[0].mxu0
      %v2294 = vpop.f32.mrb[0].mxu0
      %v2295 = vadd.f32 0.0, %v2294
      %v2296 = vpop.f32.mrb[0].mxu0
      %2297 = vmatprep.mubr.bf16.mxu0 0
      %2298 = vmatmul.mubr.bf16.gmra.mrb[0].mxu0 %v2008
      %v2299 = vpop.f32.mrb[0].mxu0
      %v2300 = vadd.f32 0.0, %v2299
      %v2301 = vpop.f32.mrb[0].mxu0
      %v2302 = vpop.f32.mrb[0].mxu0
      %v2303 = vadd.f32 0.0, %v2302
      %v2304 = vpop.f32.mrb[0].mxu0
      %2305 = vmatprep.mubr.bf16.mxu0 0
      %2306 = vmatmul.mubr.bf16.gmra.mrb[0].mxu0 %v2016
      %v2307 = vpop.f32.mrb[0].mxu0
      %v2308 = vadd.f32 0.0, %v2307
      %v2309 = vpop.f32.mrb[0].mxu0
      %v2310 = vpop.f32.mrb[0].mxu0
      %v2311 = vadd.f32 0.0, %v2310
      %v2312 = vpop.f32.mrb[0].mxu0
      %2313 = vmatprep.mubr.bf16.mxu0 0
      %2314 = vmatmul.mubr.bf16.gmra.mrb[0].mxu0 %v2024
      %v2315 = vpop.f32.mrb[0].mxu0
      %v2316 = vadd.f32 0.0, %v2315
      %v2317 = vpop.f32.mrb[0].mxu0
      %v2318 = vpop.f32.mrb[0].mxu0
      %v2319 = vadd.f32 0.0, %v2318
      %v2320 = vpop.f32.mrb[0].mxu0
      %2321 = vmatprep.mubr.bf16.mxu0 0
      %2322 = vmatmul.mubr.bf16.gmra.mrb[0].mxu0 %v2032
      %v2323 = vpop.f32.mrb[0].mxu0
      %v2324 = vadd.f32 0.0, %v2323
      %v2325 = vpop.f32.mrb[0].mxu0
      %v2326 = vpop.f32.mrb[0].mxu0
      %v2327 = vadd.f32 0.0, %v2326
      %v2328 = vpop.f32.mrb[0].mxu0
      %2329 = vdwg.mxu0
      %v2330 = vadd.f32 %v1457, %v2140
      %v2331 = vadd.f32 %v1460, %v2143
      %v2332 = vadd.f32 %v1465, %v2148
      %v2333 = vadd.f32 %v1468, %v2151
      %v2334 = vadd.f32 %v1473, %v2156
      %v2335 = vadd.f32 %v1476, %v2159
      %v2336 = vadd.f32 %v1481, %v2164
      %v2337 = vadd.f32 %v1484, %v2167
      %v2338 = vadd.f32 %v1489, %v2172
      %v2339 = vadd.f32 %v1492, %v2175
      %v2340 = vadd.f32 %v1497, %v2180
      %v2341 = vadd.f32 %v1500, %v2183
      %v2342 = vadd.f32 %v1505, %v2188
      %v2343 = vadd.f32 %v1508, %v2191
      %v2344 = vadd.f32 %v1513, %v2196
      %v2345 = vadd.f32 %v1516, %v2199
      %v2346 = vadd.f32 %v1521, %v2204
      %v2347 = vadd.f32 %v1524, %v2207
      %v2348 = vadd.f32 %v1529, %v2212
      %v2349 = vadd.f32 %v1532, %v2215
      %v2350 = vadd.f32 %v1537, %v2220
      %v2351 = vadd.f32 %v1540, %v2223
      %v2352 = vadd.f32 %v1545, %v2228
      %v2353 = vadd.f32 %v1548, %v2231
      %v2354 = vadd.f32 %v1553, %v2236
      %v2355 = vadd.f32 %v1556, %v2239
      %v2356 = vadd.f32 %v1561, %v2244
      %v2357 = vadd.f32 %v1564, %v2247
      %v2358 = vadd.f32 %v1569, %v2252
      %v2359 = vadd.f32 %v1572, %v2255
      %v2360 = vadd.f32 %v1577, %v2260
      %v2361 = vadd.f32 %v1580, %v2263
      %v2362 = vadd.f32 %v1585, %v2268
      %v2363 = vadd.f32 %v1588, %v2271
      %v2364 = vadd.f32 %v1593, %v2276
      %v2365 = vadd.f32 %v1596, %v2279
      %v2366 = vadd.f32 %v1601, %v2284
      %v2367 = vadd.f32 %v1604, %v2287
      %v2368 = vadd.f32 %v1609, %v2292
      %v2369 = vadd.f32 %v1612, %v2295
      %v2370 = vadd.f32 %v1617, %v2300
      %v2371 = vadd.f32 %v1620, %v2303
      %v2372 = vadd.f32 %v1625, %v2308
      %v2373 = vadd.f32 %v1628, %v2311
      %v2374 = vadd.f32 %v1633, %v2316
      %v2375 = vadd.f32 %v1636, %v2319
      %v2376 = vadd.f32 %v1641, %v2324
      %v2377 = vadd.f32 %v1644, %v2327
      %v2378 = vld [vmem:[#allocation2 + $0x14] sm:$0x8]
      %v2379 = vld [vmem:[#allocation2 + $0x18] sm:$0xf]
      %v2380 = vld [vmem:[#allocation2 + $0x1c] sm:$0xf]
      %v2381 = vld [vmem:[#allocation2 + $0x20] sm:$0xf]
      %v2382 = vld [vmem:[#allocation2 + $0x24] sm:$0xf]
      %v2383 = vld [vmem:[#allocation2 + $0x28] sm:$0xf]
      %v2384 = vld [vmem:[#allocation2 + $0x2c] sm:$0xf]
      %v2385 = vld [vmem:[#allocation2 + $0x30] sm:$0xf]
      %v2386 = vld [vmem:[#allocation2 + $0x34] sm:$0xf]
      %v2387 = vld [vmem:[#allocation2 + $0x38] sm:$0xf]
      %v2388 = vld [vmem:[#allocation2 + $0x3c] sm:$0xf]
      %v2389 = vld [vmem:[#allocation2 + $0x40] sm:$0xf]
      %v2390 = vld [vmem:[#allocation2 + $0x44] sm:$0xf]
      %v2391 = vld [vmem:[#allocation2 + $0x48] sm:$0xf]
      %v2392 = vld [vmem:[#allocation2 + $0x4c] sm:$0xf]
      %v2393 = vld [vmem:[#allocation2 + $0x50] sm:$0xf]
      %v2394 = vld [vmem:[#allocation2 + $0x54] sm:$0xf]
      %v2395 = vld [vmem:[#allocation2 + $0x58] sm:$0xf]
      %v2396 = vld [vmem:[#allocation2 + $0x5c] sm:$0xf]
      %v2397 = vld [vmem:[#allocation2 + $0x60] sm:$0xf]
      %v2398 = vld [vmem:[#allocation2 + $0x64] sm:$0xf]
      %v2399 = vld [vmem:[#allocation2 + $0x68] sm:$0xf]
      %v2400 = vld [vmem:[#allocation2 + $0x6c] sm:$0xf]
      %v2401 = vld [vmem:[#allocation2 + $0x70] sm:$0xf]
      %v2402 = vld [vmem:[#allocation2 + $0x74] sm:$0xf]
      %v2403 = vld [vmem:[#allocation2 + $0x78] sm:$0xf]
      %v2404 = vld [vmem:[#allocation2 + $0x7c] sm:$0xf]
      %v2405 = vld [vmem:[#allocation2 + $0x80] sm:$0xf]
      %v2406 = vld [vmem:[#allocation2 + $0x84] sm:$0xf]
      %v2407 = vld [vmem:[#allocation2 + $0x88] sm:$0xf]
      %v2408 = vld [vmem:[#allocation2 + $0x8c] sm:$0xf]
      %v2409 = vld [vmem:[#allocation2 + $0x90] sm:$0xf]
      %v2410 = vld [vmem:[#allocation2 + $0x94] sm:$0xf]
      %v2411 = vld [vmem:[#allocation2 + $0x98] sm:$0xf]
      %v2412 = vld [vmem:[#allocation2 + $0x9c] sm:$0xf]
      %v2413 = vld [vmem:[#allocation2 + $0xa0] sm:$0xf]
      %v2414 = vld [vmem:[#allocation2 + $0xa4] sm:$0xf]
      %v2415 = vld [vmem:[#allocation2 + $0xa8] sm:$0xf]
      %v2416 = vld [vmem:[#allocation2 + $0xac] sm:$0xf]
      %v2417 = vld [vmem:[#allocation2 + $0xb0] sm:$0xf]
      %v2418 = vld [vmem:[#allocation2 + $0xb4] sm:$0xf]
      %v2419 = vld [vmem:[#allocation2 + $0xb8] sm:$0xf]
      %v2420 = vld [vmem:[#allocation2 + $0xbc] sm:$0xf]
      %v2421 = vld [vmem:[#allocation2 + $0xc0] sm:$0xf]
      %v2422 = vld [vmem:[#allocation2 + $0xc4] sm:$0xf]
      %v2423 = vld [vmem:[#allocation2 + $0xc8] sm:$0xf]
      %v2424 = vld [vmem:[#allocation2 + $0xcc] sm:$0xf]
      %v2425 = vld [vmem:[#allocation2 + $0xd0] sm:$0xf]
      %v2426 = vld [vmem:[#allocation2 + $0xd4] sm:$0xf]
      %s2427 = scalar_lea.vmem %s4, 192
      %v2428 = vld [vmem:[%s2427] sm:$0xf]
      %v2429 = vld [vmem:[%s2427 + $0x4] sm:$0xf]
      %v2430 = vld [vmem:[%s2427 + $0x8] sm:$0xf]
      %v2431 = vld [vmem:[%s2427 + $0xc] sm:$0xf]
      %v2432 = vld [vmem:[%s2427 + $0x10] sm:$0xf]
      %v2433 = vld [vmem:[%s2427 + $0x14] sm:$0xf]
      %v2434 = vld [vmem:[%s2427 + $0x18] sm:$0xf]
      %v2435 = vld [vmem:[%s2427 + $0x1c] sm:$0xf]
      %v2436 = vld [vmem:[%s2427 + $0x20] sm:$0xf]
      %v2437 = vld [vmem:[%s2427 + $0x24] sm:$0xf]
      %v2438 = vld [vmem:[%s2427 + $0x28] sm:$0xf]
      %v2439 = vld [vmem:[%s2427 + $0x2c] sm:$0xf]
      %v2440 = vld [vmem:[%s2427 + $0x30] sm:$0xf]
      %v2441 = vld [vmem:[%s2427 + $0x34] sm:$0xf]
      %v2442 = vld [vmem:[%s2427 + $0x38] sm:$0xf]
      %v2443 = vld [vmem:[%s2427 + $0x3c] sm:$0xf]
      %v2493 = vunpack.c.l.b16 %v2378
      %v2494 = vunpack.c.l.b16 %v2379
      %v2495 = vunpack.c.l.b16 %v2380
      %v2496 = vunpack.c.l.b16 %v2381
      %v2497 = vunpack.c.l.b16 %v2382
      %v2498 = vunpack.c.l.b16 %v2383
      %v2499 = vunpack.c.l.b16 %v2384
      %v2500 = vunpack.c.l.b16 %v2385
      %v2501 = vunpack.c.l.b16 %v2386
      %v2502 = vunpack.c.l.b16 %v2387
      %v2503 = vunpack.c.l.b16 %v2388
      %v2504 = vunpack.c.l.b16 %v2389
      %v2505 = vunpack.c.l.b16 %v2390
      %v2506 = vunpack.c.l.b16 %v2391
      %v2507 = vunpack.c.l.b16 %v2392
      %v2508 = vunpack.c.l.b16 %v2393
      %v2509 = vunpack.c.l.b16 %v2394
      %v2510 = vunpack.c.l.b16 %v2395
      %v2511 = vunpack.c.l.b16 %v2396
      %v2512 = vunpack.c.l.b16 %v2397
      %v2513 = vunpack.c.l.b16 %v2398
      %v2514 = vunpack.c.l.b16 %v2399
      %v2515 = vunpack.c.l.b16 %v2400
      %v2516 = vunpack.c.l.b16 %v2401
      %v2517 = vunpack.c.l.b16 %v2402
      %v2518 = vunpack.c.l.b16 %v2403
      %v2519 = vunpack.c.l.b16 %v2404
      %v2520 = vunpack.c.l.b16 %v2405
      %v2521 = vunpack.c.l.b16 %v2406
      %v2522 = vunpack.c.l.b16 %v2407
      %v2523 = vunpack.c.l.b16 %v2408
      %v2524 = vunpack.c.l.b16 %v2409
      %v2525 = vunpack.c.l.b16 %v2410
      %v2526 = vunpack.c.l.b16 %v2411
      %v2527 = vunpack.c.l.b16 %v2412
      %v2528 = vunpack.c.l.b16 %v2413
      %v2529 = vunpack.c.l.b16 %v2414
      %v2530 = vunpack.c.l.b16 %v2415
      %v2531 = vunpack.c.l.b16 %v2416
      %v2532 = vunpack.c.l.b16 %v2417
      %v2533 = vunpack.c.l.b16 %v2418
      %v2534 = vunpack.c.l.b16 %v2419
      %v2535 = vunpack.c.l.b16 %v2420
      %v2536 = vunpack.c.l.b16 %v2421
      %v2537 = vunpack.c.l.b16 %v2422
      %v2538 = vunpack.c.l.b16 %v2423
      %v2539 = vunpack.c.l.b16 %v2424
      %v2540 = vunpack.c.l.b16 %v2425
      %v2541 = vunpack.c.l.b16 %v2426
      %v2542 = vpack.c.b16 %v2494, %v2493
      %v2543 = vpack.c.b16 %v2496, %v2495
      %v2544 = vpack.c.b16 %v2498, %v2497
      %v2545 = vpack.c.b16 %v2500, %v2499
      %v2546 = vpack.c.b16 %v2502, %v2501
      %v2547 = vpack.c.b16 %v2504, %v2503
      %v2548 = vpack.c.b16 %v2506, %v2505
      %v2549 = vpack.c.b16 %v2508, %v2507
      %v2550 = vpack.c.b16 %v2510, %v2509
      %v2551 = vpack.c.b16 %v2512, %v2511
      %v2552 = vpack.c.b16 %v2514, %v2513
      %v2553 = vpack.c.b16 %v2516, %v2515
      %v2554 = vpack.c.b16 %v2518, %v2517
      %v2555 = vpack.c.b16 %v2520, %v2519
      %v2556 = vpack.c.b16 %v2522, %v2521
      %v2557 = vpack.c.b16 %v2524, %v2523
      %v2558 = vpack.c.b16 %v2526, %v2525
      %v2559 = vpack.c.b16 %v2528, %v2527
      %v2560 = vpack.c.b16 %v2530, %v2529
      %v2561 = vpack.c.b16 %v2532, %v2531
      %v2562 = vpack.c.b16 %v2534, %v2533
      %v2563 = vpack.c.b16 %v2536, %v2535
      %v2564 = vpack.c.b16 %v2538, %v2537
      %v2565 = vpack.c.b16 %v2540, %v2539
      %v2566 = vpack.c.b16 %v2541, %v2541
      %v2568 = vshrl.u32 %v2542, 16
      %v2570 = vrot.slane %v2568, 3
      %v2571 = vshll.u32 %v2542, 16
      %v2573 = vrot.slane %v2571, 4
      %v2574 = vor.u32 %v2570, %v2573
      %v2576 = vshrl.u32 %v2543, 16
      %v2578 = vrot.slane %v2576, 3
      %v2579 = vshll.u32 %v2543, 16
      %v2581 = vrot.slane %v2579, 4
      %v2582 = vor.u32 %v2578, %v2581
      %v2583 = vsel %vm1125, %v2574, %v2582
      %v2585 = vshrl.u32 %v2544, 16
      %v2587 = vrot.slane %v2585, 3
      %v2588 = vshll.u32 %v2544, 16
      %v2590 = vrot.slane %v2588, 4
      %v2591 = vor.u32 %v2587, %v2590
      %v2592 = vsel %vm1125, %v2582, %v2591
      %v2594 = vshrl.u32 %v2545, 16
      %v2596 = vrot.slane %v2594, 3
      %v2597 = vshll.u32 %v2545, 16
      %v2599 = vrot.slane %v2597, 4
      %v2600 = vor.u32 %v2596, %v2599
      %v2601 = vsel %vm1125, %v2591, %v2600
      %v2603 = vshrl.u32 %v2546, 16
      %v2605 = vrot.slane %v2603, 3
      %v2606 = vshll.u32 %v2546, 16
      %v2608 = vrot.slane %v2606, 4
      %v2609 = vor.u32 %v2605, %v2608
      %v2610 = vsel %vm1125, %v2600, %v2609
      %v2612 = vshrl.u32 %v2547, 16
      %v2614 = vrot.slane %v2612, 3
      %v2615 = vshll.u32 %v2547, 16
      %v2617 = vrot.slane %v2615, 4
      %v2618 = vor.u32 %v2614, %v2617
      %v2619 = vsel %vm1125, %v2609, %v2618
      %v2621 = vshrl.u32 %v2548, 16
      %v2623 = vrot.slane %v2621, 3
      %v2624 = vshll.u32 %v2548, 16
      %v2626 = vrot.slane %v2624, 4
      %v2627 = vor.u32 %v2623, %v2626
      %v2628 = vsel %vm1125, %v2618, %v2627
      %v2630 = vshrl.u32 %v2549, 16
      %v2632 = vrot.slane %v2630, 3
      %v2633 = vshll.u32 %v2549, 16
      %v2635 = vrot.slane %v2633, 4
      %v2636 = vor.u32 %v2632, %v2635
      %v2637 = vsel %vm1125, %v2627, %v2636
      %v2639 = vshrl.u32 %v2550, 16
      %v2641 = vrot.slane %v2639, 3
      %v2642 = vshll.u32 %v2550, 16
      %v2644 = vrot.slane %v2642, 4
      %v2645 = vor.u32 %v2641, %v2644
      %v2646 = vsel %vm1125, %v2636, %v2645
      %v2648 = vshrl.u32 %v2551, 16
      %v2650 = vrot.slane %v2648, 3
      %v2651 = vshll.u32 %v2551, 16
      %v2653 = vrot.slane %v2651, 4
      %v2654 = vor.u32 %v2650, %v2653
      %v2655 = vsel %vm1125, %v2645, %v2654
      %v2657 = vshrl.u32 %v2552, 16
      %v2659 = vrot.slane %v2657, 3
      %v2660 = vshll.u32 %v2552, 16
      %v2662 = vrot.slane %v2660, 4
      %v2663 = vor.u32 %v2659, %v2662
      %v2664 = vsel %vm1125, %v2654, %v2663
      %v2666 = vshrl.u32 %v2553, 16
      %v2668 = vrot.slane %v2666, 3
      %v2669 = vshll.u32 %v2553, 16
      %v2671 = vrot.slane %v2669, 4
      %v2672 = vor.u32 %v2668, %v2671
      %v2673 = vsel %vm1125, %v2663, %v2672
      %v2675 = vshrl.u32 %v2554, 16
      %v2677 = vrot.slane %v2675, 3
      %v2678 = vshll.u32 %v2554, 16
      %v2680 = vrot.slane %v2678, 4
      %v2681 = vor.u32 %v2677, %v2680
      %v2682 = vsel %vm1125, %v2672, %v2681
      %v2684 = vshrl.u32 %v2555, 16
      %v2686 = vrot.slane %v2684, 3
      %v2687 = vshll.u32 %v2555, 16
      %v2689 = vrot.slane %v2687, 4
      %v2690 = vor.u32 %v2686, %v2689
      %v2691 = vsel %vm1125, %v2681, %v2690
      %v2693 = vshrl.u32 %v2556, 16
      %v2695 = vrot.slane %v2693, 3
      %v2696 = vshll.u32 %v2556, 16
      %v2698 = vrot.slane %v2696, 4
      %v2699 = vor.u32 %v2695, %v2698
      %v2700 = vsel %vm1125, %v2690, %v2699
      %v2702 = vshrl.u32 %v2557, 16
      %v2704 = vrot.slane %v2702, 3
      %v2705 = vshll.u32 %v2557, 16
      %v2707 = vrot.slane %v2705, 4
      %v2708 = vor.u32 %v2704, %v2707
      %v2709 = vsel %vm1125, %v2699, %v2708
      %v2711 = vshrl.u32 %v2558, 16
      %v2713 = vrot.slane %v2711, 3
      %v2714 = vshll.u32 %v2558, 16
      %v2716 = vrot.slane %v2714, 4
      %v2717 = vor.u32 %v2713, %v2716
      %v2718 = vsel %vm1125, %v2708, %v2717
      %v2720 = vshrl.u32 %v2559, 16
      %v2722 = vrot.slane %v2720, 3
      %v2723 = vshll.u32 %v2559, 16
      %v2725 = vrot.slane %v2723, 4
      %v2726 = vor.u32 %v2722, %v2725
      %v2727 = vsel %vm1125, %v2717, %v2726
      %v2729 = vshrl.u32 %v2560, 16
      %v2731 = vrot.slane %v2729, 3
      %v2732 = vshll.u32 %v2560, 16
      %v2734 = vrot.slane %v2732, 4
      %v2735 = vor.u32 %v2731, %v2734
      %v2736 = vsel %vm1125, %v2726, %v2735
      %v2738 = vshrl.u32 %v2561, 16
      %v2740 = vrot.slane %v2738, 3
      %v2741 = vshll.u32 %v2561, 16
      %v2743 = vrot.slane %v2741, 4
      %v2744 = vor.u32 %v2740, %v2743
      %v2745 = vsel %vm1125, %v2735, %v2744
      %v2747 = vshrl.u32 %v2562, 16
      %v2749 = vrot.slane %v2747, 3
      %v2750 = vshll.u32 %v2562, 16
      %v2752 = vrot.slane %v2750, 4
      %v2753 = vor.u32 %v2749, %v2752
      %v2754 = vsel %vm1125, %v2744, %v2753
      %v2756 = vshrl.u32 %v2563, 16
      %v2758 = vrot.slane %v2756, 3
      %v2759 = vshll.u32 %v2563, 16
      %v2761 = vrot.slane %v2759, 4
      %v2762 = vor.u32 %v2758, %v2761
      %v2763 = vsel %vm1125, %v2753, %v2762
      %v2765 = vshrl.u32 %v2564, 16
      %v2767 = vrot.slane %v2765, 3
      %v2768 = vshll.u32 %v2564, 16
      %v2770 = vrot.slane %v2768, 4
      %v2771 = vor.u32 %v2767, %v2770
      %v2772 = vsel %vm1125, %v2762, %v2771
      %v2774 = vshrl.u32 %v2565, 16
      %v2776 = vrot.slane %v2774, 3
      %v2777 = vshll.u32 %v2565, 16
      %v2779 = vrot.slane %v2777, 4
      %v2780 = vor.u32 %v2776, %v2779
      %v2781 = vsel %vm1125, %v2771, %v2780
      %v2783 = vshrl.u32 %v2566, 16
      %v2785 = vrot.slane %v2783, 3
      %v2786 = vshll.u32 %v2566, 16
      %v2788 = vrot.slane %v2786, 4
      %v2789 = vor.u32 %v2785, %v2788
      %v2790 = vsel %vm1125, %v2780, %v2789
      %v2831 = vunpack.c.l.b16 %v2428
      %v2832 = vunpack.c.l.b16 %v2429
      %v2833 = vunpack.c.l.b16 %v2430
      %v2834 = vunpack.c.l.b16 %v2431
      %v2835 = vunpack.c.l.b16 %v2432
      %v2836 = vunpack.c.l.b16 %v2433
      %v2837 = vunpack.c.l.b16 %v2434
      %v2838 = vunpack.c.l.b16 %v2435
      %v2839 = vunpack.c.l.b16 %v2436
      %v2840 = vunpack.c.l.b16 %v2437
      %v2841 = vunpack.c.l.b16 %v2438
      %v2842 = vunpack.c.l.b16 %v2439
      %v2843 = vunpack.c.l.b16 %v2440
      %v2844 = vunpack.c.l.b16 %v2441
      %v2845 = vunpack.c.l.b16 %v2442
      %v2846 = vunpack.c.l.b16 %v2443
      %v2847 = vpack.c.b16 %v2832, %v2831
      %v2848 = vpack.c.b16 %v2834, %v2833
      %v2849 = vpack.c.b16 %v2836, %v2835
      %v2850 = vpack.c.b16 %v2838, %v2837
      %v2851 = vpack.c.b16 %v2840, %v2839
      %v2852 = vpack.c.b16 %v2842, %v2841
      %v2853 = vpack.c.b16 %v2844, %v2843
      %v2854 = vpack.c.b16 %v2846, %v2845
      %2863 = vmatprep.subr.bf16.mxu0 0
      %2864 = vmatpush1.bf16.msra.mxu0 %v2847
      %2865 = vmatprep.subr.bf16.mxu0 0
      %2866 = vmatpush1.bf16.msra.mxu0 %v2848
      %2867 = vmatprep.subr.bf16.mxu0 0
      %2868 = vmatpush1.bf16.msra.mxu0 %v2849
      %2869 = vmatprep.subr.bf16.mxu0 0
      %2870 = vmatpush1.bf16.msra.mxu0 %v2850
      %2871 = vmatprep.subr.bf16.mxu0 0
      %2872 = vmatpush1.bf16.msra.mxu0 %v2851
      %2873 = vmatprep.subr.bf16.mxu0 0
      %2874 = vmatpush1.bf16.msra.mxu0 %v2852
      %2875 = vmatprep.subr.bf16.mxu0 0
      %2876 = vmatpush1.bf16.msra.mxu0 %v2853
      %2877 = vmatprep.subr.bf16.mxu0 0
      %2878 = vmatpush1.bf16.msra.mxu0 %v2854
      %2879 = vmatprep.subr.bf16.mxu0 0
      %2880 = vmatpush1.bf16.msra.mxu0 0
      %2881 = vmatprep.subr.bf16.mxu0 0
      %2882 = vmatpush1.bf16.msra.mxu0 0
      %2883 = vmatprep.subr.bf16.mxu0 0
      %2884 = vmatpush1.bf16.msra.mxu0 0
      %2885 = vmatprep.subr.bf16.mxu0 0
      %2886 = vmatpush1.bf16.msra.mxu0 0
      %2887 = vmatprep.subr.bf16.mxu0 0
      %2888 = vmatpush1.bf16.msra.mxu0 0
      %2889 = vmatprep.subr.bf16.mxu0 0
      %2890 = vmatpush1.bf16.msra.mxu0 0
      %2891 = vmatprep.subr.bf16.mxu0 0
      %2892 = vmatpush1.bf16.msra.mxu0 0
      %2893 = vmatprep.subr.bf16.mxu0 0
      %2894 = vmatpush1.bf16.msra.mxu0 0
      %2895 = vmatprep.mubr.bf16.mxu0 0
      %2896 = vmatmul.mubr.bf16.gmra.mrb[0].mxu0 %v2583
      %v2897 = vpop.f32.mrb[0].mxu0
      %v2898 = vadd.f32 0.0, %v2897
      %v2899 = vpop.f32.mrb[0].mxu0
      %v2900 = vpop.f32.mrb[0].mxu0
      %v2901 = vadd.f32 0.0, %v2900
      %v2902 = vpop.f32.mrb[0].mxu0
      %2903 = vmatprep.mubr.bf16.mxu0 0
      %2904 = vmatmul.mubr.bf16.gmra.mrb[0].mxu0 %v2592
      %v2905 = vpop.f32.mrb[0].mxu0
      %v2906 = vadd.f32 0.0, %v2905
      %v2907 = vpop.f32.mrb[0].mxu0
      %v2908 = vpop.f32.mrb[0].mxu0
      %v2909 = vadd.f32 0.0, %v2908
      %v2910 = vpop.f32.mrb[0].mxu0
      %2911 = vmatprep.mubr.bf16.mxu0 0
      %2912 = vmatmul.mubr.bf16.gmra.mrb[0].mxu0 %v2601
      %v2913 = vpop.f32.mrb[0].mxu0
      %v2914 = vadd.f32 0.0, %v2913
      %v2915 = vpop.f32.mrb[0].mxu0
      %v2916 = vpop.f32.mrb[0].mxu0
      %v2917 = vadd.f32 0.0, %v2916
      %v2918 = vpop.f32.mrb[0].mxu0
      %2919 = vmatprep.mubr.bf16.mxu0 0
      %2920 = vmatmul.mubr.bf16.gmra.mrb[0].mxu0 %v2610
      %v2921 = vpop.f32.mrb[0].mxu0
      %v2922 = vadd.f32 0.0, %v2921
      %v2923 = vpop.f32.mrb[0].mxu0
      %v2924 = vpop.f32.mrb[0].mxu0
      %v2925 = vadd.f32 0.0, %v2924
      %v2926 = vpop.f32.mrb[0].mxu0
      %2927 = vmatprep.mubr.bf16.mxu0 0
      %2928 = vmatmul.mubr.bf16.gmra.mrb[0].mxu0 %v2619
      %v2929 = vpop.f32.mrb[0].mxu0
      %v2930 = vadd.f32 0.0, %v2929
      %v2931 = vpop.f32.mrb[0].mxu0
      %v2932 = vpop.f32.mrb[0].mxu0
      %v2933 = vadd.f32 0.0, %v2932
      %v2934 = vpop.f32.mrb[0].mxu0
      %2935 = vmatprep.mubr.bf16.mxu0 0
      %2936 = vmatmul.mubr.bf16.gmra.mrb[0].mxu0 %v2628
      %v2937 = vpop.f32.mrb[0].mxu0
      %v2938 = vadd.f32 0.0, %v2937
      %v2939 = vpop.f32.mrb[0].mxu0
      %v2940 = vpop.f32.mrb[0].mxu0
      %v2941 = vadd.f32 0.0, %v2940
      %v2942 = vpop.f32.mrb[0].mxu0
      %2943 = vmatprep.mubr.bf16.mxu0 0
      %2944 = vmatmul.mubr.bf16.gmra.mrb[0].mxu0 %v2637
      %v2945 = vpop.f32.mrb[0].mxu0
      %v2946 = vadd.f32 0.0, %v2945
      %v2947 = vpop.f32.mrb[0].mxu0
      %v2948 = vpop.f32.mrb[0].mxu0
      %v2949 = vadd.f32 0.0, %v2948
      %v2950 = vpop.f32.mrb[0].mxu0
      %2951 = vmatprep.mubr.bf16.mxu0 0
      %2952 = vmatmul.mubr.bf16.gmra.mrb[0].mxu0 %v2646
      %v2953 = vpop.f32.mrb[0].mxu0
      %v2954 = vadd.f32 0.0, %v2953
      %v2955 = vpop.f32.mrb[0].mxu0
      %v2956 = vpop.f32.mrb[0].mxu0
      %v2957 = vadd.f32 0.0, %v2956
      %v2958 = vpop.f32.mrb[0].mxu0
      %2959 = vmatprep.mubr.bf16.mxu0 0
      %2960 = vmatmul.mubr.bf16.gmra.mrb[0].mxu0 %v2655
      %v2961 = vpop.f32.mrb[0].mxu0
      %v2962 = vadd.f32 0.0, %v2961
      %v2963 = vpop.f32.mrb[0].mxu0
      %v2964 = vpop.f32.mrb[0].mxu0
      %v2965 = vadd.f32 0.0, %v2964
      %v2966 = vpop.f32.mrb[0].mxu0
      %2967 = vmatprep.mubr.bf16.mxu0 0
      %2968 = vmatmul.mubr.bf16.gmra.mrb[0].mxu0 %v2664
      %v2969 = vpop.f32.mrb[0].mxu0
      %v2970 = vadd.f32 0.0, %v2969
      %v2971 = vpop.f32.mrb[0].mxu0
      %v2972 = vpop.f32.mrb[0].mxu0
      %v2973 = vadd.f32 0.0, %v2972
      %v2974 = vpop.f32.mrb[0].mxu0
      %2975 = vmatprep.mubr.bf16.mxu0 0
      %2976 = vmatmul.mubr.bf16.gmra.mrb[0].mxu0 %v2673
      %v2977 = vpop.f32.mrb[0].mxu0
      %v2978 = vadd.f32 0.0, %v2977
      %v2979 = vpop.f32.mrb[0].mxu0
      %v2980 = vpop.f32.mrb[0].mxu0
      %v2981 = vadd.f32 0.0, %v2980
      %v2982 = vpop.f32.mrb[0].mxu0
      %2983 = vmatprep.mubr.bf16.mxu0 0
      %2984 = vmatmul.mubr.bf16.gmra.mrb[0].mxu0 %v2682
      %v2985 = vpop.f32.mrb[0].mxu0
      %v2986 = vadd.f32 0.0, %v2985
      %v2987 = vpop.f32.mrb[0].mxu0
      %v2988 = vpop.f32.mrb[0].mxu0
      %v2989 = vadd.f32 0.0, %v2988
      %v2990 = vpop.f32.mrb[0].mxu0
      %2991 = vmatprep.mubr.bf16.mxu0 0
      %2992 = vmatmul.mubr.bf16.gmra.mrb[0].mxu0 %v2691
      %v2993 = vpop.f32.mrb[0].mxu0
      %v2994 = vadd.f32 0.0, %v2993
      %v2995 = vpop.f32.mrb[0].mxu0
      %v2996 = vpop.f32.mrb[0].mxu0
      %v2997 = vadd.f32 0.0, %v2996
      %v2998 = vpop.f32.mrb[0].mxu0
      %2999 = vmatprep.mubr.bf16.mxu0 0
      %3000 = vmatmul.mubr.bf16.gmra.mrb[0].mxu0 %v2700
      %v3001 = vpop.f32.mrb[0].mxu0
      %v3002 = vadd.f32 0.0, %v3001
      %v3003 = vpop.f32.mrb[0].mxu0
      %v3004 = vpop.f32.mrb[0].mxu0
      %v3005 = vadd.f32 0.0, %v3004
      %v3006 = vpop.f32.mrb[0].mxu0
      %3007 = vmatprep.mubr.bf16.mxu0 0
      %3008 = vmatmul.mubr.bf16.gmra.mrb[0].mxu0 %v2709
      %v3009 = vpop.f32.mrb[0].mxu0
      %v3010 = vadd.f32 0.0, %v3009
      %v3011 = vpop.f32.mrb[0].mxu0
      %v3012 = vpop.f32.mrb[0].mxu0
      %v3013 = vadd.f32 0.0, %v3012
      %v3014 = vpop.f32.mrb[0].mxu0
      %3015 = vmatprep.mubr.bf16.mxu0 0
      %3016 = vmatmul.mubr.bf16.gmra.mrb[0].mxu0 %v2718
      %v3017 = vpop.f32.mrb[0].mxu0
      %v3018 = vadd.f32 0.0, %v3017
      %v3019 = vpop.f32.mrb[0].mxu0
      %v3020 = vpop.f32.mrb[0].mxu0
      %v3021 = vadd.f32 0.0, %v3020
      %v3022 = vpop.f32.mrb[0].mxu0
      %3023 = vmatprep.mubr.bf16.mxu0 0
      %3024 = vmatmul.mubr.bf16.gmra.mrb[0].mxu0 %v2727
      %v3025 = vpop.f32.mrb[0].mxu0
      %v3026 = vadd.f32 0.0, %v3025
      %v3027 = vpop.f32.mrb[0].mxu0
      %v3028 = vpop.f32.mrb[0].mxu0
      %v3029 = vadd.f32 0.0, %v3028
      %v3030 = vpop.f32.mrb[0].mxu0
      %3031 = vmatprep.mubr.bf16.mxu0 0
      %3032 = vmatmul.mubr.bf16.gmra.mrb[0].mxu0 %v2736
      %v3033 = vpop.f32.mrb[0].mxu0
      %v3034 = vadd.f32 0.0, %v3033
      %v3035 = vpop.f32.mrb[0].mxu0
      %v3036 = vpop.f32.mrb[0].mxu0
      %v3037 = vadd.f32 0.0, %v3036
      %v3038 = vpop.f32.mrb[0].mxu0
      %3039 = vmatprep.mubr.bf16.mxu0 0
      %3040 = vmatmul.mubr.bf16.gmra.mrb[0].mxu0 %v2745
      %v3041 = vpop.f32.mrb[0].mxu0
      %v3042 = vadd.f32 0.0, %v3041
      %v3043 = vpop.f32.mrb[0].mxu0
      %v3044 = vpop.f32.mrb[0].mxu0
      %v3045 = vadd.f32 0.0, %v3044
      %v3046 = vpop.f32.mrb[0].mxu0
      %3047 = vmatprep.mubr.bf16.mxu0 0
      %3048 = vmatmul.mubr.bf16.gmra.mrb[0].mxu0 %v2754
      %v3049 = vpop.f32.mrb[0].mxu0
      %v3050 = vadd.f32 0.0, %v3049
      %v3051 = vpop.f32.mrb[0].mxu0
      %v3052 = vpop.f32.mrb[0].mxu0
      %v3053 = vadd.f32 0.0, %v3052
      %v3054 = vpop.f32.mrb[0].mxu0
      %3055 = vmatprep.mubr.bf16.mxu0 0
      %3056 = vmatmul.mubr.bf16.gmra.mrb[0].mxu0 %v2763
      %v3057 = vpop.f32.mrb[0].mxu0
      %v3058 = vadd.f32 0.0, %v3057
      %v3059 = vpop.f32.mrb[0].mxu0
      %v3060 = vpop.f32.mrb[0].mxu0
      %v3061 = vadd.f32 0.0, %v3060
      %v3062 = vpop.f32.mrb[0].mxu0
      %3063 = vmatprep.mubr.bf16.mxu0 0
      %3064 = vmatmul.mubr.bf16.gmra.mrb[0].mxu0 %v2772
      %v3065 = vpop.f32.mrb[0].mxu0
      %v3066 = vadd.f32 0.0, %v3065
      %v3067 = vpop.f32.mrb[0].mxu0
      %v3068 = vpop.f32.mrb[0].mxu0
      %v3069 = vadd.f32 0.0, %v3068
      %v3070 = vpop.f32.mrb[0].mxu0
      %3071 = vmatprep.mubr.bf16.mxu0 0
      %3072 = vmatmul.mubr.bf16.gmra.mrb[0].mxu0 %v2781
      %v3073 = vpop.f32.mrb[0].mxu0
      %v3074 = vadd.f32 0.0, %v3073
      %v3075 = vpop.f32.mrb[0].mxu0
      %v3076 = vpop.f32.mrb[0].mxu0
      %v3077 = vadd.f32 0.0, %v3076
      %v3078 = vpop.f32.mrb[0].mxu0
      %3079 = vmatprep.mubr.bf16.mxu0 0
      %3080 = vmatmul.mubr.bf16.gmra.mrb[0].mxu0 %v2790
      %v3081 = vpop.f32.mrb[0].mxu0
      %v3082 = vadd.f32 0.0, %v3081
      %v3083 = vpop.f32.mrb[0].mxu0
      %v3084 = vpop.f32.mrb[0].mxu0
      %v3085 = vadd.f32 0.0, %v3084
      %v3086 = vpop.f32.mrb[0].mxu0
      %3087 = vdwg.mxu0
      %v3088 = vadd.f32 %v2330, %v2898
      %v3089 = vadd.f32 %v2331, %v2901
      %v3090 = vadd.f32 %v2332, %v2906
      %v3091 = vadd.f32 %v2333, %v2909
      %v3092 = vadd.f32 %v2334, %v2914
      %v3093 = vadd.f32 %v2335, %v2917
      %v3094 = vadd.f32 %v2336, %v2922
      %v3095 = vadd.f32 %v2337, %v2925
      %v3096 = vadd.f32 %v2338, %v2930
      %v3097 = vadd.f32 %v2339, %v2933
      %v3098 = vadd.f32 %v2340, %v2938
      %v3099 = vadd.f32 %v2341, %v2941
      %v3100 = vadd.f32 %v2342, %v2946
      %v3101 = vadd.f32 %v2343, %v2949
      %v3102 = vadd.f32 %v2344, %v2954
      %v3103 = vadd.f32 %v2345, %v2957
      %v3104 = vadd.f32 %v2346, %v2962
      %v3105 = vadd.f32 %v2347, %v2965
      %v3106 = vadd.f32 %v2348, %v2970
      %v3107 = vadd.f32 %v2349, %v2973
      %v3108 = vadd.f32 %v2350, %v2978
      %v3109 = vadd.f32 %v2351, %v2981
      %v3110 = vadd.f32 %v2352, %v2986
      %v3111 = vadd.f32 %v2353, %v2989
      %v3112 = vadd.f32 %v2354, %v2994
      %v3113 = vadd.f32 %v2355, %v2997
      %v3114 = vadd.f32 %v2356, %v3002
      %v3115 = vadd.f32 %v2357, %v3005
      %v3116 = vadd.f32 %v2358, %v3010
      %v3117 = vadd.f32 %v2359, %v3013
      %v3118 = vadd.f32 %v2360, %v3018
      %v3119 = vadd.f32 %v2361, %v3021
      %v3120 = vadd.f32 %v2362, %v3026
      %v3121 = vadd.f32 %v2363, %v3029
      %v3122 = vadd.f32 %v2364, %v3034
      %v3123 = vadd.f32 %v2365, %v3037
      %v3124 = vadd.f32 %v2366, %v3042
      %v3125 = vadd.f32 %v2367, %v3045
      %v3126 = vadd.f32 %v2368, %v3050
      %v3127 = vadd.f32 %v2369, %v3053
      %v3128 = vadd.f32 %v2370, %v3058
      %v3129 = vadd.f32 %v2371, %v3061
      %v3130 = vadd.f32 %v2372, %v3066
      %v3131 = vadd.f32 %v2373, %v3069
      %v3132 = vadd.f32 %v2374, %v3074
      %v3133 = vadd.f32 %v2375, %v3077
      %v3134 = vadd.f32 %v2376, %v3082
      %v3135 = vadd.f32 %v2377, %v3085
      %s3136 = scalar_lea.vmem %s4, 256
      %v3137 = vld [vmem:[%s3136] sm:$0xf]
      %v3138 = vld [vmem:[%s3136 + $0x4] sm:$0xf]
      %v3139 = vld [vmem:[%s3136 + $0x8] sm:$0xf]
      %v3140 = vld [vmem:[%s3136 + $0xc] sm:$0xf]
      %v3141 = vld [vmem:[%s3136 + $0x10] sm:$0xf]
      %v3142 = vld [vmem:[%s3136 + $0x14] sm:$0xf]
      %v3143 = vld [vmem:[%s3136 + $0x18] sm:$0xf]
      %v3144 = vld [vmem:[%s3136 + $0x1c] sm:$0xf]
      %v3145 = vld [vmem:[%s3136 + $0x20] sm:$0xf]
      %v3146 = vld [vmem:[%s3136 + $0x24] sm:$0xf]
      %v3147 = vld [vmem:[%s3136 + $0x28] sm:$0xf]
      %v3148 = vld [vmem:[%s3136 + $0x2c] sm:$0xf]
      %v3149 = vld [vmem:[%s3136 + $0x30] sm:$0xf]
      %v3150 = vld [vmem:[%s3136 + $0x34] sm:$0xf]
      %v3151 = vld [vmem:[%s3136 + $0x38] sm:$0xf]
      %v3152 = vld [vmem:[%s3136 + $0x3c] sm:$0xf]
      %v3153 = vpack.c.b16 %v2495, %v2494
      %v3154 = vpack.c.b16 %v2497, %v2496
      %v3155 = vpack.c.b16 %v2499, %v2498
      %v3156 = vpack.c.b16 %v2501, %v2500
      %v3157 = vpack.c.b16 %v2503, %v2502
      %v3158 = vpack.c.b16 %v2505, %v2504
      %v3159 = vpack.c.b16 %v2507, %v2506
      %v3160 = vpack.c.b16 %v2509, %v2508
      %v3161 = vpack.c.b16 %v2511, %v2510
      %v3162 = vpack.c.b16 %v2513, %v2512
      %v3163 = vpack.c.b16 %v2515, %v2514
      %v3164 = vpack.c.b16 %v2517, %v2516
      %v3165 = vpack.c.b16 %v2519, %v2518
      %v3166 = vpack.c.b16 %v2521, %v2520
      %v3167 = vpack.c.b16 %v2523, %v2522
      %v3168 = vpack.c.b16 %v2525, %v2524
      %v3169 = vpack.c.b16 %v2527, %v2526
      %v3170 = vpack.c.b16 %v2529, %v2528
      %v3171 = vpack.c.b16 %v2531, %v2530
      %v3172 = vpack.c.b16 %v2533, %v2532
      %v3173 = vpack.c.b16 %v2535, %v2534
      %v3174 = vpack.c.b16 %v2537, %v2536
      %v3175 = vpack.c.b16 %v2539, %v2538
      %v3176 = vpack.c.b16 %v2541, %v2540
      %v3217 = vunpack.c.l.b16 %v3137
      %v3218 = vunpack.c.l.b16 %v3138
      %v3219 = vunpack.c.l.b16 %v3139
      %v3220 = vunpack.c.l.b16 %v3140
      %v3221 = vunpack.c.l.b16 %v3141
      %v3222 = vunpack.c.l.b16 %v3142
      %v3223 = vunpack.c.l.b16 %v3143
      %v3224 = vunpack.c.l.b16 %v3144
      %v3225 = vunpack.c.l.b16 %v3145
      %v3226 = vunpack.c.l.b16 %v3146
      %v3227 = vunpack.c.l.b16 %v3147
      %v3228 = vunpack.c.l.b16 %v3148
      %v3229 = vunpack.c.l.b16 %v3149
      %v3230 = vunpack.c.l.b16 %v3150
      %v3231 = vunpack.c.l.b16 %v3151
      %v3232 = vunpack.c.l.b16 %v3152
      %v3233 = vpack.c.b16 %v3218, %v3217
      %v3234 = vpack.c.b16 %v3220, %v3219
      %v3235 = vpack.c.b16 %v3222, %v3221
      %v3236 = vpack.c.b16 %v3224, %v3223
      %v3237 = vpack.c.b16 %v3226, %v3225
      %v3238 = vpack.c.b16 %v3228, %v3227
      %v3239 = vpack.c.b16 %v3230, %v3229
      %v3240 = vpack.c.b16 %v3232, %v3231
      %3249 = vmatprep.subr.bf16.mxu0 0
      %3250 = vmatpush1.bf16.msra.mxu0 %v3233
      %3251 = vmatprep.subr.bf16.mxu0 0
      %3252 = vmatpush1.bf16.msra.mxu0 %v3234
      %3253 = vmatprep.subr.bf16.mxu0 0
      %3254 = vmatpush1.bf16.msra.mxu0 %v3235
      %3255 = vmatprep.subr.bf16.mxu0 0
      %3256 = vmatpush1.bf16.msra.mxu0 %v3236
      %3257 = vmatprep.subr.bf16.mxu0 0
      %3258 = vmatpush1.bf16.msra.mxu0 %v3237
      %3259 = vmatprep.subr.bf16.mxu0 0
      %3260 = vmatpush1.bf16.msra.mxu0 %v3238
      %3261 = vmatprep.subr.bf16.mxu0 0
      %3262 = vmatpush1.bf16.msra.mxu0 %v3239
      %3263 = vmatprep.subr.bf16.mxu0 0
      %3264 = vmatpush1.bf16.msra.mxu0 %v3240
      %3265 = vmatprep.subr.bf16.mxu0 0
      %3266 = vmatpush1.bf16.msra.mxu0 0
      %3267 = vmatprep.subr.bf16.mxu0 0
      %3268 = vmatpush1.bf16.msra.mxu0 0
      %3269 = vmatprep.subr.bf16.mxu0 0
      %3270 = vmatpush1.bf16.msra.mxu0 0
      %3271 = vmatprep.subr.bf16.mxu0 0
      %3272 = vmatpush1.bf16.msra.mxu0 0
      %3273 = vmatprep.subr.bf16.mxu0 0
      %3274 = vmatpush1.bf16.msra.mxu0 0
      %3275 = vmatprep.subr.bf16.mxu0 0
      %3276 = vmatpush1.bf16.msra.mxu0 0
      %3277 = vmatprep.subr.bf16.mxu0 0
      %3278 = vmatpush1.bf16.msra.mxu0 0
      %3279 = vmatprep.subr.bf16.mxu0 0
      %3280 = vmatpush1.bf16.msra.mxu0 0
      %3281 = vmatprep.mubr.bf16.mxu0 0
      %3282 = vmatmul.mubr.bf16.gmra.mrb[0].mxu0 %v3153
      %v3283 = vpop.f32.mrb[0].mxu0
      %v3284 = vadd.f32 0.0, %v3283
      %v3285 = vpop.f32.mrb[0].mxu0
      %v3286 = vpop.f32.mrb[0].mxu0
      %v3287 = vadd.f32 0.0, %v3286
      %v3288 = vpop.f32.mrb[0].mxu0
      %3289 = vmatprep.mubr.bf16.mxu0 0
      %3290 = vmatmul.mubr.bf16.gmra.mrb[0].mxu0 %v3154
      %v3291 = vpop.f32.mrb[0].mxu0
      %v3292 = vadd.f32 0.0, %v3291
      %v3293 = vpop.f32.mrb[0].mxu0
      %v3294 = vpop.f32.mrb[0].mxu0
      %v3295 = vadd.f32 0.0, %v3294
      %v3296 = vpop.f32.mrb[0].mxu0
      %3297 = vmatprep.mubr.bf16.mxu0 0
      %3298 = vmatmul.mubr.bf16.gmra.mrb[0].mxu0 %v3155
      %v3299 = vpop.f32.mrb[0].mxu0
      %v3300 = vadd.f32 0.0, %v3299
      %v3301 = vpop.f32.mrb[0].mxu0
      %v3302 = vpop.f32.mrb[0].mxu0
      %v3303 = vadd.f32 0.0, %v3302
      %v3304 = vpop.f32.mrb[0].mxu0
      %3305 = vmatprep.mubr.bf16.mxu0 0
      %3306 = vmatmul.mubr.bf16.gmra.mrb[0].mxu0 %v3156
      %v3307 = vpop.f32.mrb[0].mxu0
      %v3308 = vadd.f32 0.0, %v3307
      %v3309 = vpop.f32.mrb[0].mxu0
      %v3310 = vpop.f32.mrb[0].mxu0
      %v3311 = vadd.f32 0.0, %v3310
      %v3312 = vpop.f32.mrb[0].mxu0
      %3313 = vmatprep.mubr.bf16.mxu0 0
      %3314 = vmatmul.mubr.bf16.gmra.mrb[0].mxu0 %v3157
      %v3315 = vpop.f32.mrb[0].mxu0
      %v3316 = vadd.f32 0.0, %v3315
      %v3317 = vpop.f32.mrb[0].mxu0
      %v3318 = vpop.f32.mrb[0].mxu0
      %v3319 = vadd.f32 0.0, %v3318
      %v3320 = vpop.f32.mrb[0].mxu0
      %3321 = vmatprep.mubr.bf16.mxu0 0
      %3322 = vmatmul.mubr.bf16.gmra.mrb[0].mxu0 %v3158
      %v3323 = vpop.f32.mrb[0].mxu0
      %v3324 = vadd.f32 0.0, %v3323
      %v3325 = vpop.f32.mrb[0].mxu0
      %v3326 = vpop.f32.mrb[0].mxu0
      %v3327 = vadd.f32 0.0, %v3326
      %v3328 = vpop.f32.mrb[0].mxu0
      %3329 = vmatprep.mubr.bf16.mxu0 0
      %3330 = vmatmul.mubr.bf16.gmra.mrb[0].mxu0 %v3159
      %v3331 = vpop.f32.mrb[0].mxu0
      %v3332 = vadd.f32 0.0, %v3331
      %v3333 = vpop.f32.mrb[0].mxu0
      %v3334 = vpop.f32.mrb[0].mxu0
      %v3335 = vadd.f32 0.0, %v3334
      %v3336 = vpop.f32.mrb[0].mxu0
      %3337 = vmatprep.mubr.bf16.mxu0 0
      %3338 = vmatmul.mubr.bf16.gmra.mrb[0].mxu0 %v3160
      %v3339 = vpop.f32.mrb[0].mxu0
      %v3340 = vadd.f32 0.0, %v3339
      %v3341 = vpop.f32.mrb[0].mxu0
      %v3342 = vpop.f32.mrb[0].mxu0
      %v3343 = vadd.f32 0.0, %v3342
      %v3344 = vpop.f32.mrb[0].mxu0
      %3345 = vmatprep.mubr.bf16.mxu0 0
      %3346 = vmatmul.mubr.bf16.gmra.mrb[0].mxu0 %v3161
      %v3347 = vpop.f32.mrb[0].mxu0
      %v3348 = vadd.f32 0.0, %v3347
      %v3349 = vpop.f32.mrb[0].mxu0
      %v3350 = vpop.f32.mrb[0].mxu0
      %v3351 = vadd.f32 0.0, %v3350
      %v3352 = vpop.f32.mrb[0].mxu0
      %3353 = vmatprep.mubr.bf16.mxu0 0
      %3354 = vmatmul.mubr.bf16.gmra.mrb[0].mxu0 %v3162
      %v3355 = vpop.f32.mrb[0].mxu0
      %v3356 = vadd.f32 0.0, %v3355
      %v3357 = vpop.f32.mrb[0].mxu0
      %v3358 = vpop.f32.mrb[0].mxu0
      %v3359 = vadd.f32 0.0, %v3358
      %v3360 = vpop.f32.mrb[0].mxu0
      %3361 = vmatprep.mubr.bf16.mxu0 0
      %3362 = vmatmul.mubr.bf16.gmra.mrb[0].mxu0 %v3163
      %v3363 = vpop.f32.mrb[0].mxu0
      %v3364 = vadd.f32 0.0, %v3363
      %v3365 = vpop.f32.mrb[0].mxu0
      %v3366 = vpop.f32.mrb[0].mxu0
      %v3367 = vadd.f32 0.0, %v3366
      %v3368 = vpop.f32.mrb[0].mxu0
      %3369 = vmatprep.mubr.bf16.mxu0 0
      %3370 = vmatmul.mubr.bf16.gmra.mrb[0].mxu0 %v3164
      %v3371 = vpop.f32.mrb[0].mxu0
      %v3372 = vadd.f32 0.0, %v3371
      %v3373 = vpop.f32.mrb[0].mxu0
      %v3374 = vpop.f32.mrb[0].mxu0
      %v3375 = vadd.f32 0.0, %v3374
      %v3376 = vpop.f32.mrb[0].mxu0
      %3377 = vmatprep.mubr.bf16.mxu0 0
      %3378 = vmatmul.mubr.bf16.gmra.mrb[0].mxu0 %v3165
      %v3379 = vpop.f32.mrb[0].mxu0
      %v3380 = vadd.f32 0.0, %v3379
      %v3381 = vpop.f32.mrb[0].mxu0
      %v3382 = vpop.f32.mrb[0].mxu0
      %v3383 = vadd.f32 0.0, %v3382
      %v3384 = vpop.f32.mrb[0].mxu0
      %3385 = vmatprep.mubr.bf16.mxu0 0
      %3386 = vmatmul.mubr.bf16.gmra.mrb[0].mxu0 %v3166
      %v3387 = vpop.f32.mrb[0].mxu0
      %v3388 = vadd.f32 0.0, %v3387
      %v3389 = vpop.f32.mrb[0].mxu0
      %v3390 = vpop.f32.mrb[0].mxu0
      %v3391 = vadd.f32 0.0, %v3390
      %v3392 = vpop.f32.mrb[0].mxu0
      %3393 = vmatprep.mubr.bf16.mxu0 0
      %3394 = vmatmul.mubr.bf16.gmra.mrb[0].mxu0 %v3167
      %v3395 = vpop.f32.mrb[0].mxu0
      %v3396 = vadd.f32 0.0, %v3395
      %v3397 = vpop.f32.mrb[0].mxu0
      %v3398 = vpop.f32.mrb[0].mxu0
      %v3399 = vadd.f32 0.0, %v3398
      %v3400 = vpop.f32.mrb[0].mxu0
      %3401 = vmatprep.mubr.bf16.mxu0 0
      %3402 = vmatmul.mubr.bf16.gmra.mrb[0].mxu0 %v3168
      %v3403 = vpop.f32.mrb[0].mxu0
      %v3404 = vadd.f32 0.0, %v3403
      %v3405 = vpop.f32.mrb[0].mxu0
      %v3406 = vpop.f32.mrb[0].mxu0
      %v3407 = vadd.f32 0.0, %v3406
      %v3408 = vpop.f32.mrb[0].mxu0
      %3409 = vmatprep.mubr.bf16.mxu0 0
      %3410 = vmatmul.mubr.bf16.gmra.mrb[0].mxu0 %v3169
      %v3411 = vpop.f32.mrb[0].mxu0
      %v3412 = vadd.f32 0.0, %v3411
      %v3413 = vpop.f32.mrb[0].mxu0
      %v3414 = vpop.f32.mrb[0].mxu0
      %v3415 = vadd.f32 0.0, %v3414
      %v3416 = vpop.f32.mrb[0].mxu0
      %3417 = vmatprep.mubr.bf16.mxu0 0
      %3418 = vmatmul.mubr.bf16.gmra.mrb[0].mxu0 %v3170
      %v3419 = vpop.f32.mrb[0].mxu0
      %v3420 = vadd.f32 0.0, %v3419
      %v3421 = vpop.f32.mrb[0].mxu0
      %v3422 = vpop.f32.mrb[0].mxu0
      %v3423 = vadd.f32 0.0, %v3422
      %v3424 = vpop.f32.mrb[0].mxu0
      %3425 = vmatprep.mubr.bf16.mxu0 0
      %3426 = vmatmul.mubr.bf16.gmra.mrb[0].mxu0 %v3171
      %v3427 = vpop.f32.mrb[0].mxu0
      %v3428 = vadd.f32 0.0, %v3427
      %v3429 = vpop.f32.mrb[0].mxu0
      %v3430 = vpop.f32.mrb[0].mxu0
      %v3431 = vadd.f32 0.0, %v3430
      %v3432 = vpop.f32.mrb[0].mxu0
      %3433 = vmatprep.mubr.bf16.mxu0 0
      %3434 = vmatmul.mubr.bf16.gmra.mrb[0].mxu0 %v3172
      %v3435 = vpop.f32.mrb[0].mxu0
      %v3436 = vadd.f32 0.0, %v3435
      %v3437 = vpop.f32.mrb[0].mxu0
      %v3438 = vpop.f32.mrb[0].mxu0
      %v3439 = vadd.f32 0.0, %v3438
      %v3440 = vpop.f32.mrb[0].mxu0
      %3441 = vmatprep.mubr.bf16.mxu0 0
      %3442 = vmatmul.mubr.bf16.gmra.mrb[0].mxu0 %v3173
      %v3443 = vpop.f32.mrb[0].mxu0
      %v3444 = vadd.f32 0.0, %v3443
      %v3445 = vpop.f32.mrb[0].mxu0
      %v3446 = vpop.f32.mrb[0].mxu0
      %v3447 = vadd.f32 0.0, %v3446
      %v3448 = vpop.f32.mrb[0].mxu0
      %3449 = vmatprep.mubr.bf16.mxu0 0
      %3450 = vmatmul.mubr.bf16.gmra.mrb[0].mxu0 %v3174
      %v3451 = vpop.f32.mrb[0].mxu0
      %v3452 = vadd.f32 0.0, %v3451
      %v3453 = vpop.f32.mrb[0].mxu0
      %v3454 = vpop.f32.mrb[0].mxu0
      %v3455 = vadd.f32 0.0, %v3454
      %v3456 = vpop.f32.mrb[0].mxu0
      %3457 = vmatprep.mubr.bf16.mxu0 0
      %3458 = vmatmul.mubr.bf16.gmra.mrb[0].mxu0 %v3175
      %v3459 = vpop.f32.mrb[0].mxu0
      %v3460 = vadd.f32 0.0, %v3459
      %v3461 = vpop.f32.mrb[0].mxu0
      %v3462 = vpop.f32.mrb[0].mxu0
      %v3463 = vadd.f32 0.0, %v3462
      %v3464 = vpop.f32.mrb[0].mxu0
      %3465 = vmatprep.mubr.bf16.mxu0 0
      %3466 = vmatmul.mubr.bf16.gmra.mrb[0].mxu0 %v3176
      %v3467 = vpop.f32.mrb[0].mxu0
      %v3468 = vadd.f32 0.0, %v3467
      %v3469 = vpop.f32.mrb[0].mxu0
      %v3470 = vpop.f32.mrb[0].mxu0
      %v3471 = vadd.f32 0.0, %v3470
      %v3472 = vpop.f32.mrb[0].mxu0
      %3473 = vdwg.mxu0
      %v3474 = vadd.f32 %v3088, %v3284
      %v3475 = vadd.f32 %v3089, %v3287
      %v3476 = vadd.f32 %v3090, %v3292
      %v3477 = vadd.f32 %v3091, %v3295
      %v3478 = vadd.f32 %v3092, %v3300
      %v3479 = vadd.f32 %v3093, %v3303
      %v3480 = vadd.f32 %v3094, %v3308
      %v3481 = vadd.f32 %v3095, %v3311
      %v3482 = vadd.f32 %v3096, %v3316
      %v3483 = vadd.f32 %v3097, %v3319
      %v3484 = vadd.f32 %v3098, %v3324
      %v3485 = vadd.f32 %v3099, %v3327
      %v3486 = vadd.f32 %v3100, %v3332
      %v3487 = vadd.f32 %v3101, %v3335
      %v3488 = vadd.f32 %v3102, %v3340
      %v3489 = vadd.f32 %v3103, %v3343
      %v3490 = vadd.f32 %v3104, %v3348
      %v3491 = vadd.f32 %v3105, %v3351
      %v3492 = vadd.f32 %v3106, %v3356
      %v3493 = vadd.f32 %v3107, %v3359
      %v3494 = vadd.f32 %v3108, %v3364
      %v3495 = vadd.f32 %v3109, %v3367
      %v3496 = vadd.f32 %v3110, %v3372
      %v3497 = vadd.f32 %v3111, %v3375
      %v3498 = vadd.f32 %v3112, %v3380
      %v3499 = vadd.f32 %v3113, %v3383
      %v3500 = vadd.f32 %v3114, %v3388
      %v3501 = vadd.f32 %v3115, %v3391
      %v3502 = vadd.f32 %v3116, %v3396
      %v3503 = vadd.f32 %v3117, %v3399
      %v3504 = vadd.f32 %v3118, %v3404
      %v3505 = vadd.f32 %v3119, %v3407
      %v3506 = vadd.f32 %v3120, %v3412
      %v3507 = vadd.f32 %v3121, %v3415
      %v3508 = vadd.f32 %v3122, %v3420
      %v3509 = vadd.f32 %v3123, %v3423
      %v3510 = vadd.f32 %v3124, %v3428
      %v3511 = vadd.f32 %v3125, %v3431
      %v3512 = vadd.f32 %v3126, %v3436
      %v3513 = vadd.f32 %v3127, %v3439
      %v3514 = vadd.f32 %v3128, %v3444
      %v3515 = vadd.f32 %v3129, %v3447
      %v3516 = vadd.f32 %v3130, %v3452
      %v3517 = vadd.f32 %v3131, %v3455
      %v3518 = vadd.f32 %v3132, %v3460
      %v3519 = vadd.f32 %v3133, %v3463
      %v3520 = vadd.f32 %v3134, %v3468
      %v3521 = vadd.f32 %v3135, %v3471
      %v3522 = vld [vmem:[#allocation2 + $0x18] sm:$0xf]
      %v3523 = vld [vmem:[#allocation2 + $0x1c] sm:$0xf]
      %v3524 = vld [vmem:[#allocation2 + $0x20] sm:$0xf]
      %v3525 = vld [vmem:[#allocation2 + $0x24] sm:$0xf]
      %v3526 = vld [vmem:[#allocation2 + $0x28] sm:$0xf]
      %v3527 = vld [vmem:[#allocation2 + $0x2c] sm:$0xf]
      %v3528 = vld [vmem:[#allocation2 + $0x30] sm:$0xf]
      %v3529 = vld [vmem:[#allocation2 + $0x34] sm:$0xf]
      %v3530 = vld [vmem:[#allocation2 + $0x38] sm:$0xf]
      %v3531 = vld [vmem:[#allocation2 + $0x3c] sm:$0xf]
      %v3532 = vld [vmem:[#allocation2 + $0x40] sm:$0xf]
      %v3533 = vld [vmem:[#allocation2 + $0x44] sm:$0xf]
      %v3534 = vld [vmem:[#allocation2 + $0x48] sm:$0xf]
      %v3535 = vld [vmem:[#allocation2 + $0x4c] sm:$0xf]
      %v3536 = vld [vmem:[#allocation2 + $0x50] sm:$0xf]
      %v3537 = vld [vmem:[#allocation2 + $0x54] sm:$0xf]
      %v3538 = vld [vmem:[#allocation2 + $0x58] sm:$0xf]
      %v3539 = vld [vmem:[#allocation2 + $0x5c] sm:$0xf]
      %v3540 = vld [vmem:[#allocation2 + $0x60] sm:$0xf]
      %v3541 = vld [vmem:[#allocation2 + $0x64] sm:$0xf]
      %v3542 = vld [vmem:[#allocation2 + $0x68] sm:$0xf]
      %v3543 = vld [vmem:[#allocation2 + $0x6c] sm:$0xf]
      %v3544 = vld [vmem:[#allocation2 + $0x70] sm:$0xf]
      %v3545 = vld [vmem:[#allocation2 + $0x74] sm:$0xf]
      %v3546 = vld [vmem:[#allocation2 + $0x78] sm:$0xf]
      %v3547 = vld [vmem:[#allocation2 + $0x7c] sm:$0xf]
      %v3548 = vld [vmem:[#allocation2 + $0x80] sm:$0xf]
      %v3549 = vld [vmem:[#allocation2 + $0x84] sm:$0xf]
      %v3550 = vld [vmem:[#allocation2 + $0x88] sm:$0xf]
      %v3551 = vld [vmem:[#allocation2 + $0x8c] sm:$0xf]
      %v3552 = vld [vmem:[#allocation2 + $0x90] sm:$0xf]
      %v3553 = vld [vmem:[#allocation2 + $0x94] sm:$0xf]
      %v3554 = vld [vmem:[#allocation2 + $0x98] sm:$0xf]
      %v3555 = vld [vmem:[#allocation2 + $0x9c] sm:$0xf]
      %v3556 = vld [vmem:[#allocation2 + $0xa0] sm:$0xf]
      %v3557 = vld [vmem:[#allocation2 + $0xa4] sm:$0xf]
      %v3558 = vld [vmem:[#allocation2 + $0xa8] sm:$0xf]
      %v3559 = vld [vmem:[#allocation2 + $0xac] sm:$0xf]
      %v3560 = vld [vmem:[#allocation2 + $0xb0] sm:$0xf]
      %v3561 = vld [vmem:[#allocation2 + $0xb4] sm:$0xf]
      %v3562 = vld [vmem:[#allocation2 + $0xb8] sm:$0xf]
      %v3563 = vld [vmem:[#allocation2 + $0xbc] sm:$0xf]
      %v3564 = vld [vmem:[#allocation2 + $0xc0] sm:$0xf]
      %v3565 = vld [vmem:[#allocation2 + $0xc4] sm:$0xf]
      %v3566 = vld [vmem:[#allocation2 + $0xc8] sm:$0xf]
      %v3567 = vld [vmem:[#allocation2 + $0xcc] sm:$0xf]
      %v3568 = vld [vmem:[#allocation2 + $0xd0] sm:$0xf]
      %v3569 = vld [vmem:[#allocation2 + $0xd4] sm:$0xf]
      %v3570 = vld [vmem:[#allocation2 + $0xd8] sm:$0x1]
      %s3571 = scalar_lea.vmem %s4, 320
      %v3572 = vld [vmem:[%s3571] sm:$0xf]
      %v3573 = vld [vmem:[%s3571 + $0x4] sm:$0xf]
      %v3574 = vld [vmem:[%s3571 + $0x8] sm:$0xf]
      %v3575 = vld [vmem:[%s3571 + $0xc] sm:$0xf]
      %v3576 = vld [vmem:[%s3571 + $0x10] sm:$0xf]
      %v3577 = vld [vmem:[%s3571 + $0x14] sm:$0xf]
      %v3578 = vld [vmem:[%s3571 + $0x18] sm:$0xf]
      %v3579 = vld [vmem:[%s3571 + $0x1c] sm:$0xf]
      %v3580 = vld [vmem:[%s3571 + $0x20] sm:$0xf]
      %v3581 = vld [vmem:[%s3571 + $0x24] sm:$0xf]
      %v3582 = vld [vmem:[%s3571 + $0x28] sm:$0xf]
      %v3583 = vld [vmem:[%s3571 + $0x2c] sm:$0xf]
      %v3584 = vld [vmem:[%s3571 + $0x30] sm:$0xf]
      %v3585 = vld [vmem:[%s3571 + $0x34] sm:$0xf]
      %v3586 = vld [vmem:[%s3571 + $0x38] sm:$0xf]
      %v3587 = vld [vmem:[%s3571 + $0x3c] sm:$0xf]
      %v3637 = vunpack.c.l.b16 %v3522
      %v3638 = vunpack.c.l.b16 %v3523
      %v3639 = vunpack.c.l.b16 %v3524
      %v3640 = vunpack.c.l.b16 %v3525
      %v3641 = vunpack.c.l.b16 %v3526
      %v3642 = vunpack.c.l.b16 %v3527
      %v3643 = vunpack.c.l.b16 %v3528
      %v3644 = vunpack.c.l.b16 %v3529
      %v3645 = vunpack.c.l.b16 %v3530
      %v3646 = vunpack.c.l.b16 %v3531
      %v3647 = vunpack.c.l.b16 %v3532
      %v3648 = vunpack.c.l.b16 %v3533
      %v3649 = vunpack.c.l.b16 %v3534
      %v3650 = vunpack.c.l.b16 %v3535
      %v3651 = vunpack.c.l.b16 %v3536
      %v3652 = vunpack.c.l.b16 %v3537
      %v3653 = vunpack.c.l.b16 %v3538
      %v3654 = vunpack.c.l.b16 %v3539
      %v3655 = vunpack.c.l.b16 %v3540
      %v3656 = vunpack.c.l.b16 %v3541
      %v3657 = vunpack.c.l.b16 %v3542
      %v3658 = vunpack.c.l.b16 %v3543
      %v3659 = vunpack.c.l.b16 %v3544
      %v3660 = vunpack.c.l.b16 %v3545
      %v3661 = vunpack.c.l.b16 %v3546
      %v3662 = vunpack.c.l.b16 %v3547
      %v3663 = vunpack.c.l.b16 %v3548
      %v3664 = vunpack.c.l.b16 %v3549
      %v3665 = vunpack.c.l.b16 %v3550
      %v3666 = vunpack.c.l.b16 %v3551
      %v3667 = vunpack.c.l.b16 %v3552
      %v3668 = vunpack.c.l.b16 %v3553
      %v3669 = vunpack.c.l.b16 %v3554
      %v3670 = vunpack.c.l.b16 %v3555
      %v3671 = vunpack.c.l.b16 %v3556
      %v3672 = vunpack.c.l.b16 %v3557
      %v3673 = vunpack.c.l.b16 %v3558
      %v3674 = vunpack.c.l.b16 %v3559
      %v3675 = vunpack.c.l.b16 %v3560
      %v3676 = vunpack.c.l.b16 %v3561
      %v3677 = vunpack.c.l.b16 %v3562
      %v3678 = vunpack.c.l.b16 %v3563
      %v3679 = vunpack.c.l.b16 %v3564
      %v3680 = vunpack.c.l.b16 %v3565
      %v3681 = vunpack.c.l.b16 %v3566
      %v3682 = vunpack.c.l.b16 %v3567
      %v3683 = vunpack.c.l.b16 %v3568
      %v3684 = vunpack.c.l.b16 %v3569
      %v3685 = vunpack.c.l.b16 %v3570
      %v3686 = vpack.c.b16 %v3638, %v3637
      %v3687 = vpack.c.b16 %v3640, %v3639
      %v3688 = vpack.c.b16 %v3642, %v3641
      %v3689 = vpack.c.b16 %v3644, %v3643
      %v3690 = vpack.c.b16 %v3646, %v3645
      %v3691 = vpack.c.b16 %v3648, %v3647
      %v3692 = vpack.c.b16 %v3650, %v3649
      %v3693 = vpack.c.b16 %v3652, %v3651
      %v3694 = vpack.c.b16 %v3654, %v3653
      %v3695 = vpack.c.b16 %v3656, %v3655
      %v3696 = vpack.c.b16 %v3658, %v3657
      %v3697 = vpack.c.b16 %v3660, %v3659
      %v3698 = vpack.c.b16 %v3662, %v3661
      %v3699 = vpack.c.b16 %v3664, %v3663
      %v3700 = vpack.c.b16 %v3666, %v3665
      %v3701 = vpack.c.b16 %v3668, %v3667
      %v3702 = vpack.c.b16 %v3670, %v3669
      %v3703 = vpack.c.b16 %v3672, %v3671
      %v3704 = vpack.c.b16 %v3674, %v3673
      %v3705 = vpack.c.b16 %v3676, %v3675
      %v3706 = vpack.c.b16 %v3678, %v3677
      %v3707 = vpack.c.b16 %v3680, %v3679
      %v3708 = vpack.c.b16 %v3682, %v3681
      %v3709 = vpack.c.b16 %v3684, %v3683
      %v3710 = vpack.c.b16 %v3685, %v3685
      %v3712 = vshrl.u32 %v3686, 16
      %v3714 = vshll.u32 %v3686, 16
      %v3716 = vrot.slane %v3714, 1
      %v3717 = vor.u32 %v3712, %v3716
      %v3719 = vshll.u32 %v3687, 16
      %v3721 = vrot.slane %v3719, 1
      %v3722 = vsel %vm1836, %v3717, %v3721
      %v3723 = vshrl.u32 %v3687, 16
      %v3725 = vor.u32 %v3723, %v3721
      %v3727 = vshll.u32 %v3688, 16
      %v3729 = vrot.slane %v3727, 1
      %v3730 = vsel %vm1836, %v3725, %v3729
      %v3731 = vshrl.u32 %v3688, 16
      %v3733 = vor.u32 %v3731, %v3729
      %v3735 = vshll.u32 %v3689, 16
      %v3737 = vrot.slane %v3735, 1
      %v3738 = vsel %vm1836, %v3733, %v3737
      %v3739 = vshrl.u32 %v3689, 16
      %v3741 = vor.u32 %v3739, %v3737
      %v3743 = vshll.u32 %v3690, 16
      %v3745 = vrot.slane %v3743, 1
      %v3746 = vsel %vm1836, %v3741, %v3745
      %v3747 = vshrl.u32 %v3690, 16
      %v3749 = vor.u32 %v3747, %v3745
      %v3751 = vshll.u32 %v3691, 16
      %v3753 = vrot.slane %v3751, 1
      %v3754 = vsel %vm1836, %v3749, %v3753
      %v3755 = vshrl.u32 %v3691, 16
      %v3757 = vor.u32 %v3755, %v3753
      %v3759 = vshll.u32 %v3692, 16
      %v3761 = vrot.slane %v3759, 1
      %v3762 = vsel %vm1836, %v3757, %v3761
      %v3763 = vshrl.u32 %v3692, 16
      %v3765 = vor.u32 %v3763, %v3761
      %v3767 = vshll.u32 %v3693, 16
      %v3769 = vrot.slane %v3767, 1
      %v3770 = vsel %vm1836, %v3765, %v3769
      %v3771 = vshrl.u32 %v3693, 16
      %v3773 = vor.u32 %v3771, %v3769
      %v3775 = vshll.u32 %v3694, 16
      %v3777 = vrot.slane %v3775, 1
      %v3778 = vsel %vm1836, %v3773, %v3777
      %v3779 = vshrl.u32 %v3694, 16
      %v3781 = vor.u32 %v3779, %v3777
      %v3783 = vshll.u32 %v3695, 16
      %v3785 = vrot.slane %v3783, 1
      %v3786 = vsel %vm1836, %v3781, %v3785
      %v3787 = vshrl.u32 %v3695, 16
      %v3789 = vor.u32 %v3787, %v3785
      %v3791 = vshll.u32 %v3696, 16
      %v3793 = vrot.slane %v3791, 1
      %v3794 = vsel %vm1836, %v3789, %v3793
      %v3795 = vshrl.u32 %v3696, 16
      %v3797 = vor.u32 %v3795, %v3793
      %v3799 = vshll.u32 %v3697, 16
      %v3801 = vrot.slane %v3799, 1
      %v3802 = vsel %vm1836, %v3797, %v3801
      %v3803 = vshrl.u32 %v3697, 16
      %v3805 = vor.u32 %v3803, %v3801
      %v3807 = vshll.u32 %v3698, 16
      %v3809 = vrot.slane %v3807, 1
      %v3810 = vsel %vm1836, %v3805, %v3809
      %v3811 = vshrl.u32 %v3698, 16
      %v3813 = vor.u32 %v3811, %v3809
      %v3815 = vshll.u32 %v3699, 16
      %v3817 = vrot.slane %v3815, 1
      %v3818 = vsel %vm1836, %v3813, %v3817
      %v3819 = vshrl.u32 %v3699, 16
      %v3821 = vor.u32 %v3819, %v3817
      %v3823 = vshll.u32 %v3700, 16
      %v3825 = vrot.slane %v3823, 1
      %v3826 = vsel %vm1836, %v3821, %v3825
      %v3827 = vshrl.u32 %v3700, 16
      %v3829 = vor.u32 %v3827, %v3825
      %v3831 = vshll.u32 %v3701, 16
      %v3833 = vrot.slane %v3831, 1
      %v3834 = vsel %vm1836, %v3829, %v3833
      %v3835 = vshrl.u32 %v3701, 16
      %v3837 = vor.u32 %v3835, %v3833
      %v3839 = vshll.u32 %v3702, 16
      %v3841 = vrot.slane %v3839, 1
      %v3842 = vsel %vm1836, %v3837, %v3841
      %v3843 = vshrl.u32 %v3702, 16
      %v3845 = vor.u32 %v3843, %v3841
      %v3847 = vshll.u32 %v3703, 16
      %v3849 = vrot.slane %v3847, 1
      %v3850 = vsel %vm1836, %v3845, %v3849
      %v3851 = vshrl.u32 %v3703, 16
      %v3853 = vor.u32 %v3851, %v3849
      %v3855 = vshll.u32 %v3704, 16
      %v3857 = vrot.slane %v3855, 1
      %v3858 = vsel %vm1836, %v3853, %v3857
      %v3859 = vshrl.u32 %v3704, 16
      %v3861 = vor.u32 %v3859, %v3857
      %v3863 = vshll.u32 %v3705, 16
      %v3865 = vrot.slane %v3863, 1
      %v3866 = vsel %vm1836, %v3861, %v3865
      %v3867 = vshrl.u32 %v3705, 16
      %v3869 = vor.u32 %v3867, %v3865
      %v3871 = vshll.u32 %v3706, 16
      %v3873 = vrot.slane %v3871, 1
      %v3874 = vsel %vm1836, %v3869, %v3873
      %v3875 = vshrl.u32 %v3706, 16
      %v3877 = vor.u32 %v3875, %v3873
      %v3879 = vshll.u32 %v3707, 16
      %v3881 = vrot.slane %v3879, 1
      %v3882 = vsel %vm1836, %v3877, %v3881
      %v3883 = vshrl.u32 %v3707, 16
      %v3885 = vor.u32 %v3883, %v3881
      %v3887 = vshll.u32 %v3708, 16
      %v3889 = vrot.slane %v3887, 1
      %v3890 = vsel %vm1836, %v3885, %v3889
      %v3891 = vshrl.u32 %v3708, 16
      %v3893 = vor.u32 %v3891, %v3889
      %v3895 = vshll.u32 %v3709, 16
      %v3897 = vrot.slane %v3895, 1
      %v3898 = vsel %vm1836, %v3893, %v3897
      %v3899 = vshrl.u32 %v3709, 16
      %v3901 = vor.u32 %v3899, %v3897
      %v3903 = vshll.u32 %v3710, 16
      %v3905 = vrot.slane %v3903, 1
      %v3906 = vsel %vm1836, %v3901, %v3905
      %v3947 = vunpack.c.l.b16 %v3572
      %v3948 = vunpack.c.l.b16 %v3573
      %v3949 = vunpack.c.l.b16 %v3574
      %v3950 = vunpack.c.l.b16 %v3575
      %v3951 = vunpack.c.l.b16 %v3576
      %v3952 = vunpack.c.l.b16 %v3577
      %v3953 = vunpack.c.l.b16 %v3578
      %v3954 = vunpack.c.l.b16 %v3579
      %v3955 = vunpack.c.l.b16 %v3580
      %v3956 = vunpack.c.l.b16 %v3581
      %v3957 = vunpack.c.l.b16 %v3582
      %v3958 = vunpack.c.l.b16 %v3583
      %v3959 = vunpack.c.l.b16 %v3584
      %v3960 = vunpack.c.l.b16 %v3585
      %v3961 = vunpack.c.l.b16 %v3586
      %v3962 = vunpack.c.l.b16 %v3587
      %v3963 = vpack.c.b16 %v3948, %v3947
      %v3964 = vpack.c.b16 %v3950, %v3949
      %v3965 = vpack.c.b16 %v3952, %v3951
      %v3966 = vpack.c.b16 %v3954, %v3953
      %v3967 = vpack.c.b16 %v3956, %v3955
      %v3968 = vpack.c.b16 %v3958, %v3957
      %v3969 = vpack.c.b16 %v3960, %v3959
      %v3970 = vpack.c.b16 %v3962, %v3961
      %3979 = vmatprep.subr.bf16.mxu0 0
      %3980 = vmatpush1.bf16.msra.mxu0 %v3963
      %3981 = vmatprep.subr.bf16.mxu0 0
      %3982 = vmatpush1.bf16.msra.mxu0 %v3964
      %3983 = vmatprep.subr.bf16.mxu0 0
      %3984 = vmatpush1.bf16.msra.mxu0 %v3965
      %3985 = vmatprep.subr.bf16.mxu0 0
      %3986 = vmatpush1.bf16.msra.mxu0 %v3966
      %3987 = vmatprep.subr.bf16.mxu0 0
      %3988 = vmatpush1.bf16.msra.mxu0 %v3967
      %3989 = vmatprep.subr.bf16.mxu0 0
      %3990 = vmatpush1.bf16.msra.mxu0 %v3968
      %3991 = vmatprep.subr.bf16.mxu0 0
      %3992 = vmatpush1.bf16.msra.mxu0 %v3969
      %3993 = vmatprep.subr.bf16.mxu0 0
      %3994 = vmatpush1.bf16.msra.mxu0 %v3970
      %3995 = vmatprep.subr.bf16.mxu0 0
      %3996 = vmatpush1.bf16.msra.mxu0 0
      %3997 = vmatprep.subr.bf16.mxu0 0
      %3998 = vmatpush1.bf16.msra.mxu0 0
      %3999 = vmatprep.subr.bf16.mxu0 0
      %4000 = vmatpush1.bf16.msra.mxu0 0
      %4001 = vmatprep.subr.bf16.mxu0 0
      %4002 = vmatpush1.bf16.msra.mxu0 0
      %4003 = vmatprep.subr.bf16.mxu0 0
      %4004 = vmatpush1.bf16.msra.mxu0 0
      %4005 = vmatprep.subr.bf16.mxu0 0
      %4006 = vmatpush1.bf16.msra.mxu0 0
      %4007 = vmatprep.subr.bf16.mxu0 0
      %4008 = vmatpush1.bf16.msra.mxu0 0
      %4009 = vmatprep.subr.bf16.mxu0 0
      %4010 = vmatpush1.bf16.msra.mxu0 0
      %4011 = vmatprep.mubr.bf16.mxu0 0
      %4012 = vmatmul.mubr.bf16.gmra.mrb[0].mxu0 %v3722
      %v4013 = vpop.f32.mrb[0].mxu0
      %v4014 = vadd.f32 0.0, %v4013
      %v4015 = vpop.f32.mrb[0].mxu0
      %v4016 = vpop.f32.mrb[0].mxu0
      %v4017 = vadd.f32 0.0, %v4016
      %v4018 = vpop.f32.mrb[0].mxu0
      %4019 = vmatprep.mubr.bf16.mxu0 0
      %4020 = vmatmul.mubr.bf16.gmra.mrb[0].mxu0 %v3730
      %v4021 = vpop.f32.mrb[0].mxu0
      %v4022 = vadd.f32 0.0, %v4021
      %v4023 = vpop.f32.mrb[0].mxu0
      %v4024 = vpop.f32.mrb[0].mxu0
      %v4025 = vadd.f32 0.0, %v4024
      %v4026 = vpop.f32.mrb[0].mxu0
      %4027 = vmatprep.mubr.bf16.mxu0 0
      %4028 = vmatmul.mubr.bf16.gmra.mrb[0].mxu0 %v3738
      %v4029 = vpop.f32.mrb[0].mxu0
      %v4030 = vadd.f32 0.0, %v4029
      %v4031 = vpop.f32.mrb[0].mxu0
      %v4032 = vpop.f32.mrb[0].mxu0
      %v4033 = vadd.f32 0.0, %v4032
      %v4034 = vpop.f32.mrb[0].mxu0
      %4035 = vmatprep.mubr.bf16.mxu0 0
      %4036 = vmatmul.mubr.bf16.gmra.mrb[0].mxu0 %v3746
      %v4037 = vpop.f32.mrb[0].mxu0
      %v4038 = vadd.f32 0.0, %v4037
      %v4039 = vpop.f32.mrb[0].mxu0
      %v4040 = vpop.f32.mrb[0].mxu0
      %v4041 = vadd.f32 0.0, %v4040
      %v4042 = vpop.f32.mrb[0].mxu0
      %4043 = vmatprep.mubr.bf16.mxu0 0
      %4044 = vmatmul.mubr.bf16.gmra.mrb[0].mxu0 %v3754
      %v4045 = vpop.f32.mrb[0].mxu0
      %v4046 = vadd.f32 0.0, %v4045
      %v4047 = vpop.f32.mrb[0].mxu0
      %v4048 = vpop.f32.mrb[0].mxu0
      %v4049 = vadd.f32 0.0, %v4048
      %v4050 = vpop.f32.mrb[0].mxu0
      %4051 = vmatprep.mubr.bf16.mxu0 0
      %4052 = vmatmul.mubr.bf16.gmra.mrb[0].mxu0 %v3762
      %v4053 = vpop.f32.mrb[0].mxu0
      %v4054 = vadd.f32 0.0, %v4053
      %v4055 = vpop.f32.mrb[0].mxu0
      %v4056 = vpop.f32.mrb[0].mxu0
      %v4057 = vadd.f32 0.0, %v4056
      %v4058 = vpop.f32.mrb[0].mxu0
      %4059 = vmatprep.mubr.bf16.mxu0 0
      %4060 = vmatmul.mubr.bf16.gmra.mrb[0].mxu0 %v3770
      %v4061 = vpop.f32.mrb[0].mxu0
      %v4062 = vadd.f32 0.0, %v4061
      %v4063 = vpop.f32.mrb[0].mxu0
      %v4064 = vpop.f32.mrb[0].mxu0
      %v4065 = vadd.f32 0.0, %v4064
      %v4066 = vpop.f32.mrb[0].mxu0
      %4067 = vmatprep.mubr.bf16.mxu0 0
      %4068 = vmatmul.mubr.bf16.gmra.mrb[0].mxu0 %v3778
      %v4069 = vpop.f32.mrb[0].mxu0
      %v4070 = vadd.f32 0.0, %v4069
      %v4071 = vpop.f32.mrb[0].mxu0
      %v4072 = vpop.f32.mrb[0].mxu0
      %v4073 = vadd.f32 0.0, %v4072
      %v4074 = vpop.f32.mrb[0].mxu0
      %4075 = vmatprep.mubr.bf16.mxu0 0
      %4076 = vmatmul.mubr.bf16.gmra.mrb[0].mxu0 %v3786
      %v4077 = vpop.f32.mrb[0].mxu0
      %v4078 = vadd.f32 0.0, %v4077
      %v4079 = vpop.f32.mrb[0].mxu0
      %v4080 = vpop.f32.mrb[0].mxu0
      %v4081 = vadd.f32 0.0, %v4080
      %v4082 = vpop.f32.mrb[0].mxu0
      %4083 = vmatprep.mubr.bf16.mxu0 0
      %4084 = vmatmul.mubr.bf16.gmra.mrb[0].mxu0 %v3794
      %v4085 = vpop.f32.mrb[0].mxu0
      %v4086 = vadd.f32 0.0, %v4085
      %v4087 = vpop.f32.mrb[0].mxu0
      %v4088 = vpop.f32.mrb[0].mxu0
      %v4089 = vadd.f32 0.0, %v4088
      %v4090 = vpop.f32.mrb[0].mxu0
      %4091 = vmatprep.mubr.bf16.mxu0 0
      %4092 = vmatmul.mubr.bf16.gmra.mrb[0].mxu0 %v3802
      %v4093 = vpop.f32.mrb[0].mxu0
      %v4094 = vadd.f32 0.0, %v4093
      %v4095 = vpop.f32.mrb[0].mxu0
      %v4096 = vpop.f32.mrb[0].mxu0
      %v4097 = vadd.f32 0.0, %v4096
      %v4098 = vpop.f32.mrb[0].mxu0
      %4099 = vmatprep.mubr.bf16.mxu0 0
      %4100 = vmatmul.mubr.bf16.gmra.mrb[0].mxu0 %v3810
      %v4101 = vpop.f32.mrb[0].mxu0
      %v4102 = vadd.f32 0.0, %v4101
      %v4103 = vpop.f32.mrb[0].mxu0
      %v4104 = vpop.f32.mrb[0].mxu0
      %v4105 = vadd.f32 0.0, %v4104
      %v4106 = vpop.f32.mrb[0].mxu0
      %4107 = vmatprep.mubr.bf16.mxu0 0
      %4108 = vmatmul.mubr.bf16.gmra.mrb[0].mxu0 %v3818
      %v4109 = vpop.f32.mrb[0].mxu0
      %v4110 = vadd.f32 0.0, %v4109
      %v4111 = vpop.f32.mrb[0].mxu0
      %v4112 = vpop.f32.mrb[0].mxu0
      %v4113 = vadd.f32 0.0, %v4112
      %v4114 = vpop.f32.mrb[0].mxu0
      %4115 = vmatprep.mubr.bf16.mxu0 0
      %4116 = vmatmul.mubr.bf16.gmra.mrb[0].mxu0 %v3826
      %v4117 = vpop.f32.mrb[0].mxu0
      %v4118 = vadd.f32 0.0, %v4117
      %v4119 = vpop.f32.mrb[0].mxu0
      %v4120 = vpop.f32.mrb[0].mxu0
      %v4121 = vadd.f32 0.0, %v4120
      %v4122 = vpop.f32.mrb[0].mxu0
      %4123 = vmatprep.mubr.bf16.mxu0 0
      %4124 = vmatmul.mubr.bf16.gmra.mrb[0].mxu0 %v3834
      %v4125 = vpop.f32.mrb[0].mxu0
      %v4126 = vadd.f32 0.0, %v4125
      %v4127 = vpop.f32.mrb[0].mxu0
      %v4128 = vpop.f32.mrb[0].mxu0
      %v4129 = vadd.f32 0.0, %v4128
      %v4130 = vpop.f32.mrb[0].mxu0
      %4131 = vmatprep.mubr.bf16.mxu0 0
      %4132 = vmatmul.mubr.bf16.gmra.mrb[0].mxu0 %v3842
      %v4133 = vpop.f32.mrb[0].mxu0
      %v4134 = vadd.f32 0.0, %v4133
      %v4135 = vpop.f32.mrb[0].mxu0
      %v4136 = vpop.f32.mrb[0].mxu0
      %v4137 = vadd.f32 0.0, %v4136
      %v4138 = vpop.f32.mrb[0].mxu0
      %4139 = vmatprep.mubr.bf16.mxu0 0
      %4140 = vmatmul.mubr.bf16.gmra.mrb[0].mxu0 %v3850
      %v4141 = vpop.f32.mrb[0].mxu0
      %v4142 = vadd.f32 0.0, %v4141
      %v4143 = vpop.f32.mrb[0].mxu0
      %v4144 = vpop.f32.mrb[0].mxu0
      %v4145 = vadd.f32 0.0, %v4144
      %v4146 = vpop.f32.mrb[0].mxu0
      %4147 = vmatprep.mubr.bf16.mxu0 0
      %4148 = vmatmul.mubr.bf16.gmra.mrb[0].mxu0 %v3858
      %v4149 = vpop.f32.mrb[0].mxu0
      %v4150 = vadd.f32 0.0, %v4149
      %v4151 = vpop.f32.mrb[0].mxu0
      %v4152 = vpop.f32.mrb[0].mxu0
      %v4153 = vadd.f32 0.0, %v4152
      %v4154 = vpop.f32.mrb[0].mxu0
      %4155 = vmatprep.mubr.bf16.mxu0 0
      %4156 = vmatmul.mubr.bf16.gmra.mrb[0].mxu0 %v3866
      %v4157 = vpop.f32.mrb[0].mxu0
      %v4158 = vadd.f32 0.0, %v4157
      %v4159 = vpop.f32.mrb[0].mxu0
      %v4160 = vpop.f32.mrb[0].mxu0
      %v4161 = vadd.f32 0.0, %v4160
      %v4162 = vpop.f32.mrb[0].mxu0
      %4163 = vmatprep.mubr.bf16.mxu0 0
      %4164 = vmatmul.mubr.bf16.gmra.mrb[0].mxu0 %v3874
      %v4165 = vpop.f32.mrb[0].mxu0
      %v4166 = vadd.f32 0.0, %v4165
      %v4167 = vpop.f32.mrb[0].mxu0
      %v4168 = vpop.f32.mrb[0].mxu0
      %v4169 = vadd.f32 0.0, %v4168
      %v4170 = vpop.f32.mrb[0].mxu0
      %4171 = vmatprep.mubr.bf16.mxu0 0
      %4172 = vmatmul.mubr.bf16.gmra.mrb[0].mxu0 %v3882
      %v4173 = vpop.f32.mrb[0].mxu0
      %v4174 = vadd.f32 0.0, %v4173
      %v4175 = vpop.f32.mrb[0].mxu0
      %v4176 = vpop.f32.mrb[0].mxu0
      %v4177 = vadd.f32 0.0, %v4176
      %v4178 = vpop.f32.mrb[0].mxu0
      %4179 = vmatprep.mubr.bf16.mxu0 0
      %4180 = vmatmul.mubr.bf16.gmra.mrb[0].mxu0 %v3890
      %v4181 = vpop.f32.mrb[0].mxu0
      %v4182 = vadd.f32 0.0, %v4181
      %v4183 = vpop.f32.mrb[0].mxu0
      %v4184 = vpop.f32.mrb[0].mxu0
      %v4185 = vadd.f32 0.0, %v4184
      %v4186 = vpop.f32.mrb[0].mxu0
      %4187 = vmatprep.mubr.bf16.mxu0 0
      %4188 = vmatmul.mubr.bf16.gmra.mrb[0].mxu0 %v3898
      %v4189 = vpop.f32.mrb[0].mxu0
      %v4190 = vadd.f32 0.0, %v4189
      %v4191 = vpop.f32.mrb[0].mxu0
      %v4192 = vpop.f32.mrb[0].mxu0
      %v4193 = vadd.f32 0.0, %v4192
      %v4194 = vpop.f32.mrb[0].mxu0
      %4195 = vmatprep.mubr.bf16.mxu0 0
      %4196 = vmatmul.mubr.bf16.gmra.mrb[0].mxu0 %v3906
      %v4197 = vpop.f32.mrb[0].mxu0
      %v4198 = vadd.f32 0.0, %v4197
      %v4199 = vpop.f32.mrb[0].mxu0
      %v4200 = vpop.f32.mrb[0].mxu0
      %v4201 = vadd.f32 0.0, %v4200
      %v4202 = vpop.f32.mrb[0].mxu0
      %4203 = vdwg.mxu0
      %v4204 = vadd.f32 %v3474, %v4014
      %v4205 = vadd.f32 %v3475, %v4017
      %v4206 = vadd.f32 %v3476, %v4022
      %v4207 = vadd.f32 %v3477, %v4025
      %v4208 = vadd.f32 %v3478, %v4030
      %v4209 = vadd.f32 %v3479, %v4033
      %v4210 = vadd.f32 %v3480, %v4038
      %v4211 = vadd.f32 %v3481, %v4041
      %v4212 = vadd.f32 %v3482, %v4046
      %v4213 = vadd.f32 %v3483, %v4049
      %v4214 = vadd.f32 %v3484, %v4054
      %v4215 = vadd.f32 %v3485, %v4057
      %v4216 = vadd.f32 %v3486, %v4062
      %v4217 = vadd.f32 %v3487, %v4065
      %v4218 = vadd.f32 %v3488, %v4070
      %v4219 = vadd.f32 %v3489, %v4073
      %v4220 = vadd.f32 %v3490, %v4078
      %v4221 = vadd.f32 %v3491, %v4081
      %v4222 = vadd.f32 %v3492, %v4086
      %v4223 = vadd.f32 %v3493, %v4089
      %v4224 = vadd.f32 %v3494, %v4094
      %v4225 = vadd.f32 %v3495, %v4097
      %v4226 = vadd.f32 %v3496, %v4102
      %v4227 = vadd.f32 %v3497, %v4105
      %v4228 = vadd.f32 %v3498, %v4110
      %v4229 = vadd.f32 %v3499, %v4113
      %v4230 = vadd.f32 %v3500, %v4118
      %v4231 = vadd.f32 %v3501, %v4121
      %v4232 = vadd.f32 %v3502, %v4126
      %v4233 = vadd.f32 %v3503, %v4129
      %v4234 = vadd.f32 %v3504, %v4134
      %v4235 = vadd.f32 %v3505, %v4137
      %v4236 = vadd.f32 %v3506, %v4142
      %v4237 = vadd.f32 %v3507, %v4145
      %v4238 = vadd.f32 %v3508, %v4150
      %v4239 = vadd.f32 %v3509, %v4153
      %v4240 = vadd.f32 %v3510, %v4158
      %v4241 = vadd.f32 %v3511, %v4161
      %v4242 = vadd.f32 %v3512, %v4166
      %v4243 = vadd.f32 %v3513, %v4169
      %v4244 = vadd.f32 %v3514, %v4174
      %v4245 = vadd.f32 %v3515, %v4177
      %v4246 = vadd.f32 %v3516, %v4182
      %v4247 = vadd.f32 %v3517, %v4185
      %v4248 = vadd.f32 %v3518, %v4190
      %v4249 = vadd.f32 %v3519, %v4193
      %v4250 = vadd.f32 %v3520, %v4198
      %v4251 = vadd.f32 %v3521, %v4201
      %v4252 = vld [vmem:[#allocation2 + $0x20] sm:$0x8]
      %v4253 = vld [vmem:[#allocation2 + $0x24] sm:$0xf]
      %v4254 = vld [vmem:[#allocation2 + $0x28] sm:$0xf]
      %v4255 = vld [vmem:[#allocation2 + $0x2c] sm:$0xf]
      %v4256 = vld [vmem:[#allocation2 + $0x30] sm:$0xf]
      %v4257 = vld [vmem:[#allocation2 + $0x34] sm:$0xf]
      %v4258 = vld [vmem:[#allocation2 + $0x38] sm:$0xf]
      %v4259 = vld [vmem:[#allocation2 + $0x3c] sm:$0xf]
      %v4260 = vld [vmem:[#allocation2 + $0x40] sm:$0xf]
      %v4261 = vld [vmem:[#allocation2 + $0x44] sm:$0xf]
      %v4262 = vld [vmem:[#allocation2 + $0x48] sm:$0xf]
      %v4263 = vld [vmem:[#allocation2 + $0x4c] sm:$0xf]
      %v4264 = vld [vmem:[#allocation2 + $0x50] sm:$0xf]
      %v4265 = vld [vmem:[#allocation2 + $0x54] sm:$0xf]
      %v4266 = vld [vmem:[#allocation2 + $0x58] sm:$0xf]
      %v4267 = vld [vmem:[#allocation2 + $0x5c] sm:$0xf]
      %v4268 = vld [vmem:[#allocation2 + $0x60] sm:$0xf]
      %v4269 = vld [vmem:[#allocation2 + $0x64] sm:$0xf]
      %v4270 = vld [vmem:[#allocation2 + $0x68] sm:$0xf]
      %v4271 = vld [vmem:[#allocation2 + $0x6c] sm:$0xf]
      %v4272 = vld [vmem:[#allocation2 + $0x70] sm:$0xf]
      %v4273 = vld [vmem:[#allocation2 + $0x74] sm:$0xf]
      %v4274 = vld [vmem:[#allocation2 + $0x78] sm:$0xf]
      %v4275 = vld [vmem:[#allocation2 + $0x7c] sm:$0xf]
      %v4276 = vld [vmem:[#allocation2 + $0x80] sm:$0xf]
      %v4277 = vld [vmem:[#allocation2 + $0x84] sm:$0xf]
      %v4278 = vld [vmem:[#allocation2 + $0x88] sm:$0xf]
      %v4279 = vld [vmem:[#allocation2 + $0x8c] sm:$0xf]
      %v4280 = vld [vmem:[#allocation2 + $0x90] sm:$0xf]
      %v4281 = vld [vmem:[#allocation2 + $0x94] sm:$0xf]
      %v4282 = vld [vmem:[#allocation2 + $0x98] sm:$0xf]
      %v4283 = vld [vmem:[#allocation2 + $0x9c] sm:$0xf]
      %v4284 = vld [vmem:[#allocation2 + $0xa0] sm:$0xf]
      %v4285 = vld [vmem:[#allocation2 + $0xa4] sm:$0xf]
      %v4286 = vld [vmem:[#allocation2 + $0xa8] sm:$0xf]
      %v4287 = vld [vmem:[#allocation2 + $0xac] sm:$0xf]
      %v4288 = vld [vmem:[#allocation2 + $0xb0] sm:$0xf]
      %v4289 = vld [vmem:[#allocation2 + $0xb4] sm:$0xf]
      %v4290 = vld [vmem:[#allocation2 + $0xb8] sm:$0xf]
      %v4291 = vld [vmem:[#allocation2 + $0xbc] sm:$0xf]
      %v4292 = vld [vmem:[#allocation2 + $0xc0] sm:$0xf]
      %v4293 = vld [vmem:[#allocation2 + $0xc4] sm:$0xf]
      %v4294 = vld [vmem:[#allocation2 + $0xc8] sm:$0xf]
      %v4295 = vld [vmem:[#allocation2 + $0xcc] sm:$0xf]
      %v4296 = vld [vmem:[#allocation2 + $0xd0] sm:$0xf]
      %v4297 = vld [vmem:[#allocation2 + $0xd4] sm:$0xf]
      %v4298 = vld [vmem:[#allocation2 + $0xd8] sm:$0xf]
      %v4299 = vld [vmem:[#allocation2 + $0xdc] sm:$0xf]
      %v4300 = vld [vmem:[#allocation2 + $0xe0] sm:$0xf]
      %s4301 = scalar_lea.vmem %s4, 384
      %v4302 = vld [vmem:[%s4301] sm:$0xf]
      %v4303 = vld [vmem:[%s4301 + $0x4] sm:$0xf]
      %v4304 = vld [vmem:[%s4301 + $0x8] sm:$0xf]
      %v4305 = vld [vmem:[%s4301 + $0xc] sm:$0xf]
      %v4306 = vld [vmem:[%s4301 + $0x10] sm:$0xf]
      %v4307 = vld [vmem:[%s4301 + $0x14] sm:$0xf]
      %v4308 = vld [vmem:[%s4301 + $0x18] sm:$0xf]
      %v4309 = vld [vmem:[%s4301 + $0x1c] sm:$0xf]
      %v4310 = vld [vmem:[%s4301 + $0x20] sm:$0xf]
      %v4311 = vld [vmem:[%s4301 + $0x24] sm:$0xf]
      %v4312 = vld [vmem:[%s4301 + $0x28] sm:$0xf]
      %v4313 = vld [vmem:[%s4301 + $0x2c] sm:$0xf]
      %v4314 = vld [vmem:[%s4301 + $0x30] sm:$0xf]
      %v4315 = vld [vmem:[%s4301 + $0x34] sm:$0xf]
      %v4316 = vld [vmem:[%s4301 + $0x38] sm:$0xf]
      %v4317 = vld [vmem:[%s4301 + $0x3c] sm:$0xf]
      %v4367 = vunpack.c.l.b16 %v4252
      %v4368 = vunpack.c.l.b16 %v4253
      %v4369 = vunpack.c.l.b16 %v4254
      %v4370 = vunpack.c.l.b16 %v4255
      %v4371 = vunpack.c.l.b16 %v4256
      %v4372 = vunpack.c.l.b16 %v4257
      %v4373 = vunpack.c.l.b16 %v4258
      %v4374 = vunpack.c.l.b16 %v4259
      %v4375 = vunpack.c.l.b16 %v4260
      %v4376 = vunpack.c.l.b16 %v4261
      %v4377 = vunpack.c.l.b16 %v4262
      %v4378 = vunpack.c.l.b16 %v4263
      %v4379 = vunpack.c.l.b16 %v4264
      %v4380 = vunpack.c.l.b16 %v4265
      %v4381 = vunpack.c.l.b16 %v4266
      %v4382 = vunpack.c.l.b16 %v4267
      %v4383 = vunpack.c.l.b16 %v4268
      %v4384 = vunpack.c.l.b16 %v4269
      %v4385 = vunpack.c.l.b16 %v4270
      %v4386 = vunpack.c.l.b16 %v4271
      %v4387 = vunpack.c.l.b16 %v4272
      %v4388 = vunpack.c.l.b16 %v4273
      %v4389 = vunpack.c.l.b16 %v4274
      %v4390 = vunpack.c.l.b16 %v4275
      %v4391 = vunpack.c.l.b16 %v4276
      %v4392 = vunpack.c.l.b16 %v4277
      %v4393 = vunpack.c.l.b16 %v4278
      %v4394 = vunpack.c.l.b16 %v4279
      %v4395 = vunpack.c.l.b16 %v4280
      %v4396 = vunpack.c.l.b16 %v4281
      %v4397 = vunpack.c.l.b16 %v4282
      %v4398 = vunpack.c.l.b16 %v4283
      %v4399 = vunpack.c.l.b16 %v4284
      %v4400 = vunpack.c.l.b16 %v4285
      %v4401 = vunpack.c.l.b16 %v4286
      %v4402 = vunpack.c.l.b16 %v4287
      %v4403 = vunpack.c.l.b16 %v4288
      %v4404 = vunpack.c.l.b16 %v4289
      %v4405 = vunpack.c.l.b16 %v4290
      %v4406 = vunpack.c.l.b16 %v4291
      %v4407 = vunpack.c.l.b16 %v4292
      %v4408 = vunpack.c.l.b16 %v4293
      %v4409 = vunpack.c.l.b16 %v4294
      %v4410 = vunpack.c.l.b16 %v4295
      %v4411 = vunpack.c.l.b16 %v4296
      %v4412 = vunpack.c.l.b16 %v4297
      %v4413 = vunpack.c.l.b16 %v4298
      %v4414 = vunpack.c.l.b16 %v4299
      %v4415 = vunpack.c.l.b16 %v4300
      %v4416 = vpack.c.b16 %v4368, %v4367
      %v4417 = vpack.c.b16 %v4370, %v4369
      %v4418 = vpack.c.b16 %v4372, %v4371
      %v4419 = vpack.c.b16 %v4374, %v4373
      %v4420 = vpack.c.b16 %v4376, %v4375
      %v4421 = vpack.c.b16 %v4378, %v4377
      %v4422 = vpack.c.b16 %v4380, %v4379
      %v4423 = vpack.c.b16 %v4382, %v4381
      %v4424 = vpack.c.b16 %v4384, %v4383
      %v4425 = vpack.c.b16 %v4386, %v4385
      %v4426 = vpack.c.b16 %v4388, %v4387
      %v4427 = vpack.c.b16 %v4390, %v4389
      %v4428 = vpack.c.b16 %v4392, %v4391
      %v4429 = vpack.c.b16 %v4394, %v4393
      %v4430 = vpack.c.b16 %v4396, %v4395
      %v4431 = vpack.c.b16 %v4398, %v4397
      %v4432 = vpack.c.b16 %v4400, %v4399
      %v4433 = vpack.c.b16 %v4402, %v4401
      %v4434 = vpack.c.b16 %v4404, %v4403
      %v4435 = vpack.c.b16 %v4406, %v4405
      %v4436 = vpack.c.b16 %v4408, %v4407
      %v4437 = vpack.c.b16 %v4410, %v4409
      %v4438 = vpack.c.b16 %v4412, %v4411
      %v4439 = vpack.c.b16 %v4414, %v4413
      %v4440 = vpack.c.b16 %v4415, %v4415
      %v4442 = vshrl.u32 %v4416, 16
      %v4444 = vrot.slane %v4442, 3
      %v4445 = vshll.u32 %v4416, 16
      %v4447 = vrot.slane %v4445, 4
      %v4448 = vor.u32 %v4444, %v4447
      %v4450 = vshrl.u32 %v4417, 16
      %v4452 = vrot.slane %v4450, 3
      %v4453 = vshll.u32 %v4417, 16
      %v4455 = vrot.slane %v4453, 4
      %v4456 = vor.u32 %v4452, %v4455
      %v4457 = vsel %vm1125, %v4448, %v4456
      %v4459 = vshrl.u32 %v4418, 16
      %v4461 = vrot.slane %v4459, 3
      %v4462 = vshll.u32 %v4418, 16
      %v4464 = vrot.slane %v4462, 4
      %v4465 = vor.u32 %v4461, %v4464
      %v4466 = vsel %vm1125, %v4456, %v4465
      %v4468 = vshrl.u32 %v4419, 16
      %v4470 = vrot.slane %v4468, 3
      %v4471 = vshll.u32 %v4419, 16
      %v4473 = vrot.slane %v4471, 4
      %v4474 = vor.u32 %v4470, %v4473
      %v4475 = vsel %vm1125, %v4465, %v4474
      %v4477 = vshrl.u32 %v4420, 16
      %v4479 = vrot.slane %v4477, 3
      %v4480 = vshll.u32 %v4420, 16
      %v4482 = vrot.slane %v4480, 4
      %v4483 = vor.u32 %v4479, %v4482
      %v4484 = vsel %vm1125, %v4474, %v4483
      %v4486 = vshrl.u32 %v4421, 16
      %v4488 = vrot.slane %v4486, 3
      %v4489 = vshll.u32 %v4421, 16
      %v4491 = vrot.slane %v4489, 4
      %v4492 = vor.u32 %v4488, %v4491
      %v4493 = vsel %vm1125, %v4483, %v4492
      %v4495 = vshrl.u32 %v4422, 16
      %v4497 = vrot.slane %v4495, 3
      %v4498 = vshll.u32 %v4422, 16
      %v4500 = vrot.slane %v4498, 4
      %v4501 = vor.u32 %v4497, %v4500
      %v4502 = vsel %vm1125, %v4492, %v4501
      %v4504 = vshrl.u32 %v4423, 16
      %v4506 = vrot.slane %v4504, 3
      %v4507 = vshll.u32 %v4423, 16
      %v4509 = vrot.slane %v4507, 4
      %v4510 = vor.u32 %v4506, %v4509
      %v4511 = vsel %vm1125, %v4501, %v4510
      %v4513 = vshrl.u32 %v4424, 16
      %v4515 = vrot.slane %v4513, 3
      %v4516 = vshll.u32 %v4424, 16
      %v4518 = vrot.slane %v4516, 4
      %v4519 = vor.u32 %v4515, %v4518
      %v4520 = vsel %vm1125, %v4510, %v4519
      %v4522 = vshrl.u32 %v4425, 16
      %v4524 = vrot.slane %v4522, 3
      %v4525 = vshll.u32 %v4425, 16
      %v4527 = vrot.slane %v4525, 4
      %v4528 = vor.u32 %v4524, %v4527
      %v4529 = vsel %vm1125, %v4519, %v4528
      %v4531 = vshrl.u32 %v4426, 16
      %v4533 = vrot.slane %v4531, 3
      %v4534 = vshll.u32 %v4426, 16
      %v4536 = vrot.slane %v4534, 4
      %v4537 = vor.u32 %v4533, %v4536
      %v4538 = vsel %vm1125, %v4528, %v4537
      %v4540 = vshrl.u32 %v4427, 16
      %v4542 = vrot.slane %v4540, 3
      %v4543 = vshll.u32 %v4427, 16
      %v4545 = vrot.slane %v4543, 4
      %v4546 = vor.u32 %v4542, %v4545
      %v4547 = vsel %vm1125, %v4537, %v4546
      %v4549 = vshrl.u32 %v4428, 16
      %v4551 = vrot.slane %v4549, 3
      %v4552 = vshll.u32 %v4428, 16
      %v4554 = vrot.slane %v4552, 4
      %v4555 = vor.u32 %v4551, %v4554
      %v4556 = vsel %vm1125, %v4546, %v4555
      %v4558 = vshrl.u32 %v4429, 16
      %v4560 = vrot.slane %v4558, 3
      %v4561 = vshll.u32 %v4429, 16
      %v4563 = vrot.slane %v4561, 4
      %v4564 = vor.u32 %v4560, %v4563
      %v4565 = vsel %vm1125, %v4555, %v4564
      %v4567 = vshrl.u32 %v4430, 16
      %v4569 = vrot.slane %v4567, 3
      %v4570 = vshll.u32 %v4430, 16
      %v4572 = vrot.slane %v4570, 4
      %v4573 = vor.u32 %v4569, %v4572
      %v4574 = vsel %vm1125, %v4564, %v4573
      %v4576 = vshrl.u32 %v4431, 16
      %v4578 = vrot.slane %v4576, 3
      %v4579 = vshll.u32 %v4431, 16
      %v4581 = vrot.slane %v4579, 4
      %v4582 = vor.u32 %v4578, %v4581
      %v4583 = vsel %vm1125, %v4573, %v4582
      %v4585 = vshrl.u32 %v4432, 16
      %v4587 = vrot.slane %v4585, 3
      %v4588 = vshll.u32 %v4432, 16
      %v4590 = vrot.slane %v4588, 4
      %v4591 = vor.u32 %v4587, %v4590
      %v4592 = vsel %vm1125, %v4582, %v4591
      %v4594 = vshrl.u32 %v4433, 16
      %v4596 = vrot.slane %v4594, 3
      %v4597 = vshll.u32 %v4433, 16
      %v4599 = vrot.slane %v4597, 4
      %v4600 = vor.u32 %v4596, %v4599
      %v4601 = vsel %vm1125, %v4591, %v4600
      %v4603 = vshrl.u32 %v4434, 16
      %v4605 = vrot.slane %v4603, 3
      %v4606 = vshll.u32 %v4434, 16
      %v4608 = vrot.slane %v4606, 4
      %v4609 = vor.u32 %v4605, %v4608
      %v4610 = vsel %vm1125, %v4600, %v4609
      %v4612 = vshrl.u32 %v4435, 16
      %v4614 = vrot.slane %v4612, 3
      %v4615 = vshll.u32 %v4435, 16
      %v4617 = vrot.slane %v4615, 4
      %v4618 = vor.u32 %v4614, %v4617
      %v4619 = vsel %vm1125, %v4609, %v4618
      %v4621 = vshrl.u32 %v4436, 16
      %v4623 = vrot.slane %v4621, 3
      %v4624 = vshll.u32 %v4436, 16
      %v4626 = vrot.slane %v4624, 4
      %v4627 = vor.u32 %v4623, %v4626
      %v4628 = vsel %vm1125, %v4618, %v4627
      %v4630 = vshrl.u32 %v4437, 16
      %v4632 = vrot.slane %v4630, 3
      %v4633 = vshll.u32 %v4437, 16
      %v4635 = vrot.slane %v4633, 4
      %v4636 = vor.u32 %v4632, %v4635
      %v4637 = vsel %vm1125, %v4627, %v4636
      %v4639 = vshrl.u32 %v4438, 16
      %v4641 = vrot.slane %v4639, 3
      %v4642 = vshll.u32 %v4438, 16
      %v4644 = vrot.slane %v4642, 4
      %v4645 = vor.u32 %v4641, %v4644
      %v4646 = vsel %vm1125, %v4636, %v4645
      %v4648 = vshrl.u32 %v4439, 16
      %v4650 = vrot.slane %v4648, 3
      %v4651 = vshll.u32 %v4439, 16
      %v4653 = vrot.slane %v4651, 4
      %v4654 = vor.u32 %v4650, %v4653
      %v4655 = vsel %vm1125, %v4645, %v4654
      %v4657 = vshrl.u32 %v4440, 16
      %v4659 = vrot.slane %v4657, 3
      %v4660 = vshll.u32 %v4440, 16
      %v4662 = vrot.slane %v4660, 4
      %v4663 = vor.u32 %v4659, %v4662
      %v4664 = vsel %vm1125, %v4654, %v4663
      %v4705 = vunpack.c.l.b16 %v4302
      %v4706 = vunpack.c.l.b16 %v4303
      %v4707 = vunpack.c.l.b16 %v4304
      %v4708 = vunpack.c.l.b16 %v4305
      %v4709 = vunpack.c.l.b16 %v4306
      %v4710 = vunpack.c.l.b16 %v4307
      %v4711 = vunpack.c.l.b16 %v4308
      %v4712 = vunpack.c.l.b16 %v4309
      %v4713 = vunpack.c.l.b16 %v4310
      %v4714 = vunpack.c.l.b16 %v4311
      %v4715 = vunpack.c.l.b16 %v4312
      %v4716 = vunpack.c.l.b16 %v4313
      %v4717 = vunpack.c.l.b16 %v4314
      %v4718 = vunpack.c.l.b16 %v4315
      %v4719 = vunpack.c.l.b16 %v4316
      %v4720 = vunpack.c.l.b16 %v4317
      %v4721 = vpack.c.b16 %v4706, %v4705
      %v4722 = vpack.c.b16 %v4708, %v4707
      %v4723 = vpack.c.b16 %v4710, %v4709
      %v4724 = vpack.c.b16 %v4712, %v4711
      %v4725 = vpack.c.b16 %v4714, %v4713
      %v4726 = vpack.c.b16 %v4716, %v4715
      %v4727 = vpack.c.b16 %v4718, %v4717
      %v4728 = vpack.c.b16 %v4720, %v4719
      %4737 = vmatprep.subr.bf16.mxu0 0
      %4738 = vmatpush1.bf16.msra.mxu0 %v4721
      %4739 = vmatprep.subr.bf16.mxu0 0
      %4740 = vmatpush1.bf16.msra.mxu0 %v4722
      %4741 = vmatprep.subr.bf16.mxu0 0
      %4742 = vmatpush1.bf16.msra.mxu0 %v4723
      %4743 = vmatprep.subr.bf16.mxu0 0
      %4744 = vmatpush1.bf16.msra.mxu0 %v4724
      %4745 = vmatprep.subr.bf16.mxu0 0
      %4746 = vmatpush1.bf16.msra.mxu0 %v4725
      %4747 = vmatprep.subr.bf16.mxu0 0
      %4748 = vmatpush1.bf16.msra.mxu0 %v4726
      %4749 = vmatprep.subr.bf16.mxu0 0
      %4750 = vmatpush1.bf16.msra.mxu0 %v4727
      %4751 = vmatprep.subr.bf16.mxu0 0
      %4752 = vmatpush1.bf16.msra.mxu0 %v4728
      %4753 = vmatprep.subr.bf16.mxu0 0
      %4754 = vmatpush1.bf16.msra.mxu0 0
      %4755 = vmatprep.subr.bf16.mxu0 0
      %4756 = vmatpush1.bf16.msra.mxu0 0
      %4757 = vmatprep.subr.bf16.mxu0 0
      %4758 = vmatpush1.bf16.msra.mxu0 0
      %4759 = vmatprep.subr.bf16.mxu0 0
      %4760 = vmatpush1.bf16.msra.mxu0 0
      %4761 = vmatprep.subr.bf16.mxu0 0
      %4762 = vmatpush1.bf16.msra.mxu0 0
      %4763 = vmatprep.subr.bf16.mxu0 0
      %4764 = vmatpush1.bf16.msra.mxu0 0
      %4765 = vmatprep.subr.bf16.mxu0 0
      %4766 = vmatpush1.bf16.msra.mxu0 0
      %4767 = vmatprep.subr.bf16.mxu0 0
      %4768 = vmatpush1.bf16.msra.mxu0 0
      %4769 = vmatprep.mubr.bf16.mxu0 0
      %4770 = vmatmul.mubr.bf16.gmra.mrb[0].mxu0 %v4457
      %v4771 = vpop.f32.mrb[0].mxu0
      %v4772 = vadd.f32 0.0, %v4771
      %v4773 = vpop.f32.mrb[0].mxu0
      %v4774 = vpop.f32.mrb[0].mxu0
      %v4775 = vadd.f32 0.0, %v4774
      %v4776 = vpop.f32.mrb[0].mxu0
      %4777 = vmatprep.mubr.bf16.mxu0 0
      %4778 = vmatmul.mubr.bf16.gmra.mrb[0].mxu0 %v4466
      %v4779 = vpop.f32.mrb[0].mxu0
      %v4780 = vadd.f32 0.0, %v4779
      %v4781 = vpop.f32.mrb[0].mxu0
      %v4782 = vpop.f32.mrb[0].mxu0
      %v4783 = vadd.f32 0.0, %v4782
      %v4784 = vpop.f32.mrb[0].mxu0
      %4785 = vmatprep.mubr.bf16.mxu0 0
      %4786 = vmatmul.mubr.bf16.gmra.mrb[0].mxu0 %v4475
      %v4787 = vpop.f32.mrb[0].mxu0
      %v4788 = vadd.f32 0.0, %v4787
      %v4789 = vpop.f32.mrb[0].mxu0
      %v4790 = vpop.f32.mrb[0].mxu0
      %v4791 = vadd.f32 0.0, %v4790
      %v4792 = vpop.f32.mrb[0].mxu0
      %4793 = vmatprep.mubr.bf16.mxu0 0
      %4794 = vmatmul.mubr.bf16.gmra.mrb[0].mxu0 %v4484
      %v4795 = vpop.f32.mrb[0].mxu0
      %v4796 = vadd.f32 0.0, %v4795
      %v4797 = vpop.f32.mrb[0].mxu0
      %v4798 = vpop.f32.mrb[0].mxu0
      %v4799 = vadd.f32 0.0, %v4798
      %v4800 = vpop.f32.mrb[0].mxu0
      %4801 = vmatprep.mubr.bf16.mxu0 0
      %4802 = vmatmul.mubr.bf16.gmra.mrb[0].mxu0 %v4493
      %v4803 = vpop.f32.mrb[0].mxu0
      %v4804 = vadd.f32 0.0, %v4803
      %v4805 = vpop.f32.mrb[0].mxu0
      %v4806 = vpop.f32.mrb[0].mxu0
      %v4807 = vadd.f32 0.0, %v4806
      %v4808 = vpop.f32.mrb[0].mxu0
      %4809 = vmatprep.mubr.bf16.mxu0 0
      %4810 = vmatmul.mubr.bf16.gmra.mrb[0].mxu0 %v4502
      %v4811 = vpop.f32.mrb[0].mxu0
      %v4812 = vadd.f32 0.0, %v4811
      %v4813 = vpop.f32.mrb[0].mxu0
      %v4814 = vpop.f32.mrb[0].mxu0
      %v4815 = vadd.f32 0.0, %v4814
      %v4816 = vpop.f32.mrb[0].mxu0
      %4817 = vmatprep.mubr.bf16.mxu0 0
      %4818 = vmatmul.mubr.bf16.gmra.mrb[0].mxu0 %v4511
      %v4819 = vpop.f32.mrb[0].mxu0
      %v4820 = vadd.f32 0.0, %v4819
      %v4821 = vpop.f32.mrb[0].mxu0
      %v4822 = vpop.f32.mrb[0].mxu0
      %v4823 = vadd.f32 0.0, %v4822
      %v4824 = vpop.f32.mrb[0].mxu0
      %4825 = vmatprep.mubr.bf16.mxu0 0
      %4826 = vmatmul.mubr.bf16.gmra.mrb[0].mxu0 %v4520
      %v4827 = vpop.f32.mrb[0].mxu0
      %v4828 = vadd.f32 0.0, %v4827
      %v4829 = vpop.f32.mrb[0].mxu0
      %v4830 = vpop.f32.mrb[0].mxu0
      %v4831 = vadd.f32 0.0, %v4830
      %v4832 = vpop.f32.mrb[0].mxu0
      %4833 = vmatprep.mubr.bf16.mxu0 0
      %4834 = vmatmul.mubr.bf16.gmra.mrb[0].mxu0 %v4529
      %v4835 = vpop.f32.mrb[0].mxu0
      %v4836 = vadd.f32 0.0, %v4835
      %v4837 = vpop.f32.mrb[0].mxu0
      %v4838 = vpop.f32.mrb[0].mxu0
      %v4839 = vadd.f32 0.0, %v4838
      %v4840 = vpop.f32.mrb[0].mxu0
      %4841 = vmatprep.mubr.bf16.mxu0 0
      %4842 = vmatmul.mubr.bf16.gmra.mrb[0].mxu0 %v4538
      %v4843 = vpop.f32.mrb[0].mxu0
      %v4844 = vadd.f32 0.0, %v4843
      %v4845 = vpop.f32.mrb[0].mxu0
      %v4846 = vpop.f32.mrb[0].mxu0
      %v4847 = vadd.f32 0.0, %v4846
      %v4848 = vpop.f32.mrb[0].mxu0
      %4849 = vmatprep.mubr.bf16.mxu0 0
      %4850 = vmatmul.mubr.bf16.gmra.mrb[0].mxu0 %v4547
      %v4851 = vpop.f32.mrb[0].mxu0
      %v4852 = vadd.f32 0.0, %v4851
      %v4853 = vpop.f32.mrb[0].mxu0
      %v4854 = vpop.f32.mrb[0].mxu0
      %v4855 = vadd.f32 0.0, %v4854
      %v4856 = vpop.f32.mrb[0].mxu0
      %4857 = vmatprep.mubr.bf16.mxu0 0
      %4858 = vmatmul.mubr.bf16.gmra.mrb[0].mxu0 %v4556
      %v4859 = vpop.f32.mrb[0].mxu0
      %v4860 = vadd.f32 0.0, %v4859
      %v4861 = vpop.f32.mrb[0].mxu0
      %v4862 = vpop.f32.mrb[0].mxu0
      %v4863 = vadd.f32 0.0, %v4862
      %v4864 = vpop.f32.mrb[0].mxu0
      %4865 = vmatprep.mubr.bf16.mxu0 0
      %4866 = vmatmul.mubr.bf16.gmra.mrb[0].mxu0 %v4565
      %v4867 = vpop.f32.mrb[0].mxu0
      %v4868 = vadd.f32 0.0, %v4867
      %v4869 = vpop.f32.mrb[0].mxu0
      %v4870 = vpop.f32.mrb[0].mxu0
      %v4871 = vadd.f32 0.0, %v4870
      %v4872 = vpop.f32.mrb[0].mxu0
      %4873 = vmatprep.mubr.bf16.mxu0 0
      %4874 = vmatmul.mubr.bf16.gmra.mrb[0].mxu0 %v4574
      %v4875 = vpop.f32.mrb[0].mxu0
      %v4876 = vadd.f32 0.0, %v4875
      %v4877 = vpop.f32.mrb[0].mxu0
      %v4878 = vpop.f32.mrb[0].mxu0
      %v4879 = vadd.f32 0.0, %v4878
      %v4880 = vpop.f32.mrb[0].mxu0
      %4881 = vmatprep.mubr.bf16.mxu0 0
      %4882 = vmatmul.mubr.bf16.gmra.mrb[0].mxu0 %v4583
      %v4883 = vpop.f32.mrb[0].mxu0
      %v4884 = vadd.f32 0.0, %v4883
      %v4885 = vpop.f32.mrb[0].mxu0
      %v4886 = vpop.f32.mrb[0].mxu0
      %v4887 = vadd.f32 0.0, %v4886
      %v4888 = vpop.f32.mrb[0].mxu0
      %4889 = vmatprep.mubr.bf16.mxu0 0
      %4890 = vmatmul.mubr.bf16.gmra.mrb[0].mxu0 %v4592
      %v4891 = vpop.f32.mrb[0].mxu0
      %v4892 = vadd.f32 0.0, %v4891
      %v4893 = vpop.f32.mrb[0].mxu0
      %v4894 = vpop.f32.mrb[0].mxu0
      %v4895 = vadd.f32 0.0, %v4894
      %v4896 = vpop.f32.mrb[0].mxu0
      %4897 = vmatprep.mubr.bf16.mxu0 0
      %4898 = vmatmul.mubr.bf16.gmra.mrb[0].mxu0 %v4601
      %v4899 = vpop.f32.mrb[0].mxu0
      %v4900 = vadd.f32 0.0, %v4899
      %v4901 = vpop.f32.mrb[0].mxu0
      %v4902 = vpop.f32.mrb[0].mxu0
      %v4903 = vadd.f32 0.0, %v4902
      %v4904 = vpop.f32.mrb[0].mxu0
      %4905 = vmatprep.mubr.bf16.mxu0 0
      %4906 = vmatmul.mubr.bf16.gmra.mrb[0].mxu0 %v4610
      %v4907 = vpop.f32.mrb[0].mxu0
      %v4908 = vadd.f32 0.0, %v4907
      %v4909 = vpop.f32.mrb[0].mxu0
      %v4910 = vpop.f32.mrb[0].mxu0
      %v4911 = vadd.f32 0.0, %v4910
      %v4912 = vpop.f32.mrb[0].mxu0
      %4913 = vmatprep.mubr.bf16.mxu0 0
      %4914 = vmatmul.mubr.bf16.gmra.mrb[0].mxu0 %v4619
      %v4915 = vpop.f32.mrb[0].mxu0
      %v4916 = vadd.f32 0.0, %v4915
      %v4917 = vpop.f32.mrb[0].mxu0
      %v4918 = vpop.f32.mrb[0].mxu0
      %v4919 = vadd.f32 0.0, %v4918
      %v4920 = vpop.f32.mrb[0].mxu0
      %4921 = vmatprep.mubr.bf16.mxu0 0
      %4922 = vmatmul.mubr.bf16.gmra.mrb[0].mxu0 %v4628
      %v4923 = vpop.f32.mrb[0].mxu0
      %v4924 = vadd.f32 0.0, %v4923
      %v4925 = vpop.f32.mrb[0].mxu0
      %v4926 = vpop.f32.mrb[0].mxu0
      %v4927 = vadd.f32 0.0, %v4926
      %v4928 = vpop.f32.mrb[0].mxu0
      %4929 = vmatprep.mubr.bf16.mxu0 0
      %4930 = vmatmul.mubr.bf16.gmra.mrb[0].mxu0 %v4637
      %v4931 = vpop.f32.mrb[0].mxu0
      %v4932 = vadd.f32 0.0, %v4931
      %v4933 = vpop.f32.mrb[0].mxu0
      %v4934 = vpop.f32.mrb[0].mxu0
      %v4935 = vadd.f32 0.0, %v4934
      %v4936 = vpop.f32.mrb[0].mxu0
      %4937 = vmatprep.mubr.bf16.mxu0 0
      %4938 = vmatmul.mubr.bf16.gmra.mrb[0].mxu0 %v4646
      %v4939 = vpop.f32.mrb[0].mxu0
      %v4940 = vadd.f32 0.0, %v4939
      %v4941 = vpop.f32.mrb[0].mxu0
      %v4942 = vpop.f32.mrb[0].mxu0
      %v4943 = vadd.f32 0.0, %v4942
      %v4944 = vpop.f32.mrb[0].mxu0
      %4945 = vmatprep.mubr.bf16.mxu0 0
      %4946 = vmatmul.mubr.bf16.gmra.mrb[0].mxu0 %v4655
      %v4947 = vpop.f32.mrb[0].mxu0
      %v4948 = vadd.f32 0.0, %v4947
      %v4949 = vpop.f32.mrb[0].mxu0
      %v4950 = vpop.f32.mrb[0].mxu0
      %v4951 = vadd.f32 0.0, %v4950
      %v4952 = vpop.f32.mrb[0].mxu0
      %4953 = vmatprep.mubr.bf16.mxu0 0
      %4954 = vmatmul.mubr.bf16.gmra.mrb[0].mxu0 %v4664
      %v4955 = vpop.f32.mrb[0].mxu0
      %v4956 = vadd.f32 0.0, %v4955
      %v4957 = vpop.f32.mrb[0].mxu0
      %v4958 = vpop.f32.mrb[0].mxu0
      %v4959 = vadd.f32 0.0, %v4958
      %v4960 = vpop.f32.mrb[0].mxu0
      %4961 = vdwg.mxu0
      %v4962 = vadd.f32 %v4204, %v4772
      %v4963 = vadd.f32 %v4205, %v4775
      %v4964 = vadd.f32 %v4206, %v4780
      %v4965 = vadd.f32 %v4207, %v4783
      %v4966 = vadd.f32 %v4208, %v4788
      %v4967 = vadd.f32 %v4209, %v4791
      %v4968 = vadd.f32 %v4210, %v4796
      %v4969 = vadd.f32 %v4211, %v4799
      %v4970 = vadd.f32 %v4212, %v4804
      %v4971 = vadd.f32 %v4213, %v4807
      %v4972 = vadd.f32 %v4214, %v4812
      %v4973 = vadd.f32 %v4215, %v4815
      %v4974 = vadd.f32 %v4216, %v4820
      %v4975 = vadd.f32 %v4217, %v4823
      %v4976 = vadd.f32 %v4218, %v4828
      %v4977 = vadd.f32 %v4219, %v4831
      %v4978 = vadd.f32 %v4220, %v4836
      %v4979 = vadd.f32 %v4221, %v4839
      %v4980 = vadd.f32 %v4222, %v4844
      %v4981 = vadd.f32 %v4223, %v4847
      %v4982 = vadd.f32 %v4224, %v4852
      %v4983 = vadd.f32 %v4225, %v4855
      %v4984 = vadd.f32 %v4226, %v4860
      %v4985 = vadd.f32 %v4227, %v4863
      %v4986 = vadd.f32 %v4228, %v4868
      %v4987 = vadd.f32 %v4229, %v4871
      %v4988 = vadd.f32 %v4230, %v4876
      %v4989 = vadd.f32 %v4231, %v4879
      %v4990 = vadd.f32 %v4232, %v4884
      %v4991 = vadd.f32 %v4233, %v4887
      %v4992 = vadd.f32 %v4234, %v4892
      %v4993 = vadd.f32 %v4235, %v4895
      %v4994 = vadd.f32 %v4236, %v4900
      %v4995 = vadd.f32 %v4237, %v4903
      %v4996 = vadd.f32 %v4238, %v4908
      %v4997 = vadd.f32 %v4239, %v4911
      %v4998 = vadd.f32 %v4240, %v4916
      %v4999 = vadd.f32 %v4241, %v4919
      %v5000 = vadd.f32 %v4242, %v4924
      %v5001 = vadd.f32 %v4243, %v4927
      %v5002 = vadd.f32 %v4244, %v4932
      %v5003 = vadd.f32 %v4245, %v4935
      %v5004 = vadd.f32 %v4246, %v4940
      %v5005 = vadd.f32 %v4247, %v4943
      %v5006 = vadd.f32 %v4248, %v4948
      %v5007 = vadd.f32 %v4249, %v4951
      %v5008 = vadd.f32 %v4250, %v4956
      %v5009 = vadd.f32 %v4251, %v4959
      %s5010 = scalar_lea.vmem %s4, 448
      %v5011 = vld [vmem:[%s5010] sm:$0xf]
      %v5012 = vld [vmem:[%s5010 + $0x4] sm:$0xf]
      %v5013 = vld [vmem:[%s5010 + $0x8] sm:$0xf]
      %v5014 = vld [vmem:[%s5010 + $0xc] sm:$0xf]
      %v5015 = vld [vmem:[%s5010 + $0x10] sm:$0xf]
      %v5016 = vld [vmem:[%s5010 + $0x14] sm:$0xf]
      %v5017 = vld [vmem:[%s5010 + $0x18] sm:$0xf]
      %v5018 = vld [vmem:[%s5010 + $0x1c] sm:$0xf]
      %v5019 = vld [vmem:[%s5010 + $0x20] sm:$0xf]
      %v5020 = vld [vmem:[%s5010 + $0x24] sm:$0xf]
      %v5021 = vld [vmem:[%s5010 + $0x28] sm:$0xf]
      %v5022 = vld [vmem:[%s5010 + $0x2c] sm:$0xf]
      %v5023 = vld [vmem:[%s5010 + $0x30] sm:$0xf]
      %v5024 = vld [vmem:[%s5010 + $0x34] sm:$0xf]
      %v5025 = vld [vmem:[%s5010 + $0x38] sm:$0xf]
      %v5026 = vld [vmem:[%s5010 + $0x3c] sm:$0xf]
      %v5027 = vpack.c.b16 %v4369, %v4368
      %v5028 = vpack.c.b16 %v4371, %v4370
      %v5029 = vpack.c.b16 %v4373, %v4372
      %v5030 = vpack.c.b16 %v4375, %v4374
      %v5031 = vpack.c.b16 %v4377, %v4376
      %v5032 = vpack.c.b16 %v4379, %v4378
      %v5033 = vpack.c.b16 %v4381, %v4380
      %v5034 = vpack.c.b16 %v4383, %v4382
      %v5035 = vpack.c.b16 %v4385, %v4384
      %v5036 = vpack.c.b16 %v4387, %v4386
      %v5037 = vpack.c.b16 %v4389, %v4388
      %v5038 = vpack.c.b16 %v4391, %v4390
      %v5039 = vpack.c.b16 %v4393, %v4392
      %v5040 = vpack.c.b16 %v4395, %v4394
      %v5041 = vpack.c.b16 %v4397, %v4396
      %v5042 = vpack.c.b16 %v4399, %v4398
      %v5043 = vpack.c.b16 %v4401, %v4400
      %v5044 = vpack.c.b16 %v4403, %v4402
      %v5045 = vpack.c.b16 %v4405, %v4404
      %v5046 = vpack.c.b16 %v4407, %v4406
      %v5047 = vpack.c.b16 %v4409, %v4408
      %v5048 = vpack.c.b16 %v4411, %v4410
      %v5049 = vpack.c.b16 %v4413, %v4412
      %v5050 = vpack.c.b16 %v4415, %v4414
      %v5091 = vunpack.c.l.b16 %v5011
      %v5092 = vunpack.c.l.b16 %v5012
      %v5093 = vunpack.c.l.b16 %v5013
      %v5094 = vunpack.c.l.b16 %v5014
      %v5095 = vunpack.c.l.b16 %v5015
      %v5096 = vunpack.c.l.b16 %v5016
      %v5097 = vunpack.c.l.b16 %v5017
      %v5098 = vunpack.c.l.b16 %v5018
      %v5099 = vunpack.c.l.b16 %v5019
      %v5100 = vunpack.c.l.b16 %v5020
      %v5101 = vunpack.c.l.b16 %v5021
      %v5102 = vunpack.c.l.b16 %v5022
      %v5103 = vunpack.c.l.b16 %v5023
      %v5104 = vunpack.c.l.b16 %v5024
      %v5105 = vunpack.c.l.b16 %v5025
      %v5106 = vunpack.c.l.b16 %v5026
      %v5107 = vpack.c.b16 %v5092, %v5091
      %v5108 = vpack.c.b16 %v5094, %v5093
      %v5109 = vpack.c.b16 %v5096, %v5095
      %v5110 = vpack.c.b16 %v5098, %v5097
      %v5111 = vpack.c.b16 %v5100, %v5099
      %v5112 = vpack.c.b16 %v5102, %v5101
      %v5113 = vpack.c.b16 %v5104, %v5103
      %v5114 = vpack.c.b16 %v5106, %v5105
      %5123 = vmatprep.subr.bf16.mxu0 0
      %5124 = vmatpush1.bf16.msra.mxu0 %v5107
      %5125 = vmatprep.subr.bf16.mxu0 0
      %5126 = vmatpush1.bf16.msra.mxu0 %v5108
      %5127 = vmatprep.subr.bf16.mxu0 0
      %5128 = vmatpush1.bf16.msra.mxu0 %v5109
      %5129 = vmatprep.subr.bf16.mxu0 0
      %5130 = vmatpush1.bf16.msra.mxu0 %v5110
      %5131 = vmatprep.subr.bf16.mxu0 0
      %5132 = vmatpush1.bf16.msra.mxu0 %v5111
      %5133 = vmatprep.subr.bf16.mxu0 0
      %5134 = vmatpush1.bf16.msra.mxu0 %v5112
      %5135 = vmatprep.subr.bf16.mxu0 0
      %5136 = vmatpush1.bf16.msra.mxu0 %v5113
      %5137 = vmatprep.subr.bf16.mxu0 0
      %5138 = vmatpush1.bf16.msra.mxu0 %v5114
      %5139 = vmatprep.subr.bf16.mxu0 0
      %5140 = vmatpush1.bf16.msra.mxu0 0
      %5141 = vmatprep.subr.bf16.mxu0 0
      %5142 = vmatpush1.bf16.msra.mxu0 0
      %5143 = vmatprep.subr.bf16.mxu0 0
      %5144 = vmatpush1.bf16.msra.mxu0 0
      %5145 = vmatprep.subr.bf16.mxu0 0
      %5146 = vmatpush1.bf16.msra.mxu0 0
      %5147 = vmatprep.subr.bf16.mxu0 0
      %5148 = vmatpush1.bf16.msra.mxu0 0
      %5149 = vmatprep.subr.bf16.mxu0 0
      %5150 = vmatpush1.bf16.msra.mxu0 0
      %5151 = vmatprep.subr.bf16.mxu0 0
      %5152 = vmatpush1.bf16.msra.mxu0 0
      %5153 = vmatprep.subr.bf16.mxu0 0
      %5154 = vmatpush1.bf16.msra.mxu0 0
      %5155 = vmatprep.mubr.bf16.mxu0 0
      %5156 = vmatmul.mubr.bf16.gmra.mrb[0].mxu0 %v5027
      %v5157 = vpop.f32.mrb[0].mxu0
      %v5158 = vadd.f32 0.0, %v5157
      %v5159 = vpop.f32.mrb[0].mxu0
      %v5160 = vpop.f32.mrb[0].mxu0
      %v5161 = vadd.f32 0.0, %v5160
      %v5162 = vpop.f32.mrb[0].mxu0
      %5163 = vmatprep.mubr.bf16.mxu0 0
      %5164 = vmatmul.mubr.bf16.gmra.mrb[0].mxu0 %v5028
      %v5165 = vpop.f32.mrb[0].mxu0
      %v5166 = vadd.f32 0.0, %v5165
      %v5167 = vpop.f32.mrb[0].mxu0
      %v5168 = vpop.f32.mrb[0].mxu0
      %v5169 = vadd.f32 0.0, %v5168
      %v5170 = vpop.f32.mrb[0].mxu0
      %5171 = vmatprep.mubr.bf16.mxu0 0
      %5172 = vmatmul.mubr.bf16.gmra.mrb[0].mxu0 %v5029
      %v5173 = vpop.f32.mrb[0].mxu0
      %v5174 = vadd.f32 0.0, %v5173
      %v5175 = vpop.f32.mrb[0].mxu0
      %v5176 = vpop.f32.mrb[0].mxu0
      %v5177 = vadd.f32 0.0, %v5176
      %v5178 = vpop.f32.mrb[0].mxu0
      %5179 = vmatprep.mubr.bf16.mxu0 0
      %5180 = vmatmul.mubr.bf16.gmra.mrb[0].mxu0 %v5030
      %v5181 = vpop.f32.mrb[0].mxu0
      %v5182 = vadd.f32 0.0, %v5181
      %v5183 = vpop.f32.mrb[0].mxu0
      %v5184 = vpop.f32.mrb[0].mxu0
      %v5185 = vadd.f32 0.0, %v5184
      %v5186 = vpop.f32.mrb[0].mxu0
      %5187 = vmatprep.mubr.bf16.mxu0 0
      %5188 = vmatmul.mubr.bf16.gmra.mrb[0].mxu0 %v5031
      %v5189 = vpop.f32.mrb[0].mxu0
      %v5190 = vadd.f32 0.0, %v5189
      %v5191 = vpop.f32.mrb[0].mxu0
      %v5192 = vpop.f32.mrb[0].mxu0
      %v5193 = vadd.f32 0.0, %v5192
      %v5194 = vpop.f32.mrb[0].mxu0
      %5195 = vmatprep.mubr.bf16.mxu0 0
      %5196 = vmatmul.mubr.bf16.gmra.mrb[0].mxu0 %v5032
      %v5197 = vpop.f32.mrb[0].mxu0
      %v5198 = vadd.f32 0.0, %v5197
      %v5199 = vpop.f32.mrb[0].mxu0
      %v5200 = vpop.f32.mrb[0].mxu0
      %v5201 = vadd.f32 0.0, %v5200
      %v5202 = vpop.f32.mrb[0].mxu0
      %5203 = vmatprep.mubr.bf16.mxu0 0
      %5204 = vmatmul.mubr.bf16.gmra.mrb[0].mxu0 %v5033
      %v5205 = vpop.f32.mrb[0].mxu0
      %v5206 = vadd.f32 0.0, %v5205
      %v5207 = vpop.f32.mrb[0].mxu0
      %v5208 = vpop.f32.mrb[0].mxu0
      %v5209 = vadd.f32 0.0, %v5208
      %v5210 = vpop.f32.mrb[0].mxu0
      %5211 = vmatprep.mubr.bf16.mxu0 0
      %5212 = vmatmul.mubr.bf16.gmra.mrb[0].mxu0 %v5034
      %v5213 = vpop.f32.mrb[0].mxu0
      %v5214 = vadd.f32 0.0, %v5213
      %v5215 = vpop.f32.mrb[0].mxu0
      %v5216 = vpop.f32.mrb[0].mxu0
      %v5217 = vadd.f32 0.0, %v5216
      %v5218 = vpop.f32.mrb[0].mxu0
      %5219 = vmatprep.mubr.bf16.mxu0 0
      %5220 = vmatmul.mubr.bf16.gmra.mrb[0].mxu0 %v5035
      %v5221 = vpop.f32.mrb[0].mxu0
      %v5222 = vadd.f32 0.0, %v5221
      %v5223 = vpop.f32.mrb[0].mxu0
      %v5224 = vpop.f32.mrb[0].mxu0
      %v5225 = vadd.f32 0.0, %v5224
      %v5226 = vpop.f32.mrb[0].mxu0
      %5227 = vmatprep.mubr.bf16.mxu0 0
      %5228 = vmatmul.mubr.bf16.gmra.mrb[0].mxu0 %v5036
      %v5229 = vpop.f32.mrb[0].mxu0
      %v5230 = vadd.f32 0.0, %v5229
      %v5231 = vpop.f32.mrb[0].mxu0
      %v5232 = vpop.f32.mrb[0].mxu0
      %v5233 = vadd.f32 0.0, %v5232
      %v5234 = vpop.f32.mrb[0].mxu0
      %5235 = vmatprep.mubr.bf16.mxu0 0
      %5236 = vmatmul.mubr.bf16.gmra.mrb[0].mxu0 %v5037
      %v5237 = vpop.f32.mrb[0].mxu0
      %v5238 = vadd.f32 0.0, %v5237
      %v5239 = vpop.f32.mrb[0].mxu0
      %v5240 = vpop.f32.mrb[0].mxu0
      %v5241 = vadd.f32 0.0, %v5240
      %v5242 = vpop.f32.mrb[0].mxu0
      %5243 = vmatprep.mubr.bf16.mxu0 0
      %5244 = vmatmul.mubr.bf16.gmra.mrb[0].mxu0 %v5038
      %v5245 = vpop.f32.mrb[0].mxu0
      %v5246 = vadd.f32 0.0, %v5245
      %v5247 = vpop.f32.mrb[0].mxu0
      %v5248 = vpop.f32.mrb[0].mxu0
      %v5249 = vadd.f32 0.0, %v5248
      %v5250 = vpop.f32.mrb[0].mxu0
      %5251 = vmatprep.mubr.bf16.mxu0 0
      %5252 = vmatmul.mubr.bf16.gmra.mrb[0].mxu0 %v5039
      %v5253 = vpop.f32.mrb[0].mxu0
      %v5254 = vadd.f32 0.0, %v5253
      %v5255 = vpop.f32.mrb[0].mxu0
      %v5256 = vpop.f32.mrb[0].mxu0
      %v5257 = vadd.f32 0.0, %v5256
      %v5258 = vpop.f32.mrb[0].mxu0
      %5259 = vmatprep.mubr.bf16.mxu0 0
      %5260 = vmatmul.mubr.bf16.gmra.mrb[0].mxu0 %v5040
      %v5261 = vpop.f32.mrb[0].mxu0
      %v5262 = vadd.f32 0.0, %v5261
      %v5263 = vpop.f32.mrb[0].mxu0
      %v5264 = vpop.f32.mrb[0].mxu0
      %v5265 = vadd.f32 0.0, %v5264
      %v5266 = vpop.f32.mrb[0].mxu0
      %5267 = vmatprep.mubr.bf16.mxu0 0
      %5268 = vmatmul.mubr.bf16.gmra.mrb[0].mxu0 %v5041
      %v5269 = vpop.f32.mrb[0].mxu0
      %v5270 = vadd.f32 0.0, %v5269
      %v5271 = vpop.f32.mrb[0].mxu0
      %v5272 = vpop.f32.mrb[0].mxu0
      %v5273 = vadd.f32 0.0, %v5272
      %v5274 = vpop.f32.mrb[0].mxu0
      %5275 = vmatprep.mubr.bf16.mxu0 0
      %5276 = vmatmul.mubr.bf16.gmra.mrb[0].mxu0 %v5042
      %v5277 = vpop.f32.mrb[0].mxu0
      %v5278 = vadd.f32 0.0, %v5277
      %v5279 = vpop.f32.mrb[0].mxu0
      %v5280 = vpop.f32.mrb[0].mxu0
      %v5281 = vadd.f32 0.0, %v5280
      %v5282 = vpop.f32.mrb[0].mxu0
      %5283 = vmatprep.mubr.bf16.mxu0 0
      %5284 = vmatmul.mubr.bf16.gmra.mrb[0].mxu0 %v5043
      %v5285 = vpop.f32.mrb[0].mxu0
      %v5286 = vadd.f32 0.0, %v5285
      %v5287 = vpop.f32.mrb[0].mxu0
      %v5288 = vpop.f32.mrb[0].mxu0
      %v5289 = vadd.f32 0.0, %v5288
      %v5290 = vpop.f32.mrb[0].mxu0
      %5291 = vmatprep.mubr.bf16.mxu0 0
      %5292 = vmatmul.mubr.bf16.gmra.mrb[0].mxu0 %v5044
      %v5293 = vpop.f32.mrb[0].mxu0
      %v5294 = vadd.f32 0.0, %v5293
      %v5295 = vpop.f32.mrb[0].mxu0
      %v5296 = vpop.f32.mrb[0].mxu0
      %v5297 = vadd.f32 0.0, %v5296
      %v5298 = vpop.f32.mrb[0].mxu0
      %5299 = vmatprep.mubr.bf16.mxu0 0
      %5300 = vmatmul.mubr.bf16.gmra.mrb[0].mxu0 %v5045
      %v5301 = vpop.f32.mrb[0].mxu0
      %v5302 = vadd.f32 0.0, %v5301
      %v5303 = vpop.f32.mrb[0].mxu0
      %v5304 = vpop.f32.mrb[0].mxu0
      %v5305 = vadd.f32 0.0, %v5304
      %v5306 = vpop.f32.mrb[0].mxu0
      %5307 = vmatprep.mubr.bf16.mxu0 0
      %5308 = vmatmul.mubr.bf16.gmra.mrb[0].mxu0 %v5046
      %v5309 = vpop.f32.mrb[0].mxu0
      %v5310 = vadd.f32 0.0, %v5309
      %v5311 = vpop.f32.mrb[0].mxu0
      %v5312 = vpop.f32.mrb[0].mxu0
      %v5313 = vadd.f32 0.0, %v5312
      %v5314 = vpop.f32.mrb[0].mxu0
      %5315 = vmatprep.mubr.bf16.mxu0 0
      %5316 = vmatmul.mubr.bf16.gmra.mrb[0].mxu0 %v5047
      %v5317 = vpop.f32.mrb[0].mxu0
      %v5318 = vadd.f32 0.0, %v5317
      %v5319 = vpop.f32.mrb[0].mxu0
      %v5320 = vpop.f32.mrb[0].mxu0
      %v5321 = vadd.f32 0.0, %v5320
      %v5322 = vpop.f32.mrb[0].mxu0
      %5323 = vmatprep.mubr.bf16.mxu0 0
      %5324 = vmatmul.mubr.bf16.gmra.mrb[0].mxu0 %v5048
      %v5325 = vpop.f32.mrb[0].mxu0
      %v5326 = vadd.f32 0.0, %v5325
      %v5327 = vpop.f32.mrb[0].mxu0
      %v5328 = vpop.f32.mrb[0].mxu0
      %v5329 = vadd.f32 0.0, %v5328
      %v5330 = vpop.f32.mrb[0].mxu0
      %5331 = vmatprep.mubr.bf16.mxu0 0
      %5332 = vmatmul.mubr.bf16.gmra.mrb[0].mxu0 %v5049
      %v5333 = vpop.f32.mrb[0].mxu0
      %v5334 = vadd.f32 0.0, %v5333
      %v5335 = vpop.f32.mrb[0].mxu0
      %v5336 = vpop.f32.mrb[0].mxu0
      %v5337 = vadd.f32 0.0, %v5336
      %v5338 = vpop.f32.mrb[0].mxu0
      %5339 = vmatprep.mubr.bf16.mxu0 0
      %5340 = vmatmul.mubr.bf16.gmra.mrb[0].mxu0 %v5050
      %v5341 = vpop.f32.mrb[0].mxu0
      %v5342 = vadd.f32 0.0, %v5341
      %v5343 = vpop.f32.mrb[0].mxu0
      %v5344 = vpop.f32.mrb[0].mxu0
      %v5345 = vadd.f32 0.0, %v5344
      %v5346 = vpop.f32.mrb[0].mxu0
      %5347 = vdwg.mxu0
      %v5348 = vadd.f32 %v4962, %v5158
      %v5349 = vadd.f32 %v4963, %v5161
      %v5350 = vadd.f32 %v4964, %v5166
      %v5351 = vadd.f32 %v4965, %v5169
      %v5352 = vadd.f32 %v4966, %v5174
      %v5353 = vadd.f32 %v4967, %v5177
      %v5354 = vadd.f32 %v4968, %v5182
      %v5355 = vadd.f32 %v4969, %v5185
      %v5356 = vadd.f32 %v4970, %v5190
      %v5357 = vadd.f32 %v4971, %v5193
      %v5358 = vadd.f32 %v4972, %v5198
      %v5359 = vadd.f32 %v4973, %v5201
      %v5360 = vadd.f32 %v4974, %v5206
      %v5361 = vadd.f32 %v4975, %v5209
      %v5362 = vadd.f32 %v4976, %v5214
      %v5363 = vadd.f32 %v4977, %v5217
      %v5364 = vadd.f32 %v4978, %v5222
      %v5365 = vadd.f32 %v4979, %v5225
      %v5366 = vadd.f32 %v4980, %v5230
      %v5367 = vadd.f32 %v4981, %v5233
      %v5368 = vadd.f32 %v4982, %v5238
      %v5369 = vadd.f32 %v4983, %v5241
      %v5370 = vadd.f32 %v4984, %v5246
      %v5371 = vadd.f32 %v4985, %v5249
      %v5372 = vadd.f32 %v4986, %v5254
      %v5373 = vadd.f32 %v4987, %v5257
      %v5374 = vadd.f32 %v4988, %v5262
      %v5375 = vadd.f32 %v4989, %v5265
      %v5376 = vadd.f32 %v4990, %v5270
      %v5377 = vadd.f32 %v4991, %v5273
      %v5378 = vadd.f32 %v4992, %v5278
      %v5379 = vadd.f32 %v4993, %v5281
      %v5380 = vadd.f32 %v4994, %v5286
      %v5381 = vadd.f32 %v4995, %v5289
      %v5382 = vadd.f32 %v4996, %v5294
      %v5383 = vadd.f32 %v4997, %v5297
      %v5384 = vadd.f32 %v4998, %v5302
      %v5385 = vadd.f32 %v4999, %v5305
      %v5386 = vadd.f32 %v5000, %v5310
      %v5387 = vadd.f32 %v5001, %v5313
      %v5388 = vadd.f32 %v5002, %v5318
      %v5389 = vadd.f32 %v5003, %v5321
      %v5390 = vadd.f32 %v5004, %v5326
      %v5391 = vadd.f32 %v5005, %v5329
      %v5392 = vadd.f32 %v5006, %v5334
      %v5393 = vadd.f32 %v5007, %v5337
      %v5394 = vadd.f32 %v5008, %v5342
      %v5395 = vadd.f32 %v5009, %v5345
      %v5396 = vld [vmem:[#allocation2 + $0x24] sm:$0xf]
      %v5397 = vld [vmem:[#allocation2 + $0x28] sm:$0xf]
      %v5398 = vld [vmem:[#allocation2 + $0x2c] sm:$0xf]
      %v5399 = vld [vmem:[#allocation2 + $0x30] sm:$0xf]
      %v5400 = vld [vmem:[#allocation2 + $0x34] sm:$0xf]
      %v5401 = vld [vmem:[#allocation2 + $0x38] sm:$0xf]
      %v5402 = vld [vmem:[#allocation2 + $0x3c] sm:$0xf]
      %v5403 = vld [vmem:[#allocation2 + $0x40] sm:$0xf]
      %v5404 = vld [vmem:[#allocation2 + $0x44] sm:$0xf]
      %v5405 = vld [vmem:[#allocation2 + $0x48] sm:$0xf]
      %v5406 = vld [vmem:[#allocation2 + $0x4c] sm:$0xf]
      %v5407 = vld [vmem:[#allocation2 + $0x50] sm:$0xf]
      %v5408 = vld [vmem:[#allocation2 + $0x54] sm:$0xf]
      %v5409 = vld [vmem:[#allocation2 + $0x58] sm:$0xf]
      %v5410 = vld [vmem:[#allocation2 + $0x5c] sm:$0xf]
      %v5411 = vld [vmem:[#allocation2 + $0x60] sm:$0xf]
      %v5412 = vld [vmem:[#allocation2 + $0x64] sm:$0xf]
      %v5413 = vld [vmem:[#allocation2 + $0x68] sm:$0xf]
      %v5414 = vld [vmem:[#allocation2 + $0x6c] sm:$0xf]
      %v5415 = vld [vmem:[#allocation2 + $0x70] sm:$0xf]
      %v5416 = vld [vmem:[#allocation2 + $0x74] sm:$0xf]
      %v5417 = vld [vmem:[#allocation2 + $0x78] sm:$0xf]
      %v5418 = vld [vmem:[#allocation2 + $0x7c] sm:$0xf]
      %v5419 = vld [vmem:[#allocation2 + $0x80] sm:$0xf]
      %v5420 = vld [vmem:[#allocation2 + $0x84] sm:$0xf]
      %v5421 = vld [vmem:[#allocation2 + $0x88] sm:$0xf]
      %v5422 = vld [vmem:[#allocation2 + $0x8c] sm:$0xf]
      %v5423 = vld [vmem:[#allocation2 + $0x90] sm:$0xf]
      %v5424 = vld [vmem:[#allocation2 + $0x94] sm:$0xf]
      %v5425 = vld [vmem:[#allocation2 + $0x98] sm:$0xf]
      %v5426 = vld [vmem:[#allocation2 + $0x9c] sm:$0xf]
      %v5427 = vld [vmem:[#allocation2 + $0xa0] sm:$0xf]
      %v5428 = vld [vmem:[#allocation2 + $0xa4] sm:$0xf]
      %v5429 = vld [vmem:[#allocation2 + $0xa8] sm:$0xf]
      %v5430 = vld [vmem:[#allocation2 + $0xac] sm:$0xf]
      %v5431 = vld [vmem:[#allocation2 + $0xb0] sm:$0xf]
      %v5432 = vld [vmem:[#allocation2 + $0xb4] sm:$0xf]
      %v5433 = vld [vmem:[#allocation2 + $0xb8] sm:$0xf]
      %v5434 = vld [vmem:[#allocation2 + $0xbc] sm:$0xf]
      %v5435 = vld [vmem:[#allocation2 + $0xc0] sm:$0xf]
      %v5436 = vld [vmem:[#allocation2 + $0xc4] sm:$0xf]
      %v5437 = vld [vmem:[#allocation2 + $0xc8] sm:$0xf]
      %v5438 = vld [vmem:[#allocation2 + $0xcc] sm:$0xf]
      %v5439 = vld [vmem:[#allocation2 + $0xd0] sm:$0xf]
      %v5440 = vld [vmem:[#allocation2 + $0xd4] sm:$0xf]
      %v5441 = vld [vmem:[#allocation2 + $0xd8] sm:$0xf]
      %v5442 = vld [vmem:[#allocation2 + $0xdc] sm:$0xf]
      %v5443 = vld [vmem:[#allocation2 + $0xe0] sm:$0xf]
      %v5444 = vld [vmem:[#allocation2 + $0xe4] sm:$0x1]
      %s5445 = scalar_lea.vmem %s4, 512
      %v5446 = vld [vmem:[%s5445] sm:$0xf]
      %v5447 = vld [vmem:[%s5445 + $0x4] sm:$0xf]
      %v5448 = vld [vmem:[%s5445 + $0x8] sm:$0xf]
      %v5449 = vld [vmem:[%s5445 + $0xc] sm:$0xf]
      %v5450 = vld [vmem:[%s5445 + $0x10] sm:$0xf]
      %v5451 = vld [vmem:[%s5445 + $0x14] sm:$0xf]
      %v5452 = vld [vmem:[%s5445 + $0x18] sm:$0xf]
      %v5453 = vld [vmem:[%s5445 + $0x1c] sm:$0xf]
      %v5454 = vld [vmem:[%s5445 + $0x20] sm:$0xf]
      %v5455 = vld [vmem:[%s5445 + $0x24] sm:$0xf]
      %v5456 = vld [vmem:[%s5445 + $0x28] sm:$0xf]
      %v5457 = vld [vmem:[%s5445 + $0x2c] sm:$0xf]
      %v5458 = vld [vmem:[%s5445 + $0x30] sm:$0xf]
      %v5459 = vld [vmem:[%s5445 + $0x34] sm:$0xf]
      %v5460 = vld [vmem:[%s5445 + $0x38] sm:$0xf]
      %v5461 = vld [vmem:[%s5445 + $0x3c] sm:$0xf]
      %v5511 = vunpack.c.l.b16 %v5396
      %v5512 = vunpack.c.l.b16 %v5397
      %v5513 = vunpack.c.l.b16 %v5398
      %v5514 = vunpack.c.l.b16 %v5399
      %v5515 = vunpack.c.l.b16 %v5400
      %v5516 = vunpack.c.l.b16 %v5401
      %v5517 = vunpack.c.l.b16 %v5402
      %v5518 = vunpack.c.l.b16 %v5403
      %v5519 = vunpack.c.l.b16 %v5404
      %v5520 = vunpack.c.l.b16 %v5405
      %v5521 = vunpack.c.l.b16 %v5406
      %v5522 = vunpack.c.l.b16 %v5407
      %v5523 = vunpack.c.l.b16 %v5408
      %v5524 = vunpack.c.l.b16 %v5409
      %v5525 = vunpack.c.l.b16 %v5410
      %v5526 = vunpack.c.l.b16 %v5411
      %v5527 = vunpack.c.l.b16 %v5412
      %v5528 = vunpack.c.l.b16 %v5413
      %v5529 = vunpack.c.l.b16 %v5414
      %v5530 = vunpack.c.l.b16 %v5415
      %v5531 = vunpack.c.l.b16 %v5416
      %v5532 = vunpack.c.l.b16 %v5417
      %v5533 = vunpack.c.l.b16 %v5418
      %v5534 = vunpack.c.l.b16 %v5419
      %v5535 = vunpack.c.l.b16 %v5420
      %v5536 = vunpack.c.l.b16 %v5421
      %v5537 = vunpack.c.l.b16 %v5422
      %v5538 = vunpack.c.l.b16 %v5423
      %v5539 = vunpack.c.l.b16 %v5424
      %v5540 = vunpack.c.l.b16 %v5425
      %v5541 = vunpack.c.l.b16 %v5426
      %v5542 = vunpack.c.l.b16 %v5427
      %v5543 = vunpack.c.l.b16 %v5428
      %v5544 = vunpack.c.l.b16 %v5429
      %v5545 = vunpack.c.l.b16 %v5430
      %v5546 = vunpack.c.l.b16 %v5431
      %v5547 = vunpack.c.l.b16 %v5432
      %v5548 = vunpack.c.l.b16 %v5433
      %v5549 = vunpack.c.l.b16 %v5434
      %v5550 = vunpack.c.l.b16 %v5435
      %v5551 = vunpack.c.l.b16 %v5436
      %v5552 = vunpack.c.l.b16 %v5437
      %v5553 = vunpack.c.l.b16 %v5438
      %v5554 = vunpack.c.l.b16 %v5439
      %v5555 = vunpack.c.l.b16 %v5440
      %v5556 = vunpack.c.l.b16 %v5441
      %v5557 = vunpack.c.l.b16 %v5442
      %v5558 = vunpack.c.l.b16 %v5443
      %v5559 = vunpack.c.l.b16 %v5444
      %v5560 = vpack.c.b16 %v5512, %v5511
      %v5561 = vpack.c.b16 %v5514, %v5513
      %v5562 = vpack.c.b16 %v5516, %v5515
      %v5563 = vpack.c.b16 %v5518, %v5517
      %v5564 = vpack.c.b16 %v5520, %v5519
      %v5565 = vpack.c.b16 %v5522, %v5521
      %v5566 = vpack.c.b16 %v5524, %v5523
      %v5567 = vpack.c.b16 %v5526, %v5525
      %v5568 = vpack.c.b16 %v5528, %v5527
      %v5569 = vpack.c.b16 %v5530, %v5529
      %v5570 = vpack.c.b16 %v5532, %v5531
      %v5571 = vpack.c.b16 %v5534, %v5533
      %v5572 = vpack.c.b16 %v5536, %v5535
      %v5573 = vpack.c.b16 %v5538, %v5537
      %v5574 = vpack.c.b16 %v5540, %v5539
      %v5575 = vpack.c.b16 %v5542, %v5541
      %v5576 = vpack.c.b16 %v5544, %v5543
      %v5577 = vpack.c.b16 %v5546, %v5545
      %v5578 = vpack.c.b16 %v5548, %v5547
      %v5579 = vpack.c.b16 %v5550, %v5549
      %v5580 = vpack.c.b16 %v5552, %v5551
      %v5581 = vpack.c.b16 %v5554, %v5553
      %v5582 = vpack.c.b16 %v5556, %v5555
      %v5583 = vpack.c.b16 %v5558, %v5557
      %v5584 = vpack.c.b16 %v5559, %v5559
      %v5586 = vshrl.u32 %v5560, 16
      %v5588 = vshll.u32 %v5560, 16
      %v5590 = vrot.slane %v5588, 1
      %v5591 = vor.u32 %v5586, %v5590
      %v5593 = vshll.u32 %v5561, 16
      %v5595 = vrot.slane %v5593, 1
      %v5596 = vsel %vm1836, %v5591, %v5595
      %v5597 = vshrl.u32 %v5561, 16
      %v5599 = vor.u32 %v5597, %v5595
      %v5601 = vshll.u32 %v5562, 16
      %v5603 = vrot.slane %v5601, 1
      %v5604 = vsel %vm1836, %v5599, %v5603
      %v5605 = vshrl.u32 %v5562, 16
      %v5607 = vor.u32 %v5605, %v5603
      %v5609 = vshll.u32 %v5563, 16
      %v5611 = vrot.slane %v5609, 1
      %v5612 = vsel %vm1836, %v5607, %v5611
      %v5613 = vshrl.u32 %v5563, 16
      %v5615 = vor.u32 %v5613, %v5611
      %v5617 = vshll.u32 %v5564, 16
      %v5619 = vrot.slane %v5617, 1
      %v5620 = vsel %vm1836, %v5615, %v5619
      %v5621 = vshrl.u32 %v5564, 16
      %v5623 = vor.u32 %v5621, %v5619
      %v5625 = vshll.u32 %v5565, 16
      %v5627 = vrot.slane %v5625, 1
      %v5628 = vsel %vm1836, %v5623, %v5627
      %v5629 = vshrl.u32 %v5565, 16
      %v5631 = vor.u32 %v5629, %v5627
      %v5633 = vshll.u32 %v5566, 16
      %v5635 = vrot.slane %v5633, 1
      %v5636 = vsel %vm1836, %v5631, %v5635
      %v5637 = vshrl.u32 %v5566, 16
      %v5639 = vor.u32 %v5637, %v5635
      %v5641 = vshll.u32 %v5567, 16
      %v5643 = vrot.slane %v5641, 1
      %v5644 = vsel %vm1836, %v5639, %v5643
      %v5645 = vshrl.u32 %v5567, 16
      %v5647 = vor.u32 %v5645, %v5643
      %v5649 = vshll.u32 %v5568, 16
      %v5651 = vrot.slane %v5649, 1
      %v5652 = vsel %vm1836, %v5647, %v5651
      %v5653 = vshrl.u32 %v5568, 16
      %v5655 = vor.u32 %v5653, %v5651
      %v5657 = vshll.u32 %v5569, 16
      %v5659 = vrot.slane %v5657, 1
      %v5660 = vsel %vm1836, %v5655, %v5659
      %v5661 = vshrl.u32 %v5569, 16
      %v5663 = vor.u32 %v5661, %v5659
      %v5665 = vshll.u32 %v5570, 16
      %v5667 = vrot.slane %v5665, 1
      %v5668 = vsel %vm1836, %v5663, %v5667
      %v5669 = vshrl.u32 %v5570, 16
      %v5671 = vor.u32 %v5669, %v5667
      %v5673 = vshll.u32 %v5571, 16
      %v5675 = vrot.slane %v5673, 1
      %v5676 = vsel %vm1836, %v5671, %v5675
      %v5677 = vshrl.u32 %v5571, 16
      %v5679 = vor.u32 %v5677, %v5675
      %v5681 = vshll.u32 %v5572, 16
      %v5683 = vrot.slane %v5681, 1
      %v5684 = vsel %vm1836, %v5679, %v5683
      %v5685 = vshrl.u32 %v5572, 16
      %v5687 = vor.u32 %v5685, %v5683
      %v5689 = vshll.u32 %v5573, 16
      %v5691 = vrot.slane %v5689, 1
      %v5692 = vsel %vm1836, %v5687, %v5691
      %v5693 = vshrl.u32 %v5573, 16
      %v5695 = vor.u32 %v5693, %v5691
      %v5697 = vshll.u32 %v5574, 16
      %v5699 = vrot.slane %v5697, 1
      %v5700 = vsel %vm1836, %v5695, %v5699
      %v5701 = vshrl.u32 %v5574, 16
      %v5703 = vor.u32 %v5701, %v5699
      %v5705 = vshll.u32 %v5575, 16
      %v5707 = vrot.slane %v5705, 1
      %v5708 = vsel %vm1836, %v5703, %v5707
      %v5709 = vshrl.u32 %v5575, 16
      %v5711 = vor.u32 %v5709, %v5707
      %v5713 = vshll.u32 %v5576, 16
      %v5715 = vrot.slane %v5713, 1
      %v5716 = vsel %vm1836, %v5711, %v5715
      %v5717 = vshrl.u32 %v5576, 16
      %v5719 = vor.u32 %v5717, %v5715
      %v5721 = vshll.u32 %v5577, 16
      %v5723 = vrot.slane %v5721, 1
      %v5724 = vsel %vm1836, %v5719, %v5723
      %v5725 = vshrl.u32 %v5577, 16
      %v5727 = vor.u32 %v5725, %v5723
      %v5729 = vshll.u32 %v5578, 16
      %v5731 = vrot.slane %v5729, 1
      %v5732 = vsel %vm1836, %v5727, %v5731
      %v5733 = vshrl.u32 %v5578, 16
      %v5735 = vor.u32 %v5733, %v5731
      %v5737 = vshll.u32 %v5579, 16
      %v5739 = vrot.slane %v5737, 1
      %v5740 = vsel %vm1836, %v5735, %v5739
      %v5741 = vshrl.u32 %v5579, 16
      %v5743 = vor.u32 %v5741, %v5739
      %v5745 = vshll.u32 %v5580, 16
      %v5747 = vrot.slane %v5745, 1
      %v5748 = vsel %vm1836, %v5743, %v5747
      %v5749 = vshrl.u32 %v5580, 16
      %v5751 = vor.u32 %v5749, %v5747
      %v5753 = vshll.u32 %v5581, 16
      %v5755 = vrot.slane %v5753, 1
      %v5756 = vsel %vm1836, %v5751, %v5755
      %v5757 = vshrl.u32 %v5581, 16
      %v5759 = vor.u32 %v5757, %v5755
      %v5761 = vshll.u32 %v5582, 16
      %v5763 = vrot.slane %v5761, 1
      %v5764 = vsel %vm1836, %v5759, %v5763
      %v5765 = vshrl.u32 %v5582, 16
      %v5767 = vor.u32 %v5765, %v5763
      %v5769 = vshll.u32 %v5583, 16
      %v5771 = vrot.slane %v5769, 1
      %v5772 = vsel %vm1836, %v5767, %v5771
      %v5773 = vshrl.u32 %v5583, 16
      %v5775 = vor.u32 %v5773, %v5771
      %v5777 = vshll.u32 %v5584, 16
      %v5779 = vrot.slane %v5777, 1
      %v5780 = vsel %vm1836, %v5775, %v5779
      %v5821 = vunpack.c.l.b16 %v5446
      %v5822 = vunpack.c.l.b16 %v5447
      %v5823 = vunpack.c.l.b16 %v5448
      %v5824 = vunpack.c.l.b16 %v5449
      %v5825 = vunpack.c.l.b16 %v5450
      %v5826 = vunpack.c.l.b16 %v5451
      %v5827 = vunpack.c.l.b16 %v5452
      %v5828 = vunpack.c.l.b16 %v5453
      %v5829 = vunpack.c.l.b16 %v5454
      %v5830 = vunpack.c.l.b16 %v5455
      %v5831 = vunpack.c.l.b16 %v5456
      %v5832 = vunpack.c.l.b16 %v5457
      %v5833 = vunpack.c.l.b16 %v5458
      %v5834 = vunpack.c.l.b16 %v5459
      %v5835 = vunpack.c.l.b16 %v5460
      %v5836 = vunpack.c.l.b16 %v5461
      %v5837 = vpack.c.b16 %v5822, %v5821
      %v5838 = vpack.c.b16 %v5824, %v5823
      %v5839 = vpack.c.b16 %v5826, %v5825
      %v5840 = vpack.c.b16 %v5828, %v5827
      %v5841 = vpack.c.b16 %v5830, %v5829
      %v5842 = vpack.c.b16 %v5832, %v5831
      %v5843 = vpack.c.b16 %v5834, %v5833
      %v5844 = vpack.c.b16 %v5836, %v5835
      %5853 = vmatprep.subr.bf16.mxu0 0
      %5854 = vmatpush1.bf16.msra.mxu0 %v5837
      %5855 = vmatprep.subr.bf16.mxu0 0
      %5856 = vmatpush1.bf16.msra.mxu0 %v5838
      %5857 = vmatprep.subr.bf16.mxu0 0
      %5858 = vmatpush1.bf16.msra.mxu0 %v5839
      %5859 = vmatprep.subr.bf16.mxu0 0
      %5860 = vmatpush1.bf16.msra.mxu0 %v5840
      %5861 = vmatprep.subr.bf16.mxu0 0
      %5862 = vmatpush1.bf16.msra.mxu0 %v5841
      %5863 = vmatprep.subr.bf16.mxu0 0
      %5864 = vmatpush1.bf16.msra.mxu0 %v5842
      %5865 = vmatprep.subr.bf16.mxu0 0
      %5866 = vmatpush1.bf16.msra.mxu0 %v5843
      %5867 = vmatprep.subr.bf16.mxu0 0
      %5868 = vmatpush1.bf16.msra.mxu0 %v5844
      %5869 = vmatprep.subr.bf16.mxu0 0
      %5870 = vmatpush1.bf16.msra.mxu0 0
      %5871 = vmatprep.subr.bf16.mxu0 0
      %5872 = vmatpush1.bf16.msra.mxu0 0
      %5873 = vmatprep.subr.bf16.mxu0 0
      %5874 = vmatpush1.bf16.msra.mxu0 0
      %5875 = vmatprep.subr.bf16.mxu0 0
      %5876 = vmatpush1.bf16.msra.mxu0 0
      %5877 = vmatprep.subr.bf16.mxu0 0
      %5878 = vmatpush1.bf16.msra.mxu0 0
      %5879 = vmatprep.subr.bf16.mxu0 0
      %5880 = vmatpush1.bf16.msra.mxu0 0
      %5881 = vmatprep.subr.bf16.mxu0 0
      %5882 = vmatpush1.bf16.msra.mxu0 0
      %5883 = vmatprep.subr.bf16.mxu0 0
      %5884 = vmatpush1.bf16.msra.mxu0 0
      %5885 = vmatprep.mubr.bf16.mxu0 0
      %5886 = vmatmul.mubr.bf16.gmra.mrb[0].mxu0 %v5596
      %v5887 = vpop.f32.mrb[0].mxu0
      %v5888 = vadd.f32 0.0, %v5887
      %v5889 = vpop.f32.mrb[0].mxu0
      %v5890 = vpop.f32.mrb[0].mxu0
      %v5891 = vadd.f32 0.0, %v5890
      %v5892 = vpop.f32.mrb[0].mxu0
      %5893 = vmatprep.mubr.bf16.mxu0 0
      %5894 = vmatmul.mubr.bf16.gmra.mrb[0].mxu0 %v5604
      %v5895 = vpop.f32.mrb[0].mxu0
      %v5896 = vadd.f32 0.0, %v5895
      %v5897 = vpop.f32.mrb[0].mxu0
      %v5898 = vpop.f32.mrb[0].mxu0
      %v5899 = vadd.f32 0.0, %v5898
      %v5900 = vpop.f32.mrb[0].mxu0
      %5901 = vmatprep.mubr.bf16.mxu0 0
      %5902 = vmatmul.mubr.bf16.gmra.mrb[0].mxu0 %v5612
      %v5903 = vpop.f32.mrb[0].mxu0
      %v5904 = vadd.f32 0.0, %v5903
      %v5905 = vpop.f32.mrb[0].mxu0
      %v5906 = vpop.f32.mrb[0].mxu0
      %v5907 = vadd.f32 0.0, %v5906
      %v5908 = vpop.f32.mrb[0].mxu0
      %5909 = vmatprep.mubr.bf16.mxu0 0
      %5910 = vmatmul.mubr.bf16.gmra.mrb[0].mxu0 %v5620
      %v5911 = vpop.f32.mrb[0].mxu0
      %v5912 = vadd.f32 0.0, %v5911
      %v5913 = vpop.f32.mrb[0].mxu0
      %v5914 = vpop.f32.mrb[0].mxu0
      %v5915 = vadd.f32 0.0, %v5914
      %v5916 = vpop.f32.mrb[0].mxu0
      %5917 = vmatprep.mubr.bf16.mxu0 0
      %5918 = vmatmul.mubr.bf16.gmra.mrb[0].mxu0 %v5628
      %v5919 = vpop.f32.mrb[0].mxu0
      %v5920 = vadd.f32 0.0, %v5919
      %v5921 = vpop.f32.mrb[0].mxu0
      %v5922 = vpop.f32.mrb[0].mxu0
      %v5923 = vadd.f32 0.0, %v5922
      %v5924 = vpop.f32.mrb[0].mxu0
      %5925 = vmatprep.mubr.bf16.mxu0 0
      %5926 = vmatmul.mubr.bf16.gmra.mrb[0].mxu0 %v5636
      %v5927 = vpop.f32.mrb[0].mxu0
      %v5928 = vadd.f32 0.0, %v5927
      %v5929 = vpop.f32.mrb[0].mxu0
      %v5930 = vpop.f32.mrb[0].mxu0
      %v5931 = vadd.f32 0.0, %v5930
      %v5932 = vpop.f32.mrb[0].mxu0
      %5933 = vmatprep.mubr.bf16.mxu0 0
      %5934 = vmatmul.mubr.bf16.gmra.mrb[0].mxu0 %v5644
      %v5935 = vpop.f32.mrb[0].mxu0
      %v5936 = vadd.f32 0.0, %v5935
      %v5937 = vpop.f32.mrb[0].mxu0
      %v5938 = vpop.f32.mrb[0].mxu0
      %v5939 = vadd.f32 0.0, %v5938
      %v5940 = vpop.f32.mrb[0].mxu0
      %5941 = vmatprep.mubr.bf16.mxu0 0
      %5942 = vmatmul.mubr.bf16.gmra.mrb[0].mxu0 %v5652
      %v5943 = vpop.f32.mrb[0].mxu0
      %v5944 = vadd.f32 0.0, %v5943
      %v5945 = vpop.f32.mrb[0].mxu0
      %v5946 = vpop.f32.mrb[0].mxu0
      %v5947 = vadd.f32 0.0, %v5946
      %v5948 = vpop.f32.mrb[0].mxu0
      %5949 = vmatprep.mubr.bf16.mxu0 0
      %5950 = vmatmul.mubr.bf16.gmra.mrb[0].mxu0 %v5660
      %v5951 = vpop.f32.mrb[0].mxu0
      %v5952 = vadd.f32 0.0, %v5951
      %v5953 = vpop.f32.mrb[0].mxu0
      %v5954 = vpop.f32.mrb[0].mxu0
      %v5955 = vadd.f32 0.0, %v5954
      %v5956 = vpop.f32.mrb[0].mxu0
      %5957 = vmatprep.mubr.bf16.mxu0 0
      %5958 = vmatmul.mubr.bf16.gmra.mrb[0].mxu0 %v5668
      %v5959 = vpop.f32.mrb[0].mxu0
      %v5960 = vadd.f32 0.0, %v5959
      %v5961 = vpop.f32.mrb[0].mxu0
      %v5962 = vpop.f32.mrb[0].mxu0
      %v5963 = vadd.f32 0.0, %v5962
      %v5964 = vpop.f32.mrb[0].mxu0
      %5965 = vmatprep.mubr.bf16.mxu0 0
      %5966 = vmatmul.mubr.bf16.gmra.mrb[0].mxu0 %v5676
      %v5967 = vpop.f32.mrb[0].mxu0
      %v5968 = vadd.f32 0.0, %v5967
      %v5969 = vpop.f32.mrb[0].mxu0
      %v5970 = vpop.f32.mrb[0].mxu0
      %v5971 = vadd.f32 0.0, %v5970
      %v5972 = vpop.f32.mrb[0].mxu0
      %5973 = vmatprep.mubr.bf16.mxu0 0
      %5974 = vmatmul.mubr.bf16.gmra.mrb[0].mxu0 %v5684
      %v5975 = vpop.f32.mrb[0].mxu0
      %v5976 = vadd.f32 0.0, %v5975
      %v5977 = vpop.f32.mrb[0].mxu0
      %v5978 = vpop.f32.mrb[0].mxu0
      %v5979 = vadd.f32 0.0, %v5978
      %v5980 = vpop.f32.mrb[0].mxu0
      %5981 = vmatprep.mubr.bf16.mxu0 0
      %5982 = vmatmul.mubr.bf16.gmra.mrb[0].mxu0 %v5692
      %v5983 = vpop.f32.mrb[0].mxu0
      %v5984 = vadd.f32 0.0, %v5983
      %v5985 = vpop.f32.mrb[0].mxu0
      %v5986 = vpop.f32.mrb[0].mxu0
      %v5987 = vadd.f32 0.0, %v5986
      %v5988 = vpop.f32.mrb[0].mxu0
      %5989 = vmatprep.mubr.bf16.mxu0 0
      %5990 = vmatmul.mubr.bf16.gmra.mrb[0].mxu0 %v5700
      %v5991 = vpop.f32.mrb[0].mxu0
      %v5992 = vadd.f32 0.0, %v5991
      %v5993 = vpop.f32.mrb[0].mxu0
      %v5994 = vpop.f32.mrb[0].mxu0
      %v5995 = vadd.f32 0.0, %v5994
      %v5996 = vpop.f32.mrb[0].mxu0
      %5997 = vmatprep.mubr.bf16.mxu0 0
      %5998 = vmatmul.mubr.bf16.gmra.mrb[0].mxu0 %v5708
      %v5999 = vpop.f32.mrb[0].mxu0
      %v6000 = vadd.f32 0.0, %v5999
      %v6001 = vpop.f32.mrb[0].mxu0
      %v6002 = vpop.f32.mrb[0].mxu0
      %v6003 = vadd.f32 0.0, %v6002
      %v6004 = vpop.f32.mrb[0].mxu0
      %6005 = vmatprep.mubr.bf16.mxu0 0
      %6006 = vmatmul.mubr.bf16.gmra.mrb[0].mxu0 %v5716
      %v6007 = vpop.f32.mrb[0].mxu0
      %v6008 = vadd.f32 0.0, %v6007
      %v6009 = vpop.f32.mrb[0].mxu0
      %v6010 = vpop.f32.mrb[0].mxu0
      %v6011 = vadd.f32 0.0, %v6010
      %v6012 = vpop.f32.mrb[0].mxu0
      %6013 = vmatprep.mubr.bf16.mxu0 0
      %6014 = vmatmul.mubr.bf16.gmra.mrb[0].mxu0 %v5724
      %v6015 = vpop.f32.mrb[0].mxu0
      %v6016 = vadd.f32 0.0, %v6015
      %v6017 = vpop.f32.mrb[0].mxu0
      %v6018 = vpop.f32.mrb[0].mxu0
      %v6019 = vadd.f32 0.0, %v6018
      %v6020 = vpop.f32.mrb[0].mxu0
      %6021 = vmatprep.mubr.bf16.mxu0 0
      %6022 = vmatmul.mubr.bf16.gmra.mrb[0].mxu0 %v5732
      %v6023 = vpop.f32.mrb[0].mxu0
      %v6024 = vadd.f32 0.0, %v6023
      %v6025 = vpop.f32.mrb[0].mxu0
      %v6026 = vpop.f32.mrb[0].mxu0
      %v6027 = vadd.f32 0.0, %v6026
      %v6028 = vpop.f32.mrb[0].mxu0
      %6029 = vmatprep.mubr.bf16.mxu0 0
      %6030 = vmatmul.mubr.bf16.gmra.mrb[0].mxu0 %v5740
      %v6031 = vpop.f32.mrb[0].mxu0
      %v6032 = vadd.f32 0.0, %v6031
      %v6033 = vpop.f32.mrb[0].mxu0
      %v6034 = vpop.f32.mrb[0].mxu0
      %v6035 = vadd.f32 0.0, %v6034
      %v6036 = vpop.f32.mrb[0].mxu0
      %6037 = vmatprep.mubr.bf16.mxu0 0
      %6038 = vmatmul.mubr.bf16.gmra.mrb[0].mxu0 %v5748
      %v6039 = vpop.f32.mrb[0].mxu0
      %v6040 = vadd.f32 0.0, %v6039
      %v6041 = vpop.f32.mrb[0].mxu0
      %v6042 = vpop.f32.mrb[0].mxu0
      %v6043 = vadd.f32 0.0, %v6042
      %v6044 = vpop.f32.mrb[0].mxu0
      %6045 = vmatprep.mubr.bf16.mxu0 0
      %6046 = vmatmul.mubr.bf16.gmra.mrb[0].mxu0 %v5756
      %v6047 = vpop.f32.mrb[0].mxu0
      %v6048 = vadd.f32 0.0, %v6047
      %v6049 = vpop.f32.mrb[0].mxu0
      %v6050 = vpop.f32.mrb[0].mxu0
      %v6051 = vadd.f32 0.0, %v6050
      %v6052 = vpop.f32.mrb[0].mxu0
      %6053 = vmatprep.mubr.bf16.mxu0 0
      %6054 = vmatmul.mubr.bf16.gmra.mrb[0].mxu0 %v5764
      %v6055 = vpop.f32.mrb[0].mxu0
      %v6056 = vadd.f32 0.0, %v6055
      %v6057 = vpop.f32.mrb[0].mxu0
      %v6058 = vpop.f32.mrb[0].mxu0
      %v6059 = vadd.f32 0.0, %v6058
      %v6060 = vpop.f32.mrb[0].mxu0
      %6061 = vmatprep.mubr.bf16.mxu0 0
      %6062 = vmatmul.mubr.bf16.gmra.mrb[0].mxu0 %v5772
      %v6063 = vpop.f32.mrb[0].mxu0
      %v6064 = vadd.f32 0.0, %v6063
      %v6065 = vpop.f32.mrb[0].mxu0
      %v6066 = vpop.f32.mrb[0].mxu0
      %v6067 = vadd.f32 0.0, %v6066
      %v6068 = vpop.f32.mrb[0].mxu0
      %6069 = vmatprep.mubr.bf16.mxu0 0
      %6070 = vmatmul.mubr.bf16.gmra.mrb[0].mxu0 %v5780
      %v6071 = vpop.f32.mrb[0].mxu0
      %v6072 = vadd.f32 0.0, %v6071
      %v6073 = vpop.f32.mrb[0].mxu0
      %v6074 = vpop.f32.mrb[0].mxu0
      %v6075 = vadd.f32 0.0, %v6074
      %v6076 = vpop.f32.mrb[0].mxu0
      %6077 = vdwg.mxu0
      %v6078 = vadd.f32 %v5348, %v5888
      %v6079 = vadd.f32 %v5349, %v5891
      %v6080 = vadd.f32 %v5350, %v5896
      %v6081 = vadd.f32 %v5351, %v5899
      %v6082 = vadd.f32 %v5352, %v5904
      %v6083 = vadd.f32 %v5353, %v5907
      %v6084 = vadd.f32 %v5354, %v5912
      %v6085 = vadd.f32 %v5355, %v5915
      %v6086 = vadd.f32 %v5356, %v5920
      %v6087 = vadd.f32 %v5357, %v5923
      %v6088 = vadd.f32 %v5358, %v5928
      %v6089 = vadd.f32 %v5359, %v5931
      %v6090 = vadd.f32 %v5360, %v5936
      %v6091 = vadd.f32 %v5361, %v5939
      %v6092 = vadd.f32 %v5362, %v5944
      %v6093 = vadd.f32 %v5363, %v5947
      %v6094 = vadd.f32 %v5364, %v5952
      %v6095 = vadd.f32 %v5365, %v5955
      %v6096 = vadd.f32 %v5366, %v5960
      %v6097 = vadd.f32 %v5367, %v5963
      %v6098 = vadd.f32 %v5368, %v5968
      %v6099 = vadd.f32 %v5369, %v5971
      %v6100 = vadd.f32 %v5370, %v5976
      %v6101 = vadd.f32 %v5371, %v5979
      %v6102 = vadd.f32 %v5372, %v5984
      %v6103 = vadd.f32 %v5373, %v5987
      %v6104 = vadd.f32 %v5374, %v5992
      %v6105 = vadd.f32 %v5375, %v5995
      %v6106 = vadd.f32 %v5376, %v6000
      %v6107 = vadd.f32 %v5377, %v6003
      %v6108 = vadd.f32 %v5378, %v6008
      %v6109 = vadd.f32 %v5379, %v6011
      %v6110 = vadd.f32 %v5380, %v6016
      %v6111 = vadd.f32 %v5381, %v6019
      %v6112 = vadd.f32 %v5382, %v6024
      %v6113 = vadd.f32 %v5383, %v6027
      %v6114 = vadd.f32 %v5384, %v6032
      %v6115 = vadd.f32 %v5385, %v6035
      %v6116 = vadd.f32 %v5386, %v6040
      %v6117 = vadd.f32 %v5387, %v6043
      %v6118 = vadd.f32 %v5388, %v6048
      %v6119 = vadd.f32 %v5389, %v6051
      %v6120 = vadd.f32 %v5390, %v6056
      %v6121 = vadd.f32 %v5391, %v6059
      %v6122 = vadd.f32 %v5392, %v6064
      %v6123 = vadd.f32 %v5393, %v6067
      %v6124 = vadd.f32 %v5394, %v6072
      %v6125 = vadd.f32 %v5395, %v6075
      %v6126 = vld [vmem:[%s5] sm:$0x1]
      %v6127 = vld [vmem:[%s459] sm:$0xff]
      %v6128 = vld [vmem:[%s459 + $0x8] sm:$0xff]
      %v6129 = vld [vmem:[%s459 + $0x10] sm:$0xff]
      %v6130 = vld [vmem:[%s459 + $0x18] sm:$0xff]
      %v6131 = vld [vmem:[%s459 + $0x20] sm:$0xff]
      %v6132 = vld [vmem:[%s459 + $0x28] sm:$0xff]
      %v6133 = vld [vmem:[%s459 + $0x30] sm:$0xff]
      %v6134 = vld [vmem:[%s459 + $0x38] sm:$0xff]
      %v6135 = vld [vmem:[%s459 + $0x40] sm:$0xff]
      %v6136 = vld [vmem:[%s459 + $0x48] sm:$0xff]
      %v6137 = vld [vmem:[%s459 + $0x50] sm:$0xff]
      %v6138 = vld [vmem:[%s459 + $0x58] sm:$0xff]
      %v6139 = vld [vmem:[%s459 + $0x60] sm:$0xff]
      %v6140 = vld [vmem:[%s459 + $0x68] sm:$0xff]
      %v6141 = vld [vmem:[%s459 + $0x70] sm:$0xff]
      %v6142 = vld [vmem:[%s459 + $0x78] sm:$0xff]
      %v6143 = vld [vmem:[%s459 + $0x80] sm:$0xff]
      %v6144 = vld [vmem:[%s459 + $0x88] sm:$0xff]
      %v6145 = vld [vmem:[%s459 + $0x90] sm:$0xff]
      %v6146 = vld [vmem:[%s459 + $0x98] sm:$0xff]
      %v6147 = vld [vmem:[%s459 + $0xa0] sm:$0xff]
      %v6148 = vld [vmem:[%s459 + $0xa8] sm:$0xff]
      %v6149 = vld [vmem:[%s459 + $0xb0] sm:$0xff]
      %v6150 = vld [vmem:[%s459 + $0xb8] sm:$0xff]
      %v6151 = vld [vmem:[%s459 + $0xc0] sm:$0xff]
      %v6152 = vld [vmem:[%s459 + $0xc8] sm:$0xff]
      %v6153 = vld [vmem:[%s459 + $0xd0] sm:$0xff]
      %v6154 = vld [vmem:[%s459 + $0xd8] sm:$0xff]
      %v6155 = vld [vmem:[%s459 + $0xe0] sm:$0xff]
      %v6156 = vld [vmem:[%s459 + $0xe8] sm:$0xff]
      %v6157 = vld [vmem:[%s459 + $0xf0] sm:$0xff]
      %v6158 = vld [vmem:[%s459 + $0xf8] sm:$0xff]
      %v6159 = vld [vmem:[%s459 + $0x100] sm:$0xff]
      %v6160 = vld [vmem:[%s459 + $0x108] sm:$0xff]
      %v6161 = vld [vmem:[%s459 + $0x110] sm:$0xff]
      %v6162 = vld [vmem:[%s459 + $0x118] sm:$0xff]
      %v6163 = vld [vmem:[%s459 + $0x120] sm:$0xff]
      %v6164 = vld [vmem:[%s459 + $0x128] sm:$0xff]
      %v6165 = vld [vmem:[%s459 + $0x130] sm:$0xff]
      %v6166 = vld [vmem:[%s459 + $0x138] sm:$0xff]
      %v6167 = vld [vmem:[%s459 + $0x140] sm:$0xff]
      %v6168 = vld [vmem:[%s459 + $0x148] sm:$0xff]
      %v6169 = vld [vmem:[%s459 + $0x150] sm:$0xff]
      %v6170 = vld [vmem:[%s459 + $0x158] sm:$0xff]
      %v6171 = vld [vmem:[%s459 + $0x160] sm:$0xff]
      %v6172 = vld [vmem:[%s459 + $0x168] sm:$0xff]
      %v6173 = vld [vmem:[%s459 + $0x170] sm:$0xff]
      %v6174 = vld [vmem:[%s459 + $0x178] sm:$0xff]
      %v6176 = vlaneseq
      %v6177 = vshrl.u32 %v6176, 7
      %v6178 = vsub.s32 0, %v6177
      %v6179 = vrot.slane %v6126, %v6178
      %v6181 = vadd.f32 %v6078, %v6179
      %v6182 = vadd.f32 %v6079, %v6179
      %v6183 = vadd.f32 %v6080, %v6179
      %v6184 = vadd.f32 %v6081, %v6179
      %v6185 = vadd.f32 %v6082, %v6179
      %v6186 = vadd.f32 %v6083, %v6179
      %v6187 = vadd.f32 %v6084, %v6179
      %v6188 = vadd.f32 %v6085, %v6179
      %v6189 = vadd.f32 %v6086, %v6179
      %v6190 = vadd.f32 %v6087, %v6179
      %v6191 = vadd.f32 %v6088, %v6179
      %v6192 = vadd.f32 %v6089, %v6179
      %v6193 = vadd.f32 %v6090, %v6179
      %v6194 = vadd.f32 %v6091, %v6179
      %v6195 = vadd.f32 %v6092, %v6179
      %v6196 = vadd.f32 %v6093, %v6179
      %v6197 = vadd.f32 %v6094, %v6179
      %v6198 = vadd.f32 %v6095, %v6179
      %v6199 = vadd.f32 %v6096, %v6179
      %v6200 = vadd.f32 %v6097, %v6179
      %v6201 = vadd.f32 %v6098, %v6179
      %v6202 = vadd.f32 %v6099, %v6179
      %v6203 = vadd.f32 %v6100, %v6179
      %v6204 = vadd.f32 %v6101, %v6179
      %v6205 = vadd.f32 %v6102, %v6179
      %v6206 = vadd.f32 %v6103, %v6179
      %v6207 = vadd.f32 %v6104, %v6179
      %v6208 = vadd.f32 %v6105, %v6179
      %v6209 = vadd.f32 %v6106, %v6179
      %v6210 = vadd.f32 %v6107, %v6179
      %v6211 = vadd.f32 %v6108, %v6179
      %v6212 = vadd.f32 %v6109, %v6179
      %v6213 = vadd.f32 %v6110, %v6179
      %v6214 = vadd.f32 %v6111, %v6179
      %v6215 = vadd.f32 %v6112, %v6179
      %v6216 = vadd.f32 %v6113, %v6179
      %v6217 = vadd.f32 %v6114, %v6179
      %v6218 = vadd.f32 %v6115, %v6179
      %v6219 = vadd.f32 %v6116, %v6179
      %v6220 = vadd.f32 %v6117, %v6179
      %v6221 = vadd.f32 %v6118, %v6179
      %v6222 = vadd.f32 %v6119, %v6179
      %v6223 = vadd.f32 %v6120, %v6179
      %v6224 = vadd.f32 %v6121, %v6179
      %v6225 = vadd.f32 %v6122, %v6179
      %v6226 = vadd.f32 %v6123, %v6179
      %v6227 = vadd.f32 %v6124, %v6179
      %v6228 = vadd.f32 %v6125, %v6179
      %v6229 = vmax.f32 %v6181, 0.0
      %v6230 = vmax.f32 %v6182, 0.0
      %v6231 = vmax.f32 %v6183, 0.0
      %v6232 = vmax.f32 %v6184, 0.0
      %v6233 = vmax.f32 %v6185, 0.0
      %v6234 = vmax.f32 %v6186, 0.0
      %v6235 = vmax.f32 %v6187, 0.0
      %v6236 = vmax.f32 %v6188, 0.0
      %v6237 = vmax.f32 %v6189, 0.0
      %v6238 = vmax.f32 %v6190, 0.0
      %v6239 = vmax.f32 %v6191, 0.0
      %v6240 = vmax.f32 %v6192, 0.0
      %v6241 = vmax.f32 %v6193, 0.0
      %v6242 = vmax.f32 %v6194, 0.0
      %v6243 = vmax.f32 %v6195, 0.0
      %v6244 = vmax.f32 %v6196, 0.0
      %v6245 = vmax.f32 %v6197, 0.0
      %v6246 = vmax.f32 %v6198, 0.0
      %v6247 = vmax.f32 %v6199, 0.0
      %v6248 = vmax.f32 %v6200, 0.0
      %v6249 = vmax.f32 %v6201, 0.0
      %v6250 = vmax.f32 %v6202, 0.0
      %v6251 = vmax.f32 %v6203, 0.0
      %v6252 = vmax.f32 %v6204, 0.0
      %v6253 = vmax.f32 %v6205, 0.0
      %v6254 = vmax.f32 %v6206, 0.0
      %v6255 = vmax.f32 %v6207, 0.0
      %v6256 = vmax.f32 %v6208, 0.0
      %v6257 = vmax.f32 %v6209, 0.0
      %v6258 = vmax.f32 %v6210, 0.0
      %v6259 = vmax.f32 %v6211, 0.0
      %v6260 = vmax.f32 %v6212, 0.0
      %v6261 = vmax.f32 %v6213, 0.0
      %v6262 = vmax.f32 %v6214, 0.0
      %v6263 = vmax.f32 %v6215, 0.0
      %v6264 = vmax.f32 %v6216, 0.0
      %v6265 = vmax.f32 %v6217, 0.0
      %v6266 = vmax.f32 %v6218, 0.0
      %v6267 = vmax.f32 %v6219, 0.0
      %v6268 = vmax.f32 %v6220, 0.0
      %v6269 = vmax.f32 %v6221, 0.0
      %v6270 = vmax.f32 %v6222, 0.0
      %v6271 = vmax.f32 %v6223, 0.0
      %v6272 = vmax.f32 %v6224, 0.0
      %v6273 = vmax.f32 %v6225, 0.0
      %v6274 = vmax.f32 %v6226, 0.0
      %v6275 = vmax.f32 %v6227, 0.0
      %v6276 = vmax.f32 %v6228, 0.0
      %vm6277 = vcmp.gt.f32.partialorder %v6127, 0.0
      %vm6278 = vcmp.gt.f32.partialorder %v6128, 0.0
      %vm6279 = vcmp.gt.f32.partialorder %v6129, 0.0
      %vm6280 = vcmp.gt.f32.partialorder %v6130, 0.0
      %vm6281 = vcmp.gt.f32.partialorder %v6131, 0.0
      %vm6282 = vcmp.gt.f32.partialorder %v6132, 0.0
      %vm6283 = vcmp.gt.f32.partialorder %v6133, 0.0
      %vm6284 = vcmp.gt.f32.partialorder %v6134, 0.0
      %vm6285 = vcmp.gt.f32.partialorder %v6135, 0.0
      %vm6286 = vcmp.gt.f32.partialorder %v6136, 0.0
      %vm6287 = vcmp.gt.f32.partialorder %v6137, 0.0
      %vm6288 = vcmp.gt.f32.partialorder %v6138, 0.0
      %vm6289 = vcmp.gt.f32.partialorder %v6139, 0.0
      %vm6290 = vcmp.gt.f32.partialorder %v6140, 0.0
      %vm6291 = vcmp.gt.f32.partialorder %v6141, 0.0
      %vm6292 = vcmp.gt.f32.partialorder %v6142, 0.0
      %vm6293 = vcmp.gt.f32.partialorder %v6143, 0.0
      %vm6294 = vcmp.gt.f32.partialorder %v6144, 0.0
      %vm6295 = vcmp.gt.f32.partialorder %v6145, 0.0
      %vm6296 = vcmp.gt.f32.partialorder %v6146, 0.0
      %vm6297 = vcmp.gt.f32.partialorder %v6147, 0.0
      %vm6298 = vcmp.gt.f32.partialorder %v6148, 0.0
      %vm6299 = vcmp.gt.f32.partialorder %v6149, 0.0
      %vm6300 = vcmp.gt.f32.partialorder %v6150, 0.0
      %vm6301 = vcmp.gt.f32.partialorder %v6151, 0.0
      %vm6302 = vcmp.gt.f32.partialorder %v6152, 0.0
      %vm6303 = vcmp.gt.f32.partialorder %v6153, 0.0
      %vm6304 = vcmp.gt.f32.partialorder %v6154, 0.0
      %vm6305 = vcmp.gt.f32.partialorder %v6155, 0.0
      %vm6306 = vcmp.gt.f32.partialorder %v6156, 0.0
      %vm6307 = vcmp.gt.f32.partialorder %v6157, 0.0
      %vm6308 = vcmp.gt.f32.partialorder %v6158, 0.0
      %vm6309 = vcmp.gt.f32.partialorder %v6159, 0.0
      %vm6310 = vcmp.gt.f32.partialorder %v6160, 0.0
      %vm6311 = vcmp.gt.f32.partialorder %v6161, 0.0
      %vm6312 = vcmp.gt.f32.partialorder %v6162, 0.0
      %vm6313 = vcmp.gt.f32.partialorder %v6163, 0.0
      %vm6314 = vcmp.gt.f32.partialorder %v6164, 0.0
      %vm6315 = vcmp.gt.f32.partialorder %v6165, 0.0
      %vm6316 = vcmp.gt.f32.partialorder %v6166, 0.0
      %vm6317 = vcmp.gt.f32.partialorder %v6167, 0.0
      %vm6318 = vcmp.gt.f32.partialorder %v6168, 0.0
      %vm6319 = vcmp.gt.f32.partialorder %v6169, 0.0
      %vm6320 = vcmp.gt.f32.partialorder %v6170, 0.0
      %vm6321 = vcmp.gt.f32.partialorder %v6171, 0.0
      %vm6322 = vcmp.gt.f32.partialorder %v6172, 0.0
      %vm6323 = vcmp.gt.f32.partialorder %v6173, 0.0
      %vm6324 = vcmp.gt.f32.partialorder %v6174, 0.0
      %v6325 = vsel %vm6277, 1, 0
      %v6326 = vsel %vm6278, 1, 0
      %v6327 = vsel %vm6279, 1, 0
      %v6328 = vsel %vm6280, 1, 0
      %v6329 = vsel %vm6281, 1, 0
      %v6330 = vsel %vm6282, 1, 0
      %v6331 = vsel %vm6283, 1, 0
      %v6332 = vsel %vm6284, 1, 0
      %v6333 = vsel %vm6285, 1, 0
      %v6334 = vsel %vm6286, 1, 0
      %v6335 = vsel %vm6287, 1, 0
      %v6336 = vsel %vm6288, 1, 0
      %v6337 = vsel %vm6289, 1, 0
      %v6338 = vsel %vm6290, 1, 0
      %v6339 = vsel %vm6291, 1, 0
      %v6340 = vsel %vm6292, 1, 0
      %v6341 = vsel %vm6293, 1, 0
      %v6342 = vsel %vm6294, 1, 0
      %v6343 = vsel %vm6295, 1, 0
      %v6344 = vsel %vm6296, 1, 0
      %v6345 = vsel %vm6297, 1, 0
      %v6346 = vsel %vm6298, 1, 0
      %v6347 = vsel %vm6299, 1, 0
      %v6348 = vsel %vm6300, 1, 0
      %v6349 = vsel %vm6301, 1, 0
      %v6350 = vsel %vm6302, 1, 0
      %v6351 = vsel %vm6303, 1, 0
      %v6352 = vsel %vm6304, 1, 0
      %v6353 = vsel %vm6305, 1, 0
      %v6354 = vsel %vm6306, 1, 0
      %v6355 = vsel %vm6307, 1, 0
      %v6356 = vsel %vm6308, 1, 0
      %v6357 = vsel %vm6309, 1, 0
      %v6358 = vsel %vm6310, 1, 0
      %v6359 = vsel %vm6311, 1, 0
      %v6360 = vsel %vm6312, 1, 0
      %v6361 = vsel %vm6313, 1, 0
      %v6362 = vsel %vm6314, 1, 0
      %v6363 = vsel %vm6315, 1, 0
      %v6364 = vsel %vm6316, 1, 0
      %v6365 = vsel %vm6317, 1, 0
      %v6366 = vsel %vm6318, 1, 0
      %v6367 = vsel %vm6319, 1, 0
      %v6368 = vsel %vm6320, 1, 0
      %v6369 = vsel %vm6321, 1, 0
      %v6370 = vsel %vm6322, 1, 0
      %v6371 = vsel %vm6323, 1, 0
      %v6372 = vsel %vm6324, 1, 0
      %6373 = vset.pattern.permute.xlu0 0
      %6374 = vperm.xlu0 %6373, %v6325
      %v6375 = vpop.permute.xlu0 %6374
      %6376 = vset.pattern.permute.xlu0 0
      %6377 = vperm.xlu0 %6376, %v6326
      %v6378 = vpop.permute.xlu0 %6377
      %6379 = vset.pattern.permute.xlu0 0
      %6380 = vperm.xlu0 %6379, %v6327
      %v6381 = vpop.permute.xlu0 %6380
      %6382 = vset.pattern.permute.xlu0 0
      %6383 = vperm.xlu0 %6382, %v6328
      %v6384 = vpop.permute.xlu0 %6383
      %6385 = vset.pattern.permute.xlu0 0
      %6386 = vperm.xlu0 %6385, %v6329
      %v6387 = vpop.permute.xlu0 %6386
      %6388 = vset.pattern.permute.xlu0 0
      %6389 = vperm.xlu0 %6388, %v6330
      %v6390 = vpop.permute.xlu0 %6389
      %6391 = vset.pattern.permute.xlu0 0
      %6392 = vperm.xlu0 %6391, %v6331
      %v6393 = vpop.permute.xlu0 %6392
      %6394 = vset.pattern.permute.xlu0 0
      %6395 = vperm.xlu0 %6394, %v6332
      %v6396 = vpop.permute.xlu0 %6395
      %6397 = vset.pattern.permute.xlu0 0
      %6398 = vperm.xlu0 %6397, %v6333
      %v6399 = vpop.permute.xlu0 %6398
      %6400 = vset.pattern.permute.xlu0 0
      %6401 = vperm.xlu0 %6400, %v6334
      %v6402 = vpop.permute.xlu0 %6401
      %6403 = vset.pattern.permute.xlu0 0
      %6404 = vperm.xlu0 %6403, %v6335
      %v6405 = vpop.permute.xlu0 %6404
      %6406 = vset.pattern.permute.xlu0 0
      %6407 = vperm.xlu0 %6406, %v6336
      %v6408 = vpop.permute.xlu0 %6407
      %6409 = vset.pattern.permute.xlu0 0
      %6410 = vperm.xlu0 %6409, %v6337
      %v6411 = vpop.permute.xlu0 %6410
      %6412 = vset.pattern.permute.xlu0 0
      %6413 = vperm.xlu0 %6412, %v6338
      %v6414 = vpop.permute.xlu0 %6413
      %6415 = vset.pattern.permute.xlu0 0
      %6416 = vperm.xlu0 %6415, %v6339
      %v6417 = vpop.permute.xlu0 %6416
      %6418 = vset.pattern.permute.xlu0 0
      %6419 = vperm.xlu0 %6418, %v6340
      %v6420 = vpop.permute.xlu0 %6419
      %6421 = vset.pattern.permute.xlu0 0
      %6422 = vperm.xlu0 %6421, %v6341
      %v6423 = vpop.permute.xlu0 %6422
      %6424 = vset.pattern.permute.xlu0 0
      %6425 = vperm.xlu0 %6424, %v6342
      %v6426 = vpop.permute.xlu0 %6425
      %6427 = vset.pattern.permute.xlu0 0
      %6428 = vperm.xlu0 %6427, %v6343
      %v6429 = vpop.permute.xlu0 %6428
      %6430 = vset.pattern.permute.xlu0 0
      %6431 = vperm.xlu0 %6430, %v6344
      %v6432 = vpop.permute.xlu0 %6431
      %6433 = vset.pattern.permute.xlu0 0
      %6434 = vperm.xlu0 %6433, %v6345
      %v6435 = vpop.permute.xlu0 %6434
      %6436 = vset.pattern.permute.xlu0 0
      %6437 = vperm.xlu0 %6436, %v6346
      %v6438 = vpop.permute.xlu0 %6437
      %6439 = vset.pattern.permute.xlu0 0
      %6440 = vperm.xlu0 %6439, %v6347
      %v6441 = vpop.permute.xlu0 %6440
      %6442 = vset.pattern.permute.xlu0 0
      %6443 = vperm.xlu0 %6442, %v6348
      %v6444 = vpop.permute.xlu0 %6443
      %6445 = vset.pattern.permute.xlu0 0
      %6446 = vperm.xlu0 %6445, %v6349
      %v6447 = vpop.permute.xlu0 %6446
      %6448 = vset.pattern.permute.xlu0 0
      %6449 = vperm.xlu0 %6448, %v6350
      %v6450 = vpop.permute.xlu0 %6449
      %6451 = vset.pattern.permute.xlu0 0
      %6452 = vperm.xlu0 %6451, %v6351
      %v6453 = vpop.permute.xlu0 %6452
      %6454 = vset.pattern.permute.xlu0 0
      %6455 = vperm.xlu0 %6454, %v6352
      %v6456 = vpop.permute.xlu0 %6455
      %6457 = vset.pattern.permute.xlu0 0
      %6458 = vperm.xlu0 %6457, %v6353
      %v6459 = vpop.permute.xlu0 %6458
      %6460 = vset.pattern.permute.xlu0 0
      %6461 = vperm.xlu0 %6460, %v6354
      %v6462 = vpop.permute.xlu0 %6461
      %6463 = vset.pattern.permute.xlu0 0
      %6464 = vperm.xlu0 %6463, %v6355
      %v6465 = vpop.permute.xlu0 %6464
      %6466 = vset.pattern.permute.xlu0 0
      %6467 = vperm.xlu0 %6466, %v6356
      %v6468 = vpop.permute.xlu0 %6467
      %6469 = vset.pattern.permute.xlu0 0
      %6470 = vperm.xlu0 %6469, %v6357
      %v6471 = vpop.permute.xlu0 %6470
      %6472 = vset.pattern.permute.xlu0 0
      %6473 = vperm.xlu0 %6472, %v6358
      %v6474 = vpop.permute.xlu0 %6473
      %6475 = vset.pattern.permute.xlu0 0
      %6476 = vperm.xlu0 %6475, %v6359
      %v6477 = vpop.permute.xlu0 %6476
      %6478 = vset.pattern.permute.xlu0 0
      %6479 = vperm.xlu0 %6478, %v6360
      %v6480 = vpop.permute.xlu0 %6479
      %6481 = vset.pattern.permute.xlu0 0
      %6482 = vperm.xlu0 %6481, %v6361
      %v6483 = vpop.permute.xlu0 %6482
      %6484 = vset.pattern.permute.xlu0 0
      %6485 = vperm.xlu0 %6484, %v6362
      %v6486 = vpop.permute.xlu0 %6485
      %6487 = vset.pattern.permute.xlu0 0
      %6488 = vperm.xlu0 %6487, %v6363
      %v6489 = vpop.permute.xlu0 %6488
      %6490 = vset.pattern.permute.xlu0 0
      %6491 = vperm.xlu0 %6490, %v6364
      %v6492 = vpop.permute.xlu0 %6491
      %6493 = vset.pattern.permute.xlu0 0
      %6494 = vperm.xlu0 %6493, %v6365
      %v6495 = vpop.permute.xlu0 %6494
      %6496 = vset.pattern.permute.xlu0 0
      %6497 = vperm.xlu0 %6496, %v6366
      %v6498 = vpop.permute.xlu0 %6497
      %6499 = vset.pattern.permute.xlu0 0
      %6500 = vperm.xlu0 %6499, %v6367
      %v6501 = vpop.permute.xlu0 %6500
      %6502 = vset.pattern.permute.xlu0 0
      %6503 = vperm.xlu0 %6502, %v6368
      %v6504 = vpop.permute.xlu0 %6503
      %6505 = vset.pattern.permute.xlu0 0
      %6506 = vperm.xlu0 %6505, %v6369
      %v6507 = vpop.permute.xlu0 %6506
      %6508 = vset.pattern.permute.xlu0 0
      %6509 = vperm.xlu0 %6508, %v6370
      %v6510 = vpop.permute.xlu0 %6509
      %6511 = vset.pattern.permute.xlu0 0
      %6512 = vperm.xlu0 %6511, %v6371
      %v6513 = vpop.permute.xlu0 %6512
      %6514 = vset.pattern.permute.xlu0 0
      %6515 = vperm.xlu0 %6514, %v6372
      %v6516 = vpop.permute.xlu0 %6515
      %vm6517 = vcmp.eq.s32.totalorder %v6375, 1
      %vm6518 = vcmp.eq.s32.totalorder %v6378, 1
      %vm6519 = vcmp.eq.s32.totalorder %v6381, 1
      %vm6520 = vcmp.eq.s32.totalorder %v6384, 1
      %vm6521 = vcmp.eq.s32.totalorder %v6387, 1
      %vm6522 = vcmp.eq.s32.totalorder %v6390, 1
      %vm6523 = vcmp.eq.s32.totalorder %v6393, 1
      %vm6524 = vcmp.eq.s32.totalorder %v6396, 1
      %vm6525 = vcmp.eq.s32.totalorder %v6399, 1
      %vm6526 = vcmp.eq.s32.totalorder %v6402, 1
      %vm6527 = vcmp.eq.s32.totalorder %v6405, 1
      %vm6528 = vcmp.eq.s32.totalorder %v6408, 1
      %vm6529 = vcmp.eq.s32.totalorder %v6411, 1
      %vm6530 = vcmp.eq.s32.totalorder %v6414, 1
      %vm6531 = vcmp.eq.s32.totalorder %v6417, 1
      %vm6532 = vcmp.eq.s32.totalorder %v6420, 1
      %vm6533 = vcmp.eq.s32.totalorder %v6423, 1
      %vm6534 = vcmp.eq.s32.totalorder %v6426, 1
      %vm6535 = vcmp.eq.s32.totalorder %v6429, 1
      %vm6536 = vcmp.eq.s32.totalorder %v6432, 1
      %vm6537 = vcmp.eq.s32.totalorder %v6435, 1
      %vm6538 = vcmp.eq.s32.totalorder %v6438, 1
      %vm6539 = vcmp.eq.s32.totalorder %v6441, 1
      %vm6540 = vcmp.eq.s32.totalorder %v6444, 1
      %vm6541 = vcmp.eq.s32.totalorder %v6447, 1
      %vm6542 = vcmp.eq.s32.totalorder %v6450, 1
      %vm6543 = vcmp.eq.s32.totalorder %v6453, 1
      %vm6544 = vcmp.eq.s32.totalorder %v6456, 1
      %vm6545 = vcmp.eq.s32.totalorder %v6459, 1
      %vm6546 = vcmp.eq.s32.totalorder %v6462, 1
      %vm6547 = vcmp.eq.s32.totalorder %v6465, 1
      %vm6548 = vcmp.eq.s32.totalorder %v6468, 1
      %vm6549 = vcmp.eq.s32.totalorder %v6471, 1
      %vm6550 = vcmp.eq.s32.totalorder %v6474, 1
      %vm6551 = vcmp.eq.s32.totalorder %v6477, 1
      %vm6552 = vcmp.eq.s32.totalorder %v6480, 1
      %vm6553 = vcmp.eq.s32.totalorder %v6483, 1
      %vm6554 = vcmp.eq.s32.totalorder %v6486, 1
      %vm6555 = vcmp.eq.s32.totalorder %v6489, 1
      %vm6556 = vcmp.eq.s32.totalorder %v6492, 1
      %vm6557 = vcmp.eq.s32.totalorder %v6495, 1
      %vm6558 = vcmp.eq.s32.totalorder %v6498, 1
      %vm6559 = vcmp.eq.s32.totalorder %v6501, 1
      %vm6560 = vcmp.eq.s32.totalorder %v6504, 1
      %vm6561 = vcmp.eq.s32.totalorder %v6507, 1
      %vm6562 = vcmp.eq.s32.totalorder %v6510, 1
      %vm6563 = vcmp.eq.s32.totalorder %v6513, 1
      %vm6564 = vcmp.eq.s32.totalorder %v6516, 1
      %v6565 = vsel %vm6517, %v6229, 0.0
      %v6566 = vsel %vm6518, %v6230, 0.0
      %v6567 = vsel %vm6519, %v6231, 0.0
      %v6568 = vsel %vm6520, %v6232, 0.0
      %v6569 = vsel %vm6521, %v6233, 0.0
      %v6570 = vsel %vm6522, %v6234, 0.0
      %v6571 = vsel %vm6523, %v6235, 0.0
      %v6572 = vsel %vm6524, %v6236, 0.0
      %v6573 = vsel %vm6525, %v6237, 0.0
      %v6574 = vsel %vm6526, %v6238, 0.0
      %v6575 = vsel %vm6527, %v6239, 0.0
      %v6576 = vsel %vm6528, %v6240, 0.0
      %v6577 = vsel %vm6529, %v6241, 0.0
      %v6578 = vsel %vm6530, %v6242, 0.0
      %v6579 = vsel %vm6531, %v6243, 0.0
      %v6580 = vsel %vm6532, %v6244, 0.0
      %v6581 = vsel %vm6533, %v6245, 0.0
      %v6582 = vsel %vm6534, %v6246, 0.0
      %v6583 = vsel %vm6535, %v6247, 0.0
      %v6584 = vsel %vm6536, %v6248, 0.0
      %v6585 = vsel %vm6537, %v6249, 0.0
      %v6586 = vsel %vm6538, %v6250, 0.0
      %v6587 = vsel %vm6539, %v6251, 0.0
      %v6588 = vsel %vm6540, %v6252, 0.0
      %v6589 = vsel %vm6541, %v6253, 0.0
      %v6590 = vsel %vm6542, %v6254, 0.0
      %v6591 = vsel %vm6543, %v6255, 0.0
      %v6592 = vsel %vm6544, %v6256, 0.0
      %v6593 = vsel %vm6545, %v6257, 0.0
      %v6594 = vsel %vm6546, %v6258, 0.0
      %v6595 = vsel %vm6547, %v6259, 0.0
      %v6596 = vsel %vm6548, %v6260, 0.0
      %v6597 = vsel %vm6549, %v6261, 0.0
      %v6598 = vsel %vm6550, %v6262, 0.0
      %v6599 = vsel %vm6551, %v6263, 0.0
      %v6600 = vsel %vm6552, %v6264, 0.0
      %v6601 = vsel %vm6553, %v6265, 0.0
      %v6602 = vsel %vm6554, %v6266, 0.0
      %v6603 = vsel %vm6555, %v6267, 0.0
      %v6604 = vsel %vm6556, %v6268, 0.0
      %v6605 = vsel %vm6557, %v6269, 0.0
      %v6606 = vsel %vm6558, %v6270, 0.0
      %v6607 = vsel %vm6559, %v6271, 0.0
      %v6608 = vsel %vm6560, %v6272, 0.0
      %v6609 = vsel %vm6561, %v6273, 0.0
      %v6610 = vsel %vm6562, %v6274, 0.0
      %v6611 = vsel %vm6563, %v6275, 0.0
      %v6612 = vsel %vm6564, %v6276, 0.0
      %v6613 = vadd.f32 %v6565, %v6566
      %v6614 = vadd.f32 %v6613, %v6567
      %v6615 = vadd.f32 %v6614, %v6568
      %v6616 = vadd.f32 %v6615, %v6569
      %v6617 = vadd.f32 %v6616, %v6570
      %v6618 = vadd.f32 %v6617, %v6571
      %v6619 = vadd.f32 %v6618, %v6572
      %v6620 = vadd.f32 %v6619, %v6573
      %v6621 = vadd.f32 %v6620, %v6574
      %v6622 = vadd.f32 %v6621, %v6575
      %v6623 = vadd.f32 %v6622, %v6576
      %v6624 = vadd.f32 %v6623, %v6577
      %v6625 = vadd.f32 %v6624, %v6578
      %v6626 = vadd.f32 %v6625, %v6579
      %v6627 = vadd.f32 %v6626, %v6580
      %v6628 = vadd.f32 %v6627, %v6581
      %v6629 = vadd.f32 %v6628, %v6582
      %v6630 = vadd.f32 %v6629, %v6583
      %v6631 = vadd.f32 %v6630, %v6584
      %v6632 = vadd.f32 %v6631, %v6585
      %v6633 = vadd.f32 %v6632, %v6586
      %v6634 = vadd.f32 %v6633, %v6587
      %v6635 = vadd.f32 %v6634, %v6588
      %v6636 = vadd.f32 %v6635, %v6589
      %v6637 = vadd.f32 %v6636, %v6590
      %v6638 = vadd.f32 %v6637, %v6591
      %v6639 = vadd.f32 %v6638, %v6592
      %v6640 = vadd.f32 %v6639, %v6593
      %v6641 = vadd.f32 %v6640, %v6594
      %v6642 = vadd.f32 %v6641, %v6595
      %v6643 = vadd.f32 %v6642, %v6596
      %v6644 = vadd.f32 %v6643, %v6597
      %v6645 = vadd.f32 %v6644, %v6598
      %v6646 = vadd.f32 %v6645, %v6599
      %v6647 = vadd.f32 %v6646, %v6600
      %v6648 = vadd.f32 %v6647, %v6601
      %v6649 = vadd.f32 %v6648, %v6602
      %v6650 = vadd.f32 %v6649, %v6603
      %v6651 = vadd.f32 %v6650, %v6604
      %v6652 = vadd.f32 %v6651, %v6605
      %v6653 = vadd.f32 %v6652, %v6606
      %v6654 = vadd.f32 %v6653, %v6607
      %v6655 = vadd.f32 %v6654, %v6608
      %v6656 = vadd.f32 %v6655, %v6609
      %v6657 = vadd.f32 %v6656, %v6610
      %v6658 = vadd.f32 %v6657, %v6611
      %v6659 = vadd.f32 %v6658, %v6612
      %v6660 = vrot.slane %v6659, 4
      %v6661 = vadd.f32 %v6659, %v6660
      %v6662 = vrot.slane %v6661, 2
      %v6663 = vadd.f32 %v6661, %v6662
      %v6664 = vrot.slane %v6663, 1
      %v6665 = vadd.f32 %v6663, %v6664
      %v6666 = vmul.f32 %v6565, %v6565
      %v6667 = vmul.f32 %v6566, %v6566
      %v6668 = vmul.f32 %v6567, %v6567
      %v6669 = vmul.f32 %v6568, %v6568
      %v6670 = vmul.f32 %v6569, %v6569
      %v6671 = vmul.f32 %v6570, %v6570
      %v6672 = vmul.f32 %v6571, %v6571
      %v6673 = vmul.f32 %v6572, %v6572
      %v6674 = vmul.f32 %v6573, %v6573
      %v6675 = vmul.f32 %v6574, %v6574
      %v6676 = vmul.f32 %v6575, %v6575
      %v6677 = vmul.f32 %v6576, %v6576
      %v6678 = vmul.f32 %v6577, %v6577
      %v6679 = vmul.f32 %v6578, %v6578
      %v6680 = vmul.f32 %v6579, %v6579
      %v6681 = vmul.f32 %v6580, %v6580
      %v6682 = vmul.f32 %v6581, %v6581
      %v6683 = vmul.f32 %v6582, %v6582
      %v6684 = vmul.f32 %v6583, %v6583
      %v6685 = vmul.f32 %v6584, %v6584
      %v6686 = vmul.f32 %v6585, %v6585
      %v6687 = vmul.f32 %v6586, %v6586
      %v6688 = vmul.f32 %v6587, %v6587
      %v6689 = vmul.f32 %v6588, %v6588
      %v6690 = vmul.f32 %v6589, %v6589
      %v6691 = vmul.f32 %v6590, %v6590
      %v6692 = vmul.f32 %v6591, %v6591
      %v6693 = vmul.f32 %v6592, %v6592
      %v6694 = vmul.f32 %v6593, %v6593
      %v6695 = vmul.f32 %v6594, %v6594
      %v6696 = vmul.f32 %v6595, %v6595
      %v6697 = vmul.f32 %v6596, %v6596
      %v6698 = vmul.f32 %v6597, %v6597
      %v6699 = vmul.f32 %v6598, %v6598
      %v6700 = vmul.f32 %v6599, %v6599
      %v6701 = vmul.f32 %v6600, %v6600
      %v6702 = vmul.f32 %v6601, %v6601
      %v6703 = vmul.f32 %v6602, %v6602
      %v6704 = vmul.f32 %v6603, %v6603
      %v6705 = vmul.f32 %v6604, %v6604
      %v6706 = vmul.f32 %v6605, %v6605
      %v6707 = vmul.f32 %v6606, %v6606
      %v6708 = vmul.f32 %v6607, %v6607
      %v6709 = vmul.f32 %v6608, %v6608
      %v6710 = vmul.f32 %v6609, %v6609
      %v6711 = vmul.f32 %v6610, %v6610
      %v6712 = vmul.f32 %v6611, %v6611
      %v6713 = vmul.f32 %v6612, %v6612
      %v6714 = vadd.f32 %v6666, %v6667
      %v6715 = vadd.f32 %v6714, %v6668
      %v6716 = vadd.f32 %v6715, %v6669
      %v6717 = vadd.f32 %v6716, %v6670
      %v6718 = vadd.f32 %v6717, %v6671
      %v6719 = vadd.f32 %v6718, %v6672
      %v6720 = vadd.f32 %v6719, %v6673
      %v6721 = vadd.f32 %v6720, %v6674
      %v6722 = vadd.f32 %v6721, %v6675
      %v6723 = vadd.f32 %v6722, %v6676
      %v6724 = vadd.f32 %v6723, %v6677
      %v6725 = vadd.f32 %v6724, %v6678
      %v6726 = vadd.f32 %v6725, %v6679
      %v6727 = vadd.f32 %v6726, %v6680
      %v6728 = vadd.f32 %v6727, %v6681
      %v6729 = vadd.f32 %v6728, %v6682
      %v6730 = vadd.f32 %v6729, %v6683
      %v6731 = vadd.f32 %v6730, %v6684
      %v6732 = vadd.f32 %v6731, %v6685
      %v6733 = vadd.f32 %v6732, %v6686
      %v6734 = vadd.f32 %v6733, %v6687
      %v6735 = vadd.f32 %v6734, %v6688
      %v6736 = vadd.f32 %v6735, %v6689
      %v6737 = vadd.f32 %v6736, %v6690
      %v6738 = vadd.f32 %v6737, %v6691
      %v6739 = vadd.f32 %v6738, %v6692
      %v6740 = vadd.f32 %v6739, %v6693
      %v6741 = vadd.f32 %v6740, %v6694
      %v6742 = vadd.f32 %v6741, %v6695
      %v6743 = vadd.f32 %v6742, %v6696
      %v6744 = vadd.f32 %v6743, %v6697
      %v6745 = vadd.f32 %v6744, %v6698
      %v6746 = vadd.f32 %v6745, %v6699
      %v6747 = vadd.f32 %v6746, %v6700
      %v6748 = vadd.f32 %v6747, %v6701
      %v6749 = vadd.f32 %v6748, %v6702
      %v6750 = vadd.f32 %v6749, %v6703
      %v6751 = vadd.f32 %v6750, %v6704
      %v6752 = vadd.f32 %v6751, %v6705
      %v6753 = vadd.f32 %v6752, %v6706
      %v6754 = vadd.f32 %v6753, %v6707
      %v6755 = vadd.f32 %v6754, %v6708
      %v6756 = vadd.f32 %v6755, %v6709
      %v6757 = vadd.f32 %v6756, %v6710
      %v6758 = vadd.f32 %v6757, %v6711
      %v6759 = vadd.f32 %v6758, %v6712
      %v6760 = vadd.f32 %v6759, %v6713
      %v6761 = vrot.slane %v6760, 4
      %v6762 = vadd.f32 %v6760, %v6761
      %v6763 = vrot.slane %v6762, 2
      %v6764 = vadd.f32 %v6762, %v6763
      %v6765 = vrot.slane %v6764, 1
      %v6766 = vadd.f32 %v6764, %v6765
      %vm6767 = vcmask 1040384
      %v6768 = vsel %vm6767, %v6665, %v6766
      %v6769 = vpack.c.bf16 %v6566, %v6565
      %v6770 = vpack.c.bf16 %v6568, %v6567
      %v6771 = vpack.c.bf16 %v6570, %v6569
      %v6772 = vpack.c.bf16 %v6572, %v6571
      %v6773 = vpack.c.bf16 %v6574, %v6573
      %v6774 = vpack.c.bf16 %v6576, %v6575
      %v6775 = vpack.c.bf16 %v6578, %v6577
      %v6776 = vpack.c.bf16 %v6580, %v6579
      %v6777 = vpack.c.bf16 %v6582, %v6581
      %v6778 = vpack.c.bf16 %v6584, %v6583
      %v6779 = vpack.c.bf16 %v6586, %v6585
      %v6780 = vpack.c.bf16 %v6588, %v6587
      %v6781 = vpack.c.bf16 %v6590, %v6589
      %v6782 = vpack.c.bf16 %v6592, %v6591
      %v6783 = vpack.c.bf16 %v6594, %v6593
      %v6784 = vpack.c.bf16 %v6596, %v6595
      %v6785 = vpack.c.bf16 %v6598, %v6597
      %v6786 = vpack.c.bf16 %v6600, %v6599
      %v6787 = vpack.c.bf16 %v6602, %v6601
      %v6788 = vpack.c.bf16 %v6604, %v6603
      %v6789 = vpack.c.bf16 %v6606, %v6605
      %v6790 = vpack.c.bf16 %v6608, %v6607
      %v6791 = vpack.c.bf16 %v6610, %v6609
      %v6792 = vpack.c.bf16 %v6612, %v6611
      %v6817 = vunpack.c.l.b16 %v6769
      %v6818 = vunpack.c.h.b16 %v6769
      %v6819 = vunpack.c.l.b16 %v6770
      %v6820 = vunpack.c.h.b16 %v6770
      %v6821 = vunpack.c.l.b16 %v6771
      %v6822 = vunpack.c.h.b16 %v6771
      %v6823 = vunpack.c.l.b16 %v6772
      %v6824 = vunpack.c.h.b16 %v6772
      %v6825 = vunpack.c.l.b16 %v6773
      %v6826 = vunpack.c.h.b16 %v6773
      %v6827 = vunpack.c.l.b16 %v6774
      %v6828 = vunpack.c.h.b16 %v6774
      %v6829 = vunpack.c.l.b16 %v6775
      %v6830 = vunpack.c.h.b16 %v6775
      %v6831 = vunpack.c.l.b16 %v6776
      %v6832 = vunpack.c.h.b16 %v6776
      %v6833 = vunpack.c.l.b16 %v6777
      %v6834 = vunpack.c.h.b16 %v6777
      %v6835 = vunpack.c.l.b16 %v6778
      %v6836 = vunpack.c.h.b16 %v6778
      %v6837 = vunpack.c.l.b16 %v6779
      %v6838 = vunpack.c.h.b16 %v6779
      %v6839 = vunpack.c.l.b16 %v6780
      %v6840 = vunpack.c.h.b16 %v6780
      %v6841 = vunpack.c.l.b16 %v6781
      %v6842 = vunpack.c.h.b16 %v6781
      %v6843 = vunpack.c.l.b16 %v6782
      %v6844 = vunpack.c.h.b16 %v6782
      %v6845 = vunpack.c.l.b16 %v6783
      %v6846 = vunpack.c.h.b16 %v6783
      %v6847 = vunpack.c.l.b16 %v6784
      %v6848 = vunpack.c.h.b16 %v6784
      %v6849 = vunpack.c.l.b16 %v6785
      %v6850 = vunpack.c.h.b16 %v6785
      %v6851 = vunpack.c.l.b16 %v6786
      %v6852 = vunpack.c.h.b16 %v6786
      %v6853 = vunpack.c.l.b16 %v6787
      %v6854 = vunpack.c.h.b16 %v6787
      %v6855 = vunpack.c.l.b16 %v6788
      %v6856 = vunpack.c.h.b16 %v6788
      %v6857 = vunpack.c.l.b16 %v6789
      %v6858 = vunpack.c.h.b16 %v6789
      %v6859 = vunpack.c.l.b16 %v6790
      %v6860 = vunpack.c.h.b16 %v6790
      %v6861 = vunpack.c.l.b16 %v6791
      %v6862 = vunpack.c.h.b16 %v6791
      %v6863 = vunpack.c.l.b16 %v6792
      %v6864 = vunpack.c.h.b16 %v6792
      %v6865 = vpack.c.b16 %v6817, %v6817
      %v6866 = vpack.c.b16 %v6818, %v6818
      %v6867 = vpack.c.b16 %v6819, %v6819
      %v6868 = vpack.c.b16 %v6820, %v6820
      %v6869 = vpack.c.b16 %v6821, %v6821
      %v6870 = vpack.c.b16 %v6822, %v6822
      %v6871 = vpack.c.b16 %v6823, %v6823
      %v6872 = vpack.c.b16 %v6824, %v6824
      %v6873 = vpack.c.b16 %v6825, %v6825
      %v6874 = vpack.c.b16 %v6826, %v6826
      %v6875 = vpack.c.b16 %v6827, %v6827
      %v6876 = vpack.c.b16 %v6828, %v6828
      %v6877 = vpack.c.b16 %v6829, %v6829
      %v6878 = vpack.c.b16 %v6830, %v6830
      %v6879 = vpack.c.b16 %v6831, %v6831
      %v6880 = vpack.c.b16 %v6832, %v6832
      %v6881 = vpack.c.b16 %v6833, %v6833
      %v6882 = vpack.c.b16 %v6834, %v6834
      %v6883 = vpack.c.b16 %v6835, %v6835
      %v6884 = vpack.c.b16 %v6836, %v6836
      %v6885 = vpack.c.b16 %v6837, %v6837
      %v6886 = vpack.c.b16 %v6838, %v6838
      %v6887 = vpack.c.b16 %v6839, %v6839
      %v6888 = vpack.c.b16 %v6840, %v6840
      %v6889 = vpack.c.b16 %v6841, %v6841
      %v6890 = vpack.c.b16 %v6842, %v6842
      %v6891 = vpack.c.b16 %v6843, %v6843
      %v6892 = vpack.c.b16 %v6844, %v6844
      %v6893 = vpack.c.b16 %v6845, %v6845
      %v6894 = vpack.c.b16 %v6846, %v6846
      %v6895 = vpack.c.b16 %v6847, %v6847
      %v6896 = vpack.c.b16 %v6848, %v6848
      %v6897 = vpack.c.b16 %v6849, %v6849
      %v6898 = vpack.c.b16 %v6850, %v6850
      %v6899 = vpack.c.b16 %v6851, %v6851
      %v6900 = vpack.c.b16 %v6852, %v6852
      %v6901 = vpack.c.b16 %v6853, %v6853
      %v6902 = vpack.c.b16 %v6854, %v6854
      %v6903 = vpack.c.b16 %v6855, %v6855
      %v6904 = vpack.c.b16 %v6856, %v6856
      %v6905 = vpack.c.b16 %v6857, %v6857
      %v6906 = vpack.c.b16 %v6858, %v6858
      %v6907 = vpack.c.b16 %v6859, %v6859
      %v6908 = vpack.c.b16 %v6860, %v6860
      %v6909 = vpack.c.b16 %v6861, %v6861
      %v6910 = vpack.c.b16 %v6862, %v6862
      %v6911 = vpack.c.b16 %v6863, %v6863
      %v6912 = vpack.c.b16 %v6864, %v6864
      %6961 = vst [vmem:[%s469] sm:$0xf] %v6865
      %6962 = vst [vmem:[%s469 + $0x4] sm:$0xf] %v6866
      %6963 = vst [vmem:[%s469 + $0x8] sm:$0xf] %v6867
      %6964 = vst [vmem:[%s469 + $0xc] sm:$0xf] %v6868
      %6965 = vst [vmem:[%s469 + $0x10] sm:$0xf] %v6869
      %6966 = vst [vmem:[%s469 + $0x14] sm:$0xf] %v6870
      %6967 = vst [vmem:[%s469 + $0x18] sm:$0xf] %v6871
      %6968 = vst [vmem:[%s469 + $0x1c] sm:$0xf] %v6872
      %6969 = vst [vmem:[%s469 + $0x20] sm:$0xf] %v6873
      %6970 = vst [vmem:[%s469 + $0x24] sm:$0xf] %v6874
      %6971 = vst [vmem:[%s469 + $0x28] sm:$0xf] %v6875
      %6972 = vst [vmem:[%s469 + $0x2c] sm:$0xf] %v6876
      %6973 = vst [vmem:[%s469 + $0x30] sm:$0xf] %v6877
      %6974 = vst [vmem:[%s469 + $0x34] sm:$0xf] %v6878
      %6975 = vst [vmem:[%s469 + $0x38] sm:$0xf] %v6879
      %6976 = vst [vmem:[%s469 + $0x3c] sm:$0xf] %v6880
      %6977 = vst [vmem:[%s469 + $0x40] sm:$0xf] %v6881
      %6978 = vst [vmem:[%s469 + $0x44] sm:$0xf] %v6882
      %6979 = vst [vmem:[%s469 + $0x48] sm:$0xf] %v6883
      %6980 = vst [vmem:[%s469 + $0x4c] sm:$0xf] %v6884
      %6981 = vst [vmem:[%s469 + $0x50] sm:$0xf] %v6885
      %6982 = vst [vmem:[%s469 + $0x54] sm:$0xf] %v6886
      %6983 = vst [vmem:[%s469 + $0x58] sm:$0xf] %v6887
      %6984 = vst [vmem:[%s469 + $0x5c] sm:$0xf] %v6888
      %6985 = vst [vmem:[%s469 + $0x60] sm:$0xf] %v6889
      %6986 = vst [vmem:[%s469 + $0x64] sm:$0xf] %v6890
      %6987 = vst [vmem:[%s469 + $0x68] sm:$0xf] %v6891
      %6988 = vst [vmem:[%s469 + $0x6c] sm:$0xf] %v6892
      %6989 = vst [vmem:[%s469 + $0x70] sm:$0xf] %v6893
      %6990 = vst [vmem:[%s469 + $0x74] sm:$0xf] %v6894
      %6991 = vst [vmem:[%s469 + $0x78] sm:$0xf] %v6895
      %6992 = vst [vmem:[%s469 + $0x7c] sm:$0xf] %v6896
      %6993 = vst [vmem:[%s469 + $0x80] sm:$0xf] %v6897
      %6994 = vst [vmem:[%s469 + $0x84] sm:$0xf] %v6898
      %6995 = vst [vmem:[%s469 + $0x88] sm:$0xf] %v6899
      %6996 = vst [vmem:[%s469 + $0x8c] sm:$0xf] %v6900
      %6997 = vst [vmem:[%s469 + $0x90] sm:$0xf] %v6901
      %6998 = vst [vmem:[%s469 + $0x94] sm:$0xf] %v6902
      %6999 = vst [vmem:[%s469 + $0x98] sm:$0xf] %v6903
      %7000 = vst [vmem:[%s469 + $0x9c] sm:$0xf] %v6904
      %7001 = vst [vmem:[%s469 + $0xa0] sm:$0xf] %v6905
      %7002 = vst [vmem:[%s469 + $0xa4] sm:$0xf] %v6906
      %7003 = vst [vmem:[%s469 + $0xa8] sm:$0xf] %v6907
      %7004 = vst [vmem:[%s469 + $0xac] sm:$0xf] %v6908
      %7005 = vst [vmem:[%s469 + $0xb0] sm:$0xf] %v6909
      %7006 = vst [vmem:[%s469 + $0xb4] sm:$0xf] %v6910
      %7007 = vst [vmem:[%s469 + $0xb8] sm:$0xf] %v6911
      %7008 = vst [vmem:[%s469 + $0xbc] sm:$0xf] %v6912
      %7009 = vst [vmem:[%s476] sm:$0x3] %v6768
      %p7010 = scmp.lt.s32.totalorder %s23, 1
      %s7011 = scalar_select %p7010, %s23, 1
      %p7012 = scmp.lt.s32.totalorder %s24, 0
      %s7013 = scalar_select %p7012, %s24, 0
      %s7014 = smul.addr %s7013, 48
      %s7015 = smul.addr %s7011, 48
      %s7016 = sadd.s32 %s7014, %s7015
      %s7017 = smul.addr %s7016, 4
      %s7018 = scalar_lea.vmem %s6, %s7017
      %p7019 = scmp.lt.s32.totalorder %s23, 1
      %s7020 = scalar_select %p7019, %s23, 1
      %p7021 = scmp.lt.s32.totalorder %s24, 0
      %s7022 = scalar_select %p7021, %s24, 0
      %s7023 = sadd.s32 %s7022, %s7020
      %s7024 = smul.addr %s7023, 2
      %s7025 = scalar_lea.vmem %s7, %s7024
      // Predicated region
      $region45: #{unet_conv_block.6} parent=43 // pred_check
        %p7026 = pneg %p217
      $region46: #{unet_conv_block.6} parent=43 // pred_check_branch
        %7028 = sbr.rel (%p7026) target = $region48
      $region47: #{unet_conv_block.6} parent=43 // pred_region
        _
      $region48: #{unet_conv_block.6} parent=43 // pred_fallthru
        _
      // Predicated region
      $region49: #{unet_conv_block.6} parent=43 // pred_check
        %p7029 = pneg %p245
      $region50: #{unet_conv_block.6} parent=43 // pred_check_branch
        %7031 = sbr.rel (%p7029) target = $region52
      $region51: #{unet_conv_block.6} parent=43 // pred_region
        _
      $region52: #{unet_conv_block.6} parent=43 // pred_fallthru
        _
    $region44: #{unet_conv_block.6} parent=5 // pred_fallthru
      _
    %p7032 = scmp.le.s32.totalorder 2, %s14
    // Predicated region
    $region53: #{unet_conv_block.6} parent=5 // pred_check
      %p7033 = pneg %p7032
    $region54: #{unet_conv_block.6} parent=5 // pred_check_branch
      %7035 = sbr.rel (%p7033) target = $region56
    $region55: #{unet_conv_block.6} parent=5 // pred_region
      %s7036 = ssub.s32 %s14, 2
      // Predicated region
      $region57: #{unet_conv_block.6} parent=55 // pred_check
        %p7037 = pneg %p223
      $region58: #{unet_conv_block.6} parent=55 // pred_check_branch
        %7039 = sbr.rel (%p7037) target = $region60
      $region59: #{unet_conv_block.6} parent=55 // pred_region
        %p7040 = scmp.lt.s32.totalorder %s25, 1
        %s7041 = scalar_select %p7040, %s25, 1
        %p7042 = scmp.lt.s32.totalorder %s26, 0
        %s7043 = scalar_select %p7042, %s26, 0
        %s7044 = smul.addr %s7043, 48
        %s7045 = smul.addr %s7041, 48
        %s7046 = sadd.s32 %s7044, %s7045
        %s7047 = smul.addr %s7046, 4
        %s7048 = scalar_lea.vmem %s6, %s7047
      $region60: #{unet_conv_block.6} parent=55 // pred_fallthru
        _
      // Predicated region
      $region61: #{unet_conv_block.6} parent=55 // pred_check
        %p7049 = pneg %p251
      $region62: #{unet_conv_block.6} parent=55 // pred_check_branch
        %7051 = sbr.rel (%p7049) target = $region64
      $region63: #{unet_conv_block.6} parent=55 // pred_region
        %p7052 = scmp.lt.s32.totalorder %s25, 1
        %s7053 = scalar_select %p7052, %s25, 1
        %p7054 = scmp.lt.s32.totalorder %s26, 0
        %s7055 = scalar_select %p7054, %s26, 0
        %s7056 = sadd.s32 %s7055, %s7053
        %s7057 = smul.addr %s7056, 2
        %s7058 = scalar_lea.vmem %s7, %s7057
      $region64: #{unet_conv_block.6} parent=55 // pred_fallthru
        _
    $region56: #{unet_conv_block.6} parent=5 // pred_fallthru
      _
  $region6: #{unet_conv_block.6} parent=0 // loop_footer
    %s18 = sadd.s32 1, %s14
  $region7: #{unet_conv_block.6} parent=0 // loop_footer_branch
    %13 = sbr.rel target = $region3
  $region8: #{unet_conv_block.6} parent=0 // loop_exit
    _

</llo_original>
